<compile_context>
chip_gen: v7x
topology: tpu7x:2x2x1
jax: 0.10.0
libtpu: 0.0.40
codegen_flags: <defaults>
</compile_context>

<pallas_src>
import functools

import jax
import jax.numpy as jnp
from jax.experimental import pallas as pl
from jax.experimental.pallas import tpu as pltpu


# --------------------------------------------------------------------------
# Kernel 1: fused layer-0 input projection + 3-layer GRU recurrence.
# Gate order (r, z, n) matches torch.nn.GRU; gates concatenated along lanes.
#   bi_l = [bir+bhr, biz+bhz, bin]   (added to the input-side contribution)
#   bh_l = [0, 0, bhn]               (must stay inside r * (h @ Whn + bhn))
# h_0 for every layer = Linear(z) (decod_lat2hid_layer), computed in-kernel.
# --------------------------------------------------------------------------
def _fused_gru_kernel(z_ref, wl2h_ref, bl2h_ref, x_ref,
                      wih0_ref, bi0_ref, whh0_ref, bh0_ref,
                      wih1_ref, bi1_ref, whh1_ref, bh1_ref,
                      wih2_ref, bi2_ref, whh2_ref, bh2_ref,
                      out_ref):
    Tm1, B, H = out_ref.shape      # only T-1 steps are ever consumed

    # h_0 = decod_lat2hid_layer(z), replicated to all 3 layers (f32 state)
    h_init = (jnp.dot(z_ref[...].astype(jnp.bfloat16), wl2h_ref[...],
                      preferred_element_type=jnp.float32)
              + bl2h_ref[...])                                   # (B, H)

    # --- hoisted loop-invariant loads / broadcasts -------------------------
    whh0 = whh0_ref[...]
    whh1 = whh1_ref[...]
    whh2 = whh2_ref[...]
    wih1 = wih1_ref[...]
    wih2 = wih2_ref[...]
    bh0_b = jnp.broadcast_to(bh0_ref[...], (B, 3 * H))
    bh1_b = jnp.broadcast_to(bh1_ref[...], (B, 3 * H))
    bh2_b = jnp.broadcast_to(bh2_ref[...], (B, 3 * H))
    bi1_b = jnp.broadcast_to(bi1_ref[...], (B, 3 * H))
    bi2_b = jnp.broadcast_to(bi2_ref[...], (B, 3 * H))

    # --- layer-0 input projection for ALL timesteps: one bf16 MXU matmul ---
    gi0_all = (jnp.dot(x_ref[...], wih0_ref[...],
                       preferred_element_type=jnp.float32)
               + bi0_ref[...])                                   # (Tm1*B, 3H) f32

    def gru_cell(gi, h, whh_bf16, bh_b):
        # one (B,H)@(H,3H) bf16 matmul for the hidden contribution of all gates
        gh = (jnp.dot(h.astype(jnp.bfloat16), whh_bf16,
                      preferred_element_type=jnp.float32) + bh_b)
        r = jax.nn.sigmoid(gi[:, :H] + gh[:, :H])
        zg = jax.nn.sigmoid(gi[:, H:2 * H] + gh[:, H:2 * H])
        n = jnp.tanh(gi[:, 2 * H:] + r * gh[:, 2 * H:])
        return (1.0 - zg) * n + zg * h

    h0 = h_init
    h1 = h_init
    h2 = h_init
    # Tm1 is static and small here; fully unrolled straight-line recurrence.
    # TODO(synk): switch to lax.fori_loop(unroll=4..8) over a VMEM gi0 scratch
    # for production-scale T to bound compile time / vreg live ranges.
    for t in range(Tm1):
        gi0 = gi0_all[t * B:(t + 1) * B, :]                      # static slice
        h0 = gru_cell(gi0, h0, whh0, bh0_b)                      # layer 0
        gi1 = (jnp.dot(h0.astype(jnp.bfloat16), wih1,
                       preferred_element_type=jnp.float32) + bi1_b)
        h1 = gru_cell(gi1, h1, whh1, bh1_b)                      # layer 1
        gi2 = (jnp.dot(h1.astype(jnp.bfloat16), wih2,
                       preferred_element_type=jnp.float32) + bi2_b)
        h2 = gru_cell(gi2, h2, whh2, bh2_b)                      # layer 2
        out_ref[t] = h2.astype(out_ref.dtype)                    # bf16 writeback


def fused_gru(z, x2d, params, Tm1, B, H):
    Z = z.shape[1]
    Din = x2d.shape[1]

    f2 = lambda shape: pl.BlockSpec(shape, lambda i: (0, 0))

    return pl.pallas_call(
        _fused_gru_kernel,
        out_shape=jax.ShapeDtypeStruct((Tm1, B, H), jnp.bfloat16),
        grid=(1,),
        in_specs=[
            f2((B, Z)), f2((Z, H)), f2((1, H)),
            f2((Tm1 * B, Din)),
            f2((Din, 3 * H)), f2((1, 3 * H)),        # wih0, bi0
            f2((H, 3 * H)), f2((1, 3 * H)),          # whh0, bh0
            f2((H, 3 * H)), f2((1, 3 * H)),          # wih1, bi1
            f2((H, 3 * H)), f2((1, 3 * H)),          # whh1, bh1
            f2((H, 3 * H)), f2((1, 3 * H)),          # wih2, bi2
            f2((H, 3 * H)), f2((1, 3 * H)),          # whh2, bh2
        ],
        out_specs=pl.BlockSpec((Tm1, B, H), lambda i: (0, 0, 0)),
        compiler_params=pltpu.CompilerParams(
            dimension_semantics=("arbitrary",)),
    )(z, params["w_l2h"], params["b_l2h"], x2d,
      params["wih_0"], params["bi_0"], params["whh_0"], params["bh_0"],
      params["wih_1"], params["bi_1"], params["whh_1"], params["bh_1"],
      params["wih_2"], params["bi_2"], params["whh_2"], params["bh_2"])


# --------------------------------------------------------------------------
# Kernel 2: output projection + masked cross-entropy, row-tiled.
# Each row tile: one (TM,H)@(H,V) bf16 matmul + LSE; masked-NLL sum and mask
# count are accumulated across the grid into a single resident (1,1) output.
# --------------------------------------------------------------------------
def _proj_ce_kernel(pad_id, h_ref, tgt_ref, w_ref, b_ref, sum_ref, cnt_ref):
    @pl.when(pl.program_id(0) == 0)
    def _():
        sum_ref[...] = jnp.zeros_like(sum_ref)
        cnt_ref[...] = jnp.zeros_like(cnt_ref)

    logits = (jnp.dot(h_ref[...], w_ref[...],
                      preferred_element_type=jnp.float32)
              + b_ref[...])                                      # (TM, V) f32
    tgt = tgt_ref[...]                                           # (TM, 1) int32

    TM, V = logits.shape
    vocab_ids = jax.lax.broadcasted_iota(jnp.int32, (TM, V), 1)

    m = jnp.max(logits, axis=1, keepdims=True)                   # (TM, 1)
    lse = m + jnp.log(jnp.sum(jnp.exp(logits - m), axis=1, keepdims=True))
    picked = jnp.sum(jnp.where(vocab_ids == tgt, logits, 0.0),
                     axis=1, keepdims=True)                      # masked select
    nll = lse - picked                                           # (TM, 1)

    mask = (tgt != pad_id).astype(jnp.float32)                   # (TM, 1)
    sum_ref[...] += jnp.sum(nll * mask, keepdims=True)
    cnt_ref[...] += jnp.sum(mask, keepdims=True)


def projection_ce_loss(h2d, tgt, w_out, b_out, pad_id):
    M, H = h2d.shape
    V = w_out.shape[1]
    TM = M if M <= 512 else 256
    assert M % TM == 0
    G = M // TM

    kernel = functools.partial(_proj_ce_kernel, pad_id)
    sums, cnts = pl.pallas_call(
        kernel,
        out_shape=(jax.ShapeDtypeStruct((1, 1), jnp.float32),
                   jax.ShapeDtypeStruct((1, 1), jnp.float32)),
        grid=(G,),
        in_specs=[
            pl.BlockSpec((TM, H), lambda g: (g, 0)),
            pl.BlockSpec((TM, 1), lambda g: (g, 0)),
            pl.BlockSpec((H, V), lambda g: (0, 0)),
            pl.BlockSpec((1, V), lambda g: (0, 0)),
        ],
        out_specs=(pl.BlockSpec((1, 1), lambda g: (0, 0)),
                   pl.BlockSpec((1, 1), lambda g: (0, 0))),
        compiler_params=pltpu.CompilerParams(
            dimension_semantics=("arbitrary",)),
    )(h2d, tgt, w_out, b_out)

    # Note: returns 0 (not NaN) if every target is pad_id.
    return sums[0, 0] / jnp.maximum(cnts[0, 0], 1.0)


# --------------------------------------------------------------------------
# Parameter init (deterministic, synthetic), gate-concatenated layout.
# All MXU weights in bf16; biases (and elementwise/gate math) stay f32.
# --------------------------------------------------------------------------
def init_decoder_params(key, n_vocab, emb_dim, lat_dim, hidden_dim,
                        num_layers=3):
    def nrm(k, shape, scale=0.1):
        return (scale * jax.random.normal(k, shape)).astype(jnp.float32)

    H = hidden_dim
    keys = iter(jax.random.split(key, 8 + 4 * num_layers))
    p = {}
    p["embedding"] = nrm(next(keys), (n_vocab, emb_dim))
    p["w_l2h"] = nrm(next(keys), (lat_dim, H)).astype(jnp.bfloat16)
    p["b_l2h"] = nrm(next(keys), (1, H))

    din = emb_dim + lat_dim
    for l in range(num_layers):
        wih = nrm(next(keys), (din, 3 * H))            # [r | z | n] along lanes
        whh = nrm(next(keys), (H, 3 * H))
        bih = nrm(next(keys), (3 * H,))
        bhh = nrm(next(keys), (3 * H,))
        # pre-combine biases: r,z biases go to the input-side add; the n-gate
        # hidden bias must stay inside r*(h@Whn + bhn).
        bi = jnp.concatenate([bih[:2 * H] + bhh[:2 * H], bih[2 * H:]])[None, :]
        bh = jnp.concatenate([jnp.zeros((2 * H,), jnp.float32),
                              bhh[2 * H:]])[None, :]
        p[f"wih_{l}"] = wih.astype(jnp.bfloat16)
        p[f"whh_{l}"] = whh.astype(jnp.bfloat16)
        p[f"bi_{l}"] = bi
        p[f"bh_{l}"] = bh
        din = H

    p["w_out"] = nrm(next(keys), (H, n_vocab)).astype(jnp.bfloat16)
    p["b_out"] = nrm(next(keys), (1, n_vocab))
    return p


# --------------------------------------------------------------------------
# Forward pass == Decoder.forward (padded tokens, masked recon loss)
# --------------------------------------------------------------------------
def decoder_forward(params, tokens, z, pad_id):
    """tokens: (B, T) int32 already padded with pad_id; z: (B, Z) float32."""
    B, T = tokens.shape
    E = params["embedding"].shape[1]
    Z = z.shape[1]
    H = params["w_l2h"].shape[1]
    Tm1 = T - 1

    # glue: embedding gather + latent broadcast + concat (plain JAX).
    # Only the first T-1 timesteps are needed (last GRU output is discarded).
    emb = jnp.take(params["embedding"], tokens, axis=0)             # (B, T, E)
    z0 = jnp.broadcast_to(z[:, None, :], (B, T, Z))                 # (B, T, Z)
    x_input = jnp.concatenate([emb, z0], axis=-1)                   # (B, T, E+Z)
    x_tm = jnp.transpose(x_input[:, :Tm1, :], (1, 0, 2))            # (T-1, B, Din)
    Din = E + Z
    x2d = x_tm.reshape(Tm1 * B, Din).astype(jnp.bfloat16)

    # fused layer-0 projection + 3-layer GRU recurrence (h0 linear folded in)
    h_seq = fused_gru(z, x2d, params, Tm1, B, H)                    # (T-1,B,H) bf16

    # de-serialized projection + masked cross-entropy (ignore_index=pad_id)
    h2d = h_seq.reshape(Tm1 * B, H)
    tgt = jnp.transpose(tokens, (1, 0))[1:].reshape(Tm1 * B, 1)
    tgt = tgt.astype(jnp.int32)
    return projection_ce_loss(h2d, tgt, params["w_out"], params["b_out"],
                              pad_id)


if __name__ == "__main__":
    key = jax.random.PRNGKey(0)
    # vocab, emb, latent, hidden, batch, seq — tile-friendly small shapes
    V, E, Z, H, B, T = 128, 32, 32, 128, 8, 8
    pad_id = 0

    pkey, tkey, zkey = jax.random.split(key, 3)
    params = init_decoder_params(pkey, V, E, Z, H)

    # emulate nn.utils.rnn.pad_sequence: variable-length sentences padded to T
    # (padded steps still update the hidden state, as in the reference which
    #  does not use pack_padded_sequence; padded targets are masked in the loss)
    lengths = jnp.array([8, 6, 5, 7, 8, 4, 6, 7], dtype=jnp.int32)
    tok = jax.random.randint(tkey, (B, T), 1, V, dtype=jnp.int32)
    pos = jnp.arange(T, dtype=jnp.int32)[None, :]
    tok = jnp.where(pos < lengths[:, None], tok, pad_id)

    z = jax.random.normal(zkey, (B, Z), dtype=jnp.float32)

    fwd = jax.jit(functools.partial(decoder_forward, pad_id=pad_id))
    loss = fwd(params, tok, z)
    jax.block_until_ready(loss)
    print("KERNEL_OK")
</pallas_src>

<mosaic_0001>
module attributes {stable_mosaic.version = 11 : i64} {
  func.func @_proj_ce_kernel(%arg0: i32, %arg1: memref<56x128xbf16, #tpu.memory_space<vmem>>, %arg2: memref<56x1xi32, #tpu.memory_space<vmem>>, %arg3: memref<128x128xbf16, #tpu.memory_space<vmem>>, %arg4: memref<1x128xf32, #tpu.memory_space<vmem>>, %arg5: memref<1x1xf32, #tpu.memory_space<vmem>>, %arg6: memref<1x1xf32, #tpu.memory_space<vmem>>) attributes {dimension_semantics = [#tpu.dimension_semantics<arbitrary>], iteration_bounds = array<i64: 1>, scalar_prefetch = 0 : i64, scratch_operands = 0 : i64, tpu.core_type = #tpu.core_type<tc>, window_params = [{transform_indices = @transform_0, window_bounds = array<i64: 56, 128>}, {transform_indices = @transform_1, window_bounds = array<i64: 56, 1>}, {pipeline_mode = #tpu.pipeline_mode<synchronous>, transform_indices = @transform_2, window_bounds = array<i64: 128, 128>}, {pipeline_mode = #tpu.pipeline_mode<synchronous>, transform_indices = @transform_3, window_bounds = array<i64: 1, 128>}, {pipeline_mode = #tpu.pipeline_mode<synchronous>, transform_indices = @transform_4, window_bounds = array<i64: 1, 1>}, {pipeline_mode = #tpu.pipeline_mode<synchronous>, transform_indices = @transform_5, window_bounds = array<i64: 1, 1>}]} {
    %c0_i32 = arith.constant 0 : i32
    %0 = arith.cmpi eq, %arg0, %c0_i32 : i32
    %1 = arith.extui %0 : i1 to i32
    %c0_i32_0 = arith.constant 0 : i32
    %2 = arith.cmpi ne, %1, %c0_i32_0 : i32
    scf.if %2 {
      %cst_23 = arith.constant 0.000000e+00 : f32
      %48 = vector.broadcast %cst_23 : f32 to vector<1x1xf32>
      %c0_24 = arith.constant 0 : index
      %c0_25 = arith.constant 0 : index
      %49 = vector.load %arg5[%c0_24, %c0_25] : memref<1x1xf32, #tpu.memory_space<vmem>>, vector<1x1xf32>
      tpu.vector_store %arg5[%c0_24, %c0_25], %48 {strides = array<i32>} : memref<1x1xf32, #tpu.memory_space<vmem>>, vector<1x1xf32>,
      %cst_26 = arith.constant 0.000000e+00 : f32
      %50 = vector.broadcast %cst_26 : f32 to vector<1x1xf32>
      %c0_27 = arith.constant 0 : index
      %c0_28 = arith.constant 0 : index
      %51 = vector.load %arg6[%c0_27, %c0_28] : memref<1x1xf32, #tpu.memory_space<vmem>>, vector<1x1xf32>
      tpu.vector_store %arg6[%c0_27, %c0_28], %50 {strides = array<i32>} : memref<1x1xf32, #tpu.memory_space<vmem>>, vector<1x1xf32>,
    } else {
    }
    %c0 = arith.constant 0 : index
    %c0_1 = arith.constant 0 : index
    %3 = vector.load %arg1[%c0, %c0_1] : memref<56x128xbf16, #tpu.memory_space<vmem>>, vector<56x128xbf16>
    %c0_2 = arith.constant 0 : index
    %c0_3 = arith.constant 0 : index
    %4 = vector.load %arg3[%c0_2, %c0_3] : memref<128x128xbf16, #tpu.memory_space<vmem>>, vector<128x128xbf16>
    %cst = arith.constant dense<0.000000e+00> : vector<56x128xf32>
    %5 = tpu.matmul %3, %4, %cst {dimension_numbers = #tpu.dot_dimension_numbers<[1], [0], [0], [1], [0, 0, 1, 1], [], []>} : vector<56x128xbf16>, vector<128x128xbf16>, vector<56x128xf32> -> vector<56x128xf32>
    %c0_4 = arith.constant 0 : index
    %c0_5 = arith.constant 0 : index
    %6 = vector.load %arg4[%c0_4, %c0_5] : memref<1x128xf32, #tpu.memory_space<vmem>>, vector<1x128xf32>
    %7 = vector.broadcast %6 : vector<1x128xf32> to vector<56x128xf32>
    %8 = arith.addf %5, %7 : vector<56x128xf32>
    %c0_6 = arith.constant 0 : index
    %c0_7 = arith.constant 0 : index
    %9 = vector.load %arg2[%c0_6, %c0_7] : memref<56x1xi32, #tpu.memory_space<vmem>>, vector<56x1xi32>
    %10 = tpu.iota {dimensions = array<i32: 1>} : vector<56x128xi32>
    %cst_8 = arith.constant dense<0xFF800000> : vector<56xf32>
    %11 = vector.multi_reduction <maximumf>, %8, %cst_8 [1] : vector<56x128xf32> to vector<56xf32>
    %12 = vector.shape_cast %11 : vector<56xf32> to vector<56x1xf32>
    %13 = vector.broadcast %12 : vector<56x1xf32> to vector<56x128xf32>
    %14 = arith.subf %8, %13 : vector<56x128xf32>
    %15 = math.exp %14 : vector<56x128xf32>
    %cst_9 = arith.constant dense<0.000000e+00> : vector<56xf32>
    %16 = vector.multi_reduction <add>, %15, %cst_9 [1] : vector<56x128xf32> to vector<56xf32>
    %17 = vector.shape_cast %16 : vector<56xf32> to vector<56x1xf32>
    %18 = math.log %17 : vector<56x1xf32>
    %19 = arith.addf %12, %18 : vector<56x1xf32>
    %20 = vector.broadcast %9 : vector<56x1xi32> to vector<56x128xi32>
    %21 = arith.cmpi eq, %10, %20 : vector<56x128xi32>
    %cst_10 = arith.constant 0.000000e+00 : f32
    %22 = vector.broadcast %cst_10 : f32 to vector<56x128xf32>
    %23 = arith.select %21, %8, %22 : vector<56x128xi1>, vector<56x128xf32>
    %cst_11 = arith.constant dense<0.000000e+00> : vector<56xf32>
    %24 = vector.multi_reduction <add>, %23, %cst_11 [1] : vector<56x128xf32> to vector<56xf32>
    %25 = vector.shape_cast %24 : vector<56xf32> to vector<56x1xf32>
    %26 = arith.subf %19, %25 : vector<56x1xf32>
    %c0_i32_12 = arith.constant 0 : i32
    %27 = vector.broadcast %c0_i32_12 : i32 to vector<56x1xi32>
    %28 = arith.cmpi ne, %9, %27 : vector<56x1xi32>
    %29 = arith.extui %28 : vector<56x1xi1> to vector<56x1xi32>
    %30 = arith.sitofp %29 : vector<56x1xi32> to vector<56x1xf32>
    %c0_13 = arith.constant 0 : index
    %c0_14 = arith.constant 0 : index
    %31 = vector.load %arg5[%c0_13, %c0_14] : memref<1x1xf32, #tpu.memory_space<vmem>>, vector<1x1xf32>
    %32 = arith.mulf %26, %30 : vector<56x1xf32>
    %33 = vector.shape_cast %32 : vector<56x1xf32> to vector<1x56x1xf32>
    %cst_15 = arith.constant dense<0.000000e+00> : vector<1xf32>
    %34 = vector.multi_reduction <add>, %33, %cst_15 [1, 2] : vector<1x56x1xf32> to vector<1xf32>
    %35 = vector.shape_cast %34 : vector<1xf32> to vector<1x1x1xf32>
    %36 = vector.extract %35[0, 0, 0] : f32 from vector<1x1x1xf32>
    %37 = vector.broadcast %36 : f32 to vector<1x1xf32>
    %38 = arith.addf %31, %37 : vector<1x1xf32>
    %c0_16 = arith.constant 0 : index
    %c0_17 = arith.constant 0 : index
    %39 = vector.load %arg5[%c0_16, %c0_17] : memref<1x1xf32, #tpu.memory_space<vmem>>, vector<1x1xf32>
    tpu.vector_store %arg5[%c0_16, %c0_17], %38 {strides = array<i32>} : memref<1x1xf32, #tpu.memory_space<vmem>>, vector<1x1xf32>,
    %c0_18 = arith.constant 0 : index
    %c0_19 = arith.constant 0 : index
    %40 = vector.load %arg6[%c0_18, %c0_19] : memref<1x1xf32, #tpu.memory_space<vmem>>, vector<1x1xf32>
    %41 = vector.shape_cast %30 : vector<56x1xf32> to vector<1x56x1xf32>
    %cst_20 = arith.constant dense<0.000000e+00> : vector<1xf32>
    %42 = vector.multi_reduction <add>, %41, %cst_20 [1, 2] : vector<1x56x1xf32> to vector<1xf32>
    %43 = vector.shape_cast %42 : vector<1xf32> to vector<1x1x1xf32>
    %44 = vector.extract %43[0, 0, 0] : f32 from vector<1x1x1xf32>
    %45 = vector.broadcast %44 : f32 to vector<1x1xf32>
    %46 = arith.addf %40, %45 : vector<1x1xf32>
    %c0_21 = arith.constant 0 : index
    %c0_22 = arith.constant 0 : index
    %47 = vector.load %arg6[%c0_21, %c0_22] : memref<1x1xf32, #tpu.memory_space<vmem>>, vector<1x1xf32>
    tpu.vector_store %arg6[%c0_21, %c0_22], %46 {strides = array<i32>} : memref<1x1xf32, #tpu.memory_space<vmem>>, vector<1x1xf32>,
    return
  }
  func.func @transform_0(%arg0: i32) -> (i32, i32) {
    %c0_i32 = arith.constant 0 : i32
    %c0_i32_0 = arith.constant 0 : i32
    return %arg0, %c0_i32 : i32, i32
  }
  func.func @transform_1(%arg0: i32) -> (i32, i32) {
    %c0_i32 = arith.constant 0 : i32
    %c0_i32_0 = arith.constant 0 : i32
    return %arg0, %c0_i32 : i32, i32
  }
  func.func @transform_2(%arg0: i32) -> (i32, i32) {
    %c0_i32 = arith.constant 0 : i32
    %c0_i32_0 = arith.constant 0 : i32
    %c0_i32_1 = arith.constant 0 : i32
    return %c0_i32, %c0_i32_0 : i32, i32
  }
  func.func @transform_3(%arg0: i32) -> (i32, i32) {
    %c0_i32 = arith.constant 0 : i32
    %c0_i32_0 = arith.constant 0 : i32
    %c0_i32_1 = arith.constant 0 : i32
    return %c0_i32, %c0_i32_0 : i32, i32
  }
  func.func @transform_4(%arg0: i32) -> (i32, i32) {
    %c0_i32 = arith.constant 0 : i32
    %c0_i32_0 = arith.constant 0 : i32
    %c0_i32_1 = arith.constant 0 : i32
    return %c0_i32, %c0_i32_0 : i32, i32
  }
  func.func @transform_5(%arg0: i32) -> (i32, i32) {
    %c0_i32 = arith.constant 0 : i32
    %c0_i32_0 = arith.constant 0 : i32
    %c0_i32_1 = arith.constant 0 : i32
    return %c0_i32, %c0_i32_0 : i32, i32
  }
}

module attributes {stable_mosaic.version = 11 : i64} {
  func.func @_fused_gru_kernel(%arg0: i32, %arg1: memref<8x32xf32, #tpu.memory_space<vmem>>, %arg2: memref<32x128xbf16, #tpu.memory_space<vmem>>, %arg3: memref<1x128xf32, #tpu.memory_space<vmem>>, %arg4: memref<56x64xbf16, #tpu.memory_space<vmem>>, %arg5: memref<64x384xbf16, #tpu.memory_space<vmem>>, %arg6: memref<1x384xf32, #tpu.memory_space<vmem>>, %arg7: memref<128x384xbf16, #tpu.memory_space<vmem>>, %arg8: memref<1x384xf32, #tpu.memory_space<vmem>>, %arg9: memref<128x384xbf16, #tpu.memory_space<vmem>>, %arg10: memref<1x384xf32, #tpu.memory_space<vmem>>, %arg11: memref<128x384xbf16, #tpu.memory_space<vmem>>, %arg12: memref<1x384xf32, #tpu.memory_space<vmem>>, %arg13: memref<128x384xbf16, #tpu.memory_space<vmem>>, %arg14: memref<1x384xf32, #tpu.memory_space<vmem>>, %arg15: memref<128x384xbf16, #tpu.memory_space<vmem>>, %arg16: memref<1x384xf32, #tpu.memory_space<vmem>>, %arg17: memref<7x8x128xbf16, #tpu.memory_space<vmem>>) attributes {dimension_semantics = [#tpu.dimension_semantics<arbitrary>], iteration_bounds = array<i64: 1>, scalar_prefetch = 0 : i64, scratch_operands = 0 : i64, tpu.core_type = #tpu.core_type<tc>, window_params = [{pipeline_mode = #tpu.pipeline_mode<synchronous>, transform_indices = @transform_0, window_bounds = array<i64: 8, 32>}, {pipeline_mode = #tpu.pipeline_mode<synchronous>, transform_indices = @transform_1, window_bounds = array<i64: 32, 128>}, {pipeline_mode = #tpu.pipeline_mode<synchronous>, transform_indices = @transform_2, window_bounds = array<i64: 1, 128>}, {pipeline_mode = #tpu.pipeline_mode<synchronous>, transform_indices = @transform_3, window_bounds = array<i64: 56, 64>}, {pipeline_mode = #tpu.pipeline_mode<synchronous>, transform_indices = @transform_4, window_bounds = array<i64: 64, 384>}, {pipeline_mode = #tpu.pipeline_mode<synchronous>, transform_indices = @transform_5, window_bounds = array<i64: 1, 384>}, {pipeline_mode = #tpu.pipeline_mode<synchronous>, transform_indices = @transform_6, window_bounds = array<i64: 128, 384>}, {pipeline_mode = #tpu.pipeline_mode<synchronous>, transform_indices = @transform_7, window_bounds = array<i64: 1, 384>}, {pipeline_mode = #tpu.pipeline_mode<synchronous>, transform_indices = @transform_8, window_bounds = array<i64: 128, 384>}, {pipeline_mode = #tpu.pipeline_mode<synchronous>, transform_indices = @transform_9, window_bounds = array<i64: 1, 384>}, {pipeline_mode = #tpu.pipeline_mode<synchronous>, transform_indices = @transform_10, window_bounds = array<i64: 128, 384>}, {pipeline_mode = #tpu.pipeline_mode<synchronous>, transform_indices = @transform_11, window_bounds = array<i64: 1, 384>}, {pipeline_mode = #tpu.pipeline_mode<synchronous>, transform_indices = @transform_12, window_bounds = array<i64: 128, 384>}, {pipeline_mode = #tpu.pipeline_mode<synchronous>, transform_indices = @transform_13, window_bounds = array<i64: 1, 384>}, {pipeline_mode = #tpu.pipeline_mode<synchronous>, transform_indices = @transform_14, window_bounds = array<i64: 128, 384>}, {pipeline_mode = #tpu.pipeline_mode<synchronous>, transform_indices = @transform_15, window_bounds = array<i64: 1, 384>}, {pipeline_mode = #tpu.pipeline_mode<synchronous>, transform_indices = @transform_16, window_bounds = array<i64: 7, 8, 128>}]} {
    %c0 = arith.constant 0 : index
    %c0_0 = arith.constant 0 : index
    %0 = vector.load %arg1[%c0, %c0_0] : memref<8x32xf32, #tpu.memory_space<vmem>>, vector<8x32xf32>
    %1 = arith.truncf %0 : vector<8x32xf32> to vector<8x32xbf16>
    %c0_1 = arith.constant 0 : index
    %c0_2 = arith.constant 0 : index
    %2 = vector.load %arg2[%c0_1, %c0_2] : memref<32x128xbf16, #tpu.memory_space<vmem>>, vector<32x128xbf16>
    %cst = arith.constant dense<0.000000e+00> : vector<8x128xf32>
    %3 = tpu.matmul %1, %2, %cst {dimension_numbers = #tpu.dot_dimension_numbers<[1], [0], [0], [1], [0, 0, 1, 1], [], []>} : vector<8x32xbf16>, vector<32x128xbf16>, vector<8x128xf32> -> vector<8x128xf32>
    %c0_3 = arith.constant 0 : index
    %c0_4 = arith.constant 0 : index
    %4 = vector.load %arg3[%c0_3, %c0_4] : memref<1x128xf32, #tpu.memory_space<vmem>>, vector<1x128xf32>
    %5 = vector.broadcast %4 : vector<1x128xf32> to vector<8x128xf32>
    %6 = arith.addf %3, %5 : vector<8x128xf32>
    %c0_5 = arith.constant 0 : index
    %c0_6 = arith.constant 0 : index
    %7 = vector.load %arg7[%c0_5, %c0_6] : memref<128x384xbf16, #tpu.memory_space<vmem>>, vector<128x384xbf16>
    %c0_7 = arith.constant 0 : index
    %c0_8 = arith.constant 0 : index
    %8 = vector.load %arg11[%c0_7, %c0_8] : memref<128x384xbf16, #tpu.memory_space<vmem>>, vector<128x384xbf16>
    %c0_9 = arith.constant 0 : index
    %c0_10 = arith.constant 0 : index
    %9 = vector.load %arg15[%c0_9, %c0_10] : memref<128x384xbf16, #tpu.memory_space<vmem>>, vector<128x384xbf16>
    %c0_11 = arith.constant 0 : index
    %c0_12 = arith.constant 0 : index
    %10 = vector.load %arg9[%c0_11, %c0_12] : memref<128x384xbf16, #tpu.memory_space<vmem>>, vector<128x384xbf16>
    %c0_13 = arith.constant 0 : index
    %c0_14 = arith.constant 0 : index
    %11 = vector.load %arg13[%c0_13, %c0_14] : memref<128x384xbf16, #tpu.memory_space<vmem>>, vector<128x384xbf16>
    %c0_15 = arith.constant 0 : index
    %c0_16 = arith.constant 0 : index
    %12 = vector.load %arg8[%c0_15, %c0_16] : memref<1x384xf32, #tpu.memory_space<vmem>>, vector<1x384xf32>
    %13 = vector.shape_cast %12 : vector<1x384xf32> to vector<1x384xf32>
    %14 = vector.broadcast %13 : vector<1x384xf32> to vector<8x384xf32>
    %c0_17 = arith.constant 0 : index
    %c0_18 = arith.constant 0 : index
    %15 = vector.load %arg12[%c0_17, %c0_18] : memref<1x384xf32, #tpu.memory_space<vmem>>, vector<1x384xf32>
    %16 = vector.shape_cast %15 : vector<1x384xf32> to vector<1x384xf32>
    %17 = vector.broadcast %16 : vector<1x384xf32> to vector<8x384xf32>
    %c0_19 = arith.constant 0 : index
    %c0_20 = arith.constant 0 : index
    %18 = vector.load %arg16[%c0_19, %c0_20] : memref<1x384xf32, #tpu.memory_space<vmem>>, vector<1x384xf32>
    %19 = vector.shape_cast %18 : vector<1x384xf32> to vector<1x384xf32>
    %20 = vector.broadcast %19 : vector<1x384xf32> to vector<8x384xf32>
    %c0_21 = arith.constant 0 : index
    %c0_22 = arith.constant 0 : index
    %21 = vector.load %arg10[%c0_21, %c0_22] : memref<1x384xf32, #tpu.memory_space<vmem>>, vector<1x384xf32>
    %22 = vector.shape_cast %21 : vector<1x384xf32> to vector<1x384xf32>
    %23 = vector.broadcast %22 : vector<1x384xf32> to vector<8x384xf32>
    %c0_23 = arith.constant 0 : index
    %c0_24 = arith.constant 0 : index
    %24 = vector.load %arg14[%c0_23, %c0_24] : memref<1x384xf32, #tpu.memory_space<vmem>>, vector<1x384xf32>
    %25 = vector.shape_cast %24 : vector<1x384xf32> to vector<1x384xf32>
    %26 = vector.broadcast %25 : vector<1x384xf32> to vector<8x384xf32>
    %c0_25 = arith.constant 0 : index
    %c0_26 = arith.constant 0 : index
    %27 = vector.load %arg4[%c0_25, %c0_26] : memref<56x64xbf16, #tpu.memory_space<vmem>>, vector<56x64xbf16>
    %c0_27 = arith.constant 0 : index
    %c0_28 = arith.constant 0 : index
    %28 = vector.load %arg5[%c0_27, %c0_28] : memref<64x384xbf16, #tpu.memory_space<vmem>>, vector<64x384xbf16>
    %cst_29 = arith.constant dense<0.000000e+00> : vector<56x384xf32>
    %29 = tpu.matmul %27, %28, %cst_29 {dimension_numbers = #tpu.dot_dimension_numbers<[1], [0], [0], [1], [0, 0, 1, 1], [], []>} : vector<56x64xbf16>, vector<64x384xbf16>, vector<56x384xf32> -> vector<56x384xf32>
    %c0_30 = arith.constant 0 : index
    %c0_31 = arith.constant 0 : index
    %30 = vector.load %arg6[%c0_30, %c0_31] : memref<1x384xf32, #tpu.memory_space<vmem>>, vector<1x384xf32>
    %31 = vector.broadcast %30 : vector<1x384xf32> to vector<56x384xf32>
    %32 = arith.addf %29, %31 : vector<56x384xf32>
    %33 = vector.extract_strided_slice %32 {offsets = [0, 0], sizes = [8, 384], strides = [1, 1]} : vector<56x384xf32> to vector<8x384xf32>
    %34 = arith.truncf %6 : vector<8x128xf32> to vector<8x128xbf16>
    %cst_32 = arith.constant dense<0.000000e+00> : vector<8x384xf32>
    %35 = tpu.matmul %34, %7, %cst_32 {dimension_numbers = #tpu.dot_dimension_numbers<[1], [0], [0], [1], [0, 0, 1, 1], [], []>} : vector<8x128xbf16>, vector<128x384xbf16>, vector<8x384xf32> -> vector<8x384xf32>
    %36 = arith.addf %35, %14 : vector<8x384xf32>
    %37 = vector.extract_strided_slice %33 {offsets = [0, 0], sizes = [8, 128], strides = [1, 1]} : vector<8x384xf32> to vector<8x128xf32>
    %38 = vector.extract_strided_slice %36 {offsets = [0, 0], sizes = [8, 128], strides = [1, 1]} : vector<8x384xf32> to vector<8x128xf32>
    %39 = arith.addf %37, %38 : vector<8x128xf32>
    %40 = arith.negf %39 : vector<8x128xf32>
    %41 = math.exp %40 : vector<8x128xf32>
    %cst_33 = arith.constant 1.000000e+00 : f32
    %42 = vector.broadcast %cst_33 : f32 to vector<8x128xf32>
    %43 = arith.addf %42, %41 : vector<8x128xf32>
    %44 = arith.divf %42, %43 : vector<8x128xf32>
    %45 = vector.extract_strided_slice %33 {offsets = [0, 128], sizes = [8, 128], strides = [1, 1]} : vector<8x384xf32> to vector<8x128xf32>
    %46 = vector.extract_strided_slice %36 {offsets = [0, 128], sizes = [8, 128], strides = [1, 1]} : vector<8x384xf32> to vector<8x128xf32>
    %47 = arith.addf %45, %46 : vector<8x128xf32>
    %48 = arith.negf %47 : vector<8x128xf32>
    %49 = math.exp %48 : vector<8x128xf32>
    %cst_34 = arith.constant 1.000000e+00 : f32
    %50 = vector.broadcast %cst_34 : f32 to vector<8x128xf32>
    %51 = arith.addf %50, %49 : vector<8x128xf32>
    %52 = arith.divf %50, %51 : vector<8x128xf32>
    %53 = vector.extract_strided_slice %33 {offsets = [0, 256], sizes = [8, 128], strides = [1, 1]} : vector<8x384xf32> to vector<8x128xf32>
    %54 = vector.extract_strided_slice %36 {offsets = [0, 256], sizes = [8, 128], strides = [1, 1]} : vector<8x384xf32> to vector<8x128xf32>
    %55 = arith.mulf %44, %54 : vector<8x128xf32>
    %56 = arith.addf %53, %55 : vector<8x128xf32>
    %57 = math.tanh %56 : vector<8x128xf32>
    %cst_35 = arith.constant 1.000000e+00 : f32
    %58 = vector.broadcast %cst_35 : f32 to vector<8x128xf32>
    %59 = arith.subf %58, %52 : vector<8x128xf32>
    %60 = arith.mulf %59, %57 : vector<8x128xf32>
    %61 = arith.mulf %52, %6 : vector<8x128xf32>
    %62 = arith.addf %60, %61 : vector<8x128xf32>
    %63 = arith.truncf %62 : vector<8x128xf32> to vector<8x128xbf16>
    %cst_36 = arith.constant dense<0.000000e+00> : vector<8x384xf32>
    %64 = tpu.matmul %63, %10, %cst_36 {dimension_numbers = #tpu.dot_dimension_numbers<[1], [0], [0], [1], [0, 0, 1, 1], [], []>} : vector<8x128xbf16>, vector<128x384xbf16>, vector<8x384xf32> -> vector<8x384xf32>
    %65 = arith.addf %64, %23 : vector<8x384xf32>
    %66 = arith.truncf %6 : vector<8x128xf32> to vector<8x128xbf16>
    %cst_37 = arith.constant dense<0.000000e+00> : vector<8x384xf32>
    %67 = tpu.matmul %66, %8, %cst_37 {dimension_numbers = #tpu.dot_dimension_numbers<[1], [0], [0], [1], [0, 0, 1, 1], [], []>} : vector<8x128xbf16>, vector<128x384xbf16>, vector<8x384xf32> -> vector<8x384xf32>
    %68 = arith.addf %67, %17 : vector<8x384xf32>
    %69 = vector.extract_strided_slice %65 {offsets = [0, 0], sizes = [8, 128], strides = [1, 1]} : vector<8x384xf32> to vector<8x128xf32>
    %70 = vector.extract_strided_slice %68 {offsets = [0, 0], sizes = [8, 128], strides = [1, 1]} : vector<8x384xf32> to vector<8x128xf32>
    %71 = arith.addf %69, %70 : vector<8x128xf32>
    %72 = arith.negf %71 : vector<8x128xf32>
    %73 = math.exp %72 : vector<8x128xf32>
    %cst_38 = arith.constant 1.000000e+00 : f32
    %74 = vector.broadcast %cst_38 : f32 to vector<8x128xf32>
    %75 = arith.addf %74, %73 : vector<8x128xf32>
    %76 = arith.divf %74, %75 : vector<8x128xf32>
    %77 = vector.extract_strided_slice %65 {offsets = [0, 128], sizes = [8, 128], strides = [1, 1]} : vector<8x384xf32> to vector<8x128xf32>
    %78 = vector.extract_strided_slice %68 {offsets = [0, 128], sizes = [8, 128], strides = [1, 1]} : vector<8x384xf32> to vector<8x128xf32>
    %79 = arith.addf %77, %78 : vector<8x128xf32>
    %80 = arith.negf %79 : vector<8x128xf32>
    %81 = math.exp %80 : vector<8x128xf32>
    %cst_39 = arith.constant 1.000000e+00 : f32
    %82 = vector.broadcast %cst_39 : f32 to vector<8x128xf32>
    %83 = arith.addf %82, %81 : vector<8x128xf32>
    %84 = arith.divf %82, %83 : vector<8x128xf32>
    %85 = vector.extract_strided_slice %65 {offsets = [0, 256], sizes = [8, 128], strides = [1, 1]} : vector<8x384xf32> to vector<8x128xf32>
    %86 = vector.extract_strided_slice %68 {offsets = [0, 256], sizes = [8, 128], strides = [1, 1]} : vector<8x384xf32> to vector<8x128xf32>
    %87 = arith.mulf %76, %86 : vector<8x128xf32>
    %88 = arith.addf %85, %87 : vector<8x128xf32>
    %89 = math.tanh %88 : vector<8x128xf32>
    %cst_40 = arith.constant 1.000000e+00 : f32
    %90 = vector.broadcast %cst_40 : f32 to vector<8x128xf32>
    %91 = arith.subf %90, %84 : vector<8x128xf32>
    %92 = arith.mulf %91, %89 : vector<8x128xf32>
    %93 = arith.mulf %84, %6 : vector<8x128xf32>
    %94 = arith.addf %92, %93 : vector<8x128xf32>
    %95 = arith.truncf %94 : vector<8x128xf32> to vector<8x128xbf16>
    %cst_41 = arith.constant dense<0.000000e+00> : vector<8x384xf32>
    %96 = tpu.matmul %95, %11, %cst_41 {dimension_numbers = #tpu.dot_dimension_numbers<[1], [0], [0], [1], [0, 0, 1, 1], [], []>} : vector<8x128xbf16>, vector<128x384xbf16>, vector<8x384xf32> -> vector<8x384xf32>
    %97 = arith.addf %96, %26 : vector<8x384xf32>
    %98 = arith.truncf %6 : vector<8x128xf32> to vector<8x128xbf16>
    %cst_42 = arith.constant dense<0.000000e+00> : vector<8x384xf32>
    %99 = tpu.matmul %98, %9, %cst_42 {dimension_numbers = #tpu.dot_dimension_numbers<[1], [0], [0], [1], [0, 0, 1, 1], [], []>} : vector<8x128xbf16>, vector<128x384xbf16>, vector<8x384xf32> -> vector<8x384xf32>
    %100 = arith.addf %99, %20 : vector<8x384xf32>
    %101 = vector.extract_strided_slice %97 {offsets = [0, 0], sizes = [8, 128], strides = [1, 1]} : vector<8x384xf32> to vector<8x128xf32>
    %102 = vector.extract_strided_slice %100 {offsets = [0, 0], sizes = [8, 128], strides = [1, 1]} : vector<8x384xf32> to vector<8x128xf32>
    %103 = arith.addf %101, %102 : vector<8x128xf32>
    %104 = arith.negf %103 : vector<8x128xf32>
    %105 = math.exp %104 : vector<8x128xf32>
    %cst_43 = arith.constant 1.000000e+00 : f32
    %106 = vector.broadcast %cst_43 : f32 to vector<8x128xf32>
    %107 = arith.addf %106, %105 : vector<8x128xf32>
    %108 = arith.divf %106, %107 : vector<8x128xf32>
    %109 = vector.extract_strided_slice %97 {offsets = [0, 128], sizes = [8, 128], strides = [1, 1]} : vector<8x384xf32> to vector<8x128xf32>
    %110 = vector.extract_strided_slice %100 {offsets = [0, 128], sizes = [8, 128], strides = [1, 1]} : vector<8x384xf32> to vector<8x128xf32>
    %111 = arith.addf %109, %110 : vector<8x128xf32>
    %112 = arith.negf %111 : vector<8x128xf32>
    %113 = math.exp %112 : vector<8x128xf32>
    %cst_44 = arith.constant 1.000000e+00 : f32
    %114 = vector.broadcast %cst_44 : f32 to vector<8x128xf32>
    %115 = arith.addf %114, %113 : vector<8x128xf32>
    %116 = arith.divf %114, %115 : vector<8x128xf32>
    %117 = vector.extract_strided_slice %97 {offsets = [0, 256], sizes = [8, 128], strides = [1, 1]} : vector<8x384xf32> to vector<8x128xf32>
    %118 = vector.extract_strided_slice %100 {offsets = [0, 256], sizes = [8, 128], strides = [1, 1]} : vector<8x384xf32> to vector<8x128xf32>
    %119 = arith.mulf %108, %118 : vector<8x128xf32>
    %120 = arith.addf %117, %119 : vector<8x128xf32>
    %121 = math.tanh %120 : vector<8x128xf32>
    %cst_45 = arith.constant 1.000000e+00 : f32
    %122 = vector.broadcast %cst_45 : f32 to vector<8x128xf32>
    %123 = arith.subf %122, %116 : vector<8x128xf32>
    %124 = arith.mulf %123, %121 : vector<8x128xf32>
    %125 = arith.mulf %116, %6 : vector<8x128xf32>
    %126 = arith.addf %124, %125 : vector<8x128xf32>
    %127 = arith.truncf %126 : vector<8x128xf32> to vector<8x128xbf16>
    %c0_46 = arith.constant 0 : index
    %c0_47 = arith.constant 0 : index
    %c0_48 = arith.constant 0 : index
    %128 = vector.load %arg17[%c0_46, %c0_47, %c0_48] : memref<7x8x128xbf16, #tpu.memory_space<vmem>>, vector<1x8x128xbf16>
    %129 = vector.shape_cast %128 : vector<1x8x128xbf16> to vector<8x128xbf16>
    %130 = vector.shape_cast %127 : vector<8x128xbf16> to vector<1x8x128xbf16>
    tpu.vector_store %arg17[%c0_46, %c0_47, %c0_48], %130 {strides = array<i32>} : memref<7x8x128xbf16, #tpu.memory_space<vmem>>, vector<1x8x128xbf16>,
    %131 = vector.extract_strided_slice %32 {offsets = [8, 0], sizes = [8, 384], strides = [1, 1]} : vector<56x384xf32> to vector<8x384xf32>
    %132 = arith.truncf %62 : vector<8x128xf32> to vector<8x128xbf16>
    %cst_49 = arith.constant dense<0.000000e+00> : vector<8x384xf32>
    %133 = tpu.matmul %132, %7, %cst_49 {dimension_numbers = #tpu.dot_dimension_numbers<[1], [0], [0], [1], [0, 0, 1, 1], [], []>} : vector<8x128xbf16>, vector<128x384xbf16>, vector<8x384xf32> -> vector<8x384xf32>
    %134 = arith.addf %133, %14 : vector<8x384xf32>
    %135 = vector.extract_strided_slice %131 {offsets = [0, 0], sizes = [8, 128], strides = [1, 1]} : vector<8x384xf32> to vector<8x128xf32>
    %136 = vector.extract_strided_slice %134 {offsets = [0, 0], sizes = [8, 128], strides = [1, 1]} : vector<8x384xf32> to vector<8x128xf32>
    %137 = arith.addf %135, %136 : vector<8x128xf32>
    %138 = arith.negf %137 : vector<8x128xf32>
    %139 = math.exp %138 : vector<8x128xf32>
    %cst_50 = arith.constant 1.000000e+00 : f32
    %140 = vector.broadcast %cst_50 : f32 to vector<8x128xf32>
    %141 = arith.addf %140, %139 : vector<8x128xf32>
    %142 = arith.divf %140, %141 : vector<8x128xf32>
    %143 = vector.extract_strided_slice %131 {offsets = [0, 128], sizes = [8, 128], strides = [1, 1]} : vector<8x384xf32> to vector<8x128xf32>
    %144 = vector.extract_strided_slice %134 {offsets = [0, 128], sizes = [8, 128], strides = [1, 1]} : vector<8x384xf32> to vector<8x128xf32>
    %145 = arith.addf %143, %144 : vector<8x128xf32>
    %146 = arith.negf %145 : vector<8x128xf32>
    %147 = math.exp %146 : vector<8x128xf32>
    %cst_51 = arith.constant 1.000000e+00 : f32
    %148 = vector.broadcast %cst_51 : f32 to vector<8x128xf32>
    %149 = arith.addf %148, %147 : vector<8x128xf32>
    %150 = arith.divf %148, %149 : vector<8x128xf32>
    %151 = vector.extract_strided_slice %131 {offsets = [0, 256], sizes = [8, 128], strides = [1, 1]} : vector<8x384xf32> to vector<8x128xf32>
    %152 = vector.extract_strided_slice %134 {offsets = [0, 256], sizes = [8, 128], strides = [1, 1]} : vector<8x384xf32> to vector<8x128xf32>
    %153 = arith.mulf %142, %152 : vector<8x128xf32>
    %154 = arith.addf %151, %153 : vector<8x128xf32>
    %155 = math.tanh %154 : vector<8x128xf32>
    %cst_52 = arith.constant 1.000000e+00 : f32
    %156 = vector.broadcast %cst_52 : f32 to vector<8x128xf32>
    %157 = arith.subf %156, %150 : vector<8x128xf32>
    %158 = arith.mulf %157, %155 : vector<8x128xf32>
    %159 = arith.mulf %150, %62 : vector<8x128xf32>
    %160 = arith.addf %158, %159 : vector<8x128xf32>
    %161 = arith.truncf %160 : vector<8x128xf32> to vector<8x128xbf16>
    %cst_53 = arith.constant dense<0.000000e+00> : vector<8x384xf32>
    %162 = tpu.matmul %161, %10, %cst_53 {dimension_numbers = #tpu.dot_dimension_numbers<[1], [0], [0], [1], [0, 0, 1, 1], [], []>} : vector<8x128xbf16>, vector<128x384xbf16>, vector<8x384xf32> -> vector<8x384xf32>
    %163 = arith.addf %162, %23 : vector<8x384xf32>
    %164 = arith.truncf %94 : vector<8x128xf32> to vector<8x128xbf16>
    %cst_54 = arith.constant dense<0.000000e+00> : vector<8x384xf32>
    %165 = tpu.matmul %164, %8, %cst_54 {dimension_numbers = #tpu.dot_dimension_numbers<[1], [0], [0], [1], [0, 0, 1, 1], [], []>} : vector<8x128xbf16>, vector<128x384xbf16>, vector<8x384xf32> -> vector<8x384xf32>
    %166 = arith.addf %165, %17 : vector<8x384xf32>
    %167 = vector.extract_strided_slice %163 {offsets = [0, 0], sizes = [8, 128], strides = [1, 1]} : vector<8x384xf32> to vector<8x128xf32>
    %168 = vector.extract_strided_slice %166 {offsets = [0, 0], sizes = [8, 128], strides = [1, 1]} : vector<8x384xf32> to vector<8x128xf32>
    %169 = arith.addf %167, %168 : vector<8x128xf32>
    %170 = arith.negf %169 : vector<8x128xf32>
    %171 = math.exp %170 : vector<8x128xf32>
    %cst_55 = arith.constant 1.000000e+00 : f32
    %172 = vector.broadcast %cst_55 : f32 to vector<8x128xf32>
    %173 = arith.addf %172, %171 : vector<8x128xf32>
    %174 = arith.divf %172, %173 : vector<8x128xf32>
    %175 = vector.extract_strided_slice %163 {offsets = [0, 128], sizes = [8, 128], strides = [1, 1]} : vector<8x384xf32> to vector<8x128xf32>
    %176 = vector.extract_strided_slice %166 {offsets = [0, 128], sizes = [8, 128], strides = [1, 1]} : vector<8x384xf32> to vector<8x128xf32>
    %177 = arith.addf %175, %176 : vector<8x128xf32>
    %178 = arith.negf %177 : vector<8x128xf32>
    %179 = math.exp %178 : vector<8x128xf32>
    %cst_56 = arith.constant 1.000000e+00 : f32
    %180 = vector.broadcast %cst_56 : f32 to vector<8x128xf32>
    %181 = arith.addf %180, %179 : vector<8x128xf32>
    %182 = arith.divf %180, %181 : vector<8x128xf32>
    %183 = vector.extract_strided_slice %163 {offsets = [0, 256], sizes = [8, 128], strides = [1, 1]} : vector<8x384xf32> to vector<8x128xf32>
    %184 = vector.extract_strided_slice %166 {offsets = [0, 256], sizes = [8, 128], strides = [1, 1]} : vector<8x384xf32> to vector<8x128xf32>
    %185 = arith.mulf %174, %184 : vector<8x128xf32>
    %186 = arith.addf %183, %185 : vector<8x128xf32>
    %187 = math.tanh %186 : vector<8x128xf32>
    %cst_57 = arith.constant 1.000000e+00 : f32
    %188 = vector.broadcast %cst_57 : f32 to vector<8x128xf32>
    %189 = arith.subf %188, %182 : vector<8x128xf32>
    %190 = arith.mulf %189, %187 : vector<8x128xf32>
    %191 = arith.mulf %182, %94 : vector<8x128xf32>
    %192 = arith.addf %190, %191 : vector<8x128xf32>
    %193 = arith.truncf %192 : vector<8x128xf32> to vector<8x128xbf16>
    %cst_58 = arith.constant dense<0.000000e+00> : vector<8x384xf32>
    %194 = tpu.matmul %193, %11, %cst_58 {dimension_numbers = #tpu.dot_dimension_numbers<[1], [0], [0], [1], [0, 0, 1, 1], [], []>} : vector<8x128xbf16>, vector<128x384xbf16>, vector<8x384xf32> -> vector<8x384xf32>
    %195 = arith.addf %194, %26 : vector<8x384xf32>
    %196 = arith.truncf %126 : vector<8x128xf32> to vector<8x128xbf16>
    %cst_59 = arith.constant dense<0.000000e+00> : vector<8x384xf32>
    %197 = tpu.matmul %196, %9, %cst_59 {dimension_numbers = #tpu.dot_dimension_numbers<[1], [0], [0], [1], [0, 0, 1, 1], [], []>} : vector<8x128xbf16>, vector<128x384xbf16>, vector<8x384xf32> -> vector<8x384xf32>
    %198 = arith.addf %197, %20 : vector<8x384xf32>
    %199 = vector.extract_strided_slice %195 {offsets = [0, 0], sizes = [8, 128], strides = [1, 1]} : vector<8x384xf32> to vector<8x128xf32>
    %200 = vector.extract_strided_slice %198 {offsets = [0, 0], sizes = [8, 128], strides = [1, 1]} : vector<8x384xf32> to vector<8x128xf32>
    %201 = arith.addf %199, %200 : vector<8x128xf32>
    %202 = arith.negf %201 : vector<8x128xf32>
    %203 = math.exp %202 : vector<8x128xf32>
    %cst_60 = arith.constant 1.000000e+00 : f32
    %204 = vector.broadcast %cst_60 : f32 to vector<8x128xf32>
    %205 = arith.addf %204, %203 : vector<8x128xf32>
    %206 = arith.divf %204, %205 : vector<8x128xf32>
    %207 = vector.extract_strided_slice %195 {offsets = [0, 128], sizes = [8, 128], strides = [1, 1]} : vector<8x384xf32> to vector<8x128xf32>
    %208 = vector.extract_strided_slice %198 {offsets = [0, 128], sizes = [8, 128], strides = [1, 1]} : vector<8x384xf32> to vector<8x128xf32>
    %209 = arith.addf %207, %208 : vector<8x128xf32>
    %210 = arith.negf %209 : vector<8x128xf32>
    %211 = math.exp %210 : vector<8x128xf32>
    %cst_61 = arith.constant 1.000000e+00 : f32
    %212 = vector.broadcast %cst_61 : f32 to vector<8x128xf32>
    %213 = arith.addf %212, %211 : vector<8x128xf32>
    %214 = arith.divf %212, %213 : vector<8x128xf32>
    %215 = vector.extract_strided_slice %195 {offsets = [0, 256], sizes = [8, 128], strides = [1, 1]} : vector<8x384xf32> to vector<8x128xf32>
    %216 = vector.extract_strided_slice %198 {offsets = [0, 256], sizes = [8, 128], strides = [1, 1]} : vector<8x384xf32> to vector<8x128xf32>
    %217 = arith.mulf %206, %216 : vector<8x128xf32>
    %218 = arith.addf %215, %217 : vector<8x128xf32>
    %219 = math.tanh %218 : vector<8x128xf32>
    %cst_62 = arith.constant 1.000000e+00 : f32
    %220 = vector.broadcast %cst_62 : f32 to vector<8x128xf32>
    %221 = arith.subf %220, %214 : vector<8x128xf32>
    %222 = arith.mulf %221, %219 : vector<8x128xf32>
    %223 = arith.mulf %214, %126 : vector<8x128xf32>
    %224 = arith.addf %222, %223 : vector<8x128xf32>
    %225 = arith.truncf %224 : vector<8x128xf32> to vector<8x128xbf16>
    %c1 = arith.constant 1 : index
    %c0_63 = arith.constant 0 : index
    %c0_64 = arith.constant 0 : index
    %226 = vector.load %arg17[%c1, %c0_63, %c0_64] : memref<7x8x128xbf16, #tpu.memory_space<vmem>>, vector<1x8x128xbf16>
    %227 = vector.shape_cast %226 : vector<1x8x128xbf16> to vector<8x128xbf16>
    %228 = vector.shape_cast %225 : vector<8x128xbf16> to vector<1x8x128xbf16>
    tpu.vector_store %arg17[%c1, %c0_63, %c0_64], %228 {strides = array<i32>} : memref<7x8x128xbf16, #tpu.memory_space<vmem>>, vector<1x8x128xbf16>,
    %229 = vector.extract_strided_slice %32 {offsets = [16, 0], sizes = [8, 384], strides = [1, 1]} : vector<56x384xf32> to vector<8x384xf32>
    %230 = arith.truncf %160 : vector<8x128xf32> to vector<8x128xbf16>
    %cst_65 = arith.constant dense<0.000000e+00> : vector<8x384xf32>
    %231 = tpu.matmul %230, %7, %cst_65 {dimension_numbers = #tpu.dot_dimension_numbers<[1], [0], [0], [1], [0, 0, 1, 1], [], []>} : vector<8x128xbf16>, vector<128x384xbf16>, vector<8x384xf32> -> vector<8x384xf32>
    %232 = arith.addf %231, %14 : vector<8x384xf32>
    %233 = vector.extract_strided_slice %229 {offsets = [0, 0], sizes = [8, 128], strides = [1, 1]} : vector<8x384xf32> to vector<8x128xf32>
    %234 = vector.extract_strided_slice %232 {offsets = [0, 0], sizes = [8, 128], strides = [1, 1]} : vector<8x384xf32> to vector<8x128xf32>
    %235 = arith.addf %233, %234 : vector<8x128xf32>
    %236 = arith.negf %235 : vector<8x128xf32>
    %237 = math.exp %236 : vector<8x128xf32>
    %cst_66 = arith.constant 1.000000e+00 : f32
    %238 = vector.broadcast %cst_66 : f32 to vector<8x128xf32>
    %239 = arith.addf %238, %237 : vector<8x128xf32>
    %240 = arith.divf %238, %239 : vector<8x128xf32>
    %241 = vector.extract_strided_slice %229 {offsets = [0, 128], sizes = [8, 128], strides = [1, 1]} : vector<8x384xf32> to vector<8x128xf32>
    %242 = vector.extract_strided_slice %232 {offsets = [0, 128], sizes = [8, 128], strides = [1, 1]} : vector<8x384xf32> to vector<8x128xf32>
    %243 = arith.addf %241, %242 : vector<8x128xf32>
    %244 = arith.negf %243 : vector<8x128xf32>
    %245 = math.exp %244 : vector<8x128xf32>
    %cst_67 = arith.constant 1.000000e+00 : f32
    %246 = vector.broadcast %cst_67 : f32 to vector<8x128xf32>
    %247 = arith.addf %246, %245 : vector<8x128xf32>
    %248 = arith.divf %246, %247 : vector<8x128xf32>
    %249 = vector.extract_strided_slice %229 {offsets = [0, 256], sizes = [8, 128], strides = [1, 1]} : vector<8x384xf32> to vector<8x128xf32>
    %250 = vector.extract_strided_slice %232 {offsets = [0, 256], sizes = [8, 128], strides = [1, 1]} : vector<8x384xf32> to vector<8x128xf32>
    %251 = arith.mulf %240, %250 : vector<8x128xf32>
    %252 = arith.addf %249, %251 : vector<8x128xf32>
    %253 = math.tanh %252 : vector<8x128xf32>
    %cst_68 = arith.constant 1.000000e+00 : f32
    %254 = vector.broadcast %cst_68 : f32 to vector<8x128xf32>
    %255 = arith.subf %254, %248 : vector<8x128xf32>
    %256 = arith.mulf %255, %253 : vector<8x128xf32>
    %257 = arith.mulf %248, %160 : vector<8x128xf32>
    %258 = arith.addf %256, %257 : vector<8x128xf32>
    %259 = arith.truncf %258 : vector<8x128xf32> to vector<8x128xbf16>
    %cst_69 = arith.constant dense<0.000000e+00> : vector<8x384xf32>
    %260 = tpu.matmul %259, %10, %cst_69 {dimension_numbers = #tpu.dot_dimension_numbers<[1], [0], [0], [1], [0, 0, 1, 1], [], []>} : vector<8x128xbf16>, vector<128x384xbf16>, vector<8x384xf32> -> vector<8x384xf32>
    %261 = arith.addf %260, %23 : vector<8x384xf32>
    %262 = arith.truncf %192 : vector<8x128xf32> to vector<8x128xbf16>
    %cst_70 = arith.constant dense<0.000000e+00> : vector<8x384xf32>
    %263 = tpu.matmul %262, %8, %cst_70 {dimension_numbers = #tpu.dot_dimension_numbers<[1], [0], [0], [1], [0, 0, 1, 1], [], []>} : vector<8x128xbf16>, vector<128x384xbf16>, vector<8x384xf32> -> vector<8x384xf32>
    %264 = arith.addf %263, %17 : vector<8x384xf32>
    %265 = vector.extract_strided_slice %261 {offsets = [0, 0], sizes = [8, 128], strides = [1, 1]} : vector<8x384xf32> to vector<8x128xf32>
    %266 = vector.extract_strided_slice %264 {offsets = [0, 0], sizes = [8, 128], strides = [1, 1]} : vector<8x384xf32> to vector<8x128xf32>
    %267 = arith.addf %265, %266 : vector<8x128xf32>
    %268 = arith.negf %267 : vector<8x128xf32>
    %269 = math.exp %268 : vector<8x128xf32>
    %cst_71 = arith.constant 1.000000e+00 : f32
    %270 = vector.broadcast %cst_71 : f32 to vector<8x128xf32>
    %271 = arith.addf %270, %269 : vector<8x128xf32>
    %272 = arith.divf %270, %271 : vector<8x128xf32>
    %273 = vector.extract_strided_slice %261 {offsets = [0, 128], sizes = [8, 128], strides = [1, 1]} : vector<8x384xf32> to vector<8x128xf32>
    %274 = vector.extract_strided_slice %264 {offsets = [0, 128], sizes = [8, 128], strides = [1, 1]} : vector<8x384xf32> to vector<8x128xf32>
    %275 = arith.addf %273, %274 : vector<8x128xf32>
    %276 = arith.negf %275 : vector<8x128xf32>
    %277 = math.exp %276 : vector<8x128xf32>
    %cst_72 = arith.constant 1.000000e+00 : f32
    %278 = vector.broadcast %cst_72 : f32 to vector<8x128xf32>
    %279 = arith.addf %278, %277 : vector<8x128xf32>
    %280 = arith.divf %278, %279 : vector<8x128xf32>
    %281 = vector.extract_strided_slice %261 {offsets = [0, 256], sizes = [8, 128], strides = [1, 1]} : vector<8x384xf32> to vector<8x128xf32>
    %282 = vector.extract_strided_slice %264 {offsets = [0, 256], sizes = [8, 128], strides = [1, 1]} : vector<8x384xf32> to vector<8x128xf32>
    %283 = arith.mulf %272, %282 : vector<8x128xf32>
    %284 = arith.addf %281, %283 : vector<8x128xf32>
    %285 = math.tanh %284 : vector<8x128xf32>
    %cst_73 = arith.constant 1.000000e+00 : f32
    %286 = vector.broadcast %cst_73 : f32 to vector<8x128xf32>
    %287 = arith.subf %286, %280 : vector<8x128xf32>
    %288 = arith.mulf %287, %285 : vector<8x128xf32>
    %289 = arith.mulf %280, %192 : vector<8x128xf32>
    %290 = arith.addf %288, %289 : vector<8x128xf32>
    %291 = arith.truncf %290 : vector<8x128xf32> to vector<8x128xbf16>
    %cst_74 = arith.constant dense<0.000000e+00> : vector<8x384xf32>
    %292 = tpu.matmul %291, %11, %cst_74 {dimension_numbers = #tpu.dot_dimension_numbers<[1], [0], [0], [1], [0, 0, 1, 1], [], []>} : vector<8x128xbf16>, vector<128x384xbf16>, vector<8x384xf32> -> vector<8x384xf32>
    %293 = arith.addf %292, %26 : vector<8x384xf32>
    %294 = arith.truncf %224 : vector<8x128xf32> to vector<8x128xbf16>
    %cst_75 = arith.constant dense<0.000000e+00> : vector<8x384xf32>
    %295 = tpu.matmul %294, %9, %cst_75 {dimension_numbers = #tpu.dot_dimension_numbers<[1], [0], [0], [1], [0, 0, 1, 1], [], []>} : vector<8x128xbf16>, vector<128x384xbf16>, vector<8x384xf32> -> vector<8x384xf32>
    %296 = arith.addf %295, %20 : vector<8x384xf32>
    %297 = vector.extract_strided_slice %293 {offsets = [0, 0], sizes = [8, 128], strides = [1, 1]} : vector<8x384xf32> to vector<8x128xf32>
    %298 = vector.extract_strided_slice %296 {offsets = [0, 0], sizes = [8, 128], strides = [1, 1]} : vector<8x384xf32> to vector<8x128xf32>
    %299 = arith.addf %297, %298 : vector<8x128xf32>
    %300 = arith.negf %299 : vector<8x128xf32>
    %301 = math.exp %300 : vector<8x128xf32>
    %cst_76 = arith.constant 1.000000e+00 : f32
    %302 = vector.broadcast %cst_76 : f32 to vector<8x128xf32>
    %303 = arith.addf %302, %301 : vector<8x128xf32>
    %304 = arith.divf %302, %303 : vector<8x128xf32>
    %305 = vector.extract_strided_slice %293 {offsets = [0, 128], sizes = [8, 128], strides = [1, 1]} : vector<8x384xf32> to vector<8x128xf32>
    %306 = vector.extract_strided_slice %296 {offsets = [0, 128], sizes = [8, 128], strides = [1, 1]} : vector<8x384xf32> to vector<8x128xf32>
    %307 = arith.addf %305, %306 : vector<8x128xf32>
    %308 = arith.negf %307 : vector<8x128xf32>
    %309 = math.exp %308 : vector<8x128xf32>
    %cst_77 = arith.constant 1.000000e+00 : f32
    %310 = vector.broadcast %cst_77 : f32 to vector<8x128xf32>
    %311 = arith.addf %310, %309 : vector<8x128xf32>
    %312 = arith.divf %310, %311 : vector<8x128xf32>
    %313 = vector.extract_strided_slice %293 {offsets = [0, 256], sizes = [8, 128], strides = [1, 1]} : vector<8x384xf32> to vector<8x128xf32>
    %314 = vector.extract_strided_slice %296 {offsets = [0, 256], sizes = [8, 128], strides = [1, 1]} : vector<8x384xf32> to vector<8x128xf32>
    %315 = arith.mulf %304, %314 : vector<8x128xf32>
    %316 = arith.addf %313, %315 : vector<8x128xf32>
    %317 = math.tanh %316 : vector<8x128xf32>
    %cst_78 = arith.constant 1.000000e+00 : f32
    %318 = vector.broadcast %cst_78 : f32 to vector<8x128xf32>
    %319 = arith.subf %318, %312 : vector<8x128xf32>
    %320 = arith.mulf %319, %317 : vector<8x128xf32>
    %321 = arith.mulf %312, %224 : vector<8x128xf32>
    %322 = arith.addf %320, %321 : vector<8x128xf32>
    %323 = arith.truncf %322 : vector<8x128xf32> to vector<8x128xbf16>
    %c2 = arith.constant 2 : index
    %c0_79 = arith.constant 0 : index
    %c0_80 = arith.constant 0 : index
    %324 = vector.load %arg17[%c2, %c0_79, %c0_80] : memref<7x8x128xbf16, #tpu.memory_space<vmem>>, vector<1x8x128xbf16>
    %325 = vector.shape_cast %324 : vector<1x8x128xbf16> to vector<8x128xbf16>
    %326 = vector.shape_cast %323 : vector<8x128xbf16> to vector<1x8x128xbf16>
    tpu.vector_store %arg17[%c2, %c0_79, %c0_80], %326 {strides = array<i32>} : memref<7x8x128xbf16, #tpu.memory_space<vmem>>, vector<1x8x128xbf16>,
    %327 = vector.extract_strided_slice %32 {offsets = [24, 0], sizes = [8, 384], strides = [1, 1]} : vector<56x384xf32> to vector<8x384xf32>
    %328 = arith.truncf %258 : vector<8x128xf32> to vector<8x128xbf16>
    %cst_81 = arith.constant dense<0.000000e+00> : vector<8x384xf32>
    %329 = tpu.matmul %328, %7, %cst_81 {dimension_numbers = #tpu.dot_dimension_numbers<[1], [0], [0], [1], [0, 0, 1, 1], [], []>} : vector<8x128xbf16>, vector<128x384xbf16>, vector<8x384xf32> -> vector<8x384xf32>
    %330 = arith.addf %329, %14 : vector<8x384xf32>
    %331 = vector.extract_strided_slice %327 {offsets = [0, 0], sizes = [8, 128], strides = [1, 1]} : vector<8x384xf32> to vector<8x128xf32>
    %332 = vector.extract_strided_slice %330 {offsets = [0, 0], sizes = [8, 128], strides = [1, 1]} : vector<8x384xf32> to vector<8x128xf32>
    %333 = arith.addf %331, %332 : vector<8x128xf32>
    %334 = arith.negf %333 : vector<8x128xf32>
    %335 = math.exp %334 : vector<8x128xf32>
    %cst_82 = arith.constant 1.000000e+00 : f32
    %336 = vector.broadcast %cst_82 : f32 to vector<8x128xf32>
    %337 = arith.addf %336, %335 : vector<8x128xf32>
    %338 = arith.divf %336, %337 : vector<8x128xf32>
    %339 = vector.extract_strided_slice %327 {offsets = [0, 128], sizes = [8, 128], strides = [1, 1]} : vector<8x384xf32> to vector<8x128xf32>
    %340 = vector.extract_strided_slice %330 {offsets = [0, 128], sizes = [8, 128], strides = [1, 1]} : vector<8x384xf32> to vector<8x128xf32>
    %341 = arith.addf %339, %340 : vector<8x128xf32>
    %342 = arith.negf %341 : vector<8x128xf32>
    %343 = math.exp %342 : vector<8x128xf32>
    %cst_83 = arith.constant 1.000000e+00 : f32
    %344 = vector.broadcast %cst_83 : f32 to vector<8x128xf32>
    %345 = arith.addf %344, %343 : vector<8x128xf32>
    %346 = arith.divf %344, %345 : vector<8x128xf32>
    %347 = vector.extract_strided_slice %327 {offsets = [0, 256], sizes = [8, 128], strides = [1, 1]} : vector<8x384xf32> to vector<8x128xf32>
    %348 = vector.extract_strided_slice %330 {offsets = [0, 256], sizes = [8, 128], strides = [1, 1]} : vector<8x384xf32> to vector<8x128xf32>
    %349 = arith.mulf %338, %348 : vector<8x128xf32>
    %350 = arith.addf %347, %349 : vector<8x128xf32>
    %351 = math.tanh %350 : vector<8x128xf32>
    %cst_84 = arith.constant 1.000000e+00 : f32
    %352 = vector.broadcast %cst_84 : f32 to vector<8x128xf32>
    %353 = arith.subf %352, %346 : vector<8x128xf32>
    %354 = arith.mulf %353, %351 : vector<8x128xf32>
    %355 = arith.mulf %346, %258 : vector<8x128xf32>
    %356 = arith.addf %354, %355 : vector<8x128xf32>
    %357 = arith.truncf %356 : vector<8x128xf32> to vector<8x128xbf16>
    %cst_85 = arith.constant dense<0.000000e+00> : vector<8x384xf32>
    %358 = tpu.matmul %357, %10, %cst_85 {dimension_numbers = #tpu.dot_dimension_numbers<[1], [0], [0], [1], [0, 0, 1, 1], [], []>} : vector<8x128xbf16>, vector<128x384xbf16>, vector<8x384xf32> -> vector<8x384xf32>
    %359 = arith.addf %358, %23 : vector<8x384xf32>
    %360 = arith.truncf %290 : vector<8x128xf32> to vector<8x128xbf16>
    %cst_86 = arith.constant dense<0.000000e+00> : vector<8x384xf32>
    %361 = tpu.matmul %360, %8, %cst_86 {dimension_numbers = #tpu.dot_dimension_numbers<[1], [0], [0], [1], [0, 0, 1, 1], [], []>} : vector<8x128xbf16>, vector<128x384xbf16>, vector<8x384xf32> -> vector<8x384xf32>
    %362 = arith.addf %361, %17 : vector<8x384xf32>
    %363 = vector.extract_strided_slice %359 {offsets = [0, 0], sizes = [8, 128], strides = [1, 1]} : vector<8x384xf32> to vector<8x128xf32>
    %364 = vector.extract_strided_slice %362 {offsets = [0, 0], sizes = [8, 128], strides = [1, 1]} : vector<8x384xf32> to vector<8x128xf32>
    %365 = arith.addf %363, %364 : vector<8x128xf32>
    %366 = arith.negf %365 : vector<8x128xf32>
    %367 = math.exp %366 : vector<8x128xf32>
    %cst_87 = arith.constant 1.000000e+00 : f32
    %368 = vector.broadcast %cst_87 : f32 to vector<8x128xf32>
    %369 = arith.addf %368, %367 : vector<8x128xf32>
    %370 = arith.divf %368, %369 : vector<8x128xf32>
    %371 = vector.extract_strided_slice %359 {offsets = [0, 128], sizes = [8, 128], strides = [1, 1]} : vector<8x384xf32> to vector<8x128xf32>
    %372 = vector.extract_strided_slice %362 {offsets = [0, 128], sizes = [8, 128], strides = [1, 1]} : vector<8x384xf32> to vector<8x128xf32>
    %373 = arith.addf %371, %372 : vector<8x128xf32>
    %374 = arith.negf %373 : vector<8x128xf32>
    %375 = math.exp %374 : vector<8x128xf32>
    %cst_88 = arith.constant 1.000000e+00 : f32
    %376 = vector.broadcast %cst_88 : f32 to vector<8x128xf32>
    %377 = arith.addf %376, %375 : vector<8x128xf32>
    %378 = arith.divf %376, %377 : vector<8x128xf32>
    %379 = vector.extract_strided_slice %359 {offsets = [0, 256], sizes = [8, 128], strides = [1, 1]} : vector<8x384xf32> to vector<8x128xf32>
    %380 = vector.extract_strided_slice %362 {offsets = [0, 256], sizes = [8, 128], strides = [1, 1]} : vector<8x384xf32> to vector<8x128xf32>
    %381 = arith.mulf %370, %380 : vector<8x128xf32>
    %382 = arith.addf %379, %381 : vector<8x128xf32>
    %383 = math.tanh %382 : vector<8x128xf32>
    %cst_89 = arith.constant 1.000000e+00 : f32
    %384 = vector.broadcast %cst_89 : f32 to vector<8x128xf32>
    %385 = arith.subf %384, %378 : vector<8x128xf32>
    %386 = arith.mulf %385, %383 : vector<8x128xf32>
    %387 = arith.mulf %378, %290 : vector<8x128xf32>
    %388 = arith.addf %386, %387 : vector<8x128xf32>
    %389 = arith.truncf %388 : vector<8x128xf32> to vector<8x128xbf16>
    %cst_90 = arith.constant dense<0.000000e+00> : vector<8x384xf32>
    %390 = tpu.matmul %389, %11, %cst_90 {dimension_numbers = #tpu.dot_dimension_numbers<[1], [0], [0], [1], [0, 0, 1, 1], [], []>} : vector<8x128xbf16>, vector<128x384xbf16>, vector<8x384xf32> -> vector<8x384xf32>
    %391 = arith.addf %390, %26 : vector<8x384xf32>
    %392 = arith.truncf %322 : vector<8x128xf32> to vector<8x128xbf16>
    %cst_91 = arith.constant dense<0.000000e+00> : vector<8x384xf32>
    %393 = tpu.matmul %392, %9, %cst_91 {dimension_numbers = #tpu.dot_dimension_numbers<[1], [0], [0], [1], [0, 0, 1, 1], [], []>} : vector<8x128xbf16>, vector<128x384xbf16>, vector<8x384xf32> -> vector<8x384xf32>
    %394 = arith.addf %393, %20 : vector<8x384xf32>
    %395 = vector.extract_strided_slice %391 {offsets = [0, 0], sizes = [8, 128], strides = [1, 1]} : vector<8x384xf32> to vector<8x128xf32>
    %396 = vector.extract_strided_slice %394 {offsets = [0, 0], sizes = [8, 128], strides = [1, 1]} : vector<8x384xf32> to vector<8x128xf32>
    %397 = arith.addf %395, %396 : vector<8x128xf32>
    %398 = arith.negf %397 : vector<8x128xf32>
    %399 = math.exp %398 : vector<8x128xf32>
    %cst_92 = arith.constant 1.000000e+00 : f32
    %400 = vector.broadcast %cst_92 : f32 to vector<8x128xf32>
    %401 = arith.addf %400, %399 : vector<8x128xf32>
    %402 = arith.divf %400, %401 : vector<8x128xf32>
    %403 = vector.extract_strided_slice %391 {offsets = [0, 128], sizes = [8, 128], strides = [1, 1]} : vector<8x384xf32> to vector<8x128xf32>
    %404 = vector.extract_strided_slice %394 {offsets = [0, 128], sizes = [8, 128], strides = [1, 1]} : vector<8x384xf32> to vector<8x128xf32>
    %405 = arith.addf %403, %404 : vector<8x128xf32>
    %406 = arith.negf %405 : vector<8x128xf32>
    %407 = math.exp %406 : vector<8x128xf32>
    %cst_93 = arith.constant 1.000000e+00 : f32
    %408 = vector.broadcast %cst_93 : f32 to vector<8x128xf32>
    %409 = arith.addf %408, %407 : vector<8x128xf32>
    %410 = arith.divf %408, %409 : vector<8x128xf32>
    %411 = vector.extract_strided_slice %391 {offsets = [0, 256], sizes = [8, 128], strides = [1, 1]} : vector<8x384xf32> to vector<8x128xf32>
    %412 = vector.extract_strided_slice %394 {offsets = [0, 256], sizes = [8, 128], strides = [1, 1]} : vector<8x384xf32> to vector<8x128xf32>
    %413 = arith.mulf %402, %412 : vector<8x128xf32>
    %414 = arith.addf %411, %413 : vector<8x128xf32>
    %415 = math.tanh %414 : vector<8x128xf32>
    %cst_94 = arith.constant 1.000000e+00 : f32
    %416 = vector.broadcast %cst_94 : f32 to vector<8x128xf32>
    %417 = arith.subf %416, %410 : vector<8x128xf32>
    %418 = arith.mulf %417, %415 : vector<8x128xf32>
    %419 = arith.mulf %410, %322 : vector<8x128xf32>
    %420 = arith.addf %418, %419 : vector<8x128xf32>
    %421 = arith.truncf %420 : vector<8x128xf32> to vector<8x128xbf16>
    %c3 = arith.constant 3 : index
    %c0_95 = arith.constant 0 : index
    %c0_96 = arith.constant 0 : index
    %422 = vector.load %arg17[%c3, %c0_95, %c0_96] : memref<7x8x128xbf16, #tpu.memory_space<vmem>>, vector<1x8x128xbf16>
    %423 = vector.shape_cast %422 : vector<1x8x128xbf16> to vector<8x128xbf16>
    %424 = vector.shape_cast %421 : vector<8x128xbf16> to vector<1x8x128xbf16>
    tpu.vector_store %arg17[%c3, %c0_95, %c0_96], %424 {strides = array<i32>} : memref<7x8x128xbf16, #tpu.memory_space<vmem>>, vector<1x8x128xbf16>,
    %425 = vector.extract_strided_slice %32 {offsets = [32, 0], sizes = [8, 384], strides = [1, 1]} : vector<56x384xf32> to vector<8x384xf32>
    %426 = arith.truncf %356 : vector<8x128xf32> to vector<8x128xbf16>
    %cst_97 = arith.constant dense<0.000000e+00> : vector<8x384xf32>
    %427 = tpu.matmul %426, %7, %cst_97 {dimension_numbers = #tpu.dot_dimension_numbers<[1], [0], [0], [1], [0, 0, 1, 1], [], []>} : vector<8x128xbf16>, vector<128x384xbf16>, vector<8x384xf32> -> vector<8x384xf32>
    %428 = arith.addf %427, %14 : vector<8x384xf32>
    %429 = vector.extract_strided_slice %425 {offsets = [0, 0], sizes = [8, 128], strides = [1, 1]} : vector<8x384xf32> to vector<8x128xf32>
    %430 = vector.extract_strided_slice %428 {offsets = [0, 0], sizes = [8, 128], strides = [1, 1]} : vector<8x384xf32> to vector<8x128xf32>
    %431 = arith.addf %429, %430 : vector<8x128xf32>
    %432 = arith.negf %431 : vector<8x128xf32>
    %433 = math.exp %432 : vector<8x128xf32>
    %cst_98 = arith.constant 1.000000e+00 : f32
    %434 = vector.broadcast %cst_98 : f32 to vector<8x128xf32>
    %435 = arith.addf %434, %433 : vector<8x128xf32>
    %436 = arith.divf %434, %435 : vector<8x128xf32>
    %437 = vector.extract_strided_slice %425 {offsets = [0, 128], sizes = [8, 128], strides = [1, 1]} : vector<8x384xf32> to vector<8x128xf32>
    %438 = vector.extract_strided_slice %428 {offsets = [0, 128], sizes = [8, 128], strides = [1, 1]} : vector<8x384xf32> to vector<8x128xf32>
    %439 = arith.addf %437, %438 : vector<8x128xf32>
    %440 = arith.negf %439 : vector<8x128xf32>
    %441 = math.exp %440 : vector<8x128xf32>
    %cst_99 = arith.constant 1.000000e+00 : f32
    %442 = vector.broadcast %cst_99 : f32 to vector<8x128xf32>
    %443 = arith.addf %442, %441 : vector<8x128xf32>
    %444 = arith.divf %442, %443 : vector<8x128xf32>
    %445 = vector.extract_strided_slice %425 {offsets = [0, 256], sizes = [8, 128], strides = [1, 1]} : vector<8x384xf32> to vector<8x128xf32>
    %446 = vector.extract_strided_slice %428 {offsets = [0, 256], sizes = [8, 128], strides = [1, 1]} : vector<8x384xf32> to vector<8x128xf32>
    %447 = arith.mulf %436, %446 : vector<8x128xf32>
    %448 = arith.addf %445, %447 : vector<8x128xf32>
    %449 = math.tanh %448 : vector<8x128xf32>
    %cst_100 = arith.constant 1.000000e+00 : f32
    %450 = vector.broadcast %cst_100 : f32 to vector<8x128xf32>
    %451 = arith.subf %450, %444 : vector<8x128xf32>
    %452 = arith.mulf %451, %449 : vector<8x128xf32>
    %453 = arith.mulf %444, %356 : vector<8x128xf32>
    %454 = arith.addf %452, %453 : vector<8x128xf32>
    %455 = arith.truncf %454 : vector<8x128xf32> to vector<8x128xbf16>
    %cst_101 = arith.constant dense<0.000000e+00> : vector<8x384xf32>
    %456 = tpu.matmul %455, %10, %cst_101 {dimension_numbers = #tpu.dot_dimension_numbers<[1], [0], [0], [1], [0, 0, 1, 1], [], []>} : vector<8x128xbf16>, vector<128x384xbf16>, vector<8x384xf32> -> vector<8x384xf32>
    %457 = arith.addf %456, %23 : vector<8x384xf32>
    %458 = arith.truncf %388 : vector<8x128xf32> to vector<8x128xbf16>
    %cst_102 = arith.constant dense<0.000000e+00> : vector<8x384xf32>
    %459 = tpu.matmul %458, %8, %cst_102 {dimension_numbers = #tpu.dot_dimension_numbers<[1], [0], [0], [1], [0, 0, 1, 1], [], []>} : vector<8x128xbf16>, vector<128x384xbf16>, vector<8x384xf32> -> vector<8x384xf32>
    %460 = arith.addf %459, %17 : vector<8x384xf32>
    %461 = vector.extract_strided_slice %457 {offsets = [0, 0], sizes = [8, 128], strides = [1, 1]} : vector<8x384xf32> to vector<8x128xf32>
    %462 = vector.extract_strided_slice %460 {offsets = [0, 0], sizes = [8, 128], strides = [1, 1]} : vector<8x384xf32> to vector<8x128xf32>
    %463 = arith.addf %461, %462 : vector<8x128xf32>
    %464 = arith.negf %463 : vector<8x128xf32>
    %465 = math.exp %464 : vector<8x128xf32>
    %cst_103 = arith.constant 1.000000e+00 : f32
    %466 = vector.broadcast %cst_103 : f32 to vector<8x128xf32>
    %467 = arith.addf %466, %465 : vector<8x128xf32>
    %468 = arith.divf %466, %467 : vector<8x128xf32>
    %469 = vector.extract_strided_slice %457 {offsets = [0, 128], sizes = [8, 128], strides = [1, 1]} : vector<8x384xf32> to vector<8x128xf32>
    %470 = vector.extract_strided_slice %460 {offsets = [0, 128], sizes = [8, 128], strides = [1, 1]} : vector<8x384xf32> to vector<8x128xf32>
    %471 = arith.addf %469, %470 : vector<8x128xf32>
    %472 = arith.negf %471 : vector<8x128xf32>
    %473 = math.exp %472 : vector<8x128xf32>
    %cst_104 = arith.constant 1.000000e+00 : f32
    %474 = vector.broadcast %cst_104 : f32 to vector<8x128xf32>
    %475 = arith.addf %474, %473 : vector<8x128xf32>
    %476 = arith.divf %474, %475 : vector<8x128xf32>
    %477 = vector.extract_strided_slice %457 {offsets = [0, 256], sizes = [8, 128], strides = [1, 1]} : vector<8x384xf32> to vector<8x128xf32>
    %478 = vector.extract_strided_slice %460 {offsets = [0, 256], sizes = [8, 128], strides = [1, 1]} : vector<8x384xf32> to vector<8x128xf32>
    %479 = arith.mulf %468, %478 : vector<8x128xf32>
    %480 = arith.addf %477, %479 : vector<8x128xf32>
    %481 = math.tanh %480 : vector<8x128xf32>
    %cst_105 = arith.constant 1.000000e+00 : f32
    %482 = vector.broadcast %cst_105 : f32 to vector<8x128xf32>
    %483 = arith.subf %482, %476 : vector<8x128xf32>
    %484 = arith.mulf %483, %481 : vector<8x128xf32>
    %485 = arith.mulf %476, %388 : vector<8x128xf32>
    %486 = arith.addf %484, %485 : vector<8x128xf32>
    %487 = arith.truncf %486 : vector<8x128xf32> to vector<8x128xbf16>
    %cst_106 = arith.constant dense<0.000000e+00> : vector<8x384xf32>
    %488 = tpu.matmul %487, %11, %cst_106 {dimension_numbers = #tpu.dot_dimension_numbers<[1], [0], [0], [1], [0, 0, 1, 1], [], []>} : vector<8x128xbf16>, vector<128x384xbf16>, vector<8x384xf32> -> vector<8x384xf32>
    %489 = arith.addf %488, %26 : vector<8x384xf32>
    %490 = arith.truncf %420 : vector<8x128xf32> to vector<8x128xbf16>
    %cst_107 = arith.constant dense<0.000000e+00> : vector<8x384xf32>
    %491 = tpu.matmul %490, %9, %cst_107 {dimension_numbers = #tpu.dot_dimension_numbers<[1], [0], [0], [1], [0, 0, 1, 1], [], []>} : vector<8x128xbf16>, vector<128x384xbf16>, vector<8x384xf32> -> vector<8x384xf32>
    %492 = arith.addf %491, %20 : vector<8x384xf32>
    %493 = vector.extract_strided_slice %489 {offsets = [0, 0], sizes = [8, 128], strides = [1, 1]} : vector<8x384xf32> to vector<8x128xf32>
    %494 = vector.extract_strided_slice %492 {offsets = [0, 0], sizes = [8, 128], strides = [1, 1]} : vector<8x384xf32> to vector<8x128xf32>
    %495 = arith.addf %493, %494 : vector<8x128xf32>
    %496 = arith.negf %495 : vector<8x128xf32>
    %497 = math.exp %496 : vector<8x128xf32>
    %cst_108 = arith.constant 1.000000e+00 : f32
    %498 = vector.broadcast %cst_108 : f32 to vector<8x128xf32>
    %499 = arith.addf %498, %497 : vector<8x128xf32>
    %500 = arith.divf %498, %499 : vector<8x128xf32>
    %501 = vector.extract_strided_slice %489 {offsets = [0, 128], sizes = [8, 128], strides = [1, 1]} : vector<8x384xf32> to vector<8x128xf32>
    %502 = vector.extract_strided_slice %492 {offsets = [0, 128], sizes = [8, 128], strides = [1, 1]} : vector<8x384xf32> to vector<8x128xf32>
    %503 = arith.addf %501, %502 : vector<8x128xf32>
    %504 = arith.negf %503 : vector<8x128xf32>
    %505 = math.exp %504 : vector<8x128xf32>
    %cst_109 = arith.constant 1.000000e+00 : f32
    %506 = vector.broadcast %cst_109 : f32 to vector<8x128xf32>
    %507 = arith.addf %506, %505 : vector<8x128xf32>
    %508 = arith.divf %506, %507 : vector<8x128xf32>
    %509 = vector.extract_strided_slice %489 {offsets = [0, 256], sizes = [8, 128], strides = [1, 1]} : vector<8x384xf32> to vector<8x128xf32>
    %510 = vector.extract_strided_slice %492 {offsets = [0, 256], sizes = [8, 128], strides = [1, 1]} : vector<8x384xf32> to vector<8x128xf32>
    %511 = arith.mulf %500, %510 : vector<8x128xf32>
    %512 = arith.addf %509, %511 : vector<8x128xf32>
    %513 = math.tanh %512 : vector<8x128xf32>
    %cst_110 = arith.constant 1.000000e+00 : f32
    %514 = vector.broadcast %cst_110 : f32 to vector<8x128xf32>
    %515 = arith.subf %514, %508 : vector<8x128xf32>
    %516 = arith.mulf %515, %513 : vector<8x128xf32>
    %517 = arith.mulf %508, %420 : vector<8x128xf32>
    %518 = arith.addf %516, %517 : vector<8x128xf32>
    %519 = arith.truncf %518 : vector<8x128xf32> to vector<8x128xbf16>
    %c4 = arith.constant 4 : index
    %c0_111 = arith.constant 0 : index
    %c0_112 = arith.constant 0 : index
    %520 = vector.load %arg17[%c4, %c0_111, %c0_112] : memref<7x8x128xbf16, #tpu.memory_space<vmem>>, vector<1x8x128xbf16>
    %521 = vector.shape_cast %520 : vector<1x8x128xbf16> to vector<8x128xbf16>
    %522 = vector.shape_cast %519 : vector<8x128xbf16> to vector<1x8x128xbf16>
    tpu.vector_store %arg17[%c4, %c0_111, %c0_112], %522 {strides = array<i32>} : memref<7x8x128xbf16, #tpu.memory_space<vmem>>, vector<1x8x128xbf16>,
    %523 = vector.extract_strided_slice %32 {offsets = [40, 0], sizes = [8, 384], strides = [1, 1]} : vector<56x384xf32> to vector<8x384xf32>
    %524 = arith.truncf %454 : vector<8x128xf32> to vector<8x128xbf16>
    %cst_113 = arith.constant dense<0.000000e+00> : vector<8x384xf32>
    %525 = tpu.matmul %524, %7, %cst_113 {dimension_numbers = #tpu.dot_dimension_numbers<[1], [0], [0], [1], [0, 0, 1, 1], [], []>} : vector<8x128xbf16>, vector<128x384xbf16>, vector<8x384xf32> -> vector<8x384xf32>
    %526 = arith.addf %525, %14 : vector<8x384xf32>
    %527 = vector.extract_strided_slice %523 {offsets = [0, 0], sizes = [8, 128], strides = [1, 1]} : vector<8x384xf32> to vector<8x128xf32>
    %528 = vector.extract_strided_slice %526 {offsets = [0, 0], sizes = [8, 128], strides = [1, 1]} : vector<8x384xf32> to vector<8x128xf32>
    %529 = arith.addf %527, %528 : vector<8x128xf32>
    %530 = arith.negf %529 : vector<8x128xf32>
    %531 = math.exp %530 : vector<8x128xf32>
    %cst_114 = arith.constant 1.000000e+00 : f32
    %532 = vector.broadcast %cst_114 : f32 to vector<8x128xf32>
    %533 = arith.addf %532, %531 : vector<8x128xf32>
    %534 = arith.divf %532, %533 : vector<8x128xf32>
    %535 = vector.extract_strided_slice %523 {offsets = [0, 128], sizes = [8, 128], strides = [1, 1]} : vector<8x384xf32> to vector<8x128xf32>
    %536 = vector.extract_strided_slice %526 {offsets = [0, 128], sizes = [8, 128], strides = [1, 1]} : vector<8x384xf32> to vector<8x128xf32>
    %537 = arith.addf %535, %536 : vector<8x128xf32>
    %538 = arith.negf %537 : vector<8x128xf32>
    %539 = math.exp %538 : vector<8x128xf32>
    %cst_115 = arith.constant 1.000000e+00 : f32
    %540 = vector.broadcast %cst_115 : f32 to vector<8x128xf32>
    %541 = arith.addf %540, %539 : vector<8x128xf32>
    %542 = arith.divf %540, %541 : vector<8x128xf32>
    %543 = vector.extract_strided_slice %523 {offsets = [0, 256], sizes = [8, 128], strides = [1, 1]} : vector<8x384xf32> to vector<8x128xf32>
    %544 = vector.extract_strided_slice %526 {offsets = [0, 256], sizes = [8, 128], strides = [1, 1]} : vector<8x384xf32> to vector<8x128xf32>
    %545 = arith.mulf %534, %544 : vector<8x128xf32>
    %546 = arith.addf %543, %545 : vector<8x128xf32>
    %547 = math.tanh %546 : vector<8x128xf32>
    %cst_116 = arith.constant 1.000000e+00 : f32
    %548 = vector.broadcast %cst_116 : f32 to vector<8x128xf32>
    %549 = arith.subf %548, %542 : vector<8x128xf32>
    %550 = arith.mulf %549, %547 : vector<8x128xf32>
    %551 = arith.mulf %542, %454 : vector<8x128xf32>
    %552 = arith.addf %550, %551 : vector<8x128xf32>
    %553 = arith.truncf %552 : vector<8x128xf32> to vector<8x128xbf16>
    %cst_117 = arith.constant dense<0.000000e+00> : vector<8x384xf32>
    %554 = tpu.matmul %553, %10, %cst_117 {dimension_numbers = #tpu.dot_dimension_numbers<[1], [0], [0], [1], [0, 0, 1, 1], [], []>} : vector<8x128xbf16>, vector<128x384xbf16>, vector<8x384xf32> -> vector<8x384xf32>
    %555 = arith.addf %554, %23 : vector<8x384xf32>
    %556 = arith.truncf %486 : vector<8x128xf32> to vector<8x128xbf16>
    %cst_118 = arith.constant dense<0.000000e+00> : vector<8x384xf32>
    %557 = tpu.matmul %556, %8, %cst_118 {dimension_numbers = #tpu.dot_dimension_numbers<[1], [0], [0], [1], [0, 0, 1, 1], [], []>} : vector<8x128xbf16>, vector<128x384xbf16>, vector<8x384xf32> -> vector<8x384xf32>
    %558 = arith.addf %557, %17 : vector<8x384xf32>
    %559 = vector.extract_strided_slice %555 {offsets = [0, 0], sizes = [8, 128], strides = [1, 1]} : vector<8x384xf32> to vector<8x128xf32>
    %560 = vector.extract_strided_slice %558 {offsets = [0, 0], sizes = [8, 128], strides = [1, 1]} : vector<8x384xf32> to vector<8x128xf32>
    %561 = arith.addf %559, %560 : vector<8x128xf32>
    %562 = arith.negf %561 : vector<8x128xf32>
    %563 = math.exp %562 : vector<8x128xf32>
    %cst_119 = arith.constant 1.000000e+00 : f32
    %564 = vector.broadcast %cst_119 : f32 to vector<8x128xf32>
    %565 = arith.addf %564, %563 : vector<8x128xf32>
    %566 = arith.divf %564, %565 : vector<8x128xf32>
    %567 = vector.extract_strided_slice %555 {offsets = [0, 128], sizes = [8, 128], strides = [1, 1]} : vector<8x384xf32> to vector<8x128xf32>
    %568 = vector.extract_strided_slice %558 {offsets = [0, 128], sizes = [8, 128], strides = [1, 1]} : vector<8x384xf32> to vector<8x128xf32>
    %569 = arith.addf %567, %568 : vector<8x128xf32>
    %570 = arith.negf %569 : vector<8x128xf32>
    %571 = math.exp %570 : vector<8x128xf32>
    %cst_120 = arith.constant 1.000000e+00 : f32
    %572 = vector.broadcast %cst_120 : f32 to vector<8x128xf32>
    %573 = arith.addf %572, %571 : vector<8x128xf32>
    %574 = arith.divf %572, %573 : vector<8x128xf32>
    %575 = vector.extract_strided_slice %555 {offsets = [0, 256], sizes = [8, 128], strides = [1, 1]} : vector<8x384xf32> to vector<8x128xf32>
    %576 = vector.extract_strided_slice %558 {offsets = [0, 256], sizes = [8, 128], strides = [1, 1]} : vector<8x384xf32> to vector<8x128xf32>
    %577 = arith.mulf %566, %576 : vector<8x128xf32>
    %578 = arith.addf %575, %577 : vector<8x128xf32>
    %579 = math.tanh %578 : vector<8x128xf32>
    %cst_121 = arith.constant 1.000000e+00 : f32
    %580 = vector.broadcast %cst_121 : f32 to vector<8x128xf32>
    %581 = arith.subf %580, %574 : vector<8x128xf32>
    %582 = arith.mulf %581, %579 : vector<8x128xf32>
    %583 = arith.mulf %574, %486 : vector<8x128xf32>
    %584 = arith.addf %582, %583 : vector<8x128xf32>
    %585 = arith.truncf %584 : vector<8x128xf32> to vector<8x128xbf16>
    %cst_122 = arith.constant dense<0.000000e+00> : vector<8x384xf32>
    %586 = tpu.matmul %585, %11, %cst_122 {dimension_numbers = #tpu.dot_dimension_numbers<[1], [0], [0], [1], [0, 0, 1, 1], [], []>} : vector<8x128xbf16>, vector<128x384xbf16>, vector<8x384xf32> -> vector<8x384xf32>
    %587 = arith.addf %586, %26 : vector<8x384xf32>
    %588 = arith.truncf %518 : vector<8x128xf32> to vector<8x128xbf16>
    %cst_123 = arith.constant dense<0.000000e+00> : vector<8x384xf32>
    %589 = tpu.matmul %588, %9, %cst_123 {dimension_numbers = #tpu.dot_dimension_numbers<[1], [0], [0], [1], [0, 0, 1, 1], [], []>} : vector<8x128xbf16>, vector<128x384xbf16>, vector<8x384xf32> -> vector<8x384xf32>
    %590 = arith.addf %589, %20 : vector<8x384xf32>
    %591 = vector.extract_strided_slice %587 {offsets = [0, 0], sizes = [8, 128], strides = [1, 1]} : vector<8x384xf32> to vector<8x128xf32>
    %592 = vector.extract_strided_slice %590 {offsets = [0, 0], sizes = [8, 128], strides = [1, 1]} : vector<8x384xf32> to vector<8x128xf32>
    %593 = arith.addf %591, %592 : vector<8x128xf32>
    %594 = arith.negf %593 : vector<8x128xf32>
    %595 = math.exp %594 : vector<8x128xf32>
    %cst_124 = arith.constant 1.000000e+00 : f32
    %596 = vector.broadcast %cst_124 : f32 to vector<8x128xf32>
    %597 = arith.addf %596, %595 : vector<8x128xf32>
    %598 = arith.divf %596, %597 : vector<8x128xf32>
    %599 = vector.extract_strided_slice %587 {offsets = [0, 128], sizes = [8, 128], strides = [1, 1]} : vector<8x384xf32> to vector<8x128xf32>
    %600 = vector.extract_strided_slice %590 {offsets = [0, 128], sizes = [8, 128], strides = [1, 1]} : vector<8x384xf32> to vector<8x128xf32>
    %601 = arith.addf %599, %600 : vector<8x128xf32>
    %602 = arith.negf %601 : vector<8x128xf32>
    %603 = math.exp %602 : vector<8x128xf32>
    %cst_125 = arith.constant 1.000000e+00 : f32
    %604 = vector.broadcast %cst_125 : f32 to vector<8x128xf32>
    %605 = arith.addf %604, %603 : vector<8x128xf32>
    %606 = arith.divf %604, %605 : vector<8x128xf32>
    %607 = vector.extract_strided_slice %587 {offsets = [0, 256], sizes = [8, 128], strides = [1, 1]} : vector<8x384xf32> to vector<8x128xf32>
    %608 = vector.extract_strided_slice %590 {offsets = [0, 256], sizes = [8, 128], strides = [1, 1]} : vector<8x384xf32> to vector<8x128xf32>
    %609 = arith.mulf %598, %608 : vector<8x128xf32>
    %610 = arith.addf %607, %609 : vector<8x128xf32>
    %611 = math.tanh %610 : vector<8x128xf32>
    %cst_126 = arith.constant 1.000000e+00 : f32
    %612 = vector.broadcast %cst_126 : f32 to vector<8x128xf32>
    %613 = arith.subf %612, %606 : vector<8x128xf32>
    %614 = arith.mulf %613, %611 : vector<8x128xf32>
    %615 = arith.mulf %606, %518 : vector<8x128xf32>
    %616 = arith.addf %614, %615 : vector<8x128xf32>
    %617 = arith.truncf %616 : vector<8x128xf32> to vector<8x128xbf16>
    %c5 = arith.constant 5 : index
    %c0_127 = arith.constant 0 : index
    %c0_128 = arith.constant 0 : index
    %618 = vector.load %arg17[%c5, %c0_127, %c0_128] : memref<7x8x128xbf16, #tpu.memory_space<vmem>>, vector<1x8x128xbf16>
    %619 = vector.shape_cast %618 : vector<1x8x128xbf16> to vector<8x128xbf16>
    %620 = vector.shape_cast %617 : vector<8x128xbf16> to vector<1x8x128xbf16>
    tpu.vector_store %arg17[%c5, %c0_127, %c0_128], %620 {strides = array<i32>} : memref<7x8x128xbf16, #tpu.memory_space<vmem>>, vector<1x8x128xbf16>,
    %621 = vector.extract_strided_slice %32 {offsets = [48, 0], sizes = [8, 384], strides = [1, 1]} : vector<56x384xf32> to vector<8x384xf32>
    %622 = arith.truncf %552 : vector<8x128xf32> to vector<8x128xbf16>
    %cst_129 = arith.constant dense<0.000000e+00> : vector<8x384xf32>
    %623 = tpu.matmul %622, %7, %cst_129 {dimension_numbers = #tpu.dot_dimension_numbers<[1], [0], [0], [1], [0, 0, 1, 1], [], []>} : vector<8x128xbf16>, vector<128x384xbf16>, vector<8x384xf32> -> vector<8x384xf32>
    %624 = arith.addf %623, %14 : vector<8x384xf32>
    %625 = vector.extract_strided_slice %621 {offsets = [0, 0], sizes = [8, 128], strides = [1, 1]} : vector<8x384xf32> to vector<8x128xf32>
    %626 = vector.extract_strided_slice %624 {offsets = [0, 0], sizes = [8, 128], strides = [1, 1]} : vector<8x384xf32> to vector<8x128xf32>
    %627 = arith.addf %625, %626 : vector<8x128xf32>
    %628 = arith.negf %627 : vector<8x128xf32>
    %629 = math.exp %628 : vector<8x128xf32>
    %cst_130 = arith.constant 1.000000e+00 : f32
    %630 = vector.broadcast %cst_130 : f32 to vector<8x128xf32>
    %631 = arith.addf %630, %629 : vector<8x128xf32>
    %632 = arith.divf %630, %631 : vector<8x128xf32>
    %633 = vector.extract_strided_slice %621 {offsets = [0, 128], sizes = [8, 128], strides = [1, 1]} : vector<8x384xf32> to vector<8x128xf32>
    %634 = vector.extract_strided_slice %624 {offsets = [0, 128], sizes = [8, 128], strides = [1, 1]} : vector<8x384xf32> to vector<8x128xf32>
    %635 = arith.addf %633, %634 : vector<8x128xf32>
    %636 = arith.negf %635 : vector<8x128xf32>
    %637 = math.exp %636 : vector<8x128xf32>
    %cst_131 = arith.constant 1.000000e+00 : f32
    %638 = vector.broadcast %cst_131 : f32 to vector<8x128xf32>
    %639 = arith.addf %638, %637 : vector<8x128xf32>
    %640 = arith.divf %638, %639 : vector<8x128xf32>
    %641 = vector.extract_strided_slice %621 {offsets = [0, 256], sizes = [8, 128], strides = [1, 1]} : vector<8x384xf32> to vector<8x128xf32>
    %642 = vector.extract_strided_slice %624 {offsets = [0, 256], sizes = [8, 128], strides = [1, 1]} : vector<8x384xf32> to vector<8x128xf32>
    %643 = arith.mulf %632, %642 : vector<8x128xf32>
    %644 = arith.addf %641, %643 : vector<8x128xf32>
    %645 = math.tanh %644 : vector<8x128xf32>
    %cst_132 = arith.constant 1.000000e+00 : f32
    %646 = vector.broadcast %cst_132 : f32 to vector<8x128xf32>
    %647 = arith.subf %646, %640 : vector<8x128xf32>
    %648 = arith.mulf %647, %645 : vector<8x128xf32>
    %649 = arith.mulf %640, %552 : vector<8x128xf32>
    %650 = arith.addf %648, %649 : vector<8x128xf32>
    %651 = arith.truncf %650 : vector<8x128xf32> to vector<8x128xbf16>
    %cst_133 = arith.constant dense<0.000000e+00> : vector<8x384xf32>
    %652 = tpu.matmul %651, %10, %cst_133 {dimension_numbers = #tpu.dot_dimension_numbers<[1], [0], [0], [1], [0, 0, 1, 1], [], []>} : vector<8x128xbf16>, vector<128x384xbf16>, vector<8x384xf32> -> vector<8x384xf32>
    %653 = arith.addf %652, %23 : vector<8x384xf32>
    %654 = arith.truncf %584 : vector<8x128xf32> to vector<8x128xbf16>
    %cst_134 = arith.constant dense<0.000000e+00> : vector<8x384xf32>
    %655 = tpu.matmul %654, %8, %cst_134 {dimension_numbers = #tpu.dot_dimension_numbers<[1], [0], [0], [1], [0, 0, 1, 1], [], []>} : vector<8x128xbf16>, vector<128x384xbf16>, vector<8x384xf32> -> vector<8x384xf32>
    %656 = arith.addf %655, %17 : vector<8x384xf32>
    %657 = vector.extract_strided_slice %653 {offsets = [0, 0], sizes = [8, 128], strides = [1, 1]} : vector<8x384xf32> to vector<8x128xf32>
    %658 = vector.extract_strided_slice %656 {offsets = [0, 0], sizes = [8, 128], strides = [1, 1]} : vector<8x384xf32> to vector<8x128xf32>
    %659 = arith.addf %657, %658 : vector<8x128xf32>
    %660 = arith.negf %659 : vector<8x128xf32>
    %661 = math.exp %660 : vector<8x128xf32>
    %cst_135 = arith.constant 1.000000e+00 : f32
    %662 = vector.broadcast %cst_135 : f32 to vector<8x128xf32>
    %663 = arith.addf %662, %661 : vector<8x128xf32>
    %664 = arith.divf %662, %663 : vector<8x128xf32>
    %665 = vector.extract_strided_slice %653 {offsets = [0, 128], sizes = [8, 128], strides = [1, 1]} : vector<8x384xf32> to vector<8x128xf32>
    %666 = vector.extract_strided_slice %656 {offsets = [0, 128], sizes = [8, 128], strides = [1, 1]} : vector<8x384xf32> to vector<8x128xf32>
    %667 = arith.addf %665, %666 : vector<8x128xf32>
    %668 = arith.negf %667 : vector<8x128xf32>
    %669 = math.exp %668 : vector<8x128xf32>
    %cst_136 = arith.constant 1.000000e+00 : f32
    %670 = vector.broadcast %cst_136 : f32 to vector<8x128xf32>
    %671 = arith.addf %670, %669 : vector<8x128xf32>
    %672 = arith.divf %670, %671 : vector<8x128xf32>
    %673 = vector.extract_strided_slice %653 {offsets = [0, 256], sizes = [8, 128], strides = [1, 1]} : vector<8x384xf32> to vector<8x128xf32>
    %674 = vector.extract_strided_slice %656 {offsets = [0, 256], sizes = [8, 128], strides = [1, 1]} : vector<8x384xf32> to vector<8x128xf32>
    %675 = arith.mulf %664, %674 : vector<8x128xf32>
    %676 = arith.addf %673, %675 : vector<8x128xf32>
    %677 = math.tanh %676 : vector<8x128xf32>
    %cst_137 = arith.constant 1.000000e+00 : f32
    %678 = vector.broadcast %cst_137 : f32 to vector<8x128xf32>
    %679 = arith.subf %678, %672 : vector<8x128xf32>
    %680 = arith.mulf %679, %677 : vector<8x128xf32>
    %681 = arith.mulf %672, %584 : vector<8x128xf32>
    %682 = arith.addf %680, %681 : vector<8x128xf32>
    %683 = arith.truncf %682 : vector<8x128xf32> to vector<8x128xbf16>
    %cst_138 = arith.constant dense<0.000000e+00> : vector<8x384xf32>
    %684 = tpu.matmul %683, %11, %cst_138 {dimension_numbers = #tpu.dot_dimension_numbers<[1], [0], [0], [1], [0, 0, 1, 1], [], []>} : vector<8x128xbf16>, vector<128x384xbf16>, vector<8x384xf32> -> vector<8x384xf32>
    %685 = arith.addf %684, %26 : vector<8x384xf32>
    %686 = arith.truncf %616 : vector<8x128xf32> to vector<8x128xbf16>
    %cst_139 = arith.constant dense<0.000000e+00> : vector<8x384xf32>
    %687 = tpu.matmul %686, %9, %cst_139 {dimension_numbers = #tpu.dot_dimension_numbers<[1], [0], [0], [1], [0, 0, 1, 1], [], []>} : vector<8x128xbf16>, vector<128x384xbf16>, vector<8x384xf32> -> vector<8x384xf32>
    %688 = arith.addf %687, %20 : vector<8x384xf32>
    %689 = vector.extract_strided_slice %685 {offsets = [0, 0], sizes = [8, 128], strides = [1, 1]} : vector<8x384xf32> to vector<8x128xf32>
    %690 = vector.extract_strided_slice %688 {offsets = [0, 0], sizes = [8, 128], strides = [1, 1]} : vector<8x384xf32> to vector<8x128xf32>
    %691 = arith.addf %689, %690 : vector<8x128xf32>
    %692 = arith.negf %691 : vector<8x128xf32>
    %693 = math.exp %692 : vector<8x128xf32>
    %cst_140 = arith.constant 1.000000e+00 : f32
    %694 = vector.broadcast %cst_140 : f32 to vector<8x128xf32>
    %695 = arith.addf %694, %693 : vector<8x128xf32>
    %696 = arith.divf %694, %695 : vector<8x128xf32>
    %697 = vector.extract_strided_slice %685 {offsets = [0, 128], sizes = [8, 128], strides = [1, 1]} : vector<8x384xf32> to vector<8x128xf32>
    %698 = vector.extract_strided_slice %688 {offsets = [0, 128], sizes = [8, 128], strides = [1, 1]} : vector<8x384xf32> to vector<8x128xf32>
    %699 = arith.addf %697, %698 : vector<8x128xf32>
    %700 = arith.negf %699 : vector<8x128xf32>
    %701 = math.exp %700 : vector<8x128xf32>
    %cst_141 = arith.constant 1.000000e+00 : f32
    %702 = vector.broadcast %cst_141 : f32 to vector<8x128xf32>
    %703 = arith.addf %702, %701 : vector<8x128xf32>
    %704 = arith.divf %702, %703 : vector<8x128xf32>
    %705 = vector.extract_strided_slice %685 {offsets = [0, 256], sizes = [8, 128], strides = [1, 1]} : vector<8x384xf32> to vector<8x128xf32>
    %706 = vector.extract_strided_slice %688 {offsets = [0, 256], sizes = [8, 128], strides = [1, 1]} : vector<8x384xf32> to vector<8x128xf32>
    %707 = arith.mulf %696, %706 : vector<8x128xf32>
    %708 = arith.addf %705, %707 : vector<8x128xf32>
    %709 = math.tanh %708 : vector<8x128xf32>
    %cst_142 = arith.constant 1.000000e+00 : f32
    %710 = vector.broadcast %cst_142 : f32 to vector<8x128xf32>
    %711 = arith.subf %710, %704 : vector<8x128xf32>
    %712 = arith.mulf %711, %709 : vector<8x128xf32>
    %713 = arith.mulf %704, %616 : vector<8x128xf32>
    %714 = arith.addf %712, %713 : vector<8x128xf32>
    %715 = arith.truncf %714 : vector<8x128xf32> to vector<8x128xbf16>
    %c6 = arith.constant 6 : index
    %c0_143 = arith.constant 0 : index
    %c0_144 = arith.constant 0 : index
    %716 = vector.load %arg17[%c6, %c0_143, %c0_144] : memref<7x8x128xbf16, #tpu.memory_space<vmem>>, vector<1x8x128xbf16>
    %717 = vector.shape_cast %716 : vector<1x8x128xbf16> to vector<8x128xbf16>
    %718 = vector.shape_cast %715 : vector<8x128xbf16> to vector<1x8x128xbf16>
    tpu.vector_store %arg17[%c6, %c0_143, %c0_144], %718 {strides = array<i32>} : memref<7x8x128xbf16, #tpu.memory_space<vmem>>, vector<1x8x128xbf16>,
    return
  }
  func.func @transform_0(%arg0: i32) -> (i32, i32) {
    %c0_i32 = arith.constant 0 : i32
    %c0_i32_0 = arith.constant 0 : i32
    %c0_i32_1 = arith.constant 0 : i32
    return %c0_i32, %c0_i32_0 : i32, i32
  }
  func.func @transform_1(%arg0: i32) -> (i32, i32) {
    %c0_i32 = arith.constant 0 : i32
    %c0_i32_0 = arith.constant 0 : i32
    %c0_i32_1 = arith.constant 0 : i32
    return %c0_i32, %c0_i32_0 : i32, i32
  }
  func.func @transform_2(%arg0: i32) -> (i32, i32) {
    %c0_i32 = arith.constant 0 : i32
    %c0_i32_0 = arith.constant 0 : i32
    %c0_i32_1 = arith.constant 0 : i32
    return %c0_i32, %c0_i32_0 : i32, i32
  }
  func.func @transform_3(%arg0: i32) -> (i32, i32) {
    %c0_i32 = arith.constant 0 : i32
    %c0_i32_0 = arith.constant 0 : i32
    %c0_i32_1 = arith.constant 0 : i32
    return %c0_i32, %c0_i32_0 : i32, i32
  }
  func.func @transform_4(%arg0: i32) -> (i32, i32) {
    %c0_i32 = arith.constant 0 : i32
    %c0_i32_0 = arith.constant 0 : i32
    %c0_i32_1 = arith.constant 0 : i32
    return %c0_i32, %c0_i32_0 : i32, i32
  }
  func.func @transform_5(%arg0: i32) -> (i32, i32) {
    %c0_i32 = arith.constant 0 : i32
    %c0_i32_0 = arith.constant 0 : i32
    %c0_i32_1 = arith.constant 0 : i32
    return %c0_i32, %c0_i32_0 : i32, i32
  }
  func.func @transform_6(%arg0: i32) -> (i32, i32) {
    %c0_i32 = arith.constant 0 : i32
    %c0_i32_0 = arith.constant 0 : i32
    %c0_i32_1 = arith.constant 0 : i32
    return %c0_i32, %c0_i32_0 : i32, i32
  }
  func.func @transform_7(%arg0: i32) -> (i32, i32) {
    %c0_i32 = arith.constant 0 : i32
    %c0_i32_0 = arith.constant 0 : i32
    %c0_i32_1 = arith.constant 0 : i32
    return %c0_i32, %c0_i32_0 : i32, i32
  }
  func.func @transform_8(%arg0: i32) -> (i32, i32) {
    %c0_i32 = arith.constant 0 : i32
    %c0_i32_0 = arith.constant 0 : i32
    %c0_i32_1 = arith.constant 0 : i32
    return %c0_i32, %c0_i32_0 : i32, i32
  }
  func.func @transform_9(%arg0: i32) -> (i32, i32) {
    %c0_i32 = arith.constant 0 : i32
    %c0_i32_0 = arith.constant 0 : i32
    %c0_i32_1 = arith.constant 0 : i32
    return %c0_i32, %c0_i32_0 : i32, i32
  }
  func.func @transform_10(%arg0: i32) -> (i32, i32) {
    %c0_i32 = arith.constant 0 : i32
    %c0_i32_0 = arith.constant 0 : i32
    %c0_i32_1 = arith.constant 0 : i32
    return %c0_i32, %c0_i32_0 : i32, i32
  }
  func.func @transform_11(%arg0: i32) -> (i32, i32) {
    %c0_i32 = arith.constant 0 : i32
    %c0_i32_0 = arith.constant 0 : i32
    %c0_i32_1 = arith.constant 0 : i32
    return %c0_i32, %c0_i32_0 : i32, i32
  }
  func.func @transform_12(%arg0: i32) -> (i32, i32) {
    %c0_i32 = arith.constant 0 : i32
    %c0_i32_0 = arith.constant 0 : i32
    %c0_i32_1 = arith.constant 0 : i32
    return %c0_i32, %c0_i32_0 : i32, i32
  }
  func.func @transform_13(%arg0: i32) -> (i32, i32) {
    %c0_i32 = arith.constant 0 : i32
    %c0_i32_0 = arith.constant 0 : i32
    %c0_i32_1 = arith.constant 0 : i32
    return %c0_i32, %c0_i32_0 : i32, i32
  }
  func.func @transform_14(%arg0: i32) -> (i32, i32) {
    %c0_i32 = arith.constant 0 : i32
    %c0_i32_0 = arith.constant 0 : i32
    %c0_i32_1 = arith.constant 0 : i32
    return %c0_i32, %c0_i32_0 : i32, i32
  }
  func.func @transform_15(%arg0: i32) -> (i32, i32) {
    %c0_i32 = arith.constant 0 : i32
    %c0_i32_0 = arith.constant 0 : i32
    %c0_i32_1 = arith.constant 0 : i32
    return %c0_i32, %c0_i32_0 : i32, i32
  }
  func.func @transform_16(%arg0: i32) -> (i32, i32, i32) {
    %c0_i32 = arith.constant 0 : i32
    %c0_i32_0 = arith.constant 0 : i32
    %c0_i32_1 = arith.constant 0 : i32
    %c0_i32_2 = arith.constant 0 : i32
    return %c0_i32, %c0_i32_0, %c0_i32_1 : i32, i32, i32
  }
}

</mosaic_0001>

<llo_original>
// kernel: decoder_forward.3
$region0: #{decoder_forward.3}
  #allocation0 [shape = 'u32[]', space=smem, size = 0x4, offset = 0x4, fixed_abs, tag = 'smem constant byte address 0x4 - core index']
  #allocation1 [shape = 'u32[144,128]{1,0:T(1,128)}', space=vmem, size = 0x12000, scoped, tag = 'internal scratch']
  %s0 = inlined_call_operand.vmem [shape: bf16[56,128], index: 0, kind: input, shape index: {}]
  %s1 = inlined_call_operand.vmem [shape: s32[56,1], index: 1, kind: input, shape index: {}]
  %s2 = inlined_call_operand.vmem [shape: bf16[128,128], index: 2, kind: input, shape index: {}]
  %s3 = inlined_call_operand.vmem [shape: f32[1,128], index: 3, kind: input, shape index: {}]
  %s4 = inlined_call_operand.hbm [shape: f32[1,1], index: 4, kind: output, shape index: {0}]
  %s5 = inlined_call_operand.hbm [shape: f32[1,1], index: 5, kind: output, shape index: {1}]
  %6 = xla_tuple %s4, %s5
  %s7 = sld [smem:[#allocation0]]
  $region38: #{decoder_forward.3} parent=0
    _
  %s9 = ssub.s32 1, %s7
  %s10 = scalar_select 0, %s9, %s7
  $region1: #{decoder_forward.3} parent=0
    #allocation2 [shape = 'u8[512]{0}', space=vmem, size = 0x400, scoped, tag = 'output window, operand 0, single buffered']
    #allocation3 [shape = 's32[1]{0}', space=sflag, size = 0x4, scoped, tag = 'scoped memory for decoder_forward.3']
    #allocation4 [shape = 'u8[512]{0}', space=vmem, size = 0x400, scoped, tag = 'output window, operand 1, single buffered']
    #allocation5 [shape = 's32[1]{0}', space=sflag, size = 0x4, scoped, tag = 'scoped memory for decoder_forward.3']
    %11 = vsyncpa [#allocation3], 0
    %12 = vsyncpa [#allocation5], 0
    // Predicated region
    $region2: #{decoder_forward.3} parent=1 // pred_check
      _
    $region3: #{decoder_forward.3} parent=1 // pred_check_branch
      %14 = sbr.rel (0) target = $region5
    $region4: #{decoder_forward.3} parent=1 // pred_region
      _
    $region5: #{decoder_forward.3} parent=1 // pred_fallthru
      _
    // Predicated region
    $region6: #{decoder_forward.3} parent=1 // pred_check
      _
    $region7: #{decoder_forward.3} parent=1 // pred_check_branch
      %16 = sbr.rel (0) target = $region9
    $region8: #{decoder_forward.3} parent=1 // pred_region
      _
    $region9: #{decoder_forward.3} parent=1 // pred_fallthru
      _
    // Predicated region
    $region10: #{decoder_forward.3} parent=1 // pred_check
      _
    $region11: #{decoder_forward.3} parent=1 // pred_check_branch
      %18 = sbr.rel (0) target = $region13
    $region12: #{decoder_forward.3} parent=1 // pred_region
      _
    $region13: #{decoder_forward.3} parent=1 // pred_fallthru
      _
    // Predicated region
    $region14: #{decoder_forward.3} parent=1 // pred_check
      _
    $region15: #{decoder_forward.3} parent=1 // pred_check_branch
      %20 = sbr.rel (0) target = $region17
    $region16: #{decoder_forward.3} parent=1 // pred_region
      _
    $region17: #{decoder_forward.3} parent=1 // pred_fallthru
      _
    %p22 = scmp.eq.s32.totalorder 0, 0
    // Predicated region
    $region18: #{decoder_forward.3} parent=1 // pred_check
      %p23 = pneg %p22
    $region19: #{decoder_forward.3} parent=1 // pred_check_branch
      %25 = sbr.rel (%p23) target = $region21
    $region20: #{decoder_forward.3} parent=1 // pred_region
      %vm26 = vcmask 0
      %27 = vst.msk [vmem:[#allocation2] sm:$0x1] %vm26, 0.0
      %28 = vst.msk [vmem:[#allocation4] sm:$0x1] %vm26, 0.0
    $region21: #{decoder_forward.3} parent=1 // pred_fallthru
      _
    %v29 = vld [vmem:[%s0] sm:$0xf]
    %v30 = vld [vmem:[%s0 + $0x4] sm:$0xf]
    %v31 = vld [vmem:[%s0 + $0x8] sm:$0xf]
    %v32 = vld [vmem:[%s0 + $0xc] sm:$0xf]
    %v33 = vld [vmem:[%s0 + $0x10] sm:$0xf]
    %v34 = vld [vmem:[%s0 + $0x14] sm:$0xf]
    %v35 = vld [vmem:[%s0 + $0x18] sm:$0xf]
    %v36 = vld [vmem:[%s2] sm:$0xf]
    %v37 = vld [vmem:[%s2 + $0x4] sm:$0xf]
    %v38 = vld [vmem:[%s2 + $0x8] sm:$0xf]
    %v39 = vld [vmem:[%s2 + $0xc] sm:$0xf]
    %v40 = vld [vmem:[%s2 + $0x10] sm:$0xf]
    %v41 = vld [vmem:[%s2 + $0x14] sm:$0xf]
    %v42 = vld [vmem:[%s2 + $0x18] sm:$0xf]
    %v43 = vld [vmem:[%s2 + $0x1c] sm:$0xf]
    %v44 = vld [vmem:[%s2 + $0x20] sm:$0xf]
    %v45 = vld [vmem:[%s2 + $0x24] sm:$0xf]
    %v46 = vld [vmem:[%s2 + $0x28] sm:$0xf]
    %v47 = vld [vmem:[%s2 + $0x2c] sm:$0xf]
    %v48 = vld [vmem:[%s2 + $0x30] sm:$0xf]
    %v49 = vld [vmem:[%s2 + $0x34] sm:$0xf]
    %v50 = vld [vmem:[%s2 + $0x38] sm:$0xf]
    %v51 = vld [vmem:[%s2 + $0x3c] sm:$0xf]
    %v52 = vld [vmem:[%s3] sm:$0x1]
    %v54 = vlaneseq
    %v55 = vshrl.u32 %v54, 7
    %v56 = vsub.s32 0, %v55
    %v57 = vrot.slane %v52, %v56
    %v66 = vunpack.c.l.b16 %v29
    %v67 = vunpack.c.l.b16 %v30
    %v68 = vunpack.c.l.b16 %v31
    %v69 = vunpack.c.l.b16 %v32
    %v70 = vunpack.c.l.b16 %v33
    %v71 = vunpack.c.l.b16 %v34
    %v72 = vunpack.c.l.b16 %v35
    %v73 = vpack.c.b16 %v67, %v66
    %v74 = vpack.c.b16 %v69, %v68
    %v75 = vpack.c.b16 %v71, %v70
    %v76 = vpack.c.b16 %v72, %v72
    %v97 = vunpack.c.l.b16 %v36
    %v98 = vunpack.c.l.b16 %v37
    %v99 = vunpack.c.l.b16 %v38
    %v100 = vunpack.c.l.b16 %v39
    %v101 = vunpack.c.l.b16 %v40
    %v102 = vunpack.c.l.b16 %v41
    %v103 = vunpack.c.l.b16 %v42
    %v104 = vunpack.c.l.b16 %v43
    %v105 = vunpack.c.l.b16 %v44
    %v106 = vunpack.c.l.b16 %v45
    %v107 = vunpack.c.l.b16 %v46
    %v108 = vunpack.c.l.b16 %v47
    %v109 = vunpack.c.l.b16 %v48
    %v110 = vunpack.c.l.b16 %v49
    %v111 = vunpack.c.l.b16 %v50
    %v112 = vunpack.c.l.b16 %v51
    %v113 = vpack.c.b16 %v98, %v97
    %v114 = vpack.c.b16 %v100, %v99
    %v115 = vpack.c.b16 %v102, %v101
    %v116 = vpack.c.b16 %v104, %v103
    %v117 = vpack.c.b16 %v106, %v105
    %v118 = vpack.c.b16 %v108, %v107
    %v119 = vpack.c.b16 %v110, %v109
    %v120 = vpack.c.b16 %v112, %v111
    %129 = vmatprep.subr.bf16.mxu0 0
    %130 = vmatpush1.bf16.msra.mxu0 %v113
    %131 = vmatprep.subr.bf16.mxu0 0
    %132 = vmatpush1.bf16.msra.mxu0 %v114
    %133 = vmatprep.subr.bf16.mxu0 0
    %134 = vmatpush1.bf16.msra.mxu0 %v115
    %135 = vmatprep.subr.bf16.mxu0 0
    %136 = vmatpush1.bf16.msra.mxu0 %v116
    %137 = vmatprep.subr.bf16.mxu0 0
    %138 = vmatpush1.bf16.msra.mxu0 %v117
    %139 = vmatprep.subr.bf16.mxu0 0
    %140 = vmatpush1.bf16.msra.mxu0 %v118
    %141 = vmatprep.subr.bf16.mxu0 0
    %142 = vmatpush1.bf16.msra.mxu0 %v119
    %143 = vmatprep.subr.bf16.mxu0 0
    %144 = vmatpush1.bf16.msra.mxu0 %v120
    %145 = vmatprep.subr.bf16.mxu0 0
    %146 = vmatpush1.bf16.msra.mxu0 0
    %147 = vmatprep.subr.bf16.mxu0 0
    %148 = vmatpush1.bf16.msra.mxu0 0
    %149 = vmatprep.subr.bf16.mxu0 0
    %150 = vmatpush1.bf16.msra.mxu0 0
    %151 = vmatprep.subr.bf16.mxu0 0
    %152 = vmatpush1.bf16.msra.mxu0 0
    %153 = vmatprep.subr.bf16.mxu0 0
    %154 = vmatpush1.bf16.msra.mxu0 0
    %155 = vmatprep.subr.bf16.mxu0 0
    %156 = vmatpush1.bf16.msra.mxu0 0
    %157 = vmatprep.subr.bf16.mxu0 0
    %158 = vmatpush1.bf16.msra.mxu0 0
    %159 = vmatprep.subr.bf16.mxu0 0
    %160 = vmatpush1.bf16.msra.mxu0 0
    %161 = vmatprep.mubr.bf16.mxu0 0
    %162 = vmatmul.mubr.bf16.gmra.mrb[0].mxu0 %v73
    %v163 = vpop.f32.mrb[0].mxu0
    %v164 = vadd.f32 %v57, %v163
    %v165 = vpop.f32.mrb[0].mxu0
    %v166 = vpop.f32.mrb[0].mxu0
    %v167 = vadd.f32 %v57, %v166
    %v168 = vpop.f32.mrb[0].mxu0
    %169 = vmatprep.mubr.bf16.mxu0 0
    %170 = vmatmul.mubr.bf16.gmra.mrb[0].mxu0 %v74
    %v171 = vpop.f32.mrb[0].mxu0
    %v172 = vadd.f32 %v57, %v171
    %v173 = vpop.f32.mrb[0].mxu0
    %v174 = vpop.f32.mrb[0].mxu0
    %v175 = vadd.f32 %v57, %v174
    %v176 = vpop.f32.mrb[0].mxu0
    %177 = vmatprep.mubr.bf16.mxu0 0
    %178 = vmatmul.mubr.bf16.gmra.mrb[0].mxu0 %v75
    %v179 = vpop.f32.mrb[0].mxu0
    %v180 = vadd.f32 %v57, %v179
    %v181 = vpop.f32.mrb[0].mxu0
    %v182 = vpop.f32.mrb[0].mxu0
    %v183 = vadd.f32 %v57, %v182
    %v184 = vpop.f32.mrb[0].mxu0
    %185 = vmatprep.mubr.bf16.mxu0 0
    %186 = vmatmul.mubr.bf16.gmra.mrb[0].mxu0 %v76
    %v187 = vpop.f32.mrb[0].mxu0
    %v188 = vadd.f32 %v57, %v187
    %v189 = vpop.f32.mrb[0].mxu0
    %v190 = vpop.f32.mrb[0].mxu0
    %v191 = vpop.f32.mrb[0].mxu0
    %192 = vdwg.mxu0
    %v193 = vld [vmem:[%s1] sm:$0xff]
    %v194 = vld [vmem:[%s1 + $0x8] sm:$0xff]
    %v195 = vld [vmem:[%s1 + $0x10] sm:$0xff]
    %v196 = vld [vmem:[%s1 + $0x18] sm:$0xff]
    %v197 = vld [vmem:[%s1 + $0x20] sm:$0xff]
    %v198 = vld [vmem:[%s1 + $0x28] sm:$0xff]
    %v199 = vld [vmem:[%s1 + $0x30] sm:$0xff]
    %v200 = vlaneseq
    %v201 = vand.u32 %v200, 127
    %202 = vmax.xlane.f32.xlu0 %v164
    %v203 = vpop.xlane.xlu0 %202
    %204 = vmax.xlane.f32.xlu0 %v167
    %v205 = vpop.xlane.xlu0 %204
    %206 = vmax.xlane.f32.xlu0 %v172
    %v207 = vpop.xlane.xlu0 %206
    %208 = vmax.xlane.f32.xlu0 %v175
    %v209 = vpop.xlane.xlu0 %208
    %210 = vmax.xlane.f32.xlu0 %v180
    %v211 = vpop.xlane.xlu0 %210
    %212 = vmax.xlane.f32.xlu0 %v183
    %v213 = vpop.xlane.xlu0 %212
    %214 = vmax.xlane.f32.xlu0 %v188
    %v215 = vpop.xlane.xlu0 %214
    %v216 = vsub.f32 %v164, %v203
    %v217 = vsub.f32 %v167, %v205
    %v218 = vsub.f32 %v172, %v207
    %v219 = vsub.f32 %v175, %v209
    %v220 = vsub.f32 %v180, %v211
    %v221 = vsub.f32 %v183, %v213
    %v222 = vsub.f32 %v188, %v215
    %v223 = vmul.f32 %v216, 1.442695
    %v224 = vpow.pop %v223
    %v225 = vmul.f32 %v217, 1.442695
    %v226 = vpow.pop %v225
    %v227 = vmul.f32 %v218, 1.442695
    %v228 = vpow.pop %v227
    %v229 = vmul.f32 %v219, 1.442695
    %v230 = vpow.pop %v229
    %v231 = vmul.f32 %v220, 1.442695
    %v232 = vpow.pop %v231
    %v233 = vmul.f32 %v221, 1.442695
    %v234 = vpow.pop %v233
    %v235 = vmul.f32 %v222, 1.442695
    %v236 = vpow.pop %v235
    %237 = vadd.xlane.f32.xlu0 %v224
    %v238 = vpop.xlane.xlu0 %237
    %239 = vadd.xlane.f32.xlu0 %v226
    %v240 = vpop.xlane.xlu0 %239
    %241 = vadd.xlane.f32.xlu0 %v228
    %v242 = vpop.xlane.xlu0 %241
    %243 = vadd.xlane.f32.xlu0 %v230
    %v244 = vpop.xlane.xlu0 %243
    %245 = vadd.xlane.f32.xlu0 %v232
    %v246 = vpop.xlane.xlu0 %245
    %247 = vadd.xlane.f32.xlu0 %v234
    %v248 = vpop.xlane.xlu0 %247
    %249 = vadd.xlane.f32.xlu0 %v236
    %v250 = vpop.xlane.xlu0 %249
    %v251 = vlog2.pop %v238
    %v252 = vmul.f32 %v251, 0.6931472
    %v253 = vlog2.pop %v240
    %v254 = vmul.f32 %v253, 0.6931472
    %v255 = vlog2.pop %v242
    %v256 = vmul.f32 %v255, 0.6931472
    %v257 = vlog2.pop %v244
    %v258 = vmul.f32 %v257, 0.6931472
    %v259 = vlog2.pop %v246
    %v260 = vmul.f32 %v259, 0.6931472
    %v261 = vlog2.pop %v248
    %v262 = vmul.f32 %v261, 0.6931472
    %v263 = vlog2.pop %v250
    %v264 = vmul.f32 %v263, 0.6931472
    %v265 = vadd.f32 %v203, %v252
    %v266 = vadd.f32 %v205, %v254
    %v267 = vadd.f32 %v207, %v256
    %v268 = vadd.f32 %v209, %v258
    %v269 = vadd.f32 %v211, %v260
    %v270 = vadd.f32 %v213, %v262
    %v271 = vadd.f32 %v215, %v264
    %272 = vset.pattern.permute.xlu0 0
    %273 = vperm.xlu0 %272, %v193
    %v274 = vpop.permute.xlu0 %273
    %275 = vset.pattern.permute.xlu0 0
    %276 = vperm.xlu0 %275, %v194
    %v277 = vpop.permute.xlu0 %276
    %278 = vset.pattern.permute.xlu0 0
    %279 = vperm.xlu0 %278, %v195
    %v280 = vpop.permute.xlu0 %279
    %281 = vset.pattern.permute.xlu0 0
    %282 = vperm.xlu0 %281, %v196
    %v283 = vpop.permute.xlu0 %282
    %284 = vset.pattern.permute.xlu0 0
    %285 = vperm.xlu0 %284, %v197
    %v286 = vpop.permute.xlu0 %285
    %287 = vset.pattern.permute.xlu0 0
    %288 = vperm.xlu0 %287, %v198
    %v289 = vpop.permute.xlu0 %288
    %290 = vset.pattern.permute.xlu0 0
    %291 = vperm.xlu0 %290, %v199
    %v292 = vpop.permute.xlu0 %291
    %vm293 = vcmp.eq.s32.totalorder %v201, %v274
    %vm294 = vcmp.eq.s32.totalorder %v201, %v277
    %vm295 = vcmp.eq.s32.totalorder %v201, %v280
    %vm296 = vcmp.eq.s32.totalorder %v201, %v283
    %vm297 = vcmp.eq.s32.totalorder %v201, %v286
    %vm298 = vcmp.eq.s32.totalorder %v201, %v289
    %vm299 = vcmp.eq.s32.totalorder %v201, %v292
    %v300 = vsel %vm293, %v164, 0.0
    %v301 = vsel %vm294, %v167, 0.0
    %v302 = vsel %vm295, %v172, 0.0
    %v303 = vsel %vm296, %v175, 0.0
    %v304 = vsel %vm297, %v180, 0.0
    %v305 = vsel %vm298, %v183, 0.0
    %v306 = vsel %vm299, %v188, 0.0
    %307 = vadd.xlane.f32.xlu0 %v300
    %v308 = vpop.xlane.xlu0 %307
    %309 = vadd.xlane.f32.xlu0 %v301
    %v310 = vpop.xlane.xlu0 %309
    %311 = vadd.xlane.f32.xlu0 %v302
    %v312 = vpop.xlane.xlu0 %311
    %313 = vadd.xlane.f32.xlu0 %v303
    %v314 = vpop.xlane.xlu0 %313
    %315 = vadd.xlane.f32.xlu0 %v304
    %v316 = vpop.xlane.xlu0 %315
    %317 = vadd.xlane.f32.xlu0 %v305
    %v318 = vpop.xlane.xlu0 %317
    %319 = vadd.xlane.f32.xlu0 %v306
    %v320 = vpop.xlane.xlu0 %319
    %v321 = vsub.f32 %v265, %v308
    %v322 = vsub.f32 %v266, %v310
    %v323 = vsub.f32 %v267, %v312
    %v324 = vsub.f32 %v268, %v314
    %v325 = vsub.f32 %v269, %v316
    %v326 = vsub.f32 %v270, %v318
    %v327 = vsub.f32 %v271, %v320
    %vm328 = vcmp.ne.s32.totalorder %v193, 0
    %vm329 = vcmp.ne.s32.totalorder %v194, 0
    %vm330 = vcmp.ne.s32.totalorder %v195, 0
    %vm331 = vcmp.ne.s32.totalorder %v196, 0
    %vm332 = vcmp.ne.s32.totalorder %v197, 0
    %vm333 = vcmp.ne.s32.totalorder %v198, 0
    %vm334 = vcmp.ne.s32.totalorder %v199, 0
    %v335 = vsel %vm328, 1, 0
    %v336 = vsel %vm329, 1, 0
    %v337 = vsel %vm330, 1, 0
    %v338 = vsel %vm331, 1, 0
    %v339 = vsel %vm332, 1, 0
    %v340 = vsel %vm333, 1, 0
    %v341 = vsel %vm334, 1, 0
    %v342 = vcvt.s32.f32 %v335
    %v343 = vcvt.s32.f32 %v336
    %v344 = vcvt.s32.f32 %v337
    %v345 = vcvt.s32.f32 %v338
    %v346 = vcvt.s32.f32 %v339
    %v347 = vcvt.s32.f32 %v340
    %v348 = vcvt.s32.f32 %v341
    %v349 = vld [vmem:[#allocation2] sm:$0x1]
    %v350 = vmul.f32 %v321, %v342
    %v351 = vmul.f32 %v322, %v343
    %v352 = vmul.f32 %v323, %v344
    %v353 = vmul.f32 %v324, %v345
    %v354 = vmul.f32 %v325, %v346
    %v355 = vmul.f32 %v326, %v347
    %v356 = vmul.f32 %v327, %v348
    %vm357 = vcmask 7168
    %v358 = vsel %vm357, %v350, 0.0
    %v359 = vsel %vm357, %v351, 0.0
    %v360 = vadd.f32 %v358, %v359
    %v361 = vsel %vm357, %v352, 0.0
    %v362 = vadd.f32 %v360, %v361
    %v363 = vsel %vm357, %v353, 0.0
    %v364 = vadd.f32 %v362, %v363
    %v365 = vsel %vm357, %v354, 0.0
    %v366 = vadd.f32 %v364, %v365
    %v367 = vsel %vm357, %v355, 0.0
    %v368 = vadd.f32 %v366, %v367
    %v369 = vsel %vm357, %v356, 0.0
    %v370 = vadd.f32 %v368, %v369
    %371 = vadd.xlane.f32.xlu0 %v370
    %v372 = vpop.xlane.xlu0 %371
    %v373 = vrot.slane %v372, 4
    %v374 = vadd.f32 %v372, %v373
    %v375 = vrot.slane %v374, 2
    %v376 = vadd.f32 %v374, %v375
    %v377 = vrot.slane %v376, 1
    %v378 = vadd.f32 %v376, %v377
    %s379 = vtos %v378
    %v380 = vstv %s379
    %v381 = vadd.f32 %v349, %v380
    %vm382 = vcmask 0
    %383 = vst.msk [vmem:[#allocation2] sm:$0x1] %vm382, %v381
    %v384 = vld [vmem:[#allocation4] sm:$0x1]
    %v385 = vsel %vm357, %v342, 0.0
    %v386 = vsel %vm357, %v343, 0.0
    %v387 = vadd.f32 %v385, %v386
    %v388 = vsel %vm357, %v344, 0.0
    %v389 = vadd.f32 %v387, %v388
    %v390 = vsel %vm357, %v345, 0.0
    %v391 = vadd.f32 %v389, %v390
    %v392 = vsel %vm357, %v346, 0.0
    %v393 = vadd.f32 %v391, %v392
    %v394 = vsel %vm357, %v347, 0.0
    %v395 = vadd.f32 %v393, %v394
    %v396 = vsel %vm357, %v348, 0.0
    %v397 = vadd.f32 %v395, %v396
    %398 = vadd.xlane.f32.xlu0 %v397
    %v399 = vpop.xlane.xlu0 %398
    %v400 = vrot.slane %v399, 4
    %v401 = vadd.f32 %v399, %v400
    %v402 = vrot.slane %v401, 2
    %v403 = vadd.f32 %v401, %v402
    %v404 = vrot.slane %v403, 1
    %v405 = vadd.f32 %v403, %v404
    %s406 = vtos %v405
    %v407 = vstv %s406
    %v408 = vadd.f32 %v384, %v407
    %409 = vst.msk [vmem:[#allocation4] sm:$0x1] %vm382, %v408
    // Predicated region
    $region22: #{decoder_forward.3} parent=1 // pred_check
      _
    $region23: #{decoder_forward.3} parent=1 // pred_check_branch
      %411 = sbr.rel (0) target = $region25
    $region24: #{decoder_forward.3} parent=1 // pred_region
      %s413 = ssub.s32 16, 16
      %414 = vsyncadd [#allocation3], %s413
      %s416 = sshll.u32 [#allocation2], 4
      %s417 = int_to_ptr.vmem [resolvable:$true] %s416
      %419 = dma.vmem_to_hbm [thread:$0]  %s417, 16, %s4, [#allocation3]
    $region25: #{decoder_forward.3} parent=1 // pred_fallthru
      _
    // Predicated region
    $region26: #{decoder_forward.3} parent=1 // pred_check
      _
    $region27: #{decoder_forward.3} parent=1 // pred_check_branch
      %421 = sbr.rel (0) target = $region29
    $region28: #{decoder_forward.3} parent=1 // pred_region
      %s423 = ssub.s32 16, 16
      %424 = vsyncadd [#allocation5], %s423
      %s426 = sshll.u32 [#allocation4], 4
      %s427 = int_to_ptr.vmem [resolvable:$true] %s426
      %429 = dma.vmem_to_hbm [thread:$0]  %s427, 16, %s5, [#allocation5]
    $region29: #{decoder_forward.3} parent=1 // pred_fallthru
      _
    // Predicated region
    $region30: #{decoder_forward.3} parent=1 // pred_check
      _
    $region31: #{decoder_forward.3} parent=1 // pred_check_branch
      %431 = sbr.rel (0) target = $region33
    $region32: #{decoder_forward.3} parent=1 // pred_region
      %432 = dma.done [#allocation3], 16
    $region33: #{decoder_forward.3} parent=1 // pred_fallthru
      _
    // Predicated region
    $region34: #{decoder_forward.3} parent=1 // pred_check
      _
    $region35: #{decoder_forward.3} parent=1 // pred_check_branch
      %434 = sbr.rel (0) target = $region37
    $region36: #{decoder_forward.3} parent=1 // pred_region
      %435 = dma.done [#allocation5], 16
    $region37: #{decoder_forward.3} parent=1 // pred_fallthru
      _
    %436 = vsyncpa [#allocation3], 1
    %437 = vsyncpa [#allocation5], 1

// kernel: decoder_forward.2
$region0: #{decoder_forward.2}
  #allocation0 [shape = 'u32[]', space=smem, size = 0x4, offset = 0x4, fixed_abs, tag = 'smem constant byte address 0x4 - core index']
  #allocation1 [shape = 'u32[144,128]{1,0:T(1,128)}', space=vmem, size = 0x12000, scoped, tag = 'internal scratch']
  %s0 = inlined_call_operand.vmem [shape: f32[8,32], index: 0, kind: input, shape index: {}]
  %s1 = inlined_call_operand.vmem [shape: bf16[32,128], index: 1, kind: input, shape index: {}]
  %s2 = inlined_call_operand.vmem [shape: f32[1,128], index: 2, kind: input, shape index: {}]
  %s3 = inlined_call_operand.vmem [shape: bf16[56,64], index: 3, kind: input, shape index: {}]
  %s4 = inlined_call_operand.hbm [shape: bf16[64,384], index: 4, kind: input, shape index: {}]
  %s5 = inlined_call_operand.vmem [shape: f32[1,384], index: 5, kind: input, shape index: {}]
  %s6 = inlined_call_operand.vmem [shape: bf16[128,384], index: 6, kind: input, shape index: {}]
  %s7 = inlined_call_operand.vmem [shape: f32[1,384], index: 7, kind: input, shape index: {}]
  %s8 = inlined_call_operand.vmem [shape: bf16[128,384], index: 8, kind: input, shape index: {}]
  %s9 = inlined_call_operand.vmem [shape: f32[1,384], index: 9, kind: input, shape index: {}]
  %s10 = inlined_call_operand.vmem [shape: bf16[128,384], index: 10, kind: input, shape index: {}]
  %s11 = inlined_call_operand.vmem [shape: f32[1,384], index: 11, kind: input, shape index: {}]
  %s12 = inlined_call_operand.hbm [shape: bf16[128,384], index: 12, kind: input, shape index: {}]
  %s13 = inlined_call_operand.vmem [shape: f32[1,384], index: 13, kind: input, shape index: {}]
  %s14 = inlined_call_operand.hbm [shape: bf16[128,384], index: 14, kind: input, shape index: {}]
  %s15 = inlined_call_operand.vmem [shape: f32[1,384], index: 15, kind: input, shape index: {}]
  %s16 = inlined_call_operand.vmem [shape: bf16[7,8,128], index: 16, kind: output, shape index: {}]
  %s17 = sld [smem:[#allocation0]]
  $region86: #{decoder_forward.2} parent=0
    _
  %s19 = ssub.s32 1, %s17
  %s20 = scalar_select 0, %s19, %s17
  $region1: #{decoder_forward.2} parent=0
    #allocation2 [shape = 'u8[49152]{0}', space=vmem, size = 0xc000, scoped, tag = 'input window, operand 4, single buffered']
    #allocation3 [shape = 's32[1]{0}', space=sflag, size = 0x4, scoped, tag = 'scoped memory for decoder_forward.2']
    #allocation4 [shape = 'u8[98304]{0}', space=vmem, size = 0x18000, scoped, tag = 'input window, operand 12, single buffered']
    #allocation5 [shape = 's32[1]{0}', space=sflag, size = 0x4, scoped, tag = 'scoped memory for decoder_forward.2']
    #allocation6 [shape = 'u8[98304]{0}', space=vmem, size = 0x18000, scoped, tag = 'input window, operand 14, single buffered']
    %21 = vsyncpa [#allocation3], 0
    %22 = vsyncpa [#allocation5], 0
    // Predicated region
    $region2: #{decoder_forward.2} parent=1 // pred_check
      _
    $region3: #{decoder_forward.2} parent=1 // pred_check_branch
      %24 = sbr.rel (0) target = $region5
    $region4: #{decoder_forward.2} parent=1 // pred_region
      _
    $region5: #{decoder_forward.2} parent=1 // pred_fallthru
      _
    // Predicated region
    $region6: #{decoder_forward.2} parent=1 // pred_check
      _
    $region7: #{decoder_forward.2} parent=1 // pred_check_branch
      %26 = sbr.rel (0) target = $region9
    $region8: #{decoder_forward.2} parent=1 // pred_region
      _
    $region9: #{decoder_forward.2} parent=1 // pred_fallthru
      _
    // Predicated region
    $region10: #{decoder_forward.2} parent=1 // pred_check
      _
    $region11: #{decoder_forward.2} parent=1 // pred_check_branch
      %28 = sbr.rel (0) target = $region13
    $region12: #{decoder_forward.2} parent=1 // pred_region
      _
    $region13: #{decoder_forward.2} parent=1 // pred_fallthru
      _
    // Predicated region
    $region14: #{decoder_forward.2} parent=1 // pred_check
      _
    $region15: #{decoder_forward.2} parent=1 // pred_check_branch
      %30 = sbr.rel (0) target = $region17
    $region16: #{decoder_forward.2} parent=1 // pred_region
      _
    $region17: #{decoder_forward.2} parent=1 // pred_fallthru
      _
    // Predicated region
    $region18: #{decoder_forward.2} parent=1 // pred_check
      _
    $region19: #{decoder_forward.2} parent=1 // pred_check_branch
      %32 = sbr.rel (0) target = $region21
    $region20: #{decoder_forward.2} parent=1 // pred_region
      %s34 = ssub.s32 1536, 1536
      %35 = vsyncadd [#allocation3], %s34
      %s36 = sshll.u32 [#allocation2], 4
      %s37 = int_to_ptr.vmem [resolvable:$true] %s36
      %42 = dma.hbm_to_vmem [thread:$0]  %s4, 1536, %s37, [#allocation3], 192, 192, 12
    $region21: #{decoder_forward.2} parent=1 // pred_fallthru
      _
    // Predicated region
    $region22: #{decoder_forward.2} parent=1 // pred_check
      _
    $region23: #{decoder_forward.2} parent=1 // pred_check_branch
      %44 = sbr.rel (0) target = $region25
    $region24: #{decoder_forward.2} parent=1 // pred_region
      _
    $region25: #{decoder_forward.2} parent=1 // pred_fallthru
      _
    // Predicated region
    $region26: #{decoder_forward.2} parent=1 // pred_check
      _
    $region27: #{decoder_forward.2} parent=1 // pred_check_branch
      %46 = sbr.rel (0) target = $region29
    $region28: #{decoder_forward.2} parent=1 // pred_region
      _
    $region29: #{decoder_forward.2} parent=1 // pred_fallthru
      _
    // Predicated region
    $region30: #{decoder_forward.2} parent=1 // pred_check
      _
    $region31: #{decoder_forward.2} parent=1 // pred_check_branch
      %48 = sbr.rel (0) target = $region33
    $region32: #{decoder_forward.2} parent=1 // pred_region
      _
    $region33: #{decoder_forward.2} parent=1 // pred_fallthru
      _
    // Predicated region
    $region34: #{decoder_forward.2} parent=1 // pred_check
      _
    $region35: #{decoder_forward.2} parent=1 // pred_check_branch
      %50 = sbr.rel (0) target = $region37
    $region36: #{decoder_forward.2} parent=1 // pred_region
      _
    $region37: #{decoder_forward.2} parent=1 // pred_fallthru
      _
    // Predicated region
    $region38: #{decoder_forward.2} parent=1 // pred_check
      _
    $region39: #{decoder_forward.2} parent=1 // pred_check_branch
      %52 = sbr.rel (0) target = $region41
    $region40: #{decoder_forward.2} parent=1 // pred_region
      _
    $region41: #{decoder_forward.2} parent=1 // pred_fallthru
      _
    // Predicated region
    $region42: #{decoder_forward.2} parent=1 // pred_check
      _
    $region43: #{decoder_forward.2} parent=1 // pred_check_branch
      %54 = sbr.rel (0) target = $region45
    $region44: #{decoder_forward.2} parent=1 // pred_region
      _
    $region45: #{decoder_forward.2} parent=1 // pred_fallthru
      _
    // Predicated region
    $region46: #{decoder_forward.2} parent=1 // pred_check
      _
    $region47: #{decoder_forward.2} parent=1 // pred_check_branch
      %56 = sbr.rel (0) target = $region49
    $region48: #{decoder_forward.2} parent=1 // pred_region
      _
    $region49: #{decoder_forward.2} parent=1 // pred_fallthru
      _
    // Predicated region
    $region50: #{decoder_forward.2} parent=1 // pred_check
      _
    $region51: #{decoder_forward.2} parent=1 // pred_check_branch
      %58 = sbr.rel (0) target = $region53
    $region52: #{decoder_forward.2} parent=1 // pred_region
      %s60 = ssub.s32 3072, 3072
      %61 = vsyncadd [#allocation5], %s60
      %s62 = sshll.u32 [#allocation4], 4
      %s63 = int_to_ptr.vmem [resolvable:$true] %s62
      %68 = dma.hbm_to_vmem [thread:$0]  %s12, 3072, %s63, [#allocation5], 192, 192, 12
    $region53: #{decoder_forward.2} parent=1 // pred_fallthru
      _
    // Predicated region
    $region54: #{decoder_forward.2} parent=1 // pred_check
      _
    $region55: #{decoder_forward.2} parent=1 // pred_check_branch
      %70 = sbr.rel (0) target = $region57
    $region56: #{decoder_forward.2} parent=1 // pred_region
      _
    $region57: #{decoder_forward.2} parent=1 // pred_fallthru
      _
    // Predicated region
    $region58: #{decoder_forward.2} parent=1 // pred_check
      _
    $region59: #{decoder_forward.2} parent=1 // pred_check_branch
      %72 = sbr.rel (0) target = $region61
    $region60: #{decoder_forward.2} parent=1 // pred_region
      %s74 = ssub.s32 3072, 3072
      %75 = vsyncadd [#allocation5], %s74
      %s76 = sshll.u32 [#allocation6], 4
      %s77 = int_to_ptr.vmem [resolvable:$true] %s76
      %82 = dma.hbm_to_vmem [thread:$0]  %s14, 3072, %s77, [#allocation5], 192, 192, 12
    $region61: #{decoder_forward.2} parent=1 // pred_fallthru
      _
    // Predicated region
    $region62: #{decoder_forward.2} parent=1 // pred_check
      _
    $region63: #{decoder_forward.2} parent=1 // pred_check_branch
      %84 = sbr.rel (0) target = $region65
    $region64: #{decoder_forward.2} parent=1 // pred_region
      _
    $region65: #{decoder_forward.2} parent=1 // pred_fallthru
      _
    // Predicated region
    $region66: #{decoder_forward.2} parent=1 // pred_check
      _
    $region67: #{decoder_forward.2} parent=1 // pred_check_branch
      %86 = sbr.rel (0) target = $region69
    $region68: #{decoder_forward.2} parent=1 // pred_region
      %87 = dma.done [#allocation3], 1536
    $region69: #{decoder_forward.2} parent=1 // pred_fallthru
      _
    // Predicated region
    $region70: #{decoder_forward.2} parent=1 // pred_check
      _
    $region71: #{decoder_forward.2} parent=1 // pred_check_branch
      %89 = sbr.rel (0) target = $region73
    $region72: #{decoder_forward.2} parent=1 // pred_region
      %90 = dma.done [#allocation5], 3072
    $region73: #{decoder_forward.2} parent=1 // pred_fallthru
      _
    // Predicated region
    $region74: #{decoder_forward.2} parent=1 // pred_check
      _
    $region75: #{decoder_forward.2} parent=1 // pred_check_branch
      %92 = sbr.rel (0) target = $region77
    $region76: #{decoder_forward.2} parent=1 // pred_region
      %93 = dma.done [#allocation5], 3072
    $region77: #{decoder_forward.2} parent=1 // pred_fallthru
      _
    %v95 = vld [vmem:[%s0] sm:$0xff]
    %v96 = vpack.c.bf16 %v95, %v95
    %v97 = vld [vmem:[%s1] sm:$0xf]
    %v98 = vld [vmem:[%s1 + $0x4] sm:$0xf]
    %v99 = vld [vmem:[%s1 + $0x8] sm:$0xf]
    %v100 = vld [vmem:[%s1 + $0xc] sm:$0xf]
    %v101 = vld [vmem:[%s2] sm:$0x1]
    %v103 = vlaneseq
    %v104 = vshrl.u32 %v103, 7
    %v105 = vsub.s32 0, %v104
    %v106 = vrot.slane %v101, %v105
    %v112 = vunpack.c.l.b16 %v97
    %v113 = vunpack.c.l.b16 %v98
    %v114 = vunpack.c.l.b16 %v99
    %v115 = vunpack.c.l.b16 %v100
    %v116 = vpack.c.b16 %v113, %v112
    %v117 = vpack.c.b16 %v115, %v114
    %vm120 = vcmask 261120
    %v122 = vsel %vm120, %v96, 0
    %124 = vmatprep.subr.bf16.mxu0 0
    %125 = vmatpush1.bf16.msra.mxu0 %v116
    %126 = vmatprep.subr.bf16.mxu0 0
    %127 = vmatpush1.bf16.msra.mxu0 %v117
    %128 = vmatprep.subr.bf16.mxu0 0
    %129 = vmatpush1.bf16.msra.mxu0 0
    %130 = vmatprep.subr.bf16.mxu0 0
    %131 = vmatpush1.bf16.msra.mxu0 0
    %132 = vmatprep.subr.bf16.mxu0 0
    %133 = vmatpush1.bf16.msra.mxu0 0
    %134 = vmatprep.subr.bf16.mxu0 0
    %135 = vmatpush1.bf16.msra.mxu0 0
    %136 = vmatprep.subr.bf16.mxu0 0
    %137 = vmatpush1.bf16.msra.mxu0 0
    %138 = vmatprep.subr.bf16.mxu0 0
    %139 = vmatpush1.bf16.msra.mxu0 0
    %140 = vmatprep.subr.bf16.mxu0 0
    %141 = vmatpush1.bf16.msra.mxu0 0
    %142 = vmatprep.subr.bf16.mxu0 0
    %143 = vmatpush1.bf16.msra.mxu0 0
    %144 = vmatprep.subr.bf16.mxu0 0
    %145 = vmatpush1.bf16.msra.mxu0 0
    %146 = vmatprep.subr.bf16.mxu0 0
    %147 = vmatpush1.bf16.msra.mxu0 0
    %148 = vmatprep.subr.bf16.mxu0 0
    %149 = vmatpush1.bf16.msra.mxu0 0
    %150 = vmatprep.subr.bf16.mxu0 0
    %151 = vmatpush1.bf16.msra.mxu0 0
    %152 = vmatprep.subr.bf16.mxu0 0
    %153 = vmatpush1.bf16.msra.mxu0 0
    %154 = vmatprep.subr.bf16.mxu0 0
    %155 = vmatpush1.bf16.msra.mxu0 0
    %156 = vmatprep.mubr.bf16.mxu0 0
    %157 = vmatmul.mubr.bf16.gmra.mrb[0].mxu0 %v122
    %v158 = vpop.f32.mrb[0].mxu0
    %v159 = vadd.f32 %v106, %v158
    %v160 = vpop.f32.mrb[0].mxu0
    %v161 = vpop.f32.mrb[0].mxu0
    %v162 = vpop.f32.mrb[0].mxu0
    %163 = vdwg.mxu0
    %v164 = vld [vmem:[%s6] sm:$0xff]
    %v165 = vld [vmem:[%s6 + $0x8] sm:$0xf]
    %v166 = vld [vmem:[%s6 + $0xc] sm:$0xff]
    %v167 = vld [vmem:[%s6 + $0x14] sm:$0xf]
    %v168 = vld [vmem:[%s6 + $0x18] sm:$0xff]
    %v169 = vld [vmem:[%s6 + $0x20] sm:$0xf]
    %v170 = vld [vmem:[%s6 + $0x24] sm:$0xff]
    %v171 = vld [vmem:[%s6 + $0x2c] sm:$0xf]
    %v172 = vld [vmem:[%s6 + $0x30] sm:$0xff]
    %v173 = vld [vmem:[%s6 + $0x38] sm:$0xf]
    %v174 = vld [vmem:[%s6 + $0x3c] sm:$0xff]
    %v175 = vld [vmem:[%s6 + $0x44] sm:$0xf]
    %v176 = vld [vmem:[%s6 + $0x48] sm:$0xff]
    %v177 = vld [vmem:[%s6 + $0x50] sm:$0xf]
    %v178 = vld [vmem:[%s6 + $0x54] sm:$0xff]
    %v179 = vld [vmem:[%s6 + $0x5c] sm:$0xf]
    %v180 = vld [vmem:[%s6 + $0x60] sm:$0xff]
    %v181 = vld [vmem:[%s6 + $0x68] sm:$0xf]
    %v182 = vld [vmem:[%s6 + $0x6c] sm:$0xff]
    %v183 = vld [vmem:[%s6 + $0x74] sm:$0xf]
    %v184 = vld [vmem:[%s6 + $0x78] sm:$0xff]
    %v185 = vld [vmem:[%s6 + $0x80] sm:$0xf]
    %v186 = vld [vmem:[%s6 + $0x84] sm:$0xff]
    %v187 = vld [vmem:[%s6 + $0x8c] sm:$0xf]
    %v188 = vld [vmem:[%s6 + $0x90] sm:$0xff]
    %v189 = vld [vmem:[%s6 + $0x98] sm:$0xf]
    %v190 = vld [vmem:[%s6 + $0x9c] sm:$0xff]
    %v191 = vld [vmem:[%s6 + $0xa4] sm:$0xf]
    %v192 = vld [vmem:[%s6 + $0xa8] sm:$0xff]
    %v193 = vld [vmem:[%s6 + $0xb0] sm:$0xf]
    %v194 = vld [vmem:[%s6 + $0xb4] sm:$0xff]
    %v195 = vld [vmem:[%s6 + $0xbc] sm:$0xf]
    %v196 = vld [vmem:[%s10] sm:$0xff]
    %v197 = vld [vmem:[%s10 + $0x8] sm:$0xf]
    %v198 = vld [vmem:[%s10 + $0xc] sm:$0xff]
    %v199 = vld [vmem:[%s10 + $0x14] sm:$0xf]
    %v200 = vld [vmem:[%s10 + $0x18] sm:$0xff]
    %v201 = vld [vmem:[%s10 + $0x20] sm:$0xf]
    %v202 = vld [vmem:[%s10 + $0x24] sm:$0xff]
    %v203 = vld [vmem:[%s10 + $0x2c] sm:$0xf]
    %v204 = vld [vmem:[%s10 + $0x30] sm:$0xff]
    %v205 = vld [vmem:[%s10 + $0x38] sm:$0xf]
    %v206 = vld [vmem:[%s10 + $0x3c] sm:$0xff]
    %v207 = vld [vmem:[%s10 + $0x44] sm:$0xf]
    %v208 = vld [vmem:[%s10 + $0x48] sm:$0xff]
    %v209 = vld [vmem:[%s10 + $0x50] sm:$0xf]
    %v210 = vld [vmem:[%s10 + $0x54] sm:$0xff]
    %v211 = vld [vmem:[%s10 + $0x5c] sm:$0xf]
    %v212 = vld [vmem:[%s10 + $0x60] sm:$0xff]
    %v213 = vld [vmem:[%s10 + $0x68] sm:$0xf]
    %v214 = vld [vmem:[%s10 + $0x6c] sm:$0xff]
    %v215 = vld [vmem:[%s10 + $0x74] sm:$0xf]
    %v216 = vld [vmem:[%s10 + $0x78] sm:$0xff]
    %v217 = vld [vmem:[%s10 + $0x80] sm:$0xf]
    %v218 = vld [vmem:[%s10 + $0x84] sm:$0xff]
    %v219 = vld [vmem:[%s10 + $0x8c] sm:$0xf]
    %v220 = vld [vmem:[%s10 + $0x90] sm:$0xff]
    %v221 = vld [vmem:[%s10 + $0x98] sm:$0xf]
    %v222 = vld [vmem:[%s10 + $0x9c] sm:$0xff]
    %v223 = vld [vmem:[%s10 + $0xa4] sm:$0xf]
    %v224 = vld [vmem:[%s10 + $0xa8] sm:$0xff]
    %v225 = vld [vmem:[%s10 + $0xb0] sm:$0xf]
    %v226 = vld [vmem:[%s10 + $0xb4] sm:$0xff]
    %v227 = vld [vmem:[%s10 + $0xbc] sm:$0xf]
    %v228 = vld [vmem:[#allocation6] sm:$0xff]
    %v229 = vld [vmem:[#allocation6 + $0x8] sm:$0xf]
    %v230 = vld [vmem:[#allocation6 + $0xc] sm:$0xff]
    %v231 = vld [vmem:[#allocation6 + $0x14] sm:$0xf]
    %v232 = vld [vmem:[#allocation6 + $0x18] sm:$0xff]
    %v233 = vld [vmem:[#allocation6 + $0x20] sm:$0xf]
    %v234 = vld [vmem:[#allocation6 + $0x24] sm:$0xff]
    %v235 = vld [vmem:[#allocation6 + $0x2c] sm:$0xf]
    %v236 = vld [vmem:[#allocation6 + $0x30] sm:$0xff]
    %v237 = vld [vmem:[#allocation6 + $0x38] sm:$0xf]
    %v238 = vld [vmem:[#allocation6 + $0x3c] sm:$0xff]
    %v239 = vld [vmem:[#allocation6 + $0x44] sm:$0xf]
    %v240 = vld [vmem:[#allocation6 + $0x48] sm:$0xff]
    %v241 = vld [vmem:[#allocation6 + $0x50] sm:$0xf]
    %v242 = vld [vmem:[#allocation6 + $0x54] sm:$0xff]
    %v243 = vld [vmem:[#allocation6 + $0x5c] sm:$0xf]
    %v244 = vld [vmem:[#allocation6 + $0x60] sm:$0xff]
    %v245 = vld [vmem:[#allocation6 + $0x68] sm:$0xf]
    %v246 = vld [vmem:[#allocation6 + $0x6c] sm:$0xff]
    %v247 = vld [vmem:[#allocation6 + $0x74] sm:$0xf]
    %v248 = vld [vmem:[#allocation6 + $0x78] sm:$0xff]
    %v249 = vld [vmem:[#allocation6 + $0x80] sm:$0xf]
    %v250 = vld [vmem:[#allocation6 + $0x84] sm:$0xff]
    %v251 = vld [vmem:[#allocation6 + $0x8c] sm:$0xf]
    %v252 = vld [vmem:[#allocation6 + $0x90] sm:$0xff]
    %v253 = vld [vmem:[#allocation6 + $0x98] sm:$0xf]
    %v254 = vld [vmem:[#allocation6 + $0x9c] sm:$0xff]
    %v255 = vld [vmem:[#allocation6 + $0xa4] sm:$0xf]
    %v256 = vld [vmem:[#allocation6 + $0xa8] sm:$0xff]
    %v257 = vld [vmem:[#allocation6 + $0xb0] sm:$0xf]
    %v258 = vld [vmem:[#allocation6 + $0xb4] sm:$0xff]
    %v259 = vld [vmem:[#allocation6 + $0xbc] sm:$0xf]
    %v260 = vld [vmem:[%s8] sm:$0xff]
    %v261 = vld [vmem:[%s8 + $0x8] sm:$0xf]
    %v262 = vld [vmem:[%s8 + $0xc] sm:$0xff]
    %v263 = vld [vmem:[%s8 + $0x14] sm:$0xf]
    %v264 = vld [vmem:[%s8 + $0x18] sm:$0xff]
    %v265 = vld [vmem:[%s8 + $0x20] sm:$0xf]
    %v266 = vld [vmem:[%s8 + $0x24] sm:$0xff]
    %v267 = vld [vmem:[%s8 + $0x2c] sm:$0xf]
    %v268 = vld [vmem:[%s8 + $0x30] sm:$0xff]
    %v269 = vld [vmem:[%s8 + $0x38] sm:$0xf]
    %v270 = vld [vmem:[%s8 + $0x3c] sm:$0xff]
    %v271 = vld [vmem:[%s8 + $0x44] sm:$0xf]
    %v272 = vld [vmem:[%s8 + $0x48] sm:$0xff]
    %v273 = vld [vmem:[%s8 + $0x50] sm:$0xf]
    %v274 = vld [vmem:[%s8 + $0x54] sm:$0xff]
    %v275 = vld [vmem:[%s8 + $0x5c] sm:$0xf]
    %v276 = vld [vmem:[%s8 + $0x60] sm:$0xff]
    %v277 = vld [vmem:[%s8 + $0x68] sm:$0xf]
    %v278 = vld [vmem:[%s8 + $0x6c] sm:$0xff]
    %v279 = vld [vmem:[%s8 + $0x74] sm:$0xf]
    %v280 = vld [vmem:[%s8 + $0x78] sm:$0xff]
    %v281 = vld [vmem:[%s8 + $0x80] sm:$0xf]
    %v282 = vld [vmem:[%s8 + $0x84] sm:$0xff]
    %v283 = vld [vmem:[%s8 + $0x8c] sm:$0xf]
    %v284 = vld [vmem:[%s8 + $0x90] sm:$0xff]
    %v285 = vld [vmem:[%s8 + $0x98] sm:$0xf]
    %v286 = vld [vmem:[%s8 + $0x9c] sm:$0xff]
    %v287 = vld [vmem:[%s8 + $0xa4] sm:$0xf]
    %v288 = vld [vmem:[%s8 + $0xa8] sm:$0xff]
    %v289 = vld [vmem:[%s8 + $0xb0] sm:$0xf]
    %v290 = vld [vmem:[%s8 + $0xb4] sm:$0xff]
    %v291 = vld [vmem:[%s8 + $0xbc] sm:$0xf]
    %v292 = vld [vmem:[#allocation4] sm:$0xff]
    %v293 = vld [vmem:[#allocation4 + $0x8] sm:$0xf]
    %v294 = vld [vmem:[#allocation4 + $0xc] sm:$0xff]
    %v295 = vld [vmem:[#allocation4 + $0x14] sm:$0xf]
    %v296 = vld [vmem:[#allocation4 + $0x18] sm:$0xff]
    %v297 = vld [vmem:[#allocation4 + $0x20] sm:$0xf]
    %v298 = vld [vmem:[#allocation4 + $0x24] sm:$0xff]
    %v299 = vld [vmem:[#allocation4 + $0x2c] sm:$0xf]
    %v300 = vld [vmem:[#allocation4 + $0x30] sm:$0xff]
    %v301 = vld [vmem:[#allocation4 + $0x38] sm:$0xf]
    %v302 = vld [vmem:[#allocation4 + $0x3c] sm:$0xff]
    %v303 = vld [vmem:[#allocation4 + $0x44] sm:$0xf]
    %v304 = vld [vmem:[#allocation4 + $0x48] sm:$0xff]
    %v305 = vld [vmem:[#allocation4 + $0x50] sm:$0xf]
    %v306 = vld [vmem:[#allocation4 + $0x54] sm:$0xff]
    %v307 = vld [vmem:[#allocation4 + $0x5c] sm:$0xf]
    %v308 = vld [vmem:[#allocation4 + $0x60] sm:$0xff]
    %v309 = vld [vmem:[#allocation4 + $0x68] sm:$0xf]
    %v310 = vld [vmem:[#allocation4 + $0x6c] sm:$0xff]
    %v311 = vld [vmem:[#allocation4 + $0x74] sm:$0xf]
    %v312 = vld [vmem:[#allocation4 + $0x78] sm:$0xff]
    %v313 = vld [vmem:[#allocation4 + $0x80] sm:$0xf]
    %v314 = vld [vmem:[#allocation4 + $0x84] sm:$0xff]
    %v315 = vld [vmem:[#allocation4 + $0x8c] sm:$0xf]
    %v316 = vld [vmem:[#allocation4 + $0x90] sm:$0xff]
    %v317 = vld [vmem:[#allocation4 + $0x98] sm:$0xf]
    %v318 = vld [vmem:[#allocation4 + $0x9c] sm:$0xff]
    %v319 = vld [vmem:[#allocation4 + $0xa4] sm:$0xf]
    %v320 = vld [vmem:[#allocation4 + $0xa8] sm:$0xff]
    %v321 = vld [vmem:[#allocation4 + $0xb0] sm:$0xf]
    %v322 = vld [vmem:[#allocation4 + $0xb4] sm:$0xff]
    %v323 = vld [vmem:[#allocation4 + $0xbc] sm:$0xf]
    %v324 = vld [vmem:[%s7] sm:$0x7]
    %v326 = vlaneseq
    %v327 = vshrl.u32 %v326, 7
    %v328 = vsub.s32 0, %v327
    %v329 = vrot.slane %v324, %v328
    %v330 = vlaneseq
    %v331 = vshrl.u32 %v330, 7
    %v332 = vsub.s32 1, %v331
    %v333 = vrot.slane %v324, %v332
    %v334 = vlaneseq
    %v335 = vshrl.u32 %v334, 7
    %v336 = vsub.s32 2, %v335
    %v337 = vrot.slane %v324, %v336
    %v341 = vld [vmem:[%s11] sm:$0x7]
    %v343 = vlaneseq
    %v344 = vshrl.u32 %v343, 7
    %v345 = vsub.s32 0, %v344
    %v346 = vrot.slane %v341, %v345
    %v347 = vlaneseq
    %v348 = vshrl.u32 %v347, 7
    %v349 = vsub.s32 1, %v348
    %v350 = vrot.slane %v341, %v349
    %v351 = vlaneseq
    %v352 = vshrl.u32 %v351, 7
    %v353 = vsub.s32 2, %v352
    %v354 = vrot.slane %v341, %v353
    %v358 = vld [vmem:[%s15] sm:$0x7]
    %v360 = vlaneseq
    %v361 = vshrl.u32 %v360, 7
    %v362 = vsub.s32 0, %v361
    %v363 = vrot.slane %v358, %v362
    %v364 = vlaneseq
    %v365 = vshrl.u32 %v364, 7
    %v366 = vsub.s32 1, %v365
    %v367 = vrot.slane %v358, %v366
    %v368 = vlaneseq
    %v369 = vshrl.u32 %v368, 7
    %v370 = vsub.s32 2, %v369
    %v371 = vrot.slane %v358, %v370
    %v375 = vld [vmem:[%s9] sm:$0x7]
    %v377 = vlaneseq
    %v378 = vshrl.u32 %v377, 7
    %v379 = vsub.s32 0, %v378
    %v380 = vrot.slane %v375, %v379
    %v381 = vlaneseq
    %v382 = vshrl.u32 %v381, 7
    %v383 = vsub.s32 1, %v382
    %v384 = vrot.slane %v375, %v383
    %v385 = vlaneseq
    %v386 = vshrl.u32 %v385, 7
    %v387 = vsub.s32 2, %v386
    %v388 = vrot.slane %v375, %v387
    %v392 = vld [vmem:[%s13] sm:$0x7]
    %v394 = vlaneseq
    %v395 = vshrl.u32 %v394, 7
    %v396 = vsub.s32 0, %v395
    %v397 = vrot.slane %v392, %v396
    %v398 = vlaneseq
    %v399 = vshrl.u32 %v398, 7
    %v400 = vsub.s32 1, %v399
    %v401 = vrot.slane %v392, %v400
    %v402 = vlaneseq
    %v403 = vshrl.u32 %v402, 7
    %v404 = vsub.s32 2, %v403
    %v405 = vrot.slane %v392, %v404
    %v409 = vld [vmem:[%s3] sm:$0xf]
    %v410 = vld [vmem:[%s3 + $0x4] sm:$0xf]
    %v411 = vld [vmem:[%s3 + $0x8] sm:$0xf]
    %v412 = vld [vmem:[%s3 + $0xc] sm:$0xf]
    %v413 = vld [vmem:[%s3 + $0x10] sm:$0xf]
    %v414 = vld [vmem:[%s3 + $0x14] sm:$0xf]
    %v415 = vld [vmem:[%s3 + $0x18] sm:$0xf]
    %v416 = vld [vmem:[#allocation2] sm:$0xff]
    %v417 = vld [vmem:[#allocation2 + $0x8] sm:$0xf]
    %v418 = vld [vmem:[#allocation2 + $0xc] sm:$0xff]
    %v419 = vld [vmem:[#allocation2 + $0x14] sm:$0xf]
    %v420 = vld [vmem:[#allocation2 + $0x18] sm:$0xff]
    %v421 = vld [vmem:[#allocation2 + $0x20] sm:$0xf]
    %v422 = vld [vmem:[#allocation2 + $0x24] sm:$0xff]
    %v423 = vld [vmem:[#allocation2 + $0x2c] sm:$0xf]
    %v424 = vld [vmem:[#allocation2 + $0x30] sm:$0xff]
    %v425 = vld [vmem:[#allocation2 + $0x38] sm:$0xf]
    %v426 = vld [vmem:[#allocation2 + $0x3c] sm:$0xff]
    %v427 = vld [vmem:[#allocation2 + $0x44] sm:$0xf]
    %v428 = vld [vmem:[#allocation2 + $0x48] sm:$0xff]
    %v429 = vld [vmem:[#allocation2 + $0x50] sm:$0xf]
    %v430 = vld [vmem:[#allocation2 + $0x54] sm:$0xff]
    %v431 = vld [vmem:[#allocation2 + $0x5c] sm:$0xf]
    %v432 = vld [vmem:[%s5] sm:$0x7]
    %v434 = vlaneseq
    %v435 = vshrl.u32 %v434, 7
    %v436 = vsub.s32 0, %v435
    %v437 = vrot.slane %v432, %v436
    %v438 = vlaneseq
    %v439 = vshrl.u32 %v438, 7
    %v440 = vsub.s32 1, %v439
    %v441 = vrot.slane %v432, %v440
    %v442 = vlaneseq
    %v443 = vshrl.u32 %v442, 7
    %v444 = vsub.s32 2, %v443
    %v445 = vrot.slane %v432, %v444
    %v456 = vunpack.c.l.b16 %v409
    %v457 = vunpack.c.l.b16 %v410
    %v458 = vunpack.c.l.b16 %v411
    %v459 = vunpack.c.l.b16 %v412
    %v460 = vunpack.c.l.b16 %v413
    %v461 = vunpack.c.l.b16 %v414
    %v462 = vunpack.c.l.b16 %v415
    %v463 = vpack.c.b16 %v457, %v456
    %v464 = vpack.c.b16 %v459, %v458
    %v465 = vpack.c.b16 %v461, %v460
    %v466 = vpack.c.b16 %v462, %v462
    %v483 = vunpack.c.l.b16 %v416
    %v484 = vunpack.c.h.b16 %v416
    %v485 = vunpack.c.l.b16 %v417
    %v486 = vunpack.c.l.b16 %v418
    %v487 = vunpack.c.h.b16 %v418
    %v488 = vunpack.c.l.b16 %v419
    %v489 = vunpack.c.l.b16 %v420
    %v490 = vunpack.c.h.b16 %v420
    %v491 = vunpack.c.l.b16 %v421
    %v492 = vunpack.c.l.b16 %v422
    %v493 = vunpack.c.h.b16 %v422
    %v494 = vunpack.c.l.b16 %v423
    %v495 = vunpack.c.l.b16 %v424
    %v496 = vunpack.c.h.b16 %v424
    %v497 = vunpack.c.l.b16 %v425
    %v498 = vunpack.c.l.b16 %v426
    %v499 = vunpack.c.h.b16 %v426
    %v500 = vunpack.c.l.b16 %v427
    %v501 = vunpack.c.l.b16 %v428
    %v502 = vunpack.c.h.b16 %v428
    %v503 = vunpack.c.l.b16 %v429
    %v504 = vunpack.c.l.b16 %v430
    %v505 = vunpack.c.h.b16 %v430
    %v506 = vunpack.c.l.b16 %v431
    %v507 = vpack.c.b16 %v486, %v483
    %v508 = vpack.c.b16 %v487, %v484
    %v509 = vpack.c.b16 %v488, %v485
    %v510 = vpack.c.b16 %v492, %v489
    %v511 = vpack.c.b16 %v493, %v490
    %v512 = vpack.c.b16 %v494, %v491
    %v513 = vpack.c.b16 %v498, %v495
    %v514 = vpack.c.b16 %v499, %v496
    %v515 = vpack.c.b16 %v500, %v497
    %v516 = vpack.c.b16 %v504, %v501
    %v517 = vpack.c.b16 %v505, %v502
    %v518 = vpack.c.b16 %v506, %v503
    %vm531 = vcmask 523264
    %v533 = vsel %vm531, %v463, 0
    %v536 = vsel %vm531, %v464, 0
    %v539 = vsel %vm531, %v465, 0
    %v542 = vsel %vm531, %v466, 0
    %544 = vmatprep.subr.bf16.mxu0 %v508
    %545 = vmatpush1.bf16.msra.mxu0 %v507
    %546 = vmatprep.subr.bf16.mxu0 %v511
    %547 = vmatpush1.bf16.msra.mxu0 %v510
    %548 = vmatprep.subr.bf16.mxu0 %v514
    %549 = vmatpush1.bf16.msra.mxu0 %v513
    %550 = vmatprep.subr.bf16.mxu0 %v517
    %551 = vmatpush1.bf16.msra.mxu0 %v516
    %552 = vmatprep.subr.bf16.mxu0 0
    %553 = vmatpush1.bf16.msra.mxu0 0
    %554 = vmatprep.subr.bf16.mxu0 0
    %555 = vmatpush1.bf16.msra.mxu0 0
    %556 = vmatprep.subr.bf16.mxu0 0
    %557 = vmatpush1.bf16.msra.mxu0 0
    %558 = vmatprep.subr.bf16.mxu0 0
    %559 = vmatpush1.bf16.msra.mxu0 0
    %560 = vmatprep.subr.bf16.mxu0 0
    %561 = vmatpush1.bf16.msra.mxu0 0
    %562 = vmatprep.subr.bf16.mxu0 0
    %563 = vmatpush1.bf16.msra.mxu0 0
    %564 = vmatprep.subr.bf16.mxu0 0
    %565 = vmatpush1.bf16.msra.mxu0 0
    %566 = vmatprep.subr.bf16.mxu0 0
    %567 = vmatpush1.bf16.msra.mxu0 0
    %568 = vmatprep.subr.bf16.mxu0 0
    %569 = vmatpush1.bf16.msra.mxu0 0
    %570 = vmatprep.subr.bf16.mxu0 0
    %571 = vmatpush1.bf16.msra.mxu0 0
    %572 = vmatprep.subr.bf16.mxu0 0
    %573 = vmatpush1.bf16.msra.mxu0 0
    %574 = vmatprep.subr.bf16.mxu0 0
    %575 = vmatpush1.bf16.msra.mxu0 0
    %576 = vmatprep.mubr.bf16.mxu0 0
    %577 = vmatmul.mubr.bf16.gmra.mrb[0].mxu0 %v533
    %v578 = vpop.f32.mrb[0].mxu0
    %v579 = vadd.f32 %v437, %v578
    %v580 = vpop.f32.mrb[0].mxu0
    %v581 = vadd.f32 %v441, %v580
    %v582 = vpop.f32.mrb[0].mxu0
    %v583 = vadd.f32 %v437, %v582
    %v584 = vpop.f32.mrb[0].mxu0
    %v585 = vadd.f32 %v441, %v584
    %586 = vmatprep.mubr.bf16.mxu0 0
    %587 = vmatmul.mubr.bf16.gmra.mrb[0].mxu0 %v536
    %v588 = vpop.f32.mrb[0].mxu0
    %v589 = vadd.f32 %v437, %v588
    %v590 = vpop.f32.mrb[0].mxu0
    %v591 = vadd.f32 %v441, %v590
    %v592 = vpop.f32.mrb[0].mxu0
    %v593 = vadd.f32 %v437, %v592
    %v594 = vpop.f32.mrb[0].mxu0
    %v595 = vadd.f32 %v441, %v594
    %596 = vmatprep.mubr.bf16.mxu0 0
    %597 = vmatmul.mubr.bf16.gmra.mrb[0].mxu0 %v539
    %v598 = vpop.f32.mrb[0].mxu0
    %v599 = vadd.f32 %v437, %v598
    %v600 = vpop.f32.mrb[0].mxu0
    %v601 = vadd.f32 %v441, %v600
    %v602 = vpop.f32.mrb[0].mxu0
    %v603 = vadd.f32 %v437, %v602
    %v604 = vpop.f32.mrb[0].mxu0
    %v605 = vadd.f32 %v441, %v604
    %606 = vmatprep.mubr.bf16.mxu0 0
    %607 = vmatmul.mubr.bf16.gmra.mrb[0].mxu0 %v542
    %v608 = vpop.f32.mrb[0].mxu0
    %v609 = vadd.f32 %v437, %v608
    %v610 = vpop.f32.mrb[0].mxu0
    %v611 = vadd.f32 %v441, %v610
    %v612 = vpop.f32.mrb[0].mxu0
    %v613 = vpop.f32.mrb[0].mxu0
    %614 = vdwg.mxu0
    %615 = vmatprep.subr.bf16.mxu0 0
    %616 = vmatpush1.bf16.msra.mxu0 %v509
    %617 = vmatprep.subr.bf16.mxu0 0
    %618 = vmatpush1.bf16.msra.mxu0 %v512
    %619 = vmatprep.subr.bf16.mxu0 0
    %620 = vmatpush1.bf16.msra.mxu0 %v515
    %621 = vmatprep.subr.bf16.mxu0 0
    %622 = vmatpush1.bf16.msra.mxu0 %v518
    %623 = vmatprep.subr.bf16.mxu0 0
    %624 = vmatpush1.bf16.msra.mxu0 0
    %625 = vmatprep.subr.bf16.mxu0 0
    %626 = vmatpush1.bf16.msra.mxu0 0
    %627 = vmatprep.subr.bf16.mxu0 0
    %628 = vmatpush1.bf16.msra.mxu0 0
    %629 = vmatprep.subr.bf16.mxu0 0
    %630 = vmatpush1.bf16.msra.mxu0 0
    %631 = vmatprep.subr.bf16.mxu0 0
    %632 = vmatpush1.bf16.msra.mxu0 0
    %633 = vmatprep.subr.bf16.mxu0 0
    %634 = vmatpush1.bf16.msra.mxu0 0
    %635 = vmatprep.subr.bf16.mxu0 0
    %636 = vmatpush1.bf16.msra.mxu0 0
    %637 = vmatprep.subr.bf16.mxu0 0
    %638 = vmatpush1.bf16.msra.mxu0 0
    %639 = vmatprep.subr.bf16.mxu0 0
    %640 = vmatpush1.bf16.msra.mxu0 0
    %641 = vmatprep.subr.bf16.mxu0 0
    %642 = vmatpush1.bf16.msra.mxu0 0
    %643 = vmatprep.subr.bf16.mxu0 0
    %644 = vmatpush1.bf16.msra.mxu0 0
    %645 = vmatprep.subr.bf16.mxu0 0
    %646 = vmatpush1.bf16.msra.mxu0 0
    %647 = vmatprep.mubr.bf16.mxu0 0
    %648 = vmatmul.mubr.bf16.gmra.mrb[0].mxu0 %v533
    %v649 = vpop.f32.mrb[0].mxu0
    %v650 = vadd.f32 %v445, %v649
    %v651 = vpop.f32.mrb[0].mxu0
    %v652 = vpop.f32.mrb[0].mxu0
    %v653 = vadd.f32 %v445, %v652
    %v654 = vpop.f32.mrb[0].mxu0
    %655 = vmatprep.mubr.bf16.mxu0 0
    %656 = vmatmul.mubr.bf16.gmra.mrb[0].mxu0 %v536
    %v657 = vpop.f32.mrb[0].mxu0
    %v658 = vadd.f32 %v445, %v657
    %v659 = vpop.f32.mrb[0].mxu0
    %v660 = vpop.f32.mrb[0].mxu0
    %v661 = vadd.f32 %v445, %v660
    %v662 = vpop.f32.mrb[0].mxu0
    %663 = vmatprep.mubr.bf16.mxu0 0
    %664 = vmatmul.mubr.bf16.gmra.mrb[0].mxu0 %v539
    %v665 = vpop.f32.mrb[0].mxu0
    %v666 = vadd.f32 %v445, %v665
    %v667 = vpop.f32.mrb[0].mxu0
    %v668 = vpop.f32.mrb[0].mxu0
    %v669 = vadd.f32 %v445, %v668
    %v670 = vpop.f32.mrb[0].mxu0
    %671 = vmatprep.mubr.bf16.mxu0 0
    %672 = vmatmul.mubr.bf16.gmra.mrb[0].mxu0 %v542
    %v673 = vpop.f32.mrb[0].mxu0
    %v674 = vadd.f32 %v445, %v673
    %v675 = vpop.f32.mrb[0].mxu0
    %v676 = vpop.f32.mrb[0].mxu0
    %v677 = vpop.f32.mrb[0].mxu0
    %678 = vdwg.mxu0
    %v679 = vpack.c.bf16 %v159, %v159
    %v712 = vunpack.c.l.b16 %v164
    %v713 = vunpack.c.h.b16 %v164
    %v714 = vunpack.c.l.b16 %v165
    %v715 = vunpack.c.l.b16 %v166
    %v716 = vunpack.c.h.b16 %v166
    %v717 = vunpack.c.l.b16 %v167
    %v718 = vunpack.c.l.b16 %v168
    %v719 = vunpack.c.h.b16 %v168
    %v720 = vunpack.c.l.b16 %v169
    %v721 = vunpack.c.l.b16 %v170
    %v722 = vunpack.c.h.b16 %v170
    %v723 = vunpack.c.l.b16 %v171
    %v724 = vunpack.c.l.b16 %v172
    %v725 = vunpack.c.h.b16 %v172
    %v726 = vunpack.c.l.b16 %v173
    %v727 = vunpack.c.l.b16 %v174
    %v728 = vunpack.c.h.b16 %v174
    %v729 = vunpack.c.l.b16 %v175
    %v730 = vunpack.c.l.b16 %v176
    %v731 = vunpack.c.h.b16 %v176
    %v732 = vunpack.c.l.b16 %v177
    %v733 = vunpack.c.l.b16 %v178
    %v734 = vunpack.c.h.b16 %v178
    %v735 = vunpack.c.l.b16 %v179
    %v736 = vunpack.c.l.b16 %v180
    %v737 = vunpack.c.h.b16 %v180
    %v738 = vunpack.c.l.b16 %v181
    %v739 = vunpack.c.l.b16 %v182
    %v740 = vunpack.c.h.b16 %v182
    %v741 = vunpack.c.l.b16 %v183
    %v742 = vunpack.c.l.b16 %v184
    %v743 = vunpack.c.h.b16 %v184
    %v744 = vunpack.c.l.b16 %v185
    %v745 = vunpack.c.l.b16 %v186
    %v746 = vunpack.c.h.b16 %v186
    %v747 = vunpack.c.l.b16 %v187
    %v748 = vunpack.c.l.b16 %v188
    %v749 = vunpack.c.h.b16 %v188
    %v750 = vunpack.c.l.b16 %v189
    %v751 = vunpack.c.l.b16 %v190
    %v752 = vunpack.c.h.b16 %v190
    %v753 = vunpack.c.l.b16 %v191
    %v754 = vunpack.c.l.b16 %v192
    %v755 = vunpack.c.h.b16 %v192
    %v756 = vunpack.c.l.b16 %v193
    %v757 = vunpack.c.l.b16 %v194
    %v758 = vunpack.c.h.b16 %v194
    %v759 = vunpack.c.l.b16 %v195
    %v760 = vpack.c.b16 %v715, %v712
    %v761 = vpack.c.b16 %v716, %v713
    %v762 = vpack.c.b16 %v717, %v714
    %v763 = vpack.c.b16 %v721, %v718
    %v764 = vpack.c.b16 %v722, %v719
    %v765 = vpack.c.b16 %v723, %v720
    %v766 = vpack.c.b16 %v727, %v724
    %v767 = vpack.c.b16 %v728, %v725
    %v768 = vpack.c.b16 %v729, %v726
    %v769 = vpack.c.b16 %v733, %v730
    %v770 = vpack.c.b16 %v734, %v731
    %v771 = vpack.c.b16 %v735, %v732
    %v772 = vpack.c.b16 %v739, %v736
    %v773 = vpack.c.b16 %v740, %v737
    %v774 = vpack.c.b16 %v741, %v738
    %v775 = vpack.c.b16 %v745, %v742
    %v776 = vpack.c.b16 %v746, %v743
    %v777 = vpack.c.b16 %v747, %v744
    %v778 = vpack.c.b16 %v751, %v748
    %v779 = vpack.c.b16 %v752, %v749
    %v780 = vpack.c.b16 %v753, %v750
    %v781 = vpack.c.b16 %v757, %v754
    %v782 = vpack.c.b16 %v758, %v755
    %v783 = vpack.c.b16 %v759, %v756
    %808 = vmatprep.subr.bf16.mxu0 %v761
    %809 = vmatpush1.bf16.msra.mxu0 %v760
    %810 = vmatprep.subr.bf16.mxu0 %v764
    %811 = vmatpush1.bf16.msra.mxu0 %v763
    %812 = vmatprep.subr.bf16.mxu0 %v767
    %813 = vmatpush1.bf16.msra.mxu0 %v766
    %814 = vmatprep.subr.bf16.mxu0 %v770
    %815 = vmatpush1.bf16.msra.mxu0 %v769
    %816 = vmatprep.subr.bf16.mxu0 %v773
    %817 = vmatpush1.bf16.msra.mxu0 %v772
    %818 = vmatprep.subr.bf16.mxu0 %v776
    %819 = vmatpush1.bf16.msra.mxu0 %v775
    %820 = vmatprep.subr.bf16.mxu0 %v779
    %821 = vmatpush1.bf16.msra.mxu0 %v778
    %822 = vmatprep.subr.bf16.mxu0 %v782
    %823 = vmatpush1.bf16.msra.mxu0 %v781
    %824 = vmatprep.subr.bf16.mxu0 0
    %825 = vmatpush1.bf16.msra.mxu0 0
    %826 = vmatprep.subr.bf16.mxu0 0
    %827 = vmatpush1.bf16.msra.mxu0 0
    %828 = vmatprep.subr.bf16.mxu0 0
    %829 = vmatpush1.bf16.msra.mxu0 0
    %830 = vmatprep.subr.bf16.mxu0 0
    %831 = vmatpush1.bf16.msra.mxu0 0
    %832 = vmatprep.subr.bf16.mxu0 0
    %833 = vmatpush1.bf16.msra.mxu0 0
    %834 = vmatprep.subr.bf16.mxu0 0
    %835 = vmatpush1.bf16.msra.mxu0 0
    %836 = vmatprep.subr.bf16.mxu0 0
    %837 = vmatpush1.bf16.msra.mxu0 0
    %838 = vmatprep.subr.bf16.mxu0 0
    %839 = vmatpush1.bf16.msra.mxu0 0
    %840 = vmatprep.mubr.bf16.mxu0 0
    %841 = vmatmul.mubr.bf16.gmra.mrb[0].mxu0 %v679
    %v842 = vpop.f32.mrb[0].mxu0
    %v843 = vadd.f32 %v329, %v842
    %v844 = vpop.f32.mrb[0].mxu0
    %v845 = vadd.f32 %v333, %v844
    %v846 = vpop.f32.mrb[0].mxu0
    %v847 = vpop.f32.mrb[0].mxu0
    %848 = vdwg.mxu0
    %849 = vmatprep.subr.bf16.mxu0 0
    %850 = vmatpush1.bf16.msra.mxu0 %v762
    %851 = vmatprep.subr.bf16.mxu0 0
    %852 = vmatpush1.bf16.msra.mxu0 %v765
    %853 = vmatprep.subr.bf16.mxu0 0
    %854 = vmatpush1.bf16.msra.mxu0 %v768
    %855 = vmatprep.subr.bf16.mxu0 0
    %856 = vmatpush1.bf16.msra.mxu0 %v771
    %857 = vmatprep.subr.bf16.mxu0 0
    %858 = vmatpush1.bf16.msra.mxu0 %v774
    %859 = vmatprep.subr.bf16.mxu0 0
    %860 = vmatpush1.bf16.msra.mxu0 %v777
    %861 = vmatprep.subr.bf16.mxu0 0
    %862 = vmatpush1.bf16.msra.mxu0 %v780
    %863 = vmatprep.subr.bf16.mxu0 0
    %864 = vmatpush1.bf16.msra.mxu0 %v783
    %865 = vmatprep.subr.bf16.mxu0 0
    %866 = vmatpush1.bf16.msra.mxu0 0
    %867 = vmatprep.subr.bf16.mxu0 0
    %868 = vmatpush1.bf16.msra.mxu0 0
    %869 = vmatprep.subr.bf16.mxu0 0
    %870 = vmatpush1.bf16.msra.mxu0 0
    %871 = vmatprep.subr.bf16.mxu0 0
    %872 = vmatpush1.bf16.msra.mxu0 0
    %873 = vmatprep.subr.bf16.mxu0 0
    %874 = vmatpush1.bf16.msra.mxu0 0
    %875 = vmatprep.subr.bf16.mxu0 0
    %876 = vmatpush1.bf16.msra.mxu0 0
    %877 = vmatprep.subr.bf16.mxu0 0
    %878 = vmatpush1.bf16.msra.mxu0 0
    %879 = vmatprep.subr.bf16.mxu0 0
    %880 = vmatpush1.bf16.msra.mxu0 0
    %881 = vmatprep.mubr.bf16.mxu0 0
    %882 = vmatmul.mubr.bf16.gmra.mrb[0].mxu0 %v679
    %v883 = vpop.f32.mrb[0].mxu0
    %v884 = vadd.f32 %v337, %v883
    %v885 = vpop.f32.mrb[0].mxu0
    %v886 = vpop.f32.mrb[0].mxu0
    %v887 = vpop.f32.mrb[0].mxu0
    %888 = vdwg.mxu0
    %v889 = vadd.f32 %v579, %v843
    %v890 = vxor.u32 %v889, 2147483648
    %v891 = vmul.f32 %v890, 1.442695
    %v892 = vpow.pop %v891
    %v893 = vadd.f32 %v892, 1.0
    %v894 = vrcp.pop %v893
    %v895 = vmul.f32 1.0, %v894
    %v896 = vadd.f32 %v581, %v845
    %v897 = vxor.u32 %v896, 2147483648
    %v898 = vmul.f32 %v897, 1.442695
    %v899 = vpow.pop %v898
    %v900 = vadd.f32 %v899, 1.0
    %v901 = vrcp.pop %v900
    %v902 = vmul.f32 1.0, %v901
    %v903 = vmul.f32 %v895, %v884
    %v904 = vadd.f32 %v650, %v903
    %v905 = vtanh.pop %v904
    %v906 = vsub.f32 1.0, %v902
    %v907 = vmul.f32 %v906, %v905
    %v908 = vmul.f32 %v902, %v159
    %v909 = vadd.f32 %v907, %v908
    %v910 = vpack.c.bf16 %v909, %v909
    %v943 = vunpack.c.l.b16 %v260
    %v944 = vunpack.c.h.b16 %v260
    %v945 = vunpack.c.l.b16 %v261
    %v946 = vunpack.c.l.b16 %v262
    %v947 = vunpack.c.h.b16 %v262
    %v948 = vunpack.c.l.b16 %v263
    %v949 = vunpack.c.l.b16 %v264
    %v950 = vunpack.c.h.b16 %v264
    %v951 = vunpack.c.l.b16 %v265
    %v952 = vunpack.c.l.b16 %v266
    %v953 = vunpack.c.h.b16 %v266
    %v954 = vunpack.c.l.b16 %v267
    %v955 = vunpack.c.l.b16 %v268
    %v956 = vunpack.c.h.b16 %v268
    %v957 = vunpack.c.l.b16 %v269
    %v958 = vunpack.c.l.b16 %v270
    %v959 = vunpack.c.h.b16 %v270
    %v960 = vunpack.c.l.b16 %v271
    %v961 = vunpack.c.l.b16 %v272
    %v962 = vunpack.c.h.b16 %v272
    %v963 = vunpack.c.l.b16 %v273
    %v964 = vunpack.c.l.b16 %v274
    %v965 = vunpack.c.h.b16 %v274
    %v966 = vunpack.c.l.b16 %v275
    %v967 = vunpack.c.l.b16 %v276
    %v968 = vunpack.c.h.b16 %v276
    %v969 = vunpack.c.l.b16 %v277
    %v970 = vunpack.c.l.b16 %v278
    %v971 = vunpack.c.h.b16 %v278
    %v972 = vunpack.c.l.b16 %v279
    %v973 = vunpack.c.l.b16 %v280
    %v974 = vunpack.c.h.b16 %v280
    %v975 = vunpack.c.l.b16 %v281
    %v976 = vunpack.c.l.b16 %v282
    %v977 = vunpack.c.h.b16 %v282
    %v978 = vunpack.c.l.b16 %v283
    %v979 = vunpack.c.l.b16 %v284
    %v980 = vunpack.c.h.b16 %v284
    %v981 = vunpack.c.l.b16 %v285
    %v982 = vunpack.c.l.b16 %v286
    %v983 = vunpack.c.h.b16 %v286
    %v984 = vunpack.c.l.b16 %v287
    %v985 = vunpack.c.l.b16 %v288
    %v986 = vunpack.c.h.b16 %v288
    %v987 = vunpack.c.l.b16 %v289
    %v988 = vunpack.c.l.b16 %v290
    %v989 = vunpack.c.h.b16 %v290
    %v990 = vunpack.c.l.b16 %v291
    %v991 = vpack.c.b16 %v946, %v943
    %v992 = vpack.c.b16 %v947, %v944
    %v993 = vpack.c.b16 %v948, %v945
    %v994 = vpack.c.b16 %v952, %v949
    %v995 = vpack.c.b16 %v953, %v950
    %v996 = vpack.c.b16 %v954, %v951
    %v997 = vpack.c.b16 %v958, %v955
    %v998 = vpack.c.b16 %v959, %v956
    %v999 = vpack.c.b16 %v960, %v957
    %v1000 = vpack.c.b16 %v964, %v961
    %v1001 = vpack.c.b16 %v965, %v962
    %v1002 = vpack.c.b16 %v966, %v963
    %v1003 = vpack.c.b16 %v970, %v967
    %v1004 = vpack.c.b16 %v971, %v968
    %v1005 = vpack.c.b16 %v972, %v969
    %v1006 = vpack.c.b16 %v976, %v973
    %v1007 = vpack.c.b16 %v977, %v974
    %v1008 = vpack.c.b16 %v978, %v975
    %v1009 = vpack.c.b16 %v982, %v979
    %v1010 = vpack.c.b16 %v983, %v980
    %v1011 = vpack.c.b16 %v984, %v981
    %v1012 = vpack.c.b16 %v988, %v985
    %v1013 = vpack.c.b16 %v989, %v986
    %v1014 = vpack.c.b16 %v990, %v987
    %1039 = vmatprep.subr.bf16.mxu0 %v992
    %1040 = vmatpush1.bf16.msra.mxu0 %v991
    %1041 = vmatprep.subr.bf16.mxu0 %v995
    %1042 = vmatpush1.bf16.msra.mxu0 %v994
    %1043 = vmatprep.subr.bf16.mxu0 %v998
    %1044 = vmatpush1.bf16.msra.mxu0 %v997
    %1045 = vmatprep.subr.bf16.mxu0 %v1001
    %1046 = vmatpush1.bf16.msra.mxu0 %v1000
    %1047 = vmatprep.subr.bf16.mxu0 %v1004
    %1048 = vmatpush1.bf16.msra.mxu0 %v1003
    %1049 = vmatprep.subr.bf16.mxu0 %v1007
    %1050 = vmatpush1.bf16.msra.mxu0 %v1006
    %1051 = vmatprep.subr.bf16.mxu0 %v1010
    %1052 = vmatpush1.bf16.msra.mxu0 %v1009
    %1053 = vmatprep.subr.bf16.mxu0 %v1013
    %1054 = vmatpush1.bf16.msra.mxu0 %v1012
    %1055 = vmatprep.subr.bf16.mxu0 0
    %1056 = vmatpush1.bf16.msra.mxu0 0
    %1057 = vmatprep.subr.bf16.mxu0 0
    %1058 = vmatpush1.bf16.msra.mxu0 0
    %1059 = vmatprep.subr.bf16.mxu0 0
    %1060 = vmatpush1.bf16.msra.mxu0 0
    %1061 = vmatprep.subr.bf16.mxu0 0
    %1062 = vmatpush1.bf16.msra.mxu0 0
    %1063 = vmatprep.subr.bf16.mxu0 0
    %1064 = vmatpush1.bf16.msra.mxu0 0
    %1065 = vmatprep.subr.bf16.mxu0 0
    %1066 = vmatpush1.bf16.msra.mxu0 0
    %1067 = vmatprep.subr.bf16.mxu0 0
    %1068 = vmatpush1.bf16.msra.mxu0 0
    %1069 = vmatprep.subr.bf16.mxu0 0
    %1070 = vmatpush1.bf16.msra.mxu0 0
    %1071 = vmatprep.mubr.bf16.mxu0 0
    %1072 = vmatmul.mubr.bf16.gmra.mrb[0].mxu0 %v910
    %v1073 = vpop.f32.mrb[0].mxu0
    %v1074 = vadd.f32 %v380, %v1073
    %v1075 = vpop.f32.mrb[0].mxu0
    %v1076 = vadd.f32 %v384, %v1075
    %v1077 = vpop.f32.mrb[0].mxu0
    %v1078 = vpop.f32.mrb[0].mxu0
    %1079 = vdwg.mxu0
    %1080 = vmatprep.subr.bf16.mxu0 0
    %1081 = vmatpush1.bf16.msra.mxu0 %v993
    %1082 = vmatprep.subr.bf16.mxu0 0
    %1083 = vmatpush1.bf16.msra.mxu0 %v996
    %1084 = vmatprep.subr.bf16.mxu0 0
    %1085 = vmatpush1.bf16.msra.mxu0 %v999
    %1086 = vmatprep.subr.bf16.mxu0 0
    %1087 = vmatpush1.bf16.msra.mxu0 %v1002
    %1088 = vmatprep.subr.bf16.mxu0 0
    %1089 = vmatpush1.bf16.msra.mxu0 %v1005
    %1090 = vmatprep.subr.bf16.mxu0 0
    %1091 = vmatpush1.bf16.msra.mxu0 %v1008
    %1092 = vmatprep.subr.bf16.mxu0 0
    %1093 = vmatpush1.bf16.msra.mxu0 %v1011
    %1094 = vmatprep.subr.bf16.mxu0 0
    %1095 = vmatpush1.bf16.msra.mxu0 %v1014
    %1096 = vmatprep.subr.bf16.mxu0 0
    %1097 = vmatpush1.bf16.msra.mxu0 0
    %1098 = vmatprep.subr.bf16.mxu0 0
    %1099 = vmatpush1.bf16.msra.mxu0 0
    %1100 = vmatprep.subr.bf16.mxu0 0
    %1101 = vmatpush1.bf16.msra.mxu0 0
    %1102 = vmatprep.subr.bf16.mxu0 0
    %1103 = vmatpush1.bf16.msra.mxu0 0
    %1104 = vmatprep.subr.bf16.mxu0 0
    %1105 = vmatpush1.bf16.msra.mxu0 0
    %1106 = vmatprep.subr.bf16.mxu0 0
    %1107 = vmatpush1.bf16.msra.mxu0 0
    %1108 = vmatprep.subr.bf16.mxu0 0
    %1109 = vmatpush1.bf16.msra.mxu0 0
    %1110 = vmatprep.subr.bf16.mxu0 0
    %1111 = vmatpush1.bf16.msra.mxu0 0
    %1112 = vmatprep.mubr.bf16.mxu0 0
    %1113 = vmatmul.mubr.bf16.gmra.mrb[0].mxu0 %v910
    %v1114 = vpop.f32.mrb[0].mxu0
    %v1115 = vadd.f32 %v388, %v1114
    %v1116 = vpop.f32.mrb[0].mxu0
    %v1117 = vpop.f32.mrb[0].mxu0
    %v1118 = vpop.f32.mrb[0].mxu0
    %1119 = vdwg.mxu0
    %v1152 = vunpack.c.l.b16 %v196
    %v1153 = vunpack.c.h.b16 %v196
    %v1154 = vunpack.c.l.b16 %v197
    %v1155 = vunpack.c.l.b16 %v198
    %v1156 = vunpack.c.h.b16 %v198
    %v1157 = vunpack.c.l.b16 %v199
    %v1158 = vunpack.c.l.b16 %v200
    %v1159 = vunpack.c.h.b16 %v200
    %v1160 = vunpack.c.l.b16 %v201
    %v1161 = vunpack.c.l.b16 %v202
    %v1162 = vunpack.c.h.b16 %v202
    %v1163 = vunpack.c.l.b16 %v203
    %v1164 = vunpack.c.l.b16 %v204
    %v1165 = vunpack.c.h.b16 %v204
    %v1166 = vunpack.c.l.b16 %v205
    %v1167 = vunpack.c.l.b16 %v206
    %v1168 = vunpack.c.h.b16 %v206
    %v1169 = vunpack.c.l.b16 %v207
    %v1170 = vunpack.c.l.b16 %v208
    %v1171 = vunpack.c.h.b16 %v208
    %v1172 = vunpack.c.l.b16 %v209
    %v1173 = vunpack.c.l.b16 %v210
    %v1174 = vunpack.c.h.b16 %v210
    %v1175 = vunpack.c.l.b16 %v211
    %v1176 = vunpack.c.l.b16 %v212
    %v1177 = vunpack.c.h.b16 %v212
    %v1178 = vunpack.c.l.b16 %v213
    %v1179 = vunpack.c.l.b16 %v214
    %v1180 = vunpack.c.h.b16 %v214
    %v1181 = vunpack.c.l.b16 %v215
    %v1182 = vunpack.c.l.b16 %v216
    %v1183 = vunpack.c.h.b16 %v216
    %v1184 = vunpack.c.l.b16 %v217
    %v1185 = vunpack.c.l.b16 %v218
    %v1186 = vunpack.c.h.b16 %v218
    %v1187 = vunpack.c.l.b16 %v219
    %v1188 = vunpack.c.l.b16 %v220
    %v1189 = vunpack.c.h.b16 %v220
    %v1190 = vunpack.c.l.b16 %v221
    %v1191 = vunpack.c.l.b16 %v222
    %v1192 = vunpack.c.h.b16 %v222
    %v1193 = vunpack.c.l.b16 %v223
    %v1194 = vunpack.c.l.b16 %v224
    %v1195 = vunpack.c.h.b16 %v224
    %v1196 = vunpack.c.l.b16 %v225
    %v1197 = vunpack.c.l.b16 %v226
    %v1198 = vunpack.c.h.b16 %v226
    %v1199 = vunpack.c.l.b16 %v227
    %v1200 = vpack.c.b16 %v1155, %v1152
    %v1201 = vpack.c.b16 %v1156, %v1153
    %v1202 = vpack.c.b16 %v1157, %v1154
    %v1203 = vpack.c.b16 %v1161, %v1158
    %v1204 = vpack.c.b16 %v1162, %v1159
    %v1205 = vpack.c.b16 %v1163, %v1160
    %v1206 = vpack.c.b16 %v1167, %v1164
    %v1207 = vpack.c.b16 %v1168, %v1165
    %v1208 = vpack.c.b16 %v1169, %v1166
    %v1209 = vpack.c.b16 %v1173, %v1170
    %v1210 = vpack.c.b16 %v1174, %v1171
    %v1211 = vpack.c.b16 %v1175, %v1172
    %v1212 = vpack.c.b16 %v1179, %v1176
    %v1213 = vpack.c.b16 %v1180, %v1177
    %v1214 = vpack.c.b16 %v1181, %v1178
    %v1215 = vpack.c.b16 %v1185, %v1182
    %v1216 = vpack.c.b16 %v1186, %v1183
    %v1217 = vpack.c.b16 %v1187, %v1184
    %v1218 = vpack.c.b16 %v1191, %v1188
    %v1219 = vpack.c.b16 %v1192, %v1189
    %v1220 = vpack.c.b16 %v1193, %v1190
    %v1221 = vpack.c.b16 %v1197, %v1194
    %v1222 = vpack.c.b16 %v1198, %v1195
    %v1223 = vpack.c.b16 %v1199, %v1196
    %1248 = vmatprep.subr.bf16.mxu0 %v1201
    %1249 = vmatpush1.bf16.msra.mxu0 %v1200
    %1250 = vmatprep.subr.bf16.mxu0 %v1204
    %1251 = vmatpush1.bf16.msra.mxu0 %v1203
    %1252 = vmatprep.subr.bf16.mxu0 %v1207
    %1253 = vmatpush1.bf16.msra.mxu0 %v1206
    %1254 = vmatprep.subr.bf16.mxu0 %v1210
    %1255 = vmatpush1.bf16.msra.mxu0 %v1209
    %1256 = vmatprep.subr.bf16.mxu0 %v1213
    %1257 = vmatpush1.bf16.msra.mxu0 %v1212
    %1258 = vmatprep.subr.bf16.mxu0 %v1216
    %1259 = vmatpush1.bf16.msra.mxu0 %v1215
    %1260 = vmatprep.subr.bf16.mxu0 %v1219
    %1261 = vmatpush1.bf16.msra.mxu0 %v1218
    %1262 = vmatprep.subr.bf16.mxu0 %v1222
    %1263 = vmatpush1.bf16.msra.mxu0 %v1221
    %1264 = vmatprep.subr.bf16.mxu0 0
    %1265 = vmatpush1.bf16.msra.mxu0 0
    %1266 = vmatprep.subr.bf16.mxu0 0
    %1267 = vmatpush1.bf16.msra.mxu0 0
    %1268 = vmatprep.subr.bf16.mxu0 0
    %1269 = vmatpush1.bf16.msra.mxu0 0
    %1270 = vmatprep.subr.bf16.mxu0 0
    %1271 = vmatpush1.bf16.msra.mxu0 0
    %1272 = vmatprep.subr.bf16.mxu0 0
    %1273 = vmatpush1.bf16.msra.mxu0 0
    %1274 = vmatprep.subr.bf16.mxu0 0
    %1275 = vmatpush1.bf16.msra.mxu0 0
    %1276 = vmatprep.subr.bf16.mxu0 0
    %1277 = vmatpush1.bf16.msra.mxu0 0
    %1278 = vmatprep.subr.bf16.mxu0 0
    %1279 = vmatpush1.bf16.msra.mxu0 0
    %1280 = vmatprep.mubr.bf16.mxu0 0
    %1281 = vmatmul.mubr.bf16.gmra.mrb[0].mxu0 %v679
    %v1282 = vpop.f32.mrb[0].mxu0
    %v1283 = vadd.f32 %v346, %v1282
    %v1284 = vpop.f32.mrb[0].mxu0
    %v1285 = vadd.f32 %v350, %v1284
    %v1286 = vpop.f32.mrb[0].mxu0
    %v1287 = vpop.f32.mrb[0].mxu0
    %1288 = vdwg.mxu0
    %1289 = vmatprep.subr.bf16.mxu0 0
    %1290 = vmatpush1.bf16.msra.mxu0 %v1202
    %1291 = vmatprep.subr.bf16.mxu0 0
    %1292 = vmatpush1.bf16.msra.mxu0 %v1205
    %1293 = vmatprep.subr.bf16.mxu0 0
    %1294 = vmatpush1.bf16.msra.mxu0 %v1208
    %1295 = vmatprep.subr.bf16.mxu0 0
    %1296 = vmatpush1.bf16.msra.mxu0 %v1211
    %1297 = vmatprep.subr.bf16.mxu0 0
    %1298 = vmatpush1.bf16.msra.mxu0 %v1214
    %1299 = vmatprep.subr.bf16.mxu0 0
    %1300 = vmatpush1.bf16.msra.mxu0 %v1217
    %1301 = vmatprep.subr.bf16.mxu0 0
    %1302 = vmatpush1.bf16.msra.mxu0 %v1220
    %1303 = vmatprep.subr.bf16.mxu0 0
    %1304 = vmatpush1.bf16.msra.mxu0 %v1223
    %1305 = vmatprep.subr.bf16.mxu0 0
    %1306 = vmatpush1.bf16.msra.mxu0 0
    %1307 = vmatprep.subr.bf16.mxu0 0
    %1308 = vmatpush1.bf16.msra.mxu0 0
    %1309 = vmatprep.subr.bf16.mxu0 0
    %1310 = vmatpush1.bf16.msra.mxu0 0
    %1311 = vmatprep.subr.bf16.mxu0 0
    %1312 = vmatpush1.bf16.msra.mxu0 0
    %1313 = vmatprep.subr.bf16.mxu0 0
    %1314 = vmatpush1.bf16.msra.mxu0 0
    %1315 = vmatprep.subr.bf16.mxu0 0
    %1316 = vmatpush1.bf16.msra.mxu0 0
    %1317 = vmatprep.subr.bf16.mxu0 0
    %1318 = vmatpush1.bf16.msra.mxu0 0
    %1319 = vmatprep.subr.bf16.mxu0 0
    %1320 = vmatpush1.bf16.msra.mxu0 0
    %1321 = vmatprep.mubr.bf16.mxu0 0
    %1322 = vmatmul.mubr.bf16.gmra.mrb[0].mxu0 %v679
    %v1323 = vpop.f32.mrb[0].mxu0
    %v1324 = vadd.f32 %v354, %v1323
    %v1325 = vpop.f32.mrb[0].mxu0
    %v1326 = vpop.f32.mrb[0].mxu0
    %v1327 = vpop.f32.mrb[0].mxu0
    %1328 = vdwg.mxu0
    %v1329 = vadd.f32 %v1074, %v1283
    %v1330 = vxor.u32 %v1329, 2147483648
    %v1331 = vmul.f32 %v1330, 1.442695
    %v1332 = vpow.pop %v1331
    %v1333 = vadd.f32 %v1332, 1.0
    %v1334 = vrcp.pop %v1333
    %v1335 = vmul.f32 1.0, %v1334
    %v1336 = vadd.f32 %v1076, %v1285
    %v1337 = vxor.u32 %v1336, 2147483648
    %v1338 = vmul.f32 %v1337, 1.442695
    %v1339 = vpow.pop %v1338
    %v1340 = vadd.f32 %v1339, 1.0
    %v1341 = vrcp.pop %v1340
    %v1342 = vmul.f32 1.0, %v1341
    %v1343 = vmul.f32 %v1335, %v1324
    %v1344 = vadd.f32 %v1115, %v1343
    %v1345 = vtanh.pop %v1344
    %v1346 = vsub.f32 1.0, %v1342
    %v1347 = vmul.f32 %v1346, %v1345
    %v1348 = vmul.f32 %v1342, %v159
    %v1349 = vadd.f32 %v1347, %v1348
    %v1350 = vpack.c.bf16 %v1349, %v1349
    %v1383 = vunpack.c.l.b16 %v292
    %v1384 = vunpack.c.h.b16 %v292
    %v1385 = vunpack.c.l.b16 %v293
    %v1386 = vunpack.c.l.b16 %v294
    %v1387 = vunpack.c.h.b16 %v294
    %v1388 = vunpack.c.l.b16 %v295
    %v1389 = vunpack.c.l.b16 %v296
    %v1390 = vunpack.c.h.b16 %v296
    %v1391 = vunpack.c.l.b16 %v297
    %v1392 = vunpack.c.l.b16 %v298
    %v1393 = vunpack.c.h.b16 %v298
    %v1394 = vunpack.c.l.b16 %v299
    %v1395 = vunpack.c.l.b16 %v300
    %v1396 = vunpack.c.h.b16 %v300
    %v1397 = vunpack.c.l.b16 %v301
    %v1398 = vunpack.c.l.b16 %v302
    %v1399 = vunpack.c.h.b16 %v302
    %v1400 = vunpack.c.l.b16 %v303
    %v1401 = vunpack.c.l.b16 %v304
    %v1402 = vunpack.c.h.b16 %v304
    %v1403 = vunpack.c.l.b16 %v305
    %v1404 = vunpack.c.l.b16 %v306
    %v1405 = vunpack.c.h.b16 %v306
    %v1406 = vunpack.c.l.b16 %v307
    %v1407 = vunpack.c.l.b16 %v308
    %v1408 = vunpack.c.h.b16 %v308
    %v1409 = vunpack.c.l.b16 %v309
    %v1410 = vunpack.c.l.b16 %v310
    %v1411 = vunpack.c.h.b16 %v310
    %v1412 = vunpack.c.l.b16 %v311
    %v1413 = vunpack.c.l.b16 %v312
    %v1414 = vunpack.c.h.b16 %v312
    %v1415 = vunpack.c.l.b16 %v313
    %v1416 = vunpack.c.l.b16 %v314
    %v1417 = vunpack.c.h.b16 %v314
    %v1418 = vunpack.c.l.b16 %v315
    %v1419 = vunpack.c.l.b16 %v316
    %v1420 = vunpack.c.h.b16 %v316
    %v1421 = vunpack.c.l.b16 %v317
    %v1422 = vunpack.c.l.b16 %v318
    %v1423 = vunpack.c.h.b16 %v318
    %v1424 = vunpack.c.l.b16 %v319
    %v1425 = vunpack.c.l.b16 %v320
    %v1426 = vunpack.c.h.b16 %v320
    %v1427 = vunpack.c.l.b16 %v321
    %v1428 = vunpack.c.l.b16 %v322
    %v1429 = vunpack.c.h.b16 %v322
    %v1430 = vunpack.c.l.b16 %v323
    %v1431 = vpack.c.b16 %v1386, %v1383
    %v1432 = vpack.c.b16 %v1387, %v1384
    %v1433 = vpack.c.b16 %v1388, %v1385
    %v1434 = vpack.c.b16 %v1392, %v1389
    %v1435 = vpack.c.b16 %v1393, %v1390
    %v1436 = vpack.c.b16 %v1394, %v1391
    %v1437 = vpack.c.b16 %v1398, %v1395
    %v1438 = vpack.c.b16 %v1399, %v1396
    %v1439 = vpack.c.b16 %v1400, %v1397
    %v1440 = vpack.c.b16 %v1404, %v1401
    %v1441 = vpack.c.b16 %v1405, %v1402
    %v1442 = vpack.c.b16 %v1406, %v1403
    %v1443 = vpack.c.b16 %v1410, %v1407
    %v1444 = vpack.c.b16 %v1411, %v1408
    %v1445 = vpack.c.b16 %v1412, %v1409
    %v1446 = vpack.c.b16 %v1416, %v1413
    %v1447 = vpack.c.b16 %v1417, %v1414
    %v1448 = vpack.c.b16 %v1418, %v1415
    %v1449 = vpack.c.b16 %v1422, %v1419
    %v1450 = vpack.c.b16 %v1423, %v1420
    %v1451 = vpack.c.b16 %v1424, %v1421
    %v1452 = vpack.c.b16 %v1428, %v1425
    %v1453 = vpack.c.b16 %v1429, %v1426
    %v1454 = vpack.c.b16 %v1430, %v1427
    %1479 = vmatprep.subr.bf16.mxu0 %v1432
    %1480 = vmatpush1.bf16.msra.mxu0 %v1431
    %1481 = vmatprep.subr.bf16.mxu0 %v1435
    %1482 = vmatpush1.bf16.msra.mxu0 %v1434
    %1483 = vmatprep.subr.bf16.mxu0 %v1438
    %1484 = vmatpush1.bf16.msra.mxu0 %v1437
    %1485 = vmatprep.subr.bf16.mxu0 %v1441
    %1486 = vmatpush1.bf16.msra.mxu0 %v1440
    %1487 = vmatprep.subr.bf16.mxu0 %v1444
    %1488 = vmatpush1.bf16.msra.mxu0 %v1443
    %1489 = vmatprep.subr.bf16.mxu0 %v1447
    %1490 = vmatpush1.bf16.msra.mxu0 %v1446
    %1491 = vmatprep.subr.bf16.mxu0 %v1450
    %1492 = vmatpush1.bf16.msra.mxu0 %v1449
    %1493 = vmatprep.subr.bf16.mxu0 %v1453
    %1494 = vmatpush1.bf16.msra.mxu0 %v1452
    %1495 = vmatprep.subr.bf16.mxu0 0
    %1496 = vmatpush1.bf16.msra.mxu0 0
    %1497 = vmatprep.subr.bf16.mxu0 0
    %1498 = vmatpush1.bf16.msra.mxu0 0
    %1499 = vmatprep.subr.bf16.mxu0 0
    %1500 = vmatpush1.bf16.msra.mxu0 0
    %1501 = vmatprep.subr.bf16.mxu0 0
    %1502 = vmatpush1.bf16.msra.mxu0 0
    %1503 = vmatprep.subr.bf16.mxu0 0
    %1504 = vmatpush1.bf16.msra.mxu0 0
    %1505 = vmatprep.subr.bf16.mxu0 0
    %1506 = vmatpush1.bf16.msra.mxu0 0
    %1507 = vmatprep.subr.bf16.mxu0 0
    %1508 = vmatpush1.bf16.msra.mxu0 0
    %1509 = vmatprep.subr.bf16.mxu0 0
    %1510 = vmatpush1.bf16.msra.mxu0 0
    %1511 = vmatprep.mubr.bf16.mxu0 0
    %1512 = vmatmul.mubr.bf16.gmra.mrb[0].mxu0 %v1350
    %v1513 = vpop.f32.mrb[0].mxu0
    %v1514 = vadd.f32 %v397, %v1513
    %v1515 = vpop.f32.mrb[0].mxu0
    %v1516 = vadd.f32 %v401, %v1515
    %v1517 = vpop.f32.mrb[0].mxu0
    %v1518 = vpop.f32.mrb[0].mxu0
    %1519 = vdwg.mxu0
    %1520 = vmatprep.subr.bf16.mxu0 0
    %1521 = vmatpush1.bf16.msra.mxu0 %v1433
    %1522 = vmatprep.subr.bf16.mxu0 0
    %1523 = vmatpush1.bf16.msra.mxu0 %v1436
    %1524 = vmatprep.subr.bf16.mxu0 0
    %1525 = vmatpush1.bf16.msra.mxu0 %v1439
    %1526 = vmatprep.subr.bf16.mxu0 0
    %1527 = vmatpush1.bf16.msra.mxu0 %v1442
    %1528 = vmatprep.subr.bf16.mxu0 0
    %1529 = vmatpush1.bf16.msra.mxu0 %v1445
    %1530 = vmatprep.subr.bf16.mxu0 0
    %1531 = vmatpush1.bf16.msra.mxu0 %v1448
    %1532 = vmatprep.subr.bf16.mxu0 0
    %1533 = vmatpush1.bf16.msra.mxu0 %v1451
    %1534 = vmatprep.subr.bf16.mxu0 0
    %1535 = vmatpush1.bf16.msra.mxu0 %v1454
    %1536 = vmatprep.subr.bf16.mxu0 0
    %1537 = vmatpush1.bf16.msra.mxu0 0
    %1538 = vmatprep.subr.bf16.mxu0 0
    %1539 = vmatpush1.bf16.msra.mxu0 0
    %1540 = vmatprep.subr.bf16.mxu0 0
    %1541 = vmatpush1.bf16.msra.mxu0 0
    %1542 = vmatprep.subr.bf16.mxu0 0
    %1543 = vmatpush1.bf16.msra.mxu0 0
    %1544 = vmatprep.subr.bf16.mxu0 0
    %1545 = vmatpush1.bf16.msra.mxu0 0
    %1546 = vmatprep.subr.bf16.mxu0 0
    %1547 = vmatpush1.bf16.msra.mxu0 0
    %1548 = vmatprep.subr.bf16.mxu0 0
    %1549 = vmatpush1.bf16.msra.mxu0 0
    %1550 = vmatprep.subr.bf16.mxu0 0
    %1551 = vmatpush1.bf16.msra.mxu0 0
    %1552 = vmatprep.mubr.bf16.mxu0 0
    %1553 = vmatmul.mubr.bf16.gmra.mrb[0].mxu0 %v1350
    %v1554 = vpop.f32.mrb[0].mxu0
    %v1555 = vadd.f32 %v405, %v1554
    %v1556 = vpop.f32.mrb[0].mxu0
    %v1557 = vpop.f32.mrb[0].mxu0
    %v1558 = vpop.f32.mrb[0].mxu0
    %1559 = vdwg.mxu0
    %v1592 = vunpack.c.l.b16 %v228
    %v1593 = vunpack.c.h.b16 %v228
    %v1594 = vunpack.c.l.b16 %v229
    %v1595 = vunpack.c.l.b16 %v230
    %v1596 = vunpack.c.h.b16 %v230
    %v1597 = vunpack.c.l.b16 %v231
    %v1598 = vunpack.c.l.b16 %v232
    %v1599 = vunpack.c.h.b16 %v232
    %v1600 = vunpack.c.l.b16 %v233
    %v1601 = vunpack.c.l.b16 %v234
    %v1602 = vunpack.c.h.b16 %v234
    %v1603 = vunpack.c.l.b16 %v235
    %v1604 = vunpack.c.l.b16 %v236
    %v1605 = vunpack.c.h.b16 %v236
    %v1606 = vunpack.c.l.b16 %v237
    %v1607 = vunpack.c.l.b16 %v238
    %v1608 = vunpack.c.h.b16 %v238
    %v1609 = vunpack.c.l.b16 %v239
    %v1610 = vunpack.c.l.b16 %v240
    %v1611 = vunpack.c.h.b16 %v240
    %v1612 = vunpack.c.l.b16 %v241
    %v1613 = vunpack.c.l.b16 %v242
    %v1614 = vunpack.c.h.b16 %v242
    %v1615 = vunpack.c.l.b16 %v243
    %v1616 = vunpack.c.l.b16 %v244
    %v1617 = vunpack.c.h.b16 %v244
    %v1618 = vunpack.c.l.b16 %v245
    %v1619 = vunpack.c.l.b16 %v246
    %v1620 = vunpack.c.h.b16 %v246
    %v1621 = vunpack.c.l.b16 %v247
    %v1622 = vunpack.c.l.b16 %v248
    %v1623 = vunpack.c.h.b16 %v248
    %v1624 = vunpack.c.l.b16 %v249
    %v1625 = vunpack.c.l.b16 %v250
    %v1626 = vunpack.c.h.b16 %v250
    %v1627 = vunpack.c.l.b16 %v251
    %v1628 = vunpack.c.l.b16 %v252
    %v1629 = vunpack.c.h.b16 %v252
    %v1630 = vunpack.c.l.b16 %v253
    %v1631 = vunpack.c.l.b16 %v254
    %v1632 = vunpack.c.h.b16 %v254
    %v1633 = vunpack.c.l.b16 %v255
    %v1634 = vunpack.c.l.b16 %v256
    %v1635 = vunpack.c.h.b16 %v256
    %v1636 = vunpack.c.l.b16 %v257
    %v1637 = vunpack.c.l.b16 %v258
    %v1638 = vunpack.c.h.b16 %v258
    %v1639 = vunpack.c.l.b16 %v259
    %v1640 = vpack.c.b16 %v1595, %v1592
    %v1641 = vpack.c.b16 %v1596, %v1593
    %v1642 = vpack.c.b16 %v1597, %v1594
    %v1643 = vpack.c.b16 %v1601, %v1598
    %v1644 = vpack.c.b16 %v1602, %v1599
    %v1645 = vpack.c.b16 %v1603, %v1600
    %v1646 = vpack.c.b16 %v1607, %v1604
    %v1647 = vpack.c.b16 %v1608, %v1605
    %v1648 = vpack.c.b16 %v1609, %v1606
    %v1649 = vpack.c.b16 %v1613, %v1610
    %v1650 = vpack.c.b16 %v1614, %v1611
    %v1651 = vpack.c.b16 %v1615, %v1612
    %v1652 = vpack.c.b16 %v1619, %v1616
    %v1653 = vpack.c.b16 %v1620, %v1617
    %v1654 = vpack.c.b16 %v1621, %v1618
    %v1655 = vpack.c.b16 %v1625, %v1622
    %v1656 = vpack.c.b16 %v1626, %v1623
    %v1657 = vpack.c.b16 %v1627, %v1624
    %v1658 = vpack.c.b16 %v1631, %v1628
    %v1659 = vpack.c.b16 %v1632, %v1629
    %v1660 = vpack.c.b16 %v1633, %v1630
    %v1661 = vpack.c.b16 %v1637, %v1634
    %v1662 = vpack.c.b16 %v1638, %v1635
    %v1663 = vpack.c.b16 %v1639, %v1636
    %1688 = vmatprep.subr.bf16.mxu0 %v1641
    %1689 = vmatpush1.bf16.msra.mxu0 %v1640
    %1690 = vmatprep.subr.bf16.mxu0 %v1644
    %1691 = vmatpush1.bf16.msra.mxu0 %v1643
    %1692 = vmatprep.subr.bf16.mxu0 %v1647
    %1693 = vmatpush1.bf16.msra.mxu0 %v1646
    %1694 = vmatprep.subr.bf16.mxu0 %v1650
    %1695 = vmatpush1.bf16.msra.mxu0 %v1649
    %1696 = vmatprep.subr.bf16.mxu0 %v1653
    %1697 = vmatpush1.bf16.msra.mxu0 %v1652
    %1698 = vmatprep.subr.bf16.mxu0 %v1656
    %1699 = vmatpush1.bf16.msra.mxu0 %v1655
    %1700 = vmatprep.subr.bf16.mxu0 %v1659
    %1701 = vmatpush1.bf16.msra.mxu0 %v1658
    %1702 = vmatprep.subr.bf16.mxu0 %v1662
    %1703 = vmatpush1.bf16.msra.mxu0 %v1661
    %1704 = vmatprep.subr.bf16.mxu0 0
    %1705 = vmatpush1.bf16.msra.mxu0 0
    %1706 = vmatprep.subr.bf16.mxu0 0
    %1707 = vmatpush1.bf16.msra.mxu0 0
    %1708 = vmatprep.subr.bf16.mxu0 0
    %1709 = vmatpush1.bf16.msra.mxu0 0
    %1710 = vmatprep.subr.bf16.mxu0 0
    %1711 = vmatpush1.bf16.msra.mxu0 0
    %1712 = vmatprep.subr.bf16.mxu0 0
    %1713 = vmatpush1.bf16.msra.mxu0 0
    %1714 = vmatprep.subr.bf16.mxu0 0
    %1715 = vmatpush1.bf16.msra.mxu0 0
    %1716 = vmatprep.subr.bf16.mxu0 0
    %1717 = vmatpush1.bf16.msra.mxu0 0
    %1718 = vmatprep.subr.bf16.mxu0 0
    %1719 = vmatpush1.bf16.msra.mxu0 0
    %1720 = vmatprep.mubr.bf16.mxu0 0
    %1721 = vmatmul.mubr.bf16.gmra.mrb[0].mxu0 %v679
    %v1722 = vpop.f32.mrb[0].mxu0
    %v1723 = vadd.f32 %v363, %v1722
    %v1724 = vpop.f32.mrb[0].mxu0
    %v1725 = vadd.f32 %v367, %v1724
    %v1726 = vpop.f32.mrb[0].mxu0
    %v1727 = vpop.f32.mrb[0].mxu0
    %1728 = vdwg.mxu0
    %1729 = vmatprep.subr.bf16.mxu0 0
    %1730 = vmatpush1.bf16.msra.mxu0 %v1642
    %1731 = vmatprep.subr.bf16.mxu0 0
    %1732 = vmatpush1.bf16.msra.mxu0 %v1645
    %1733 = vmatprep.subr.bf16.mxu0 0
    %1734 = vmatpush1.bf16.msra.mxu0 %v1648
    %1735 = vmatprep.subr.bf16.mxu0 0
    %1736 = vmatpush1.bf16.msra.mxu0 %v1651
    %1737 = vmatprep.subr.bf16.mxu0 0
    %1738 = vmatpush1.bf16.msra.mxu0 %v1654
    %1739 = vmatprep.subr.bf16.mxu0 0
    %1740 = vmatpush1.bf16.msra.mxu0 %v1657
    %1741 = vmatprep.subr.bf16.mxu0 0
    %1742 = vmatpush1.bf16.msra.mxu0 %v1660
    %1743 = vmatprep.subr.bf16.mxu0 0
    %1744 = vmatpush1.bf16.msra.mxu0 %v1663
    %1745 = vmatprep.subr.bf16.mxu0 0
    %1746 = vmatpush1.bf16.msra.mxu0 0
    %1747 = vmatprep.subr.bf16.mxu0 0
    %1748 = vmatpush1.bf16.msra.mxu0 0
    %1749 = vmatprep.subr.bf16.mxu0 0
    %1750 = vmatpush1.bf16.msra.mxu0 0
    %1751 = vmatprep.subr.bf16.mxu0 0
    %1752 = vmatpush1.bf16.msra.mxu0 0
    %1753 = vmatprep.subr.bf16.mxu0 0
    %1754 = vmatpush1.bf16.msra.mxu0 0
    %1755 = vmatprep.subr.bf16.mxu0 0
    %1756 = vmatpush1.bf16.msra.mxu0 0
    %1757 = vmatprep.subr.bf16.mxu0 0
    %1758 = vmatpush1.bf16.msra.mxu0 0
    %1759 = vmatprep.subr.bf16.mxu0 0
    %1760 = vmatpush1.bf16.msra.mxu0 0
    %1761 = vmatprep.mubr.bf16.mxu0 0
    %1762 = vmatmul.mubr.bf16.gmra.mrb[0].mxu0 %v679
    %v1763 = vpop.f32.mrb[0].mxu0
    %v1764 = vadd.f32 %v371, %v1763
    %v1765 = vpop.f32.mrb[0].mxu0
    %v1766 = vpop.f32.mrb[0].mxu0
    %v1767 = vpop.f32.mrb[0].mxu0
    %1768 = vdwg.mxu0
    %v1769 = vadd.f32 %v1514, %v1723
    %v1770 = vxor.u32 %v1769, 2147483648
    %v1771 = vmul.f32 %v1770, 1.442695
    %v1772 = vpow.pop %v1771
    %v1773 = vadd.f32 %v1772, 1.0
    %v1774 = vrcp.pop %v1773
    %v1775 = vmul.f32 1.0, %v1774
    %v1776 = vadd.f32 %v1516, %v1725
    %v1777 = vxor.u32 %v1776, 2147483648
    %v1778 = vmul.f32 %v1777, 1.442695
    %v1779 = vpow.pop %v1778
    %v1780 = vadd.f32 %v1779, 1.0
    %v1781 = vrcp.pop %v1780
    %v1782 = vmul.f32 1.0, %v1781
    %v1783 = vmul.f32 %v1775, %v1764
    %v1784 = vadd.f32 %v1555, %v1783
    %v1785 = vtanh.pop %v1784
    %v1786 = vsub.f32 1.0, %v1782
    %v1787 = vmul.f32 %v1786, %v1785
    %v1788 = vmul.f32 %v1782, %v159
    %v1789 = vadd.f32 %v1787, %v1788
    %v1790 = vpack.c.bf16 %v1789, %v1789
    %1791 = vst [vmem:[%s16] sm:$0xf] %v1790
    %1792 = vmatprep.subr.bf16.mxu0 %v761
    %1793 = vmatpush1.bf16.msra.mxu0 %v760
    %1794 = vmatprep.subr.bf16.mxu0 %v764
    %1795 = vmatpush1.bf16.msra.mxu0 %v763
    %1796 = vmatprep.subr.bf16.mxu0 %v767
    %1797 = vmatpush1.bf16.msra.mxu0 %v766
    %1798 = vmatprep.subr.bf16.mxu0 %v770
    %1799 = vmatpush1.bf16.msra.mxu0 %v769
    %1800 = vmatprep.subr.bf16.mxu0 %v773
    %1801 = vmatpush1.bf16.msra.mxu0 %v772
    %1802 = vmatprep.subr.bf16.mxu0 %v776
    %1803 = vmatpush1.bf16.msra.mxu0 %v775
    %1804 = vmatprep.subr.bf16.mxu0 %v779
    %1805 = vmatpush1.bf16.msra.mxu0 %v778
    %1806 = vmatprep.subr.bf16.mxu0 %v782
    %1807 = vmatpush1.bf16.msra.mxu0 %v781
    %1808 = vmatprep.subr.bf16.mxu0 0
    %1809 = vmatpush1.bf16.msra.mxu0 0
    %1810 = vmatprep.subr.bf16.mxu0 0
    %1811 = vmatpush1.bf16.msra.mxu0 0
    %1812 = vmatprep.subr.bf16.mxu0 0
    %1813 = vmatpush1.bf16.msra.mxu0 0
    %1814 = vmatprep.subr.bf16.mxu0 0
    %1815 = vmatpush1.bf16.msra.mxu0 0
    %1816 = vmatprep.subr.bf16.mxu0 0
    %1817 = vmatpush1.bf16.msra.mxu0 0
    %1818 = vmatprep.subr.bf16.mxu0 0
    %1819 = vmatpush1.bf16.msra.mxu0 0
    %1820 = vmatprep.subr.bf16.mxu0 0
    %1821 = vmatpush1.bf16.msra.mxu0 0
    %1822 = vmatprep.subr.bf16.mxu0 0
    %1823 = vmatpush1.bf16.msra.mxu0 0
    %1824 = vmatprep.mubr.bf16.mxu0 0
    %1825 = vmatmul.mubr.bf16.gmra.mrb[0].mxu0 %v910
    %v1826 = vpop.f32.mrb[0].mxu0
    %v1827 = vadd.f32 %v329, %v1826
    %v1828 = vpop.f32.mrb[0].mxu0
    %v1829 = vadd.f32 %v333, %v1828
    %v1830 = vpop.f32.mrb[0].mxu0
    %v1831 = vpop.f32.mrb[0].mxu0
    %1832 = vdwg.mxu0
    %1833 = vmatprep.subr.bf16.mxu0 0
    %1834 = vmatpush1.bf16.msra.mxu0 %v762
    %1835 = vmatprep.subr.bf16.mxu0 0
    %1836 = vmatpush1.bf16.msra.mxu0 %v765
    %1837 = vmatprep.subr.bf16.mxu0 0
    %1838 = vmatpush1.bf16.msra.mxu0 %v768
    %1839 = vmatprep.subr.bf16.mxu0 0
    %1840 = vmatpush1.bf16.msra.mxu0 %v771
    %1841 = vmatprep.subr.bf16.mxu0 0
    %1842 = vmatpush1.bf16.msra.mxu0 %v774
    %1843 = vmatprep.subr.bf16.mxu0 0
    %1844 = vmatpush1.bf16.msra.mxu0 %v777
    %1845 = vmatprep.subr.bf16.mxu0 0
    %1846 = vmatpush1.bf16.msra.mxu0 %v780
    %1847 = vmatprep.subr.bf16.mxu0 0
    %1848 = vmatpush1.bf16.msra.mxu0 %v783
    %1849 = vmatprep.subr.bf16.mxu0 0
    %1850 = vmatpush1.bf16.msra.mxu0 0
    %1851 = vmatprep.subr.bf16.mxu0 0
    %1852 = vmatpush1.bf16.msra.mxu0 0
    %1853 = vmatprep.subr.bf16.mxu0 0
    %1854 = vmatpush1.bf16.msra.mxu0 0
    %1855 = vmatprep.subr.bf16.mxu0 0
    %1856 = vmatpush1.bf16.msra.mxu0 0
    %1857 = vmatprep.subr.bf16.mxu0 0
    %1858 = vmatpush1.bf16.msra.mxu0 0
    %1859 = vmatprep.subr.bf16.mxu0 0
    %1860 = vmatpush1.bf16.msra.mxu0 0
    %1861 = vmatprep.subr.bf16.mxu0 0
    %1862 = vmatpush1.bf16.msra.mxu0 0
    %1863 = vmatprep.subr.bf16.mxu0 0
    %1864 = vmatpush1.bf16.msra.mxu0 0
    %1865 = vmatprep.mubr.bf16.mxu0 0
    %1866 = vmatmul.mubr.bf16.gmra.mrb[0].mxu0 %v910
    %v1867 = vpop.f32.mrb[0].mxu0
    %v1868 = vadd.f32 %v337, %v1867
    %v1869 = vpop.f32.mrb[0].mxu0
    %v1870 = vpop.f32.mrb[0].mxu0
    %v1871 = vpop.f32.mrb[0].mxu0
    %1872 = vdwg.mxu0
    %v1873 = vadd.f32 %v583, %v1827
    %v1874 = vxor.u32 %v1873, 2147483648
    %v1875 = vmul.f32 %v1874, 1.442695
    %v1876 = vpow.pop %v1875
    %v1877 = vadd.f32 %v1876, 1.0
    %v1878 = vrcp.pop %v1877
    %v1879 = vmul.f32 1.0, %v1878
    %v1880 = vadd.f32 %v585, %v1829
    %v1881 = vxor.u32 %v1880, 2147483648
    %v1882 = vmul.f32 %v1881, 1.442695
    %v1883 = vpow.pop %v1882
    %v1884 = vadd.f32 %v1883, 1.0
    %v1885 = vrcp.pop %v1884
    %v1886 = vmul.f32 1.0, %v1885
    %v1887 = vmul.f32 %v1879, %v1868
    %v1888 = vadd.f32 %v653, %v1887
    %v1889 = vtanh.pop %v1888
    %v1890 = vsub.f32 1.0, %v1886
    %v1891 = vmul.f32 %v1890, %v1889
    %v1892 = vmul.f32 %v1886, %v909
    %v1893 = vadd.f32 %v1891, %v1892
    %v1894 = vpack.c.bf16 %v1893, %v1893
    %1895 = vmatprep.subr.bf16.mxu0 %v992
    %1896 = vmatpush1.bf16.msra.mxu0 %v991
    %1897 = vmatprep.subr.bf16.mxu0 %v995
    %1898 = vmatpush1.bf16.msra.mxu0 %v994
    %1899 = vmatprep.subr.bf16.mxu0 %v998
    %1900 = vmatpush1.bf16.msra.mxu0 %v997
    %1901 = vmatprep.subr.bf16.mxu0 %v1001
    %1902 = vmatpush1.bf16.msra.mxu0 %v1000
    %1903 = vmatprep.subr.bf16.mxu0 %v1004
    %1904 = vmatpush1.bf16.msra.mxu0 %v1003
    %1905 = vmatprep.subr.bf16.mxu0 %v1007
    %1906 = vmatpush1.bf16.msra.mxu0 %v1006
    %1907 = vmatprep.subr.bf16.mxu0 %v1010
    %1908 = vmatpush1.bf16.msra.mxu0 %v1009
    %1909 = vmatprep.subr.bf16.mxu0 %v1013
    %1910 = vmatpush1.bf16.msra.mxu0 %v1012
    %1911 = vmatprep.subr.bf16.mxu0 0
    %1912 = vmatpush1.bf16.msra.mxu0 0
    %1913 = vmatprep.subr.bf16.mxu0 0
    %1914 = vmatpush1.bf16.msra.mxu0 0
    %1915 = vmatprep.subr.bf16.mxu0 0
    %1916 = vmatpush1.bf16.msra.mxu0 0
    %1917 = vmatprep.subr.bf16.mxu0 0
    %1918 = vmatpush1.bf16.msra.mxu0 0
    %1919 = vmatprep.subr.bf16.mxu0 0
    %1920 = vmatpush1.bf16.msra.mxu0 0
    %1921 = vmatprep.subr.bf16.mxu0 0
    %1922 = vmatpush1.bf16.msra.mxu0 0
    %1923 = vmatprep.subr.bf16.mxu0 0
    %1924 = vmatpush1.bf16.msra.mxu0 0
    %1925 = vmatprep.subr.bf16.mxu0 0
    %1926 = vmatpush1.bf16.msra.mxu0 0
    %1927 = vmatprep.mubr.bf16.mxu0 0
    %1928 = vmatmul.mubr.bf16.gmra.mrb[0].mxu0 %v1894
    %v1929 = vpop.f32.mrb[0].mxu0
    %v1930 = vadd.f32 %v380, %v1929
    %v1931 = vpop.f32.mrb[0].mxu0
    %v1932 = vadd.f32 %v384, %v1931
    %v1933 = vpop.f32.mrb[0].mxu0
    %v1934 = vpop.f32.mrb[0].mxu0
    %1935 = vdwg.mxu0
    %1936 = vmatprep.subr.bf16.mxu0 0
    %1937 = vmatpush1.bf16.msra.mxu0 %v993
    %1938 = vmatprep.subr.bf16.mxu0 0
    %1939 = vmatpush1.bf16.msra.mxu0 %v996
    %1940 = vmatprep.subr.bf16.mxu0 0
    %1941 = vmatpush1.bf16.msra.mxu0 %v999
    %1942 = vmatprep.subr.bf16.mxu0 0
    %1943 = vmatpush1.bf16.msra.mxu0 %v1002
    %1944 = vmatprep.subr.bf16.mxu0 0
    %1945 = vmatpush1.bf16.msra.mxu0 %v1005
    %1946 = vmatprep.subr.bf16.mxu0 0
    %1947 = vmatpush1.bf16.msra.mxu0 %v1008
    %1948 = vmatprep.subr.bf16.mxu0 0
    %1949 = vmatpush1.bf16.msra.mxu0 %v1011
    %1950 = vmatprep.subr.bf16.mxu0 0
    %1951 = vmatpush1.bf16.msra.mxu0 %v1014
    %1952 = vmatprep.subr.bf16.mxu0 0
    %1953 = vmatpush1.bf16.msra.mxu0 0
    %1954 = vmatprep.subr.bf16.mxu0 0
    %1955 = vmatpush1.bf16.msra.mxu0 0
    %1956 = vmatprep.subr.bf16.mxu0 0
    %1957 = vmatpush1.bf16.msra.mxu0 0
    %1958 = vmatprep.subr.bf16.mxu0 0
    %1959 = vmatpush1.bf16.msra.mxu0 0
    %1960 = vmatprep.subr.bf16.mxu0 0
    %1961 = vmatpush1.bf16.msra.mxu0 0
    %1962 = vmatprep.subr.bf16.mxu0 0
    %1963 = vmatpush1.bf16.msra.mxu0 0
    %1964 = vmatprep.subr.bf16.mxu0 0
    %1965 = vmatpush1.bf16.msra.mxu0 0
    %1966 = vmatprep.subr.bf16.mxu0 0
    %1967 = vmatpush1.bf16.msra.mxu0 0
    %1968 = vmatprep.mubr.bf16.mxu0 0
    %1969 = vmatmul.mubr.bf16.gmra.mrb[0].mxu0 %v1894
    %v1970 = vpop.f32.mrb[0].mxu0
    %v1971 = vadd.f32 %v388, %v1970
    %v1972 = vpop.f32.mrb[0].mxu0
    %v1973 = vpop.f32.mrb[0].mxu0
    %v1974 = vpop.f32.mrb[0].mxu0
    %1975 = vdwg.mxu0
    %1976 = vmatprep.subr.bf16.mxu0 %v1201
    %1977 = vmatpush1.bf16.msra.mxu0 %v1200
    %1978 = vmatprep.subr.bf16.mxu0 %v1204
    %1979 = vmatpush1.bf16.msra.mxu0 %v1203
    %1980 = vmatprep.subr.bf16.mxu0 %v1207
    %1981 = vmatpush1.bf16.msra.mxu0 %v1206
    %1982 = vmatprep.subr.bf16.mxu0 %v1210
    %1983 = vmatpush1.bf16.msra.mxu0 %v1209
    %1984 = vmatprep.subr.bf16.mxu0 %v1213
    %1985 = vmatpush1.bf16.msra.mxu0 %v1212
    %1986 = vmatprep.subr.bf16.mxu0 %v1216
    %1987 = vmatpush1.bf16.msra.mxu0 %v1215
    %1988 = vmatprep.subr.bf16.mxu0 %v1219
    %1989 = vmatpush1.bf16.msra.mxu0 %v1218
    %1990 = vmatprep.subr.bf16.mxu0 %v1222
    %1991 = vmatpush1.bf16.msra.mxu0 %v1221
    %1992 = vmatprep.subr.bf16.mxu0 0
    %1993 = vmatpush1.bf16.msra.mxu0 0
    %1994 = vmatprep.subr.bf16.mxu0 0
    %1995 = vmatpush1.bf16.msra.mxu0 0
    %1996 = vmatprep.subr.bf16.mxu0 0
    %1997 = vmatpush1.bf16.msra.mxu0 0
    %1998 = vmatprep.subr.bf16.mxu0 0
    %1999 = vmatpush1.bf16.msra.mxu0 0
    %2000 = vmatprep.subr.bf16.mxu0 0
    %2001 = vmatpush1.bf16.msra.mxu0 0
    %2002 = vmatprep.subr.bf16.mxu0 0
    %2003 = vmatpush1.bf16.msra.mxu0 0
    %2004 = vmatprep.subr.bf16.mxu0 0
    %2005 = vmatpush1.bf16.msra.mxu0 0
    %2006 = vmatprep.subr.bf16.mxu0 0
    %2007 = vmatpush1.bf16.msra.mxu0 0
    %2008 = vmatprep.mubr.bf16.mxu0 0
    %2009 = vmatmul.mubr.bf16.gmra.mrb[0].mxu0 %v1350
    %v2010 = vpop.f32.mrb[0].mxu0
    %v2011 = vadd.f32 %v346, %v2010
    %v2012 = vpop.f32.mrb[0].mxu0
    %v2013 = vadd.f32 %v350, %v2012
    %v2014 = vpop.f32.mrb[0].mxu0
    %v2015 = vpop.f32.mrb[0].mxu0
    %2016 = vdwg.mxu0
    %2017 = vmatprep.subr.bf16.mxu0 0
    %2018 = vmatpush1.bf16.msra.mxu0 %v1202
    %2019 = vmatprep.subr.bf16.mxu0 0
    %2020 = vmatpush1.bf16.msra.mxu0 %v1205
    %2021 = vmatprep.subr.bf16.mxu0 0
    %2022 = vmatpush1.bf16.msra.mxu0 %v1208
    %2023 = vmatprep.subr.bf16.mxu0 0
    %2024 = vmatpush1.bf16.msra.mxu0 %v1211
    %2025 = vmatprep.subr.bf16.mxu0 0
    %2026 = vmatpush1.bf16.msra.mxu0 %v1214
    %2027 = vmatprep.subr.bf16.mxu0 0
    %2028 = vmatpush1.bf16.msra.mxu0 %v1217
    %2029 = vmatprep.subr.bf16.mxu0 0
    %2030 = vmatpush1.bf16.msra.mxu0 %v1220
    %2031 = vmatprep.subr.bf16.mxu0 0
    %2032 = vmatpush1.bf16.msra.mxu0 %v1223
    %2033 = vmatprep.subr.bf16.mxu0 0
    %2034 = vmatpush1.bf16.msra.mxu0 0
    %2035 = vmatprep.subr.bf16.mxu0 0
    %2036 = vmatpush1.bf16.msra.mxu0 0
    %2037 = vmatprep.subr.bf16.mxu0 0
    %2038 = vmatpush1.bf16.msra.mxu0 0
    %2039 = vmatprep.subr.bf16.mxu0 0
    %2040 = vmatpush1.bf16.msra.mxu0 0
    %2041 = vmatprep.subr.bf16.mxu0 0
    %2042 = vmatpush1.bf16.msra.mxu0 0
    %2043 = vmatprep.subr.bf16.mxu0 0
    %2044 = vmatpush1.bf16.msra.mxu0 0
    %2045 = vmatprep.subr.bf16.mxu0 0
    %2046 = vmatpush1.bf16.msra.mxu0 0
    %2047 = vmatprep.subr.bf16.mxu0 0
    %2048 = vmatpush1.bf16.msra.mxu0 0
    %2049 = vmatprep.mubr.bf16.mxu0 0
    %2050 = vmatmul.mubr.bf16.gmra.mrb[0].mxu0 %v1350
    %v2051 = vpop.f32.mrb[0].mxu0
    %v2052 = vadd.f32 %v354, %v2051
    %v2053 = vpop.f32.mrb[0].mxu0
    %v2054 = vpop.f32.mrb[0].mxu0
    %v2055 = vpop.f32.mrb[0].mxu0
    %2056 = vdwg.mxu0
    %v2057 = vadd.f32 %v1930, %v2011
    %v2058 = vxor.u32 %v2057, 2147483648
    %v2059 = vmul.f32 %v2058, 1.442695
    %v2060 = vpow.pop %v2059
    %v2061 = vadd.f32 %v2060, 1.0
    %v2062 = vrcp.pop %v2061
    %v2063 = vmul.f32 1.0, %v2062
    %v2064 = vadd.f32 %v1932, %v2013
    %v2065 = vxor.u32 %v2064, 2147483648
    %v2066 = vmul.f32 %v2065, 1.442695
    %v2067 = vpow.pop %v2066
    %v2068 = vadd.f32 %v2067, 1.0
    %v2069 = vrcp.pop %v2068
    %v2070 = vmul.f32 1.0, %v2069
    %v2071 = vmul.f32 %v2063, %v2052
    %v2072 = vadd.f32 %v1971, %v2071
    %v2073 = vtanh.pop %v2072
    %v2074 = vsub.f32 1.0, %v2070
    %v2075 = vmul.f32 %v2074, %v2073
    %v2076 = vmul.f32 %v2070, %v1349
    %v2077 = vadd.f32 %v2075, %v2076
    %v2078 = vpack.c.bf16 %v2077, %v2077
    %2079 = vmatprep.subr.bf16.mxu0 %v1432
    %2080 = vmatpush1.bf16.msra.mxu0 %v1431
    %2081 = vmatprep.subr.bf16.mxu0 %v1435
    %2082 = vmatpush1.bf16.msra.mxu0 %v1434
    %2083 = vmatprep.subr.bf16.mxu0 %v1438
    %2084 = vmatpush1.bf16.msra.mxu0 %v1437
    %2085 = vmatprep.subr.bf16.mxu0 %v1441
    %2086 = vmatpush1.bf16.msra.mxu0 %v1440
    %2087 = vmatprep.subr.bf16.mxu0 %v1444
    %2088 = vmatpush1.bf16.msra.mxu0 %v1443
    %2089 = vmatprep.subr.bf16.mxu0 %v1447
    %2090 = vmatpush1.bf16.msra.mxu0 %v1446
    %2091 = vmatprep.subr.bf16.mxu0 %v1450
    %2092 = vmatpush1.bf16.msra.mxu0 %v1449
    %2093 = vmatprep.subr.bf16.mxu0 %v1453
    %2094 = vmatpush1.bf16.msra.mxu0 %v1452
    %2095 = vmatprep.subr.bf16.mxu0 0
    %2096 = vmatpush1.bf16.msra.mxu0 0
    %2097 = vmatprep.subr.bf16.mxu0 0
    %2098 = vmatpush1.bf16.msra.mxu0 0
    %2099 = vmatprep.subr.bf16.mxu0 0
    %2100 = vmatpush1.bf16.msra.mxu0 0
    %2101 = vmatprep.subr.bf16.mxu0 0
    %2102 = vmatpush1.bf16.msra.mxu0 0
    %2103 = vmatprep.subr.bf16.mxu0 0
    %2104 = vmatpush1.bf16.msra.mxu0 0
    %2105 = vmatprep.subr.bf16.mxu0 0
    %2106 = vmatpush1.bf16.msra.mxu0 0
    %2107 = vmatprep.subr.bf16.mxu0 0
    %2108 = vmatpush1.bf16.msra.mxu0 0
    %2109 = vmatprep.subr.bf16.mxu0 0
    %2110 = vmatpush1.bf16.msra.mxu0 0
    %2111 = vmatprep.mubr.bf16.mxu0 0
    %2112 = vmatmul.mubr.bf16.gmra.mrb[0].mxu0 %v2078
    %v2113 = vpop.f32.mrb[0].mxu0
    %v2114 = vadd.f32 %v397, %v2113
    %v2115 = vpop.f32.mrb[0].mxu0
    %v2116 = vadd.f32 %v401, %v2115
    %v2117 = vpop.f32.mrb[0].mxu0
    %v2118 = vpop.f32.mrb[0].mxu0
    %2119 = vdwg.mxu0
    %2120 = vmatprep.subr.bf16.mxu0 0
    %2121 = vmatpush1.bf16.msra.mxu0 %v1433
    %2122 = vmatprep.subr.bf16.mxu0 0
    %2123 = vmatpush1.bf16.msra.mxu0 %v1436
    %2124 = vmatprep.subr.bf16.mxu0 0
    %2125 = vmatpush1.bf16.msra.mxu0 %v1439
    %2126 = vmatprep.subr.bf16.mxu0 0
    %2127 = vmatpush1.bf16.msra.mxu0 %v1442
    %2128 = vmatprep.subr.bf16.mxu0 0
    %2129 = vmatpush1.bf16.msra.mxu0 %v1445
    %2130 = vmatprep.subr.bf16.mxu0 0
    %2131 = vmatpush1.bf16.msra.mxu0 %v1448
    %2132 = vmatprep.subr.bf16.mxu0 0
    %2133 = vmatpush1.bf16.msra.mxu0 %v1451
    %2134 = vmatprep.subr.bf16.mxu0 0
    %2135 = vmatpush1.bf16.msra.mxu0 %v1454
    %2136 = vmatprep.subr.bf16.mxu0 0
    %2137 = vmatpush1.bf16.msra.mxu0 0
    %2138 = vmatprep.subr.bf16.mxu0 0
    %2139 = vmatpush1.bf16.msra.mxu0 0
    %2140 = vmatprep.subr.bf16.mxu0 0
    %2141 = vmatpush1.bf16.msra.mxu0 0
    %2142 = vmatprep.subr.bf16.mxu0 0
    %2143 = vmatpush1.bf16.msra.mxu0 0
    %2144 = vmatprep.subr.bf16.mxu0 0
    %2145 = vmatpush1.bf16.msra.mxu0 0
    %2146 = vmatprep.subr.bf16.mxu0 0
    %2147 = vmatpush1.bf16.msra.mxu0 0
    %2148 = vmatprep.subr.bf16.mxu0 0
    %2149 = vmatpush1.bf16.msra.mxu0 0
    %2150 = vmatprep.subr.bf16.mxu0 0
    %2151 = vmatpush1.bf16.msra.mxu0 0
    %2152 = vmatprep.mubr.bf16.mxu0 0
    %2153 = vmatmul.mubr.bf16.gmra.mrb[0].mxu0 %v2078
    %v2154 = vpop.f32.mrb[0].mxu0
    %v2155 = vadd.f32 %v405, %v2154
    %v2156 = vpop.f32.mrb[0].mxu0
    %v2157 = vpop.f32.mrb[0].mxu0
    %v2158 = vpop.f32.mrb[0].mxu0
    %2159 = vdwg.mxu0
    %2160 = vmatprep.subr.bf16.mxu0 %v1641
    %2161 = vmatpush1.bf16.msra.mxu0 %v1640
    %2162 = vmatprep.subr.bf16.mxu0 %v1644
    %2163 = vmatpush1.bf16.msra.mxu0 %v1643
    %2164 = vmatprep.subr.bf16.mxu0 %v1647
    %2165 = vmatpush1.bf16.msra.mxu0 %v1646
    %2166 = vmatprep.subr.bf16.mxu0 %v1650
    %2167 = vmatpush1.bf16.msra.mxu0 %v1649
    %2168 = vmatprep.subr.bf16.mxu0 %v1653
    %2169 = vmatpush1.bf16.msra.mxu0 %v1652
    %2170 = vmatprep.subr.bf16.mxu0 %v1656
    %2171 = vmatpush1.bf16.msra.mxu0 %v1655
    %2172 = vmatprep.subr.bf16.mxu0 %v1659
    %2173 = vmatpush1.bf16.msra.mxu0 %v1658
    %2174 = vmatprep.subr.bf16.mxu0 %v1662
    %2175 = vmatpush1.bf16.msra.mxu0 %v1661
    %2176 = vmatprep.subr.bf16.mxu0 0
    %2177 = vmatpush1.bf16.msra.mxu0 0
    %2178 = vmatprep.subr.bf16.mxu0 0
    %2179 = vmatpush1.bf16.msra.mxu0 0
    %2180 = vmatprep.subr.bf16.mxu0 0
    %2181 = vmatpush1.bf16.msra.mxu0 0
    %2182 = vmatprep.subr.bf16.mxu0 0
    %2183 = vmatpush1.bf16.msra.mxu0 0
    %2184 = vmatprep.subr.bf16.mxu0 0
    %2185 = vmatpush1.bf16.msra.mxu0 0
    %2186 = vmatprep.subr.bf16.mxu0 0
    %2187 = vmatpush1.bf16.msra.mxu0 0
    %2188 = vmatprep.subr.bf16.mxu0 0
    %2189 = vmatpush1.bf16.msra.mxu0 0
    %2190 = vmatprep.subr.bf16.mxu0 0
    %2191 = vmatpush1.bf16.msra.mxu0 0
    %2192 = vmatprep.mubr.bf16.mxu0 0
    %2193 = vmatmul.mubr.bf16.gmra.mrb[0].mxu0 %v1790
    %v2194 = vpop.f32.mrb[0].mxu0
    %v2195 = vadd.f32 %v363, %v2194
    %v2196 = vpop.f32.mrb[0].mxu0
    %v2197 = vadd.f32 %v367, %v2196
    %v2198 = vpop.f32.mrb[0].mxu0
    %v2199 = vpop.f32.mrb[0].mxu0
    %2200 = vdwg.mxu0
    %2201 = vmatprep.subr.bf16.mxu0 0
    %2202 = vmatpush1.bf16.msra.mxu0 %v1642
    %2203 = vmatprep.subr.bf16.mxu0 0
    %2204 = vmatpush1.bf16.msra.mxu0 %v1645
    %2205 = vmatprep.subr.bf16.mxu0 0
    %2206 = vmatpush1.bf16.msra.mxu0 %v1648
    %2207 = vmatprep.subr.bf16.mxu0 0
    %2208 = vmatpush1.bf16.msra.mxu0 %v1651
    %2209 = vmatprep.subr.bf16.mxu0 0
    %2210 = vmatpush1.bf16.msra.mxu0 %v1654
    %2211 = vmatprep.subr.bf16.mxu0 0
    %2212 = vmatpush1.bf16.msra.mxu0 %v1657
    %2213 = vmatprep.subr.bf16.mxu0 0
    %2214 = vmatpush1.bf16.msra.mxu0 %v1660
    %2215 = vmatprep.subr.bf16.mxu0 0
    %2216 = vmatpush1.bf16.msra.mxu0 %v1663
    %2217 = vmatprep.subr.bf16.mxu0 0
    %2218 = vmatpush1.bf16.msra.mxu0 0
    %2219 = vmatprep.subr.bf16.mxu0 0
    %2220 = vmatpush1.bf16.msra.mxu0 0
    %2221 = vmatprep.subr.bf16.mxu0 0
    %2222 = vmatpush1.bf16.msra.mxu0 0
    %2223 = vmatprep.subr.bf16.mxu0 0
    %2224 = vmatpush1.bf16.msra.mxu0 0
    %2225 = vmatprep.subr.bf16.mxu0 0
    %2226 = vmatpush1.bf16.msra.mxu0 0
    %2227 = vmatprep.subr.bf16.mxu0 0
    %2228 = vmatpush1.bf16.msra.mxu0 0
    %2229 = vmatprep.subr.bf16.mxu0 0
    %2230 = vmatpush1.bf16.msra.mxu0 0
    %2231 = vmatprep.subr.bf16.mxu0 0
    %2232 = vmatpush1.bf16.msra.mxu0 0
    %2233 = vmatprep.mubr.bf16.mxu0 0
    %2234 = vmatmul.mubr.bf16.gmra.mrb[0].mxu0 %v1790
    %v2235 = vpop.f32.mrb[0].mxu0
    %v2236 = vadd.f32 %v371, %v2235
    %v2237 = vpop.f32.mrb[0].mxu0
    %v2238 = vpop.f32.mrb[0].mxu0
    %v2239 = vpop.f32.mrb[0].mxu0
    %2240 = vdwg.mxu0
    %v2241 = vadd.f32 %v2114, %v2195
    %v2242 = vxor.u32 %v2241, 2147483648
    %v2243 = vmul.f32 %v2242, 1.442695
    %v2244 = vpow.pop %v2243
    %v2245 = vadd.f32 %v2244, 1.0
    %v2246 = vrcp.pop %v2245
    %v2247 = vmul.f32 1.0, %v2246
    %v2248 = vadd.f32 %v2116, %v2197
    %v2249 = vxor.u32 %v2248, 2147483648
    %v2250 = vmul.f32 %v2249, 1.442695
    %v2251 = vpow.pop %v2250
    %v2252 = vadd.f32 %v2251, 1.0
    %v2253 = vrcp.pop %v2252
    %v2254 = vmul.f32 1.0, %v2253
    %v2255 = vmul.f32 %v2247, %v2236
    %v2256 = vadd.f32 %v2155, %v2255
    %v2257 = vtanh.pop %v2256
    %v2258 = vsub.f32 1.0, %v2254
    %v2259 = vmul.f32 %v2258, %v2257
    %v2260 = vmul.f32 %v2254, %v1789
    %v2261 = vadd.f32 %v2259, %v2260
    %v2262 = vpack.c.bf16 %v2261, %v2261
    %s2263 = scalar_lea.vmem %s16, 4
    %2264 = vst [vmem:[%s2263] sm:$0xf] %v2262
    %2265 = vmatprep.subr.bf16.mxu0 %v761
    %2266 = vmatpush1.bf16.msra.mxu0 %v760
    %2267 = vmatprep.subr.bf16.mxu0 %v764
    %2268 = vmatpush1.bf16.msra.mxu0 %v763
    %2269 = vmatprep.subr.bf16.mxu0 %v767
    %2270 = vmatpush1.bf16.msra.mxu0 %v766
    %2271 = vmatprep.subr.bf16.mxu0 %v770
    %2272 = vmatpush1.bf16.msra.mxu0 %v769
    %2273 = vmatprep.subr.bf16.mxu0 %v773
    %2274 = vmatpush1.bf16.msra.mxu0 %v772
    %2275 = vmatprep.subr.bf16.mxu0 %v776
    %2276 = vmatpush1.bf16.msra.mxu0 %v775
    %2277 = vmatprep.subr.bf16.mxu0 %v779
    %2278 = vmatpush1.bf16.msra.mxu0 %v778
    %2279 = vmatprep.subr.bf16.mxu0 %v782
    %2280 = vmatpush1.bf16.msra.mxu0 %v781
    %2281 = vmatprep.subr.bf16.mxu0 0
    %2282 = vmatpush1.bf16.msra.mxu0 0
    %2283 = vmatprep.subr.bf16.mxu0 0
    %2284 = vmatpush1.bf16.msra.mxu0 0
    %2285 = vmatprep.subr.bf16.mxu0 0
    %2286 = vmatpush1.bf16.msra.mxu0 0
    %2287 = vmatprep.subr.bf16.mxu0 0
    %2288 = vmatpush1.bf16.msra.mxu0 0
    %2289 = vmatprep.subr.bf16.mxu0 0
    %2290 = vmatpush1.bf16.msra.mxu0 0
    %2291 = vmatprep.subr.bf16.mxu0 0
    %2292 = vmatpush1.bf16.msra.mxu0 0
    %2293 = vmatprep.subr.bf16.mxu0 0
    %2294 = vmatpush1.bf16.msra.mxu0 0
    %2295 = vmatprep.subr.bf16.mxu0 0
    %2296 = vmatpush1.bf16.msra.mxu0 0
    %2297 = vmatprep.mubr.bf16.mxu0 0
    %2298 = vmatmul.mubr.bf16.gmra.mrb[0].mxu0 %v1894
    %v2299 = vpop.f32.mrb[0].mxu0
    %v2300 = vadd.f32 %v329, %v2299
    %v2301 = vpop.f32.mrb[0].mxu0
    %v2302 = vadd.f32 %v333, %v2301
    %v2303 = vpop.f32.mrb[0].mxu0
    %v2304 = vpop.f32.mrb[0].mxu0
    %2305 = vdwg.mxu0
    %2306 = vmatprep.subr.bf16.mxu0 0
    %2307 = vmatpush1.bf16.msra.mxu0 %v762
    %2308 = vmatprep.subr.bf16.mxu0 0
    %2309 = vmatpush1.bf16.msra.mxu0 %v765
    %2310 = vmatprep.subr.bf16.mxu0 0
    %2311 = vmatpush1.bf16.msra.mxu0 %v768
    %2312 = vmatprep.subr.bf16.mxu0 0
    %2313 = vmatpush1.bf16.msra.mxu0 %v771
    %2314 = vmatprep.subr.bf16.mxu0 0
    %2315 = vmatpush1.bf16.msra.mxu0 %v774
    %2316 = vmatprep.subr.bf16.mxu0 0
    %2317 = vmatpush1.bf16.msra.mxu0 %v777
    %2318 = vmatprep.subr.bf16.mxu0 0
    %2319 = vmatpush1.bf16.msra.mxu0 %v780
    %2320 = vmatprep.subr.bf16.mxu0 0
    %2321 = vmatpush1.bf16.msra.mxu0 %v783
    %2322 = vmatprep.subr.bf16.mxu0 0
    %2323 = vmatpush1.bf16.msra.mxu0 0
    %2324 = vmatprep.subr.bf16.mxu0 0
    %2325 = vmatpush1.bf16.msra.mxu0 0
    %2326 = vmatprep.subr.bf16.mxu0 0
    %2327 = vmatpush1.bf16.msra.mxu0 0
    %2328 = vmatprep.subr.bf16.mxu0 0
    %2329 = vmatpush1.bf16.msra.mxu0 0
    %2330 = vmatprep.subr.bf16.mxu0 0
    %2331 = vmatpush1.bf16.msra.mxu0 0
    %2332 = vmatprep.subr.bf16.mxu0 0
    %2333 = vmatpush1.bf16.msra.mxu0 0
    %2334 = vmatprep.subr.bf16.mxu0 0
    %2335 = vmatpush1.bf16.msra.mxu0 0
    %2336 = vmatprep.subr.bf16.mxu0 0
    %2337 = vmatpush1.bf16.msra.mxu0 0
    %2338 = vmatprep.mubr.bf16.mxu0 0
    %2339 = vmatmul.mubr.bf16.gmra.mrb[0].mxu0 %v1894
    %v2340 = vpop.f32.mrb[0].mxu0
    %v2341 = vadd.f32 %v337, %v2340
    %v2342 = vpop.f32.mrb[0].mxu0
    %v2343 = vpop.f32.mrb[0].mxu0
    %v2344 = vpop.f32.mrb[0].mxu0
    %2345 = vdwg.mxu0
    %v2346 = vadd.f32 %v589, %v2300
    %v2347 = vxor.u32 %v2346, 2147483648
    %v2348 = vmul.f32 %v2347, 1.442695
    %v2349 = vpow.pop %v2348
    %v2350 = vadd.f32 %v2349, 1.0
    %v2351 = vrcp.pop %v2350
    %v2352 = vmul.f32 1.0, %v2351
    %v2353 = vadd.f32 %v591, %v2302
    %v2354 = vxor.u32 %v2353, 2147483648
    %v2355 = vmul.f32 %v2354, 1.442695
    %v2356 = vpow.pop %v2355
    %v2357 = vadd.f32 %v2356, 1.0
    %v2358 = vrcp.pop %v2357
    %v2359 = vmul.f32 1.0, %v2358
    %v2360 = vmul.f32 %v2352, %v2341
    %v2361 = vadd.f32 %v658, %v2360
    %v2362 = vtanh.pop %v2361
    %v2363 = vsub.f32 1.0, %v2359
    %v2364 = vmul.f32 %v2363, %v2362
    %v2365 = vmul.f32 %v2359, %v1893
    %v2366 = vadd.f32 %v2364, %v2365
    %v2367 = vpack.c.bf16 %v2366, %v2366
    %2368 = vmatprep.subr.bf16.mxu0 %v992
    %2369 = vmatpush1.bf16.msra.mxu0 %v991
    %2370 = vmatprep.subr.bf16.mxu0 %v995
    %2371 = vmatpush1.bf16.msra.mxu0 %v994
    %2372 = vmatprep.subr.bf16.mxu0 %v998
    %2373 = vmatpush1.bf16.msra.mxu0 %v997
    %2374 = vmatprep.subr.bf16.mxu0 %v1001
    %2375 = vmatpush1.bf16.msra.mxu0 %v1000
    %2376 = vmatprep.subr.bf16.mxu0 %v1004
    %2377 = vmatpush1.bf16.msra.mxu0 %v1003
    %2378 = vmatprep.subr.bf16.mxu0 %v1007
    %2379 = vmatpush1.bf16.msra.mxu0 %v1006
    %2380 = vmatprep.subr.bf16.mxu0 %v1010
    %2381 = vmatpush1.bf16.msra.mxu0 %v1009
    %2382 = vmatprep.subr.bf16.mxu0 %v1013
    %2383 = vmatpush1.bf16.msra.mxu0 %v1012
    %2384 = vmatprep.subr.bf16.mxu0 0
    %2385 = vmatpush1.bf16.msra.mxu0 0
    %2386 = vmatprep.subr.bf16.mxu0 0
    %2387 = vmatpush1.bf16.msra.mxu0 0
    %2388 = vmatprep.subr.bf16.mxu0 0
    %2389 = vmatpush1.bf16.msra.mxu0 0
    %2390 = vmatprep.subr.bf16.mxu0 0
    %2391 = vmatpush1.bf16.msra.mxu0 0
    %2392 = vmatprep.subr.bf16.mxu0 0
    %2393 = vmatpush1.bf16.msra.mxu0 0
    %2394 = vmatprep.subr.bf16.mxu0 0
    %2395 = vmatpush1.bf16.msra.mxu0 0
    %2396 = vmatprep.subr.bf16.mxu0 0
    %2397 = vmatpush1.bf16.msra.mxu0 0
    %2398 = vmatprep.subr.bf16.mxu0 0
    %2399 = vmatpush1.bf16.msra.mxu0 0
    %2400 = vmatprep.mubr.bf16.mxu0 0
    %2401 = vmatmul.mubr.bf16.gmra.mrb[0].mxu0 %v2367
    %v2402 = vpop.f32.mrb[0].mxu0
    %v2403 = vadd.f32 %v380, %v2402
    %v2404 = vpop.f32.mrb[0].mxu0
    %v2405 = vadd.f32 %v384, %v2404
    %v2406 = vpop.f32.mrb[0].mxu0
    %v2407 = vpop.f32.mrb[0].mxu0
    %2408 = vdwg.mxu0
    %2409 = vmatprep.subr.bf16.mxu0 0
    %2410 = vmatpush1.bf16.msra.mxu0 %v993
    %2411 = vmatprep.subr.bf16.mxu0 0
    %2412 = vmatpush1.bf16.msra.mxu0 %v996
    %2413 = vmatprep.subr.bf16.mxu0 0
    %2414 = vmatpush1.bf16.msra.mxu0 %v999
    %2415 = vmatprep.subr.bf16.mxu0 0
    %2416 = vmatpush1.bf16.msra.mxu0 %v1002
    %2417 = vmatprep.subr.bf16.mxu0 0
    %2418 = vmatpush1.bf16.msra.mxu0 %v1005
    %2419 = vmatprep.subr.bf16.mxu0 0
    %2420 = vmatpush1.bf16.msra.mxu0 %v1008
    %2421 = vmatprep.subr.bf16.mxu0 0
    %2422 = vmatpush1.bf16.msra.mxu0 %v1011
    %2423 = vmatprep.subr.bf16.mxu0 0
    %2424 = vmatpush1.bf16.msra.mxu0 %v1014
    %2425 = vmatprep.subr.bf16.mxu0 0
    %2426 = vmatpush1.bf16.msra.mxu0 0
    %2427 = vmatprep.subr.bf16.mxu0 0
    %2428 = vmatpush1.bf16.msra.mxu0 0
    %2429 = vmatprep.subr.bf16.mxu0 0
    %2430 = vmatpush1.bf16.msra.mxu0 0
    %2431 = vmatprep.subr.bf16.mxu0 0
    %2432 = vmatpush1.bf16.msra.mxu0 0
    %2433 = vmatprep.subr.bf16.mxu0 0
    %2434 = vmatpush1.bf16.msra.mxu0 0
    %2435 = vmatprep.subr.bf16.mxu0 0
    %2436 = vmatpush1.bf16.msra.mxu0 0
    %2437 = vmatprep.subr.bf16.mxu0 0
    %2438 = vmatpush1.bf16.msra.mxu0 0
    %2439 = vmatprep.subr.bf16.mxu0 0
    %2440 = vmatpush1.bf16.msra.mxu0 0
    %2441 = vmatprep.mubr.bf16.mxu0 0
    %2442 = vmatmul.mubr.bf16.gmra.mrb[0].mxu0 %v2367
    %v2443 = vpop.f32.mrb[0].mxu0
    %v2444 = vadd.f32 %v388, %v2443
    %v2445 = vpop.f32.mrb[0].mxu0
    %v2446 = vpop.f32.mrb[0].mxu0
    %v2447 = vpop.f32.mrb[0].mxu0
    %2448 = vdwg.mxu0
    %2449 = vmatprep.subr.bf16.mxu0 %v1201
    %2450 = vmatpush1.bf16.msra.mxu0 %v1200
    %2451 = vmatprep.subr.bf16.mxu0 %v1204
    %2452 = vmatpush1.bf16.msra.mxu0 %v1203
    %2453 = vmatprep.subr.bf16.mxu0 %v1207
    %2454 = vmatpush1.bf16.msra.mxu0 %v1206
    %2455 = vmatprep.subr.bf16.mxu0 %v1210
    %2456 = vmatpush1.bf16.msra.mxu0 %v1209
    %2457 = vmatprep.subr.bf16.mxu0 %v1213
    %2458 = vmatpush1.bf16.msra.mxu0 %v1212
    %2459 = vmatprep.subr.bf16.mxu0 %v1216
    %2460 = vmatpush1.bf16.msra.mxu0 %v1215
    %2461 = vmatprep.subr.bf16.mxu0 %v1219
    %2462 = vmatpush1.bf16.msra.mxu0 %v1218
    %2463 = vmatprep.subr.bf16.mxu0 %v1222
    %2464 = vmatpush1.bf16.msra.mxu0 %v1221
    %2465 = vmatprep.subr.bf16.mxu0 0
    %2466 = vmatpush1.bf16.msra.mxu0 0
    %2467 = vmatprep.subr.bf16.mxu0 0
    %2468 = vmatpush1.bf16.msra.mxu0 0
    %2469 = vmatprep.subr.bf16.mxu0 0
    %2470 = vmatpush1.bf16.msra.mxu0 0
    %2471 = vmatprep.subr.bf16.mxu0 0
    %2472 = vmatpush1.bf16.msra.mxu0 0
    %2473 = vmatprep.subr.bf16.mxu0 0
    %2474 = vmatpush1.bf16.msra.mxu0 0
    %2475 = vmatprep.subr.bf16.mxu0 0
    %2476 = vmatpush1.bf16.msra.mxu0 0
    %2477 = vmatprep.subr.bf16.mxu0 0
    %2478 = vmatpush1.bf16.msra.mxu0 0
    %2479 = vmatprep.subr.bf16.mxu0 0
    %2480 = vmatpush1.bf16.msra.mxu0 0
    %2481 = vmatprep.mubr.bf16.mxu0 0
    %2482 = vmatmul.mubr.bf16.gmra.mrb[0].mxu0 %v2078
    %v2483 = vpop.f32.mrb[0].mxu0
    %v2484 = vadd.f32 %v346, %v2483
    %v2485 = vpop.f32.mrb[0].mxu0
    %v2486 = vadd.f32 %v350, %v2485
    %v2487 = vpop.f32.mrb[0].mxu0
    %v2488 = vpop.f32.mrb[0].mxu0
    %2489 = vdwg.mxu0
    %2490 = vmatprep.subr.bf16.mxu0 0
    %2491 = vmatpush1.bf16.msra.mxu0 %v1202
    %2492 = vmatprep.subr.bf16.mxu0 0
    %2493 = vmatpush1.bf16.msra.mxu0 %v1205
    %2494 = vmatprep.subr.bf16.mxu0 0
    %2495 = vmatpush1.bf16.msra.mxu0 %v1208
    %2496 = vmatprep.subr.bf16.mxu0 0
    %2497 = vmatpush1.bf16.msra.mxu0 %v1211
    %2498 = vmatprep.subr.bf16.mxu0 0
    %2499 = vmatpush1.bf16.msra.mxu0 %v1214
    %2500 = vmatprep.subr.bf16.mxu0 0
    %2501 = vmatpush1.bf16.msra.mxu0 %v1217
    %2502 = vmatprep.subr.bf16.mxu0 0
    %2503 = vmatpush1.bf16.msra.mxu0 %v1220
    %2504 = vmatprep.subr.bf16.mxu0 0
    %2505 = vmatpush1.bf16.msra.mxu0 %v1223
    %2506 = vmatprep.subr.bf16.mxu0 0
    %2507 = vmatpush1.bf16.msra.mxu0 0
    %2508 = vmatprep.subr.bf16.mxu0 0
    %2509 = vmatpush1.bf16.msra.mxu0 0
    %2510 = vmatprep.subr.bf16.mxu0 0
    %2511 = vmatpush1.bf16.msra.mxu0 0
    %2512 = vmatprep.subr.bf16.mxu0 0
    %2513 = vmatpush1.bf16.msra.mxu0 0
    %2514 = vmatprep.subr.bf16.mxu0 0
    %2515 = vmatpush1.bf16.msra.mxu0 0
    %2516 = vmatprep.subr.bf16.mxu0 0
    %2517 = vmatpush1.bf16.msra.mxu0 0
    %2518 = vmatprep.subr.bf16.mxu0 0
    %2519 = vmatpush1.bf16.msra.mxu0 0
    %2520 = vmatprep.subr.bf16.mxu0 0
    %2521 = vmatpush1.bf16.msra.mxu0 0
    %2522 = vmatprep.mubr.bf16.mxu0 0
    %2523 = vmatmul.mubr.bf16.gmra.mrb[0].mxu0 %v2078
    %v2524 = vpop.f32.mrb[0].mxu0
    %v2525 = vadd.f32 %v354, %v2524
    %v2526 = vpop.f32.mrb[0].mxu0
    %v2527 = vpop.f32.mrb[0].mxu0
    %v2528 = vpop.f32.mrb[0].mxu0
    %2529 = vdwg.mxu0
    %v2530 = vadd.f32 %v2403, %v2484
    %v2531 = vxor.u32 %v2530, 2147483648
    %v2532 = vmul.f32 %v2531, 1.442695
    %v2533 = vpow.pop %v2532
    %v2534 = vadd.f32 %v2533, 1.0
    %v2535 = vrcp.pop %v2534
    %v2536 = vmul.f32 1.0, %v2535
    %v2537 = vadd.f32 %v2405, %v2486
    %v2538 = vxor.u32 %v2537, 2147483648
    %v2539 = vmul.f32 %v2538, 1.442695
    %v2540 = vpow.pop %v2539
    %v2541 = vadd.f32 %v2540, 1.0
    %v2542 = vrcp.pop %v2541
    %v2543 = vmul.f32 1.0, %v2542
    %v2544 = vmul.f32 %v2536, %v2525
    %v2545 = vadd.f32 %v2444, %v2544
    %v2546 = vtanh.pop %v2545
    %v2547 = vsub.f32 1.0, %v2543
    %v2548 = vmul.f32 %v2547, %v2546
    %v2549 = vmul.f32 %v2543, %v2077
    %v2550 = vadd.f32 %v2548, %v2549
    %v2551 = vpack.c.bf16 %v2550, %v2550
    %2552 = vmatprep.subr.bf16.mxu0 %v1432
    %2553 = vmatpush1.bf16.msra.mxu0 %v1431
    %2554 = vmatprep.subr.bf16.mxu0 %v1435
    %2555 = vmatpush1.bf16.msra.mxu0 %v1434
    %2556 = vmatprep.subr.bf16.mxu0 %v1438
    %2557 = vmatpush1.bf16.msra.mxu0 %v1437
    %2558 = vmatprep.subr.bf16.mxu0 %v1441
    %2559 = vmatpush1.bf16.msra.mxu0 %v1440
    %2560 = vmatprep.subr.bf16.mxu0 %v1444
    %2561 = vmatpush1.bf16.msra.mxu0 %v1443
    %2562 = vmatprep.subr.bf16.mxu0 %v1447
    %2563 = vmatpush1.bf16.msra.mxu0 %v1446
    %2564 = vmatprep.subr.bf16.mxu0 %v1450
    %2565 = vmatpush1.bf16.msra.mxu0 %v1449
    %2566 = vmatprep.subr.bf16.mxu0 %v1453
    %2567 = vmatpush1.bf16.msra.mxu0 %v1452
    %2568 = vmatprep.subr.bf16.mxu0 0
    %2569 = vmatpush1.bf16.msra.mxu0 0
    %2570 = vmatprep.subr.bf16.mxu0 0
    %2571 = vmatpush1.bf16.msra.mxu0 0
    %2572 = vmatprep.subr.bf16.mxu0 0
    %2573 = vmatpush1.bf16.msra.mxu0 0
    %2574 = vmatprep.subr.bf16.mxu0 0
    %2575 = vmatpush1.bf16.msra.mxu0 0
    %2576 = vmatprep.subr.bf16.mxu0 0
    %2577 = vmatpush1.bf16.msra.mxu0 0
    %2578 = vmatprep.subr.bf16.mxu0 0
    %2579 = vmatpush1.bf16.msra.mxu0 0
    %2580 = vmatprep.subr.bf16.mxu0 0
    %2581 = vmatpush1.bf16.msra.mxu0 0
    %2582 = vmatprep.subr.bf16.mxu0 0
    %2583 = vmatpush1.bf16.msra.mxu0 0
    %2584 = vmatprep.mubr.bf16.mxu0 0
    %2585 = vmatmul.mubr.bf16.gmra.mrb[0].mxu0 %v2551
    %v2586 = vpop.f32.mrb[0].mxu0
    %v2587 = vadd.f32 %v397, %v2586
    %v2588 = vpop.f32.mrb[0].mxu0
    %v2589 = vadd.f32 %v401, %v2588
    %v2590 = vpop.f32.mrb[0].mxu0
    %v2591 = vpop.f32.mrb[0].mxu0
    %2592 = vdwg.mxu0
    %2593 = vmatprep.subr.bf16.mxu0 0
    %2594 = vmatpush1.bf16.msra.mxu0 %v1433
    %2595 = vmatprep.subr.bf16.mxu0 0
    %2596 = vmatpush1.bf16.msra.mxu0 %v1436
    %2597 = vmatprep.subr.bf16.mxu0 0
    %2598 = vmatpush1.bf16.msra.mxu0 %v1439
    %2599 = vmatprep.subr.bf16.mxu0 0
    %2600 = vmatpush1.bf16.msra.mxu0 %v1442
    %2601 = vmatprep.subr.bf16.mxu0 0
    %2602 = vmatpush1.bf16.msra.mxu0 %v1445
    %2603 = vmatprep.subr.bf16.mxu0 0
    %2604 = vmatpush1.bf16.msra.mxu0 %v1448
    %2605 = vmatprep.subr.bf16.mxu0 0
    %2606 = vmatpush1.bf16.msra.mxu0 %v1451
    %2607 = vmatprep.subr.bf16.mxu0 0
    %2608 = vmatpush1.bf16.msra.mxu0 %v1454
    %2609 = vmatprep.subr.bf16.mxu0 0
    %2610 = vmatpush1.bf16.msra.mxu0 0
    %2611 = vmatprep.subr.bf16.mxu0 0
    %2612 = vmatpush1.bf16.msra.mxu0 0
    %2613 = vmatprep.subr.bf16.mxu0 0
    %2614 = vmatpush1.bf16.msra.mxu0 0
    %2615 = vmatprep.subr.bf16.mxu0 0
    %2616 = vmatpush1.bf16.msra.mxu0 0
    %2617 = vmatprep.subr.bf16.mxu0 0
    %2618 = vmatpush1.bf16.msra.mxu0 0
    %2619 = vmatprep.subr.bf16.mxu0 0
    %2620 = vmatpush1.bf16.msra.mxu0 0
    %2621 = vmatprep.subr.bf16.mxu0 0
    %2622 = vmatpush1.bf16.msra.mxu0 0
    %2623 = vmatprep.subr.bf16.mxu0 0
    %2624 = vmatpush1.bf16.msra.mxu0 0
    %2625 = vmatprep.mubr.bf16.mxu0 0
    %2626 = vmatmul.mubr.bf16.gmra.mrb[0].mxu0 %v2551
    %v2627 = vpop.f32.mrb[0].mxu0
    %v2628 = vadd.f32 %v405, %v2627
    %v2629 = vpop.f32.mrb[0].mxu0
    %v2630 = vpop.f32.mrb[0].mxu0
    %v2631 = vpop.f32.mrb[0].mxu0
    %2632 = vdwg.mxu0
    %2633 = vmatprep.subr.bf16.mxu0 %v1641
    %2634 = vmatpush1.bf16.msra.mxu0 %v1640
    %2635 = vmatprep.subr.bf16.mxu0 %v1644
    %2636 = vmatpush1.bf16.msra.mxu0 %v1643
    %2637 = vmatprep.subr.bf16.mxu0 %v1647
    %2638 = vmatpush1.bf16.msra.mxu0 %v1646
    %2639 = vmatprep.subr.bf16.mxu0 %v1650
    %2640 = vmatpush1.bf16.msra.mxu0 %v1649
    %2641 = vmatprep.subr.bf16.mxu0 %v1653
    %2642 = vmatpush1.bf16.msra.mxu0 %v1652
    %2643 = vmatprep.subr.bf16.mxu0 %v1656
    %2644 = vmatpush1.bf16.msra.mxu0 %v1655
    %2645 = vmatprep.subr.bf16.mxu0 %v1659
    %2646 = vmatpush1.bf16.msra.mxu0 %v1658
    %2647 = vmatprep.subr.bf16.mxu0 %v1662
    %2648 = vmatpush1.bf16.msra.mxu0 %v1661
    %2649 = vmatprep.subr.bf16.mxu0 0
    %2650 = vmatpush1.bf16.msra.mxu0 0
    %2651 = vmatprep.subr.bf16.mxu0 0
    %2652 = vmatpush1.bf16.msra.mxu0 0
    %2653 = vmatprep.subr.bf16.mxu0 0
    %2654 = vmatpush1.bf16.msra.mxu0 0
    %2655 = vmatprep.subr.bf16.mxu0 0
    %2656 = vmatpush1.bf16.msra.mxu0 0
    %2657 = vmatprep.subr.bf16.mxu0 0
    %2658 = vmatpush1.bf16.msra.mxu0 0
    %2659 = vmatprep.subr.bf16.mxu0 0
    %2660 = vmatpush1.bf16.msra.mxu0 0
    %2661 = vmatprep.subr.bf16.mxu0 0
    %2662 = vmatpush1.bf16.msra.mxu0 0
    %2663 = vmatprep.subr.bf16.mxu0 0
    %2664 = vmatpush1.bf16.msra.mxu0 0
    %2665 = vmatprep.mubr.bf16.mxu0 0
    %2666 = vmatmul.mubr.bf16.gmra.mrb[0].mxu0 %v2262
    %v2667 = vpop.f32.mrb[0].mxu0
    %v2668 = vadd.f32 %v363, %v2667
    %v2669 = vpop.f32.mrb[0].mxu0
    %v2670 = vadd.f32 %v367, %v2669
    %v2671 = vpop.f32.mrb[0].mxu0
    %v2672 = vpop.f32.mrb[0].mxu0
    %2673 = vdwg.mxu0
    %2674 = vmatprep.subr.bf16.mxu0 0
    %2675 = vmatpush1.bf16.msra.mxu0 %v1642
    %2676 = vmatprep.subr.bf16.mxu0 0
    %2677 = vmatpush1.bf16.msra.mxu0 %v1645
    %2678 = vmatprep.subr.bf16.mxu0 0
    %2679 = vmatpush1.bf16.msra.mxu0 %v1648
    %2680 = vmatprep.subr.bf16.mxu0 0
    %2681 = vmatpush1.bf16.msra.mxu0 %v1651
    %2682 = vmatprep.subr.bf16.mxu0 0
    %2683 = vmatpush1.bf16.msra.mxu0 %v1654
    %2684 = vmatprep.subr.bf16.mxu0 0
    %2685 = vmatpush1.bf16.msra.mxu0 %v1657
    %2686 = vmatprep.subr.bf16.mxu0 0
    %2687 = vmatpush1.bf16.msra.mxu0 %v1660
    %2688 = vmatprep.subr.bf16.mxu0 0
    %2689 = vmatpush1.bf16.msra.mxu0 %v1663
    %2690 = vmatprep.subr.bf16.mxu0 0
    %2691 = vmatpush1.bf16.msra.mxu0 0
    %2692 = vmatprep.subr.bf16.mxu0 0
    %2693 = vmatpush1.bf16.msra.mxu0 0
    %2694 = vmatprep.subr.bf16.mxu0 0
    %2695 = vmatpush1.bf16.msra.mxu0 0
    %2696 = vmatprep.subr.bf16.mxu0 0
    %2697 = vmatpush1.bf16.msra.mxu0 0
    %2698 = vmatprep.subr.bf16.mxu0 0
    %2699 = vmatpush1.bf16.msra.mxu0 0
    %2700 = vmatprep.subr.bf16.mxu0 0
    %2701 = vmatpush1.bf16.msra.mxu0 0
    %2702 = vmatprep.subr.bf16.mxu0 0
    %2703 = vmatpush1.bf16.msra.mxu0 0
    %2704 = vmatprep.subr.bf16.mxu0 0
    %2705 = vmatpush1.bf16.msra.mxu0 0
    %2706 = vmatprep.mubr.bf16.mxu0 0
    %2707 = vmatmul.mubr.bf16.gmra.mrb[0].mxu0 %v2262
    %v2708 = vpop.f32.mrb[0].mxu0
    %v2709 = vadd.f32 %v371, %v2708
    %v2710 = vpop.f32.mrb[0].mxu0
    %v2711 = vpop.f32.mrb[0].mxu0
    %v2712 = vpop.f32.mrb[0].mxu0
    %2713 = vdwg.mxu0
    %v2714 = vadd.f32 %v2587, %v2668
    %v2715 = vxor.u32 %v2714, 2147483648
    %v2716 = vmul.f32 %v2715, 1.442695
    %v2717 = vpow.pop %v2716
    %v2718 = vadd.f32 %v2717, 1.0
    %v2719 = vrcp.pop %v2718
    %v2720 = vmul.f32 1.0, %v2719
    %v2721 = vadd.f32 %v2589, %v2670
    %v2722 = vxor.u32 %v2721, 2147483648
    %v2723 = vmul.f32 %v2722, 1.442695
    %v2724 = vpow.pop %v2723
    %v2725 = vadd.f32 %v2724, 1.0
    %v2726 = vrcp.pop %v2725
    %v2727 = vmul.f32 1.0, %v2726
    %v2728 = vmul.f32 %v2720, %v2709
    %v2729 = vadd.f32 %v2628, %v2728
    %v2730 = vtanh.pop %v2729
    %v2731 = vsub.f32 1.0, %v2727
    %v2732 = vmul.f32 %v2731, %v2730
    %v2733 = vmul.f32 %v2727, %v2261
    %v2734 = vadd.f32 %v2732, %v2733
    %v2735 = vpack.c.bf16 %v2734, %v2734
    %s2736 = scalar_lea.vmem %s16, 8
    %2737 = vst [vmem:[%s2736] sm:$0xf] %v2735
    %2738 = vmatprep.subr.bf16.mxu0 %v761
    %2739 = vmatpush1.bf16.msra.mxu0 %v760
    %2740 = vmatprep.subr.bf16.mxu0 %v764
    %2741 = vmatpush1.bf16.msra.mxu0 %v763
    %2742 = vmatprep.subr.bf16.mxu0 %v767
    %2743 = vmatpush1.bf16.msra.mxu0 %v766
    %2744 = vmatprep.subr.bf16.mxu0 %v770
    %2745 = vmatpush1.bf16.msra.mxu0 %v769
    %2746 = vmatprep.subr.bf16.mxu0 %v773
    %2747 = vmatpush1.bf16.msra.mxu0 %v772
    %2748 = vmatprep.subr.bf16.mxu0 %v776
    %2749 = vmatpush1.bf16.msra.mxu0 %v775
    %2750 = vmatprep.subr.bf16.mxu0 %v779
    %2751 = vmatpush1.bf16.msra.mxu0 %v778
    %2752 = vmatprep.subr.bf16.mxu0 %v782
    %2753 = vmatpush1.bf16.msra.mxu0 %v781
    %2754 = vmatprep.subr.bf16.mxu0 0
    %2755 = vmatpush1.bf16.msra.mxu0 0
    %2756 = vmatprep.subr.bf16.mxu0 0
    %2757 = vmatpush1.bf16.msra.mxu0 0
    %2758 = vmatprep.subr.bf16.mxu0 0
    %2759 = vmatpush1.bf16.msra.mxu0 0
    %2760 = vmatprep.subr.bf16.mxu0 0
    %2761 = vmatpush1.bf16.msra.mxu0 0
    %2762 = vmatprep.subr.bf16.mxu0 0
    %2763 = vmatpush1.bf16.msra.mxu0 0
    %2764 = vmatprep.subr.bf16.mxu0 0
    %2765 = vmatpush1.bf16.msra.mxu0 0
    %2766 = vmatprep.subr.bf16.mxu0 0
    %2767 = vmatpush1.bf16.msra.mxu0 0
    %2768 = vmatprep.subr.bf16.mxu0 0
    %2769 = vmatpush1.bf16.msra.mxu0 0
    %2770 = vmatprep.mubr.bf16.mxu0 0
    %2771 = vmatmul.mubr.bf16.gmra.mrb[0].mxu0 %v2367
    %v2772 = vpop.f32.mrb[0].mxu0
    %v2773 = vadd.f32 %v329, %v2772
    %v2774 = vpop.f32.mrb[0].mxu0
    %v2775 = vadd.f32 %v333, %v2774
    %v2776 = vpop.f32.mrb[0].mxu0
    %v2777 = vpop.f32.mrb[0].mxu0
    %2778 = vdwg.mxu0
    %2779 = vmatprep.subr.bf16.mxu0 0
    %2780 = vmatpush1.bf16.msra.mxu0 %v762
    %2781 = vmatprep.subr.bf16.mxu0 0
    %2782 = vmatpush1.bf16.msra.mxu0 %v765
    %2783 = vmatprep.subr.bf16.mxu0 0
    %2784 = vmatpush1.bf16.msra.mxu0 %v768
    %2785 = vmatprep.subr.bf16.mxu0 0
    %2786 = vmatpush1.bf16.msra.mxu0 %v771
    %2787 = vmatprep.subr.bf16.mxu0 0
    %2788 = vmatpush1.bf16.msra.mxu0 %v774
    %2789 = vmatprep.subr.bf16.mxu0 0
    %2790 = vmatpush1.bf16.msra.mxu0 %v777
    %2791 = vmatprep.subr.bf16.mxu0 0
    %2792 = vmatpush1.bf16.msra.mxu0 %v780
    %2793 = vmatprep.subr.bf16.mxu0 0
    %2794 = vmatpush1.bf16.msra.mxu0 %v783
    %2795 = vmatprep.subr.bf16.mxu0 0
    %2796 = vmatpush1.bf16.msra.mxu0 0
    %2797 = vmatprep.subr.bf16.mxu0 0
    %2798 = vmatpush1.bf16.msra.mxu0 0
    %2799 = vmatprep.subr.bf16.mxu0 0
    %2800 = vmatpush1.bf16.msra.mxu0 0
    %2801 = vmatprep.subr.bf16.mxu0 0
    %2802 = vmatpush1.bf16.msra.mxu0 0
    %2803 = vmatprep.subr.bf16.mxu0 0
    %2804 = vmatpush1.bf16.msra.mxu0 0
    %2805 = vmatprep.subr.bf16.mxu0 0
    %2806 = vmatpush1.bf16.msra.mxu0 0
    %2807 = vmatprep.subr.bf16.mxu0 0
    %2808 = vmatpush1.bf16.msra.mxu0 0
    %2809 = vmatprep.subr.bf16.mxu0 0
    %2810 = vmatpush1.bf16.msra.mxu0 0
    %2811 = vmatprep.mubr.bf16.mxu0 0
    %2812 = vmatmul.mubr.bf16.gmra.mrb[0].mxu0 %v2367
    %v2813 = vpop.f32.mrb[0].mxu0
    %v2814 = vadd.f32 %v337, %v2813
    %v2815 = vpop.f32.mrb[0].mxu0
    %v2816 = vpop.f32.mrb[0].mxu0
    %v2817 = vpop.f32.mrb[0].mxu0
    %2818 = vdwg.mxu0
    %v2819 = vadd.f32 %v593, %v2773
    %v2820 = vxor.u32 %v2819, 2147483648
    %v2821 = vmul.f32 %v2820, 1.442695
    %v2822 = vpow.pop %v2821
    %v2823 = vadd.f32 %v2822, 1.0
    %v2824 = vrcp.pop %v2823
    %v2825 = vmul.f32 1.0, %v2824
    %v2826 = vadd.f32 %v595, %v2775
    %v2827 = vxor.u32 %v2826, 2147483648
    %v2828 = vmul.f32 %v2827, 1.442695
    %v2829 = vpow.pop %v2828
    %v2830 = vadd.f32 %v2829, 1.0
    %v2831 = vrcp.pop %v2830
    %v2832 = vmul.f32 1.0, %v2831
    %v2833 = vmul.f32 %v2825, %v2814
    %v2834 = vadd.f32 %v661, %v2833
    %v2835 = vtanh.pop %v2834
    %v2836 = vsub.f32 1.0, %v2832
    %v2837 = vmul.f32 %v2836, %v2835
    %v2838 = vmul.f32 %v2832, %v2366
    %v2839 = vadd.f32 %v2837, %v2838
    %v2840 = vpack.c.bf16 %v2839, %v2839
    %2841 = vmatprep.subr.bf16.mxu0 %v992
    %2842 = vmatpush1.bf16.msra.mxu0 %v991
    %2843 = vmatprep.subr.bf16.mxu0 %v995
    %2844 = vmatpush1.bf16.msra.mxu0 %v994
    %2845 = vmatprep.subr.bf16.mxu0 %v998
    %2846 = vmatpush1.bf16.msra.mxu0 %v997
    %2847 = vmatprep.subr.bf16.mxu0 %v1001
    %2848 = vmatpush1.bf16.msra.mxu0 %v1000
    %2849 = vmatprep.subr.bf16.mxu0 %v1004
    %2850 = vmatpush1.bf16.msra.mxu0 %v1003
    %2851 = vmatprep.subr.bf16.mxu0 %v1007
    %2852 = vmatpush1.bf16.msra.mxu0 %v1006
    %2853 = vmatprep.subr.bf16.mxu0 %v1010
    %2854 = vmatpush1.bf16.msra.mxu0 %v1009
    %2855 = vmatprep.subr.bf16.mxu0 %v1013
    %2856 = vmatpush1.bf16.msra.mxu0 %v1012
    %2857 = vmatprep.subr.bf16.mxu0 0
    %2858 = vmatpush1.bf16.msra.mxu0 0
    %2859 = vmatprep.subr.bf16.mxu0 0
    %2860 = vmatpush1.bf16.msra.mxu0 0
    %2861 = vmatprep.subr.bf16.mxu0 0
    %2862 = vmatpush1.bf16.msra.mxu0 0
    %2863 = vmatprep.subr.bf16.mxu0 0
    %2864 = vmatpush1.bf16.msra.mxu0 0
    %2865 = vmatprep.subr.bf16.mxu0 0
    %2866 = vmatpush1.bf16.msra.mxu0 0
    %2867 = vmatprep.subr.bf16.mxu0 0
    %2868 = vmatpush1.bf16.msra.mxu0 0
    %2869 = vmatprep.subr.bf16.mxu0 0
    %2870 = vmatpush1.bf16.msra.mxu0 0
    %2871 = vmatprep.subr.bf16.mxu0 0
    %2872 = vmatpush1.bf16.msra.mxu0 0
    %2873 = vmatprep.mubr.bf16.mxu0 0
    %2874 = vmatmul.mubr.bf16.gmra.mrb[0].mxu0 %v2840
    %v2875 = vpop.f32.mrb[0].mxu0
    %v2876 = vadd.f32 %v380, %v2875
    %v2877 = vpop.f32.mrb[0].mxu0
    %v2878 = vadd.f32 %v384, %v2877
    %v2879 = vpop.f32.mrb[0].mxu0
    %v2880 = vpop.f32.mrb[0].mxu0
    %2881 = vdwg.mxu0
    %2882 = vmatprep.subr.bf16.mxu0 0
    %2883 = vmatpush1.bf16.msra.mxu0 %v993
    %2884 = vmatprep.subr.bf16.mxu0 0
    %2885 = vmatpush1.bf16.msra.mxu0 %v996
    %2886 = vmatprep.subr.bf16.mxu0 0
    %2887 = vmatpush1.bf16.msra.mxu0 %v999
    %2888 = vmatprep.subr.bf16.mxu0 0
    %2889 = vmatpush1.bf16.msra.mxu0 %v1002
    %2890 = vmatprep.subr.bf16.mxu0 0
    %2891 = vmatpush1.bf16.msra.mxu0 %v1005
    %2892 = vmatprep.subr.bf16.mxu0 0
    %2893 = vmatpush1.bf16.msra.mxu0 %v1008
    %2894 = vmatprep.subr.bf16.mxu0 0
    %2895 = vmatpush1.bf16.msra.mxu0 %v1011
    %2896 = vmatprep.subr.bf16.mxu0 0
    %2897 = vmatpush1.bf16.msra.mxu0 %v1014
    %2898 = vmatprep.subr.bf16.mxu0 0
    %2899 = vmatpush1.bf16.msra.mxu0 0
    %2900 = vmatprep.subr.bf16.mxu0 0
    %2901 = vmatpush1.bf16.msra.mxu0 0
    %2902 = vmatprep.subr.bf16.mxu0 0
    %2903 = vmatpush1.bf16.msra.mxu0 0
    %2904 = vmatprep.subr.bf16.mxu0 0
    %2905 = vmatpush1.bf16.msra.mxu0 0
    %2906 = vmatprep.subr.bf16.mxu0 0
    %2907 = vmatpush1.bf16.msra.mxu0 0
    %2908 = vmatprep.subr.bf16.mxu0 0
    %2909 = vmatpush1.bf16.msra.mxu0 0
    %2910 = vmatprep.subr.bf16.mxu0 0
    %2911 = vmatpush1.bf16.msra.mxu0 0
    %2912 = vmatprep.subr.bf16.mxu0 0
    %2913 = vmatpush1.bf16.msra.mxu0 0
    %2914 = vmatprep.mubr.bf16.mxu0 0
    %2915 = vmatmul.mubr.bf16.gmra.mrb[0].mxu0 %v2840
    %v2916 = vpop.f32.mrb[0].mxu0
    %v2917 = vadd.f32 %v388, %v2916
    %v2918 = vpop.f32.mrb[0].mxu0
    %v2919 = vpop.f32.mrb[0].mxu0
    %v2920 = vpop.f32.mrb[0].mxu0
    %2921 = vdwg.mxu0
    %2922 = vmatprep.subr.bf16.mxu0 %v1201
    %2923 = vmatpush1.bf16.msra.mxu0 %v1200
    %2924 = vmatprep.subr.bf16.mxu0 %v1204
    %2925 = vmatpush1.bf16.msra.mxu0 %v1203
    %2926 = vmatprep.subr.bf16.mxu0 %v1207
    %2927 = vmatpush1.bf16.msra.mxu0 %v1206
    %2928 = vmatprep.subr.bf16.mxu0 %v1210
    %2929 = vmatpush1.bf16.msra.mxu0 %v1209
    %2930 = vmatprep.subr.bf16.mxu0 %v1213
    %2931 = vmatpush1.bf16.msra.mxu0 %v1212
    %2932 = vmatprep.subr.bf16.mxu0 %v1216
    %2933 = vmatpush1.bf16.msra.mxu0 %v1215
    %2934 = vmatprep.subr.bf16.mxu0 %v1219
    %2935 = vmatpush1.bf16.msra.mxu0 %v1218
    %2936 = vmatprep.subr.bf16.mxu0 %v1222
    %2937 = vmatpush1.bf16.msra.mxu0 %v1221
    %2938 = vmatprep.subr.bf16.mxu0 0
    %2939 = vmatpush1.bf16.msra.mxu0 0
    %2940 = vmatprep.subr.bf16.mxu0 0
    %2941 = vmatpush1.bf16.msra.mxu0 0
    %2942 = vmatprep.subr.bf16.mxu0 0
    %2943 = vmatpush1.bf16.msra.mxu0 0
    %2944 = vmatprep.subr.bf16.mxu0 0
    %2945 = vmatpush1.bf16.msra.mxu0 0
    %2946 = vmatprep.subr.bf16.mxu0 0
    %2947 = vmatpush1.bf16.msra.mxu0 0
    %2948 = vmatprep.subr.bf16.mxu0 0
    %2949 = vmatpush1.bf16.msra.mxu0 0
    %2950 = vmatprep.subr.bf16.mxu0 0
    %2951 = vmatpush1.bf16.msra.mxu0 0
    %2952 = vmatprep.subr.bf16.mxu0 0
    %2953 = vmatpush1.bf16.msra.mxu0 0
    %2954 = vmatprep.mubr.bf16.mxu0 0
    %2955 = vmatmul.mubr.bf16.gmra.mrb[0].mxu0 %v2551
    %v2956 = vpop.f32.mrb[0].mxu0
    %v2957 = vadd.f32 %v346, %v2956
    %v2958 = vpop.f32.mrb[0].mxu0
    %v2959 = vadd.f32 %v350, %v2958
    %v2960 = vpop.f32.mrb[0].mxu0
    %v2961 = vpop.f32.mrb[0].mxu0
    %2962 = vdwg.mxu0
    %2963 = vmatprep.subr.bf16.mxu0 0
    %2964 = vmatpush1.bf16.msra.mxu0 %v1202
    %2965 = vmatprep.subr.bf16.mxu0 0
    %2966 = vmatpush1.bf16.msra.mxu0 %v1205
    %2967 = vmatprep.subr.bf16.mxu0 0
    %2968 = vmatpush1.bf16.msra.mxu0 %v1208
    %2969 = vmatprep.subr.bf16.mxu0 0
    %2970 = vmatpush1.bf16.msra.mxu0 %v1211
    %2971 = vmatprep.subr.bf16.mxu0 0
    %2972 = vmatpush1.bf16.msra.mxu0 %v1214
    %2973 = vmatprep.subr.bf16.mxu0 0
    %2974 = vmatpush1.bf16.msra.mxu0 %v1217
    %2975 = vmatprep.subr.bf16.mxu0 0
    %2976 = vmatpush1.bf16.msra.mxu0 %v1220
    %2977 = vmatprep.subr.bf16.mxu0 0
    %2978 = vmatpush1.bf16.msra.mxu0 %v1223
    %2979 = vmatprep.subr.bf16.mxu0 0
    %2980 = vmatpush1.bf16.msra.mxu0 0
    %2981 = vmatprep.subr.bf16.mxu0 0
    %2982 = vmatpush1.bf16.msra.mxu0 0
    %2983 = vmatprep.subr.bf16.mxu0 0
    %2984 = vmatpush1.bf16.msra.mxu0 0
    %2985 = vmatprep.subr.bf16.mxu0 0
    %2986 = vmatpush1.bf16.msra.mxu0 0
    %2987 = vmatprep.subr.bf16.mxu0 0
    %2988 = vmatpush1.bf16.msra.mxu0 0
    %2989 = vmatprep.subr.bf16.mxu0 0
    %2990 = vmatpush1.bf16.msra.mxu0 0
    %2991 = vmatprep.subr.bf16.mxu0 0
    %2992 = vmatpush1.bf16.msra.mxu0 0
    %2993 = vmatprep.subr.bf16.mxu0 0
    %2994 = vmatpush1.bf16.msra.mxu0 0
    %2995 = vmatprep.mubr.bf16.mxu0 0
    %2996 = vmatmul.mubr.bf16.gmra.mrb[0].mxu0 %v2551
    %v2997 = vpop.f32.mrb[0].mxu0
    %v2998 = vadd.f32 %v354, %v2997
    %v2999 = vpop.f32.mrb[0].mxu0
    %v3000 = vpop.f32.mrb[0].mxu0
    %v3001 = vpop.f32.mrb[0].mxu0
    %3002 = vdwg.mxu0
    %v3003 = vadd.f32 %v2876, %v2957
    %v3004 = vxor.u32 %v3003, 2147483648
    %v3005 = vmul.f32 %v3004, 1.442695
    %v3006 = vpow.pop %v3005
    %v3007 = vadd.f32 %v3006, 1.0
    %v3008 = vrcp.pop %v3007
    %v3009 = vmul.f32 1.0, %v3008
    %v3010 = vadd.f32 %v2878, %v2959
    %v3011 = vxor.u32 %v3010, 2147483648
    %v3012 = vmul.f32 %v3011, 1.442695
    %v3013 = vpow.pop %v3012
    %v3014 = vadd.f32 %v3013, 1.0
    %v3015 = vrcp.pop %v3014
    %v3016 = vmul.f32 1.0, %v3015
    %v3017 = vmul.f32 %v3009, %v2998
    %v3018 = vadd.f32 %v2917, %v3017
    %v3019 = vtanh.pop %v3018
    %v3020 = vsub.f32 1.0, %v3016
    %v3021 = vmul.f32 %v3020, %v3019
    %v3022 = vmul.f32 %v3016, %v2550
    %v3023 = vadd.f32 %v3021, %v3022
    %v3024 = vpack.c.bf16 %v3023, %v3023
    %3025 = vmatprep.subr.bf16.mxu0 %v1432
    %3026 = vmatpush1.bf16.msra.mxu0 %v1431
    %3027 = vmatprep.subr.bf16.mxu0 %v1435
    %3028 = vmatpush1.bf16.msra.mxu0 %v1434
    %3029 = vmatprep.subr.bf16.mxu0 %v1438
    %3030 = vmatpush1.bf16.msra.mxu0 %v1437
    %3031 = vmatprep.subr.bf16.mxu0 %v1441
    %3032 = vmatpush1.bf16.msra.mxu0 %v1440
    %3033 = vmatprep.subr.bf16.mxu0 %v1444
    %3034 = vmatpush1.bf16.msra.mxu0 %v1443
    %3035 = vmatprep.subr.bf16.mxu0 %v1447
    %3036 = vmatpush1.bf16.msra.mxu0 %v1446
    %3037 = vmatprep.subr.bf16.mxu0 %v1450
    %3038 = vmatpush1.bf16.msra.mxu0 %v1449
    %3039 = vmatprep.subr.bf16.mxu0 %v1453
    %3040 = vmatpush1.bf16.msra.mxu0 %v1452
    %3041 = vmatprep.subr.bf16.mxu0 0
    %3042 = vmatpush1.bf16.msra.mxu0 0
    %3043 = vmatprep.subr.bf16.mxu0 0
    %3044 = vmatpush1.bf16.msra.mxu0 0
    %3045 = vmatprep.subr.bf16.mxu0 0
    %3046 = vmatpush1.bf16.msra.mxu0 0
    %3047 = vmatprep.subr.bf16.mxu0 0
    %3048 = vmatpush1.bf16.msra.mxu0 0
    %3049 = vmatprep.subr.bf16.mxu0 0
    %3050 = vmatpush1.bf16.msra.mxu0 0
    %3051 = vmatprep.subr.bf16.mxu0 0
    %3052 = vmatpush1.bf16.msra.mxu0 0
    %3053 = vmatprep.subr.bf16.mxu0 0
    %3054 = vmatpush1.bf16.msra.mxu0 0
    %3055 = vmatprep.subr.bf16.mxu0 0
    %3056 = vmatpush1.bf16.msra.mxu0 0
    %3057 = vmatprep.mubr.bf16.mxu0 0
    %3058 = vmatmul.mubr.bf16.gmra.mrb[0].mxu0 %v3024
    %v3059 = vpop.f32.mrb[0].mxu0
    %v3060 = vadd.f32 %v397, %v3059
    %v3061 = vpop.f32.mrb[0].mxu0
    %v3062 = vadd.f32 %v401, %v3061
    %v3063 = vpop.f32.mrb[0].mxu0
    %v3064 = vpop.f32.mrb[0].mxu0
    %3065 = vdwg.mxu0
    %3066 = vmatprep.subr.bf16.mxu0 0
    %3067 = vmatpush1.bf16.msra.mxu0 %v1433
    %3068 = vmatprep.subr.bf16.mxu0 0
    %3069 = vmatpush1.bf16.msra.mxu0 %v1436
    %3070 = vmatprep.subr.bf16.mxu0 0
    %3071 = vmatpush1.bf16.msra.mxu0 %v1439
    %3072 = vmatprep.subr.bf16.mxu0 0
    %3073 = vmatpush1.bf16.msra.mxu0 %v1442
    %3074 = vmatprep.subr.bf16.mxu0 0
    %3075 = vmatpush1.bf16.msra.mxu0 %v1445
    %3076 = vmatprep.subr.bf16.mxu0 0
    %3077 = vmatpush1.bf16.msra.mxu0 %v1448
    %3078 = vmatprep.subr.bf16.mxu0 0
    %3079 = vmatpush1.bf16.msra.mxu0 %v1451
    %3080 = vmatprep.subr.bf16.mxu0 0
    %3081 = vmatpush1.bf16.msra.mxu0 %v1454
    %3082 = vmatprep.subr.bf16.mxu0 0
    %3083 = vmatpush1.bf16.msra.mxu0 0
    %3084 = vmatprep.subr.bf16.mxu0 0
    %3085 = vmatpush1.bf16.msra.mxu0 0
    %3086 = vmatprep.subr.bf16.mxu0 0
    %3087 = vmatpush1.bf16.msra.mxu0 0
    %3088 = vmatprep.subr.bf16.mxu0 0
    %3089 = vmatpush1.bf16.msra.mxu0 0
    %3090 = vmatprep.subr.bf16.mxu0 0
    %3091 = vmatpush1.bf16.msra.mxu0 0
    %3092 = vmatprep.subr.bf16.mxu0 0
    %3093 = vmatpush1.bf16.msra.mxu0 0
    %3094 = vmatprep.subr.bf16.mxu0 0
    %3095 = vmatpush1.bf16.msra.mxu0 0
    %3096 = vmatprep.subr.bf16.mxu0 0
    %3097 = vmatpush1.bf16.msra.mxu0 0
    %3098 = vmatprep.mubr.bf16.mxu0 0
    %3099 = vmatmul.mubr.bf16.gmra.mrb[0].mxu0 %v3024
    %v3100 = vpop.f32.mrb[0].mxu0
    %v3101 = vadd.f32 %v405, %v3100
    %v3102 = vpop.f32.mrb[0].mxu0
    %v3103 = vpop.f32.mrb[0].mxu0
    %v3104 = vpop.f32.mrb[0].mxu0
    %3105 = vdwg.mxu0
    %3106 = vmatprep.subr.bf16.mxu0 %v1641
    %3107 = vmatpush1.bf16.msra.mxu0 %v1640
    %3108 = vmatprep.subr.bf16.mxu0 %v1644
    %3109 = vmatpush1.bf16.msra.mxu0 %v1643
    %3110 = vmatprep.subr.bf16.mxu0 %v1647
    %3111 = vmatpush1.bf16.msra.mxu0 %v1646
    %3112 = vmatprep.subr.bf16.mxu0 %v1650
    %3113 = vmatpush1.bf16.msra.mxu0 %v1649
    %3114 = vmatprep.subr.bf16.mxu0 %v1653
    %3115 = vmatpush1.bf16.msra.mxu0 %v1652
    %3116 = vmatprep.subr.bf16.mxu0 %v1656
    %3117 = vmatpush1.bf16.msra.mxu0 %v1655
    %3118 = vmatprep.subr.bf16.mxu0 %v1659
    %3119 = vmatpush1.bf16.msra.mxu0 %v1658
    %3120 = vmatprep.subr.bf16.mxu0 %v1662
    %3121 = vmatpush1.bf16.msra.mxu0 %v1661
    %3122 = vmatprep.subr.bf16.mxu0 0
    %3123 = vmatpush1.bf16.msra.mxu0 0
    %3124 = vmatprep.subr.bf16.mxu0 0
    %3125 = vmatpush1.bf16.msra.mxu0 0
    %3126 = vmatprep.subr.bf16.mxu0 0
    %3127 = vmatpush1.bf16.msra.mxu0 0
    %3128 = vmatprep.subr.bf16.mxu0 0
    %3129 = vmatpush1.bf16.msra.mxu0 0
    %3130 = vmatprep.subr.bf16.mxu0 0
    %3131 = vmatpush1.bf16.msra.mxu0 0
    %3132 = vmatprep.subr.bf16.mxu0 0
    %3133 = vmatpush1.bf16.msra.mxu0 0
    %3134 = vmatprep.subr.bf16.mxu0 0
    %3135 = vmatpush1.bf16.msra.mxu0 0
    %3136 = vmatprep.subr.bf16.mxu0 0
    %3137 = vmatpush1.bf16.msra.mxu0 0
    %3138 = vmatprep.mubr.bf16.mxu0 0
    %3139 = vmatmul.mubr.bf16.gmra.mrb[0].mxu0 %v2735
    %v3140 = vpop.f32.mrb[0].mxu0
    %v3141 = vadd.f32 %v363, %v3140
    %v3142 = vpop.f32.mrb[0].mxu0
    %v3143 = vadd.f32 %v367, %v3142
    %v3144 = vpop.f32.mrb[0].mxu0
    %v3145 = vpop.f32.mrb[0].mxu0
    %3146 = vdwg.mxu0
    %3147 = vmatprep.subr.bf16.mxu0 0
    %3148 = vmatpush1.bf16.msra.mxu0 %v1642
    %3149 = vmatprep.subr.bf16.mxu0 0
    %3150 = vmatpush1.bf16.msra.mxu0 %v1645
    %3151 = vmatprep.subr.bf16.mxu0 0
    %3152 = vmatpush1.bf16.msra.mxu0 %v1648
    %3153 = vmatprep.subr.bf16.mxu0 0
    %3154 = vmatpush1.bf16.msra.mxu0 %v1651
    %3155 = vmatprep.subr.bf16.mxu0 0
    %3156 = vmatpush1.bf16.msra.mxu0 %v1654
    %3157 = vmatprep.subr.bf16.mxu0 0
    %3158 = vmatpush1.bf16.msra.mxu0 %v1657
    %3159 = vmatprep.subr.bf16.mxu0 0
    %3160 = vmatpush1.bf16.msra.mxu0 %v1660
    %3161 = vmatprep.subr.bf16.mxu0 0
    %3162 = vmatpush1.bf16.msra.mxu0 %v1663
    %3163 = vmatprep.subr.bf16.mxu0 0
    %3164 = vmatpush1.bf16.msra.mxu0 0
    %3165 = vmatprep.subr.bf16.mxu0 0
    %3166 = vmatpush1.bf16.msra.mxu0 0
    %3167 = vmatprep.subr.bf16.mxu0 0
    %3168 = vmatpush1.bf16.msra.mxu0 0
    %3169 = vmatprep.subr.bf16.mxu0 0
    %3170 = vmatpush1.bf16.msra.mxu0 0
    %3171 = vmatprep.subr.bf16.mxu0 0
    %3172 = vmatpush1.bf16.msra.mxu0 0
    %3173 = vmatprep.subr.bf16.mxu0 0
    %3174 = vmatpush1.bf16.msra.mxu0 0
    %3175 = vmatprep.subr.bf16.mxu0 0
    %3176 = vmatpush1.bf16.msra.mxu0 0
    %3177 = vmatprep.subr.bf16.mxu0 0
    %3178 = vmatpush1.bf16.msra.mxu0 0
    %3179 = vmatprep.mubr.bf16.mxu0 0
    %3180 = vmatmul.mubr.bf16.gmra.mrb[0].mxu0 %v2735
    %v3181 = vpop.f32.mrb[0].mxu0
    %v3182 = vadd.f32 %v371, %v3181
    %v3183 = vpop.f32.mrb[0].mxu0
    %v3184 = vpop.f32.mrb[0].mxu0
    %v3185 = vpop.f32.mrb[0].mxu0
    %3186 = vdwg.mxu0
    %v3187 = vadd.f32 %v3060, %v3141
    %v3188 = vxor.u32 %v3187, 2147483648
    %v3189 = vmul.f32 %v3188, 1.442695
    %v3190 = vpow.pop %v3189
    %v3191 = vadd.f32 %v3190, 1.0
    %v3192 = vrcp.pop %v3191
    %v3193 = vmul.f32 1.0, %v3192
    %v3194 = vadd.f32 %v3062, %v3143
    %v3195 = vxor.u32 %v3194, 2147483648
    %v3196 = vmul.f32 %v3195, 1.442695
    %v3197 = vpow.pop %v3196
    %v3198 = vadd.f32 %v3197, 1.0
    %v3199 = vrcp.pop %v3198
    %v3200 = vmul.f32 1.0, %v3199
    %v3201 = vmul.f32 %v3193, %v3182
    %v3202 = vadd.f32 %v3101, %v3201
    %v3203 = vtanh.pop %v3202
    %v3204 = vsub.f32 1.0, %v3200
    %v3205 = vmul.f32 %v3204, %v3203
    %v3206 = vmul.f32 %v3200, %v2734
    %v3207 = vadd.f32 %v3205, %v3206
    %v3208 = vpack.c.bf16 %v3207, %v3207
    %s3209 = scalar_lea.vmem %s16, 12
    %3210 = vst [vmem:[%s3209] sm:$0xf] %v3208
    %3211 = vmatprep.subr.bf16.mxu0 %v761
    %3212 = vmatpush1.bf16.msra.mxu0 %v760
    %3213 = vmatprep.subr.bf16.mxu0 %v764
    %3214 = vmatpush1.bf16.msra.mxu0 %v763
    %3215 = vmatprep.subr.bf16.mxu0 %v767
    %3216 = vmatpush1.bf16.msra.mxu0 %v766
    %3217 = vmatprep.subr.bf16.mxu0 %v770
    %3218 = vmatpush1.bf16.msra.mxu0 %v769
    %3219 = vmatprep.subr.bf16.mxu0 %v773
    %3220 = vmatpush1.bf16.msra.mxu0 %v772
    %3221 = vmatprep.subr.bf16.mxu0 %v776
    %3222 = vmatpush1.bf16.msra.mxu0 %v775
    %3223 = vmatprep.subr.bf16.mxu0 %v779
    %3224 = vmatpush1.bf16.msra.mxu0 %v778
    %3225 = vmatprep.subr.bf16.mxu0 %v782
    %3226 = vmatpush1.bf16.msra.mxu0 %v781
    %3227 = vmatprep.subr.bf16.mxu0 0
    %3228 = vmatpush1.bf16.msra.mxu0 0
    %3229 = vmatprep.subr.bf16.mxu0 0
    %3230 = vmatpush1.bf16.msra.mxu0 0
    %3231 = vmatprep.subr.bf16.mxu0 0
    %3232 = vmatpush1.bf16.msra.mxu0 0
    %3233 = vmatprep.subr.bf16.mxu0 0
    %3234 = vmatpush1.bf16.msra.mxu0 0
    %3235 = vmatprep.subr.bf16.mxu0 0
    %3236 = vmatpush1.bf16.msra.mxu0 0
    %3237 = vmatprep.subr.bf16.mxu0 0
    %3238 = vmatpush1.bf16.msra.mxu0 0
    %3239 = vmatprep.subr.bf16.mxu0 0
    %3240 = vmatpush1.bf16.msra.mxu0 0
    %3241 = vmatprep.subr.bf16.mxu0 0
    %3242 = vmatpush1.bf16.msra.mxu0 0
    %3243 = vmatprep.mubr.bf16.mxu0 0
    %3244 = vmatmul.mubr.bf16.gmra.mrb[0].mxu0 %v2840
    %v3245 = vpop.f32.mrb[0].mxu0
    %v3246 = vadd.f32 %v329, %v3245
    %v3247 = vpop.f32.mrb[0].mxu0
    %v3248 = vadd.f32 %v333, %v3247
    %v3249 = vpop.f32.mrb[0].mxu0
    %v3250 = vpop.f32.mrb[0].mxu0
    %3251 = vdwg.mxu0
    %3252 = vmatprep.subr.bf16.mxu0 0
    %3253 = vmatpush1.bf16.msra.mxu0 %v762
    %3254 = vmatprep.subr.bf16.mxu0 0
    %3255 = vmatpush1.bf16.msra.mxu0 %v765
    %3256 = vmatprep.subr.bf16.mxu0 0
    %3257 = vmatpush1.bf16.msra.mxu0 %v768
    %3258 = vmatprep.subr.bf16.mxu0 0
    %3259 = vmatpush1.bf16.msra.mxu0 %v771
    %3260 = vmatprep.subr.bf16.mxu0 0
    %3261 = vmatpush1.bf16.msra.mxu0 %v774
    %3262 = vmatprep.subr.bf16.mxu0 0
    %3263 = vmatpush1.bf16.msra.mxu0 %v777
    %3264 = vmatprep.subr.bf16.mxu0 0
    %3265 = vmatpush1.bf16.msra.mxu0 %v780
    %3266 = vmatprep.subr.bf16.mxu0 0
    %3267 = vmatpush1.bf16.msra.mxu0 %v783
    %3268 = vmatprep.subr.bf16.mxu0 0
    %3269 = vmatpush1.bf16.msra.mxu0 0
    %3270 = vmatprep.subr.bf16.mxu0 0
    %3271 = vmatpush1.bf16.msra.mxu0 0
    %3272 = vmatprep.subr.bf16.mxu0 0
    %3273 = vmatpush1.bf16.msra.mxu0 0
    %3274 = vmatprep.subr.bf16.mxu0 0
    %3275 = vmatpush1.bf16.msra.mxu0 0
    %3276 = vmatprep.subr.bf16.mxu0 0
    %3277 = vmatpush1.bf16.msra.mxu0 0
    %3278 = vmatprep.subr.bf16.mxu0 0
    %3279 = vmatpush1.bf16.msra.mxu0 0
    %3280 = vmatprep.subr.bf16.mxu0 0
    %3281 = vmatpush1.bf16.msra.mxu0 0
    %3282 = vmatprep.subr.bf16.mxu0 0
    %3283 = vmatpush1.bf16.msra.mxu0 0
    %3284 = vmatprep.mubr.bf16.mxu0 0
    %3285 = vmatmul.mubr.bf16.gmra.mrb[0].mxu0 %v2840
    %v3286 = vpop.f32.mrb[0].mxu0
    %v3287 = vadd.f32 %v337, %v3286
    %v3288 = vpop.f32.mrb[0].mxu0
    %v3289 = vpop.f32.mrb[0].mxu0
    %v3290 = vpop.f32.mrb[0].mxu0
    %3291 = vdwg.mxu0
    %v3292 = vadd.f32 %v599, %v3246
    %v3293 = vxor.u32 %v3292, 2147483648
    %v3294 = vmul.f32 %v3293, 1.442695
    %v3295 = vpow.pop %v3294
    %v3296 = vadd.f32 %v3295, 1.0
    %v3297 = vrcp.pop %v3296
    %v3298 = vmul.f32 1.0, %v3297
    %v3299 = vadd.f32 %v601, %v3248
    %v3300 = vxor.u32 %v3299, 2147483648
    %v3301 = vmul.f32 %v3300, 1.442695
    %v3302 = vpow.pop %v3301
    %v3303 = vadd.f32 %v3302, 1.0
    %v3304 = vrcp.pop %v3303
    %v3305 = vmul.f32 1.0, %v3304
    %v3306 = vmul.f32 %v3298, %v3287
    %v3307 = vadd.f32 %v666, %v3306
    %v3308 = vtanh.pop %v3307
    %v3309 = vsub.f32 1.0, %v3305
    %v3310 = vmul.f32 %v3309, %v3308
    %v3311 = vmul.f32 %v3305, %v2839
    %v3312 = vadd.f32 %v3310, %v3311
    %v3313 = vpack.c.bf16 %v3312, %v3312
    %3314 = vmatprep.subr.bf16.mxu0 %v992
    %3315 = vmatpush1.bf16.msra.mxu0 %v991
    %3316 = vmatprep.subr.bf16.mxu0 %v995
    %3317 = vmatpush1.bf16.msra.mxu0 %v994
    %3318 = vmatprep.subr.bf16.mxu0 %v998
    %3319 = vmatpush1.bf16.msra.mxu0 %v997
    %3320 = vmatprep.subr.bf16.mxu0 %v1001
    %3321 = vmatpush1.bf16.msra.mxu0 %v1000
    %3322 = vmatprep.subr.bf16.mxu0 %v1004
    %3323 = vmatpush1.bf16.msra.mxu0 %v1003
    %3324 = vmatprep.subr.bf16.mxu0 %v1007
    %3325 = vmatpush1.bf16.msra.mxu0 %v1006
    %3326 = vmatprep.subr.bf16.mxu0 %v1010
    %3327 = vmatpush1.bf16.msra.mxu0 %v1009
    %3328 = vmatprep.subr.bf16.mxu0 %v1013
    %3329 = vmatpush1.bf16.msra.mxu0 %v1012
    %3330 = vmatprep.subr.bf16.mxu0 0
    %3331 = vmatpush1.bf16.msra.mxu0 0
    %3332 = vmatprep.subr.bf16.mxu0 0
    %3333 = vmatpush1.bf16.msra.mxu0 0
    %3334 = vmatprep.subr.bf16.mxu0 0
    %3335 = vmatpush1.bf16.msra.mxu0 0
    %3336 = vmatprep.subr.bf16.mxu0 0
    %3337 = vmatpush1.bf16.msra.mxu0 0
    %3338 = vmatprep.subr.bf16.mxu0 0
    %3339 = vmatpush1.bf16.msra.mxu0 0
    %3340 = vmatprep.subr.bf16.mxu0 0
    %3341 = vmatpush1.bf16.msra.mxu0 0
    %3342 = vmatprep.subr.bf16.mxu0 0
    %3343 = vmatpush1.bf16.msra.mxu0 0
    %3344 = vmatprep.subr.bf16.mxu0 0
    %3345 = vmatpush1.bf16.msra.mxu0 0
    %3346 = vmatprep.mubr.bf16.mxu0 0
    %3347 = vmatmul.mubr.bf16.gmra.mrb[0].mxu0 %v3313
    %v3348 = vpop.f32.mrb[0].mxu0
    %v3349 = vadd.f32 %v380, %v3348
    %v3350 = vpop.f32.mrb[0].mxu0
    %v3351 = vadd.f32 %v384, %v3350
    %v3352 = vpop.f32.mrb[0].mxu0
    %v3353 = vpop.f32.mrb[0].mxu0
    %3354 = vdwg.mxu0
    %3355 = vmatprep.subr.bf16.mxu0 0
    %3356 = vmatpush1.bf16.msra.mxu0 %v993
    %3357 = vmatprep.subr.bf16.mxu0 0
    %3358 = vmatpush1.bf16.msra.mxu0 %v996
    %3359 = vmatprep.subr.bf16.mxu0 0
    %3360 = vmatpush1.bf16.msra.mxu0 %v999
    %3361 = vmatprep.subr.bf16.mxu0 0
    %3362 = vmatpush1.bf16.msra.mxu0 %v1002
    %3363 = vmatprep.subr.bf16.mxu0 0
    %3364 = vmatpush1.bf16.msra.mxu0 %v1005
    %3365 = vmatprep.subr.bf16.mxu0 0
    %3366 = vmatpush1.bf16.msra.mxu0 %v1008
    %3367 = vmatprep.subr.bf16.mxu0 0
    %3368 = vmatpush1.bf16.msra.mxu0 %v1011
    %3369 = vmatprep.subr.bf16.mxu0 0
    %3370 = vmatpush1.bf16.msra.mxu0 %v1014
    %3371 = vmatprep.subr.bf16.mxu0 0
    %3372 = vmatpush1.bf16.msra.mxu0 0
    %3373 = vmatprep.subr.bf16.mxu0 0
    %3374 = vmatpush1.bf16.msra.mxu0 0
    %3375 = vmatprep.subr.bf16.mxu0 0
    %3376 = vmatpush1.bf16.msra.mxu0 0
    %3377 = vmatprep.subr.bf16.mxu0 0
    %3378 = vmatpush1.bf16.msra.mxu0 0
    %3379 = vmatprep.subr.bf16.mxu0 0
    %3380 = vmatpush1.bf16.msra.mxu0 0
    %3381 = vmatprep.subr.bf16.mxu0 0
    %3382 = vmatpush1.bf16.msra.mxu0 0
    %3383 = vmatprep.subr.bf16.mxu0 0
    %3384 = vmatpush1.bf16.msra.mxu0 0
    %3385 = vmatprep.subr.bf16.mxu0 0
    %3386 = vmatpush1.bf16.msra.mxu0 0
    %3387 = vmatprep.mubr.bf16.mxu0 0
    %3388 = vmatmul.mubr.bf16.gmra.mrb[0].mxu0 %v3313
    %v3389 = vpop.f32.mrb[0].mxu0
    %v3390 = vadd.f32 %v388, %v3389
    %v3391 = vpop.f32.mrb[0].mxu0
    %v3392 = vpop.f32.mrb[0].mxu0
    %v3393 = vpop.f32.mrb[0].mxu0
    %3394 = vdwg.mxu0
    %3395 = vmatprep.subr.bf16.mxu0 %v1201
    %3396 = vmatpush1.bf16.msra.mxu0 %v1200
    %3397 = vmatprep.subr.bf16.mxu0 %v1204
    %3398 = vmatpush1.bf16.msra.mxu0 %v1203
    %3399 = vmatprep.subr.bf16.mxu0 %v1207
    %3400 = vmatpush1.bf16.msra.mxu0 %v1206
    %3401 = vmatprep.subr.bf16.mxu0 %v1210
    %3402 = vmatpush1.bf16.msra.mxu0 %v1209
    %3403 = vmatprep.subr.bf16.mxu0 %v1213
    %3404 = vmatpush1.bf16.msra.mxu0 %v1212
    %3405 = vmatprep.subr.bf16.mxu0 %v1216
    %3406 = vmatpush1.bf16.msra.mxu0 %v1215
    %3407 = vmatprep.subr.bf16.mxu0 %v1219
    %3408 = vmatpush1.bf16.msra.mxu0 %v1218
    %3409 = vmatprep.subr.bf16.mxu0 %v1222
    %3410 = vmatpush1.bf16.msra.mxu0 %v1221
    %3411 = vmatprep.subr.bf16.mxu0 0
    %3412 = vmatpush1.bf16.msra.mxu0 0
    %3413 = vmatprep.subr.bf16.mxu0 0
    %3414 = vmatpush1.bf16.msra.mxu0 0
    %3415 = vmatprep.subr.bf16.mxu0 0
    %3416 = vmatpush1.bf16.msra.mxu0 0
    %3417 = vmatprep.subr.bf16.mxu0 0
    %3418 = vmatpush1.bf16.msra.mxu0 0
    %3419 = vmatprep.subr.bf16.mxu0 0
    %3420 = vmatpush1.bf16.msra.mxu0 0
    %3421 = vmatprep.subr.bf16.mxu0 0
    %3422 = vmatpush1.bf16.msra.mxu0 0
    %3423 = vmatprep.subr.bf16.mxu0 0
    %3424 = vmatpush1.bf16.msra.mxu0 0
    %3425 = vmatprep.subr.bf16.mxu0 0
    %3426 = vmatpush1.bf16.msra.mxu0 0
    %3427 = vmatprep.mubr.bf16.mxu0 0
    %3428 = vmatmul.mubr.bf16.gmra.mrb[0].mxu0 %v3024
    %v3429 = vpop.f32.mrb[0].mxu0
    %v3430 = vadd.f32 %v346, %v3429
    %v3431 = vpop.f32.mrb[0].mxu0
    %v3432 = vadd.f32 %v350, %v3431
    %v3433 = vpop.f32.mrb[0].mxu0
    %v3434 = vpop.f32.mrb[0].mxu0
    %3435 = vdwg.mxu0
    %3436 = vmatprep.subr.bf16.mxu0 0
    %3437 = vmatpush1.bf16.msra.mxu0 %v1202
    %3438 = vmatprep.subr.bf16.mxu0 0
    %3439 = vmatpush1.bf16.msra.mxu0 %v1205
    %3440 = vmatprep.subr.bf16.mxu0 0
    %3441 = vmatpush1.bf16.msra.mxu0 %v1208
    %3442 = vmatprep.subr.bf16.mxu0 0
    %3443 = vmatpush1.bf16.msra.mxu0 %v1211
    %3444 = vmatprep.subr.bf16.mxu0 0
    %3445 = vmatpush1.bf16.msra.mxu0 %v1214
    %3446 = vmatprep.subr.bf16.mxu0 0
    %3447 = vmatpush1.bf16.msra.mxu0 %v1217
    %3448 = vmatprep.subr.bf16.mxu0 0
    %3449 = vmatpush1.bf16.msra.mxu0 %v1220
    %3450 = vmatprep.subr.bf16.mxu0 0
    %3451 = vmatpush1.bf16.msra.mxu0 %v1223
    %3452 = vmatprep.subr.bf16.mxu0 0
    %3453 = vmatpush1.bf16.msra.mxu0 0
    %3454 = vmatprep.subr.bf16.mxu0 0
    %3455 = vmatpush1.bf16.msra.mxu0 0
    %3456 = vmatprep.subr.bf16.mxu0 0
    %3457 = vmatpush1.bf16.msra.mxu0 0
    %3458 = vmatprep.subr.bf16.mxu0 0
    %3459 = vmatpush1.bf16.msra.mxu0 0
    %3460 = vmatprep.subr.bf16.mxu0 0
    %3461 = vmatpush1.bf16.msra.mxu0 0
    %3462 = vmatprep.subr.bf16.mxu0 0
    %3463 = vmatpush1.bf16.msra.mxu0 0
    %3464 = vmatprep.subr.bf16.mxu0 0
    %3465 = vmatpush1.bf16.msra.mxu0 0
    %3466 = vmatprep.subr.bf16.mxu0 0
    %3467 = vmatpush1.bf16.msra.mxu0 0
    %3468 = vmatprep.mubr.bf16.mxu0 0
    %3469 = vmatmul.mubr.bf16.gmra.mrb[0].mxu0 %v3024
    %v3470 = vpop.f32.mrb[0].mxu0
    %v3471 = vadd.f32 %v354, %v3470
    %v3472 = vpop.f32.mrb[0].mxu0
    %v3473 = vpop.f32.mrb[0].mxu0
    %v3474 = vpop.f32.mrb[0].mxu0
    %3475 = vdwg.mxu0
    %v3476 = vadd.f32 %v3349, %v3430
    %v3477 = vxor.u32 %v3476, 2147483648
    %v3478 = vmul.f32 %v3477, 1.442695
    %v3479 = vpow.pop %v3478
    %v3480 = vadd.f32 %v3479, 1.0
    %v3481 = vrcp.pop %v3480
    %v3482 = vmul.f32 1.0, %v3481
    %v3483 = vadd.f32 %v3351, %v3432
    %v3484 = vxor.u32 %v3483, 2147483648
    %v3485 = vmul.f32 %v3484, 1.442695
    %v3486 = vpow.pop %v3485
    %v3487 = vadd.f32 %v3486, 1.0
    %v3488 = vrcp.pop %v3487
    %v3489 = vmul.f32 1.0, %v3488
    %v3490 = vmul.f32 %v3482, %v3471
    %v3491 = vadd.f32 %v3390, %v3490
    %v3492 = vtanh.pop %v3491
    %v3493 = vsub.f32 1.0, %v3489
    %v3494 = vmul.f32 %v3493, %v3492
    %v3495 = vmul.f32 %v3489, %v3023
    %v3496 = vadd.f32 %v3494, %v3495
    %v3497 = vpack.c.bf16 %v3496, %v3496
    %3498 = vmatprep.subr.bf16.mxu0 %v1432
    %3499 = vmatpush1.bf16.msra.mxu0 %v1431
    %3500 = vmatprep.subr.bf16.mxu0 %v1435
    %3501 = vmatpush1.bf16.msra.mxu0 %v1434
    %3502 = vmatprep.subr.bf16.mxu0 %v1438
    %3503 = vmatpush1.bf16.msra.mxu0 %v1437
    %3504 = vmatprep.subr.bf16.mxu0 %v1441
    %3505 = vmatpush1.bf16.msra.mxu0 %v1440
    %3506 = vmatprep.subr.bf16.mxu0 %v1444
    %3507 = vmatpush1.bf16.msra.mxu0 %v1443
    %3508 = vmatprep.subr.bf16.mxu0 %v1447
    %3509 = vmatpush1.bf16.msra.mxu0 %v1446
    %3510 = vmatprep.subr.bf16.mxu0 %v1450
    %3511 = vmatpush1.bf16.msra.mxu0 %v1449
    %3512 = vmatprep.subr.bf16.mxu0 %v1453
    %3513 = vmatpush1.bf16.msra.mxu0 %v1452
    %3514 = vmatprep.subr.bf16.mxu0 0
    %3515 = vmatpush1.bf16.msra.mxu0 0
    %3516 = vmatprep.subr.bf16.mxu0 0
    %3517 = vmatpush1.bf16.msra.mxu0 0
    %3518 = vmatprep.subr.bf16.mxu0 0
    %3519 = vmatpush1.bf16.msra.mxu0 0
    %3520 = vmatprep.subr.bf16.mxu0 0
    %3521 = vmatpush1.bf16.msra.mxu0 0
    %3522 = vmatprep.subr.bf16.mxu0 0
    %3523 = vmatpush1.bf16.msra.mxu0 0
    %3524 = vmatprep.subr.bf16.mxu0 0
    %3525 = vmatpush1.bf16.msra.mxu0 0
    %3526 = vmatprep.subr.bf16.mxu0 0
    %3527 = vmatpush1.bf16.msra.mxu0 0
    %3528 = vmatprep.subr.bf16.mxu0 0
    %3529 = vmatpush1.bf16.msra.mxu0 0
    %3530 = vmatprep.mubr.bf16.mxu0 0
    %3531 = vmatmul.mubr.bf16.gmra.mrb[0].mxu0 %v3497
    %v3532 = vpop.f32.mrb[0].mxu0
    %v3533 = vadd.f32 %v397, %v3532
    %v3534 = vpop.f32.mrb[0].mxu0
    %v3535 = vadd.f32 %v401, %v3534
    %v3536 = vpop.f32.mrb[0].mxu0
    %v3537 = vpop.f32.mrb[0].mxu0
    %3538 = vdwg.mxu0
    %3539 = vmatprep.subr.bf16.mxu0 0
    %3540 = vmatpush1.bf16.msra.mxu0 %v1433
    %3541 = vmatprep.subr.bf16.mxu0 0
    %3542 = vmatpush1.bf16.msra.mxu0 %v1436
    %3543 = vmatprep.subr.bf16.mxu0 0
    %3544 = vmatpush1.bf16.msra.mxu0 %v1439
    %3545 = vmatprep.subr.bf16.mxu0 0
    %3546 = vmatpush1.bf16.msra.mxu0 %v1442
    %3547 = vmatprep.subr.bf16.mxu0 0
    %3548 = vmatpush1.bf16.msra.mxu0 %v1445
    %3549 = vmatprep.subr.bf16.mxu0 0
    %3550 = vmatpush1.bf16.msra.mxu0 %v1448
    %3551 = vmatprep.subr.bf16.mxu0 0
    %3552 = vmatpush1.bf16.msra.mxu0 %v1451
    %3553 = vmatprep.subr.bf16.mxu0 0
    %3554 = vmatpush1.bf16.msra.mxu0 %v1454
    %3555 = vmatprep.subr.bf16.mxu0 0
    %3556 = vmatpush1.bf16.msra.mxu0 0
    %3557 = vmatprep.subr.bf16.mxu0 0
    %3558 = vmatpush1.bf16.msra.mxu0 0
    %3559 = vmatprep.subr.bf16.mxu0 0
    %3560 = vmatpush1.bf16.msra.mxu0 0
    %3561 = vmatprep.subr.bf16.mxu0 0
    %3562 = vmatpush1.bf16.msra.mxu0 0
    %3563 = vmatprep.subr.bf16.mxu0 0
    %3564 = vmatpush1.bf16.msra.mxu0 0
    %3565 = vmatprep.subr.bf16.mxu0 0
    %3566 = vmatpush1.bf16.msra.mxu0 0
    %3567 = vmatprep.subr.bf16.mxu0 0
    %3568 = vmatpush1.bf16.msra.mxu0 0
    %3569 = vmatprep.subr.bf16.mxu0 0
    %3570 = vmatpush1.bf16.msra.mxu0 0
    %3571 = vmatprep.mubr.bf16.mxu0 0
    %3572 = vmatmul.mubr.bf16.gmra.mrb[0].mxu0 %v3497
    %v3573 = vpop.f32.mrb[0].mxu0
    %v3574 = vadd.f32 %v405, %v3573
    %v3575 = vpop.f32.mrb[0].mxu0
    %v3576 = vpop.f32.mrb[0].mxu0
    %v3577 = vpop.f32.mrb[0].mxu0
    %3578 = vdwg.mxu0
    %3579 = vmatprep.subr.bf16.mxu0 %v1641
    %3580 = vmatpush1.bf16.msra.mxu0 %v1640
    %3581 = vmatprep.subr.bf16.mxu0 %v1644
    %3582 = vmatpush1.bf16.msra.mxu0 %v1643
    %3583 = vmatprep.subr.bf16.mxu0 %v1647
    %3584 = vmatpush1.bf16.msra.mxu0 %v1646
    %3585 = vmatprep.subr.bf16.mxu0 %v1650
    %3586 = vmatpush1.bf16.msra.mxu0 %v1649
    %3587 = vmatprep.subr.bf16.mxu0 %v1653
    %3588 = vmatpush1.bf16.msra.mxu0 %v1652
    %3589 = vmatprep.subr.bf16.mxu0 %v1656
    %3590 = vmatpush1.bf16.msra.mxu0 %v1655
    %3591 = vmatprep.subr.bf16.mxu0 %v1659
    %3592 = vmatpush1.bf16.msra.mxu0 %v1658
    %3593 = vmatprep.subr.bf16.mxu0 %v1662
    %3594 = vmatpush1.bf16.msra.mxu0 %v1661
    %3595 = vmatprep.subr.bf16.mxu0 0
    %3596 = vmatpush1.bf16.msra.mxu0 0
    %3597 = vmatprep.subr.bf16.mxu0 0
    %3598 = vmatpush1.bf16.msra.mxu0 0
    %3599 = vmatprep.subr.bf16.mxu0 0
    %3600 = vmatpush1.bf16.msra.mxu0 0
    %3601 = vmatprep.subr.bf16.mxu0 0
    %3602 = vmatpush1.bf16.msra.mxu0 0
    %3603 = vmatprep.subr.bf16.mxu0 0
    %3604 = vmatpush1.bf16.msra.mxu0 0
    %3605 = vmatprep.subr.bf16.mxu0 0
    %3606 = vmatpush1.bf16.msra.mxu0 0
    %3607 = vmatprep.subr.bf16.mxu0 0
    %3608 = vmatpush1.bf16.msra.mxu0 0
    %3609 = vmatprep.subr.bf16.mxu0 0
    %3610 = vmatpush1.bf16.msra.mxu0 0
    %3611 = vmatprep.mubr.bf16.mxu0 0
    %3612 = vmatmul.mubr.bf16.gmra.mrb[0].mxu0 %v3208
    %v3613 = vpop.f32.mrb[0].mxu0
    %v3614 = vadd.f32 %v363, %v3613
    %v3615 = vpop.f32.mrb[0].mxu0
    %v3616 = vadd.f32 %v367, %v3615
    %v3617 = vpop.f32.mrb[0].mxu0
    %v3618 = vpop.f32.mrb[0].mxu0
    %3619 = vdwg.mxu0
    %3620 = vmatprep.subr.bf16.mxu0 0
    %3621 = vmatpush1.bf16.msra.mxu0 %v1642
    %3622 = vmatprep.subr.bf16.mxu0 0
    %3623 = vmatpush1.bf16.msra.mxu0 %v1645
    %3624 = vmatprep.subr.bf16.mxu0 0
    %3625 = vmatpush1.bf16.msra.mxu0 %v1648
    %3626 = vmatprep.subr.bf16.mxu0 0
    %3627 = vmatpush1.bf16.msra.mxu0 %v1651
    %3628 = vmatprep.subr.bf16.mxu0 0
    %3629 = vmatpush1.bf16.msra.mxu0 %v1654
    %3630 = vmatprep.subr.bf16.mxu0 0
    %3631 = vmatpush1.bf16.msra.mxu0 %v1657
    %3632 = vmatprep.subr.bf16.mxu0 0
    %3633 = vmatpush1.bf16.msra.mxu0 %v1660
    %3634 = vmatprep.subr.bf16.mxu0 0
    %3635 = vmatpush1.bf16.msra.mxu0 %v1663
    %3636 = vmatprep.subr.bf16.mxu0 0
    %3637 = vmatpush1.bf16.msra.mxu0 0
    %3638 = vmatprep.subr.bf16.mxu0 0
    %3639 = vmatpush1.bf16.msra.mxu0 0
    %3640 = vmatprep.subr.bf16.mxu0 0
    %3641 = vmatpush1.bf16.msra.mxu0 0
    %3642 = vmatprep.subr.bf16.mxu0 0
    %3643 = vmatpush1.bf16.msra.mxu0 0
    %3644 = vmatprep.subr.bf16.mxu0 0
    %3645 = vmatpush1.bf16.msra.mxu0 0
    %3646 = vmatprep.subr.bf16.mxu0 0
    %3647 = vmatpush1.bf16.msra.mxu0 0
    %3648 = vmatprep.subr.bf16.mxu0 0
    %3649 = vmatpush1.bf16.msra.mxu0 0
    %3650 = vmatprep.subr.bf16.mxu0 0
    %3651 = vmatpush1.bf16.msra.mxu0 0
    %3652 = vmatprep.mubr.bf16.mxu0 0
    %3653 = vmatmul.mubr.bf16.gmra.mrb[0].mxu0 %v3208
    %v3654 = vpop.f32.mrb[0].mxu0
    %v3655 = vadd.f32 %v371, %v3654
    %v3656 = vpop.f32.mrb[0].mxu0
    %v3657 = vpop.f32.mrb[0].mxu0
    %v3658 = vpop.f32.mrb[0].mxu0
    %3659 = vdwg.mxu0
    %v3660 = vadd.f32 %v3533, %v3614
    %v3661 = vxor.u32 %v3660, 2147483648
    %v3662 = vmul.f32 %v3661, 1.442695
    %v3663 = vpow.pop %v3662
    %v3664 = vadd.f32 %v3663, 1.0
    %v3665 = vrcp.pop %v3664
    %v3666 = vmul.f32 1.0, %v3665
    %v3667 = vadd.f32 %v3535, %v3616
    %v3668 = vxor.u32 %v3667, 2147483648
    %v3669 = vmul.f32 %v3668, 1.442695
    %v3670 = vpow.pop %v3669
    %v3671 = vadd.f32 %v3670, 1.0
    %v3672 = vrcp.pop %v3671
    %v3673 = vmul.f32 1.0, %v3672
    %v3674 = vmul.f32 %v3666, %v3655
    %v3675 = vadd.f32 %v3574, %v3674
    %v3676 = vtanh.pop %v3675
    %v3677 = vsub.f32 1.0, %v3673
    %v3678 = vmul.f32 %v3677, %v3676
    %v3679 = vmul.f32 %v3673, %v3207
    %v3680 = vadd.f32 %v3678, %v3679
    %v3681 = vpack.c.bf16 %v3680, %v3680
    %s3682 = scalar_lea.vmem %s16, 16
    %3683 = vst [vmem:[%s3682] sm:$0xf] %v3681
    %3684 = vmatprep.subr.bf16.mxu0 %v761
    %3685 = vmatpush1.bf16.msra.mxu0 %v760
    %3686 = vmatprep.subr.bf16.mxu0 %v764
    %3687 = vmatpush1.bf16.msra.mxu0 %v763
    %3688 = vmatprep.subr.bf16.mxu0 %v767
    %3689 = vmatpush1.bf16.msra.mxu0 %v766
    %3690 = vmatprep.subr.bf16.mxu0 %v770
    %3691 = vmatpush1.bf16.msra.mxu0 %v769
    %3692 = vmatprep.subr.bf16.mxu0 %v773
    %3693 = vmatpush1.bf16.msra.mxu0 %v772
    %3694 = vmatprep.subr.bf16.mxu0 %v776
    %3695 = vmatpush1.bf16.msra.mxu0 %v775
    %3696 = vmatprep.subr.bf16.mxu0 %v779
    %3697 = vmatpush1.bf16.msra.mxu0 %v778
    %3698 = vmatprep.subr.bf16.mxu0 %v782
    %3699 = vmatpush1.bf16.msra.mxu0 %v781
    %3700 = vmatprep.subr.bf16.mxu0 0
    %3701 = vmatpush1.bf16.msra.mxu0 0
    %3702 = vmatprep.subr.bf16.mxu0 0
    %3703 = vmatpush1.bf16.msra.mxu0 0
    %3704 = vmatprep.subr.bf16.mxu0 0
    %3705 = vmatpush1.bf16.msra.mxu0 0
    %3706 = vmatprep.subr.bf16.mxu0 0
    %3707 = vmatpush1.bf16.msra.mxu0 0
    %3708 = vmatprep.subr.bf16.mxu0 0
    %3709 = vmatpush1.bf16.msra.mxu0 0
    %3710 = vmatprep.subr.bf16.mxu0 0
    %3711 = vmatpush1.bf16.msra.mxu0 0
    %3712 = vmatprep.subr.bf16.mxu0 0
    %3713 = vmatpush1.bf16.msra.mxu0 0
    %3714 = vmatprep.subr.bf16.mxu0 0
    %3715 = vmatpush1.bf16.msra.mxu0 0
    %3716 = vmatprep.mubr.bf16.mxu0 0
    %3717 = vmatmul.mubr.bf16.gmra.mrb[0].mxu0 %v3313
    %v3718 = vpop.f32.mrb[0].mxu0
    %v3719 = vadd.f32 %v329, %v3718
    %v3720 = vpop.f32.mrb[0].mxu0
    %v3721 = vadd.f32 %v333, %v3720
    %v3722 = vpop.f32.mrb[0].mxu0
    %v3723 = vpop.f32.mrb[0].mxu0
    %3724 = vdwg.mxu0
    %3725 = vmatprep.subr.bf16.mxu0 0
    %3726 = vmatpush1.bf16.msra.mxu0 %v762
    %3727 = vmatprep.subr.bf16.mxu0 0
    %3728 = vmatpush1.bf16.msra.mxu0 %v765
    %3729 = vmatprep.subr.bf16.mxu0 0
    %3730 = vmatpush1.bf16.msra.mxu0 %v768
    %3731 = vmatprep.subr.bf16.mxu0 0
    %3732 = vmatpush1.bf16.msra.mxu0 %v771
    %3733 = vmatprep.subr.bf16.mxu0 0
    %3734 = vmatpush1.bf16.msra.mxu0 %v774
    %3735 = vmatprep.subr.bf16.mxu0 0
    %3736 = vmatpush1.bf16.msra.mxu0 %v777
    %3737 = vmatprep.subr.bf16.mxu0 0
    %3738 = vmatpush1.bf16.msra.mxu0 %v780
    %3739 = vmatprep.subr.bf16.mxu0 0
    %3740 = vmatpush1.bf16.msra.mxu0 %v783
    %3741 = vmatprep.subr.bf16.mxu0 0
    %3742 = vmatpush1.bf16.msra.mxu0 0
    %3743 = vmatprep.subr.bf16.mxu0 0
    %3744 = vmatpush1.bf16.msra.mxu0 0
    %3745 = vmatprep.subr.bf16.mxu0 0
    %3746 = vmatpush1.bf16.msra.mxu0 0
    %3747 = vmatprep.subr.bf16.mxu0 0
    %3748 = vmatpush1.bf16.msra.mxu0 0
    %3749 = vmatprep.subr.bf16.mxu0 0
    %3750 = vmatpush1.bf16.msra.mxu0 0
    %3751 = vmatprep.subr.bf16.mxu0 0
    %3752 = vmatpush1.bf16.msra.mxu0 0
    %3753 = vmatprep.subr.bf16.mxu0 0
    %3754 = vmatpush1.bf16.msra.mxu0 0
    %3755 = vmatprep.subr.bf16.mxu0 0
    %3756 = vmatpush1.bf16.msra.mxu0 0
    %3757 = vmatprep.mubr.bf16.mxu0 0
    %3758 = vmatmul.mubr.bf16.gmra.mrb[0].mxu0 %v3313
    %v3759 = vpop.f32.mrb[0].mxu0
    %v3760 = vadd.f32 %v337, %v3759
    %v3761 = vpop.f32.mrb[0].mxu0
    %v3762 = vpop.f32.mrb[0].mxu0
    %v3763 = vpop.f32.mrb[0].mxu0
    %3764 = vdwg.mxu0
    %v3765 = vadd.f32 %v603, %v3719
    %v3766 = vxor.u32 %v3765, 2147483648
    %v3767 = vmul.f32 %v3766, 1.442695
    %v3768 = vpow.pop %v3767
    %v3769 = vadd.f32 %v3768, 1.0
    %v3770 = vrcp.pop %v3769
    %v3771 = vmul.f32 1.0, %v3770
    %v3772 = vadd.f32 %v605, %v3721
    %v3773 = vxor.u32 %v3772, 2147483648
    %v3774 = vmul.f32 %v3773, 1.442695
    %v3775 = vpow.pop %v3774
    %v3776 = vadd.f32 %v3775, 1.0
    %v3777 = vrcp.pop %v3776
    %v3778 = vmul.f32 1.0, %v3777
    %v3779 = vmul.f32 %v3771, %v3760
    %v3780 = vadd.f32 %v669, %v3779
    %v3781 = vtanh.pop %v3780
    %v3782 = vsub.f32 1.0, %v3778
    %v3783 = vmul.f32 %v3782, %v3781
    %v3784 = vmul.f32 %v3778, %v3312
    %v3785 = vadd.f32 %v3783, %v3784
    %v3786 = vpack.c.bf16 %v3785, %v3785
    %3787 = vmatprep.subr.bf16.mxu0 %v992
    %3788 = vmatpush1.bf16.msra.mxu0 %v991
    %3789 = vmatprep.subr.bf16.mxu0 %v995
    %3790 = vmatpush1.bf16.msra.mxu0 %v994
    %3791 = vmatprep.subr.bf16.mxu0 %v998
    %3792 = vmatpush1.bf16.msra.mxu0 %v997
    %3793 = vmatprep.subr.bf16.mxu0 %v1001
    %3794 = vmatpush1.bf16.msra.mxu0 %v1000
    %3795 = vmatprep.subr.bf16.mxu0 %v1004
    %3796 = vmatpush1.bf16.msra.mxu0 %v1003
    %3797 = vmatprep.subr.bf16.mxu0 %v1007
    %3798 = vmatpush1.bf16.msra.mxu0 %v1006
    %3799 = vmatprep.subr.bf16.mxu0 %v1010
    %3800 = vmatpush1.bf16.msra.mxu0 %v1009
    %3801 = vmatprep.subr.bf16.mxu0 %v1013
    %3802 = vmatpush1.bf16.msra.mxu0 %v1012
    %3803 = vmatprep.subr.bf16.mxu0 0
    %3804 = vmatpush1.bf16.msra.mxu0 0
    %3805 = vmatprep.subr.bf16.mxu0 0
    %3806 = vmatpush1.bf16.msra.mxu0 0
    %3807 = vmatprep.subr.bf16.mxu0 0
    %3808 = vmatpush1.bf16.msra.mxu0 0
    %3809 = vmatprep.subr.bf16.mxu0 0
    %3810 = vmatpush1.bf16.msra.mxu0 0
    %3811 = vmatprep.subr.bf16.mxu0 0
    %3812 = vmatpush1.bf16.msra.mxu0 0
    %3813 = vmatprep.subr.bf16.mxu0 0
    %3814 = vmatpush1.bf16.msra.mxu0 0
    %3815 = vmatprep.subr.bf16.mxu0 0
    %3816 = vmatpush1.bf16.msra.mxu0 0
    %3817 = vmatprep.subr.bf16.mxu0 0
    %3818 = vmatpush1.bf16.msra.mxu0 0
    %3819 = vmatprep.mubr.bf16.mxu0 0
    %3820 = vmatmul.mubr.bf16.gmra.mrb[0].mxu0 %v3786
    %v3821 = vpop.f32.mrb[0].mxu0
    %v3822 = vadd.f32 %v380, %v3821
    %v3823 = vpop.f32.mrb[0].mxu0
    %v3824 = vadd.f32 %v384, %v3823
    %v3825 = vpop.f32.mrb[0].mxu0
    %v3826 = vpop.f32.mrb[0].mxu0
    %3827 = vdwg.mxu0
    %3828 = vmatprep.subr.bf16.mxu0 0
    %3829 = vmatpush1.bf16.msra.mxu0 %v993
    %3830 = vmatprep.subr.bf16.mxu0 0
    %3831 = vmatpush1.bf16.msra.mxu0 %v996
    %3832 = vmatprep.subr.bf16.mxu0 0
    %3833 = vmatpush1.bf16.msra.mxu0 %v999
    %3834 = vmatprep.subr.bf16.mxu0 0
    %3835 = vmatpush1.bf16.msra.mxu0 %v1002
    %3836 = vmatprep.subr.bf16.mxu0 0
    %3837 = vmatpush1.bf16.msra.mxu0 %v1005
    %3838 = vmatprep.subr.bf16.mxu0 0
    %3839 = vmatpush1.bf16.msra.mxu0 %v1008
    %3840 = vmatprep.subr.bf16.mxu0 0
    %3841 = vmatpush1.bf16.msra.mxu0 %v1011
    %3842 = vmatprep.subr.bf16.mxu0 0
    %3843 = vmatpush1.bf16.msra.mxu0 %v1014
    %3844 = vmatprep.subr.bf16.mxu0 0
    %3845 = vmatpush1.bf16.msra.mxu0 0
    %3846 = vmatprep.subr.bf16.mxu0 0
    %3847 = vmatpush1.bf16.msra.mxu0 0
    %3848 = vmatprep.subr.bf16.mxu0 0
    %3849 = vmatpush1.bf16.msra.mxu0 0
    %3850 = vmatprep.subr.bf16.mxu0 0
    %3851 = vmatpush1.bf16.msra.mxu0 0
    %3852 = vmatprep.subr.bf16.mxu0 0
    %3853 = vmatpush1.bf16.msra.mxu0 0
    %3854 = vmatprep.subr.bf16.mxu0 0
    %3855 = vmatpush1.bf16.msra.mxu0 0
    %3856 = vmatprep.subr.bf16.mxu0 0
    %3857 = vmatpush1.bf16.msra.mxu0 0
    %3858 = vmatprep.subr.bf16.mxu0 0
    %3859 = vmatpush1.bf16.msra.mxu0 0
    %3860 = vmatprep.mubr.bf16.mxu0 0
    %3861 = vmatmul.mubr.bf16.gmra.mrb[0].mxu0 %v3786
    %v3862 = vpop.f32.mrb[0].mxu0
    %v3863 = vadd.f32 %v388, %v3862
    %v3864 = vpop.f32.mrb[0].mxu0
    %v3865 = vpop.f32.mrb[0].mxu0
    %v3866 = vpop.f32.mrb[0].mxu0
    %3867 = vdwg.mxu0
    %3868 = vmatprep.subr.bf16.mxu0 %v1201
    %3869 = vmatpush1.bf16.msra.mxu0 %v1200
    %3870 = vmatprep.subr.bf16.mxu0 %v1204
    %3871 = vmatpush1.bf16.msra.mxu0 %v1203
    %3872 = vmatprep.subr.bf16.mxu0 %v1207
    %3873 = vmatpush1.bf16.msra.mxu0 %v1206
    %3874 = vmatprep.subr.bf16.mxu0 %v1210
    %3875 = vmatpush1.bf16.msra.mxu0 %v1209
    %3876 = vmatprep.subr.bf16.mxu0 %v1213
    %3877 = vmatpush1.bf16.msra.mxu0 %v1212
    %3878 = vmatprep.subr.bf16.mxu0 %v1216
    %3879 = vmatpush1.bf16.msra.mxu0 %v1215
    %3880 = vmatprep.subr.bf16.mxu0 %v1219
    %3881 = vmatpush1.bf16.msra.mxu0 %v1218
    %3882 = vmatprep.subr.bf16.mxu0 %v1222
    %3883 = vmatpush1.bf16.msra.mxu0 %v1221
    %3884 = vmatprep.subr.bf16.mxu0 0
    %3885 = vmatpush1.bf16.msra.mxu0 0
    %3886 = vmatprep.subr.bf16.mxu0 0
    %3887 = vmatpush1.bf16.msra.mxu0 0
    %3888 = vmatprep.subr.bf16.mxu0 0
    %3889 = vmatpush1.bf16.msra.mxu0 0
    %3890 = vmatprep.subr.bf16.mxu0 0
    %3891 = vmatpush1.bf16.msra.mxu0 0
    %3892 = vmatprep.subr.bf16.mxu0 0
    %3893 = vmatpush1.bf16.msra.mxu0 0
    %3894 = vmatprep.subr.bf16.mxu0 0
    %3895 = vmatpush1.bf16.msra.mxu0 0
    %3896 = vmatprep.subr.bf16.mxu0 0
    %3897 = vmatpush1.bf16.msra.mxu0 0
    %3898 = vmatprep.subr.bf16.mxu0 0
    %3899 = vmatpush1.bf16.msra.mxu0 0
    %3900 = vmatprep.mubr.bf16.mxu0 0
    %3901 = vmatmul.mubr.bf16.gmra.mrb[0].mxu0 %v3497
    %v3902 = vpop.f32.mrb[0].mxu0
    %v3903 = vadd.f32 %v346, %v3902
    %v3904 = vpop.f32.mrb[0].mxu0
    %v3905 = vadd.f32 %v350, %v3904
    %v3906 = vpop.f32.mrb[0].mxu0
    %v3907 = vpop.f32.mrb[0].mxu0
    %3908 = vdwg.mxu0
    %3909 = vmatprep.subr.bf16.mxu0 0
    %3910 = vmatpush1.bf16.msra.mxu0 %v1202
    %3911 = vmatprep.subr.bf16.mxu0 0
    %3912 = vmatpush1.bf16.msra.mxu0 %v1205
    %3913 = vmatprep.subr.bf16.mxu0 0
    %3914 = vmatpush1.bf16.msra.mxu0 %v1208
    %3915 = vmatprep.subr.bf16.mxu0 0
    %3916 = vmatpush1.bf16.msra.mxu0 %v1211
    %3917 = vmatprep.subr.bf16.mxu0 0
    %3918 = vmatpush1.bf16.msra.mxu0 %v1214
    %3919 = vmatprep.subr.bf16.mxu0 0
    %3920 = vmatpush1.bf16.msra.mxu0 %v1217
    %3921 = vmatprep.subr.bf16.mxu0 0
    %3922 = vmatpush1.bf16.msra.mxu0 %v1220
    %3923 = vmatprep.subr.bf16.mxu0 0
    %3924 = vmatpush1.bf16.msra.mxu0 %v1223
    %3925 = vmatprep.subr.bf16.mxu0 0
    %3926 = vmatpush1.bf16.msra.mxu0 0
    %3927 = vmatprep.subr.bf16.mxu0 0
    %3928 = vmatpush1.bf16.msra.mxu0 0
    %3929 = vmatprep.subr.bf16.mxu0 0
    %3930 = vmatpush1.bf16.msra.mxu0 0
    %3931 = vmatprep.subr.bf16.mxu0 0
    %3932 = vmatpush1.bf16.msra.mxu0 0
    %3933 = vmatprep.subr.bf16.mxu0 0
    %3934 = vmatpush1.bf16.msra.mxu0 0
    %3935 = vmatprep.subr.bf16.mxu0 0
    %3936 = vmatpush1.bf16.msra.mxu0 0
    %3937 = vmatprep.subr.bf16.mxu0 0
    %3938 = vmatpush1.bf16.msra.mxu0 0
    %3939 = vmatprep.subr.bf16.mxu0 0
    %3940 = vmatpush1.bf16.msra.mxu0 0
    %3941 = vmatprep.mubr.bf16.mxu0 0
    %3942 = vmatmul.mubr.bf16.gmra.mrb[0].mxu0 %v3497
    %v3943 = vpop.f32.mrb[0].mxu0
    %v3944 = vadd.f32 %v354, %v3943
    %v3945 = vpop.f32.mrb[0].mxu0
    %v3946 = vpop.f32.mrb[0].mxu0
    %v3947 = vpop.f32.mrb[0].mxu0
    %3948 = vdwg.mxu0
    %v3949 = vadd.f32 %v3822, %v3903
    %v3950 = vxor.u32 %v3949, 2147483648
    %v3951 = vmul.f32 %v3950, 1.442695
    %v3952 = vpow.pop %v3951
    %v3953 = vadd.f32 %v3952, 1.0
    %v3954 = vrcp.pop %v3953
    %v3955 = vmul.f32 1.0, %v3954
    %v3956 = vadd.f32 %v3824, %v3905
    %v3957 = vxor.u32 %v3956, 2147483648
    %v3958 = vmul.f32 %v3957, 1.442695
    %v3959 = vpow.pop %v3958
    %v3960 = vadd.f32 %v3959, 1.0
    %v3961 = vrcp.pop %v3960
    %v3962 = vmul.f32 1.0, %v3961
    %v3963 = vmul.f32 %v3955, %v3944
    %v3964 = vadd.f32 %v3863, %v3963
    %v3965 = vtanh.pop %v3964
    %v3966 = vsub.f32 1.0, %v3962
    %v3967 = vmul.f32 %v3966, %v3965
    %v3968 = vmul.f32 %v3962, %v3496
    %v3969 = vadd.f32 %v3967, %v3968
    %v3970 = vpack.c.bf16 %v3969, %v3969
    %3971 = vmatprep.subr.bf16.mxu0 %v1432
    %3972 = vmatpush1.bf16.msra.mxu0 %v1431
    %3973 = vmatprep.subr.bf16.mxu0 %v1435
    %3974 = vmatpush1.bf16.msra.mxu0 %v1434
    %3975 = vmatprep.subr.bf16.mxu0 %v1438
    %3976 = vmatpush1.bf16.msra.mxu0 %v1437
    %3977 = vmatprep.subr.bf16.mxu0 %v1441
    %3978 = vmatpush1.bf16.msra.mxu0 %v1440
    %3979 = vmatprep.subr.bf16.mxu0 %v1444
    %3980 = vmatpush1.bf16.msra.mxu0 %v1443
    %3981 = vmatprep.subr.bf16.mxu0 %v1447
    %3982 = vmatpush1.bf16.msra.mxu0 %v1446
    %3983 = vmatprep.subr.bf16.mxu0 %v1450
    %3984 = vmatpush1.bf16.msra.mxu0 %v1449
    %3985 = vmatprep.subr.bf16.mxu0 %v1453
    %3986 = vmatpush1.bf16.msra.mxu0 %v1452
    %3987 = vmatprep.subr.bf16.mxu0 0
    %3988 = vmatpush1.bf16.msra.mxu0 0
    %3989 = vmatprep.subr.bf16.mxu0 0
    %3990 = vmatpush1.bf16.msra.mxu0 0
    %3991 = vmatprep.subr.bf16.mxu0 0
    %3992 = vmatpush1.bf16.msra.mxu0 0
    %3993 = vmatprep.subr.bf16.mxu0 0
    %3994 = vmatpush1.bf16.msra.mxu0 0
    %3995 = vmatprep.subr.bf16.mxu0 0
    %3996 = vmatpush1.bf16.msra.mxu0 0
    %3997 = vmatprep.subr.bf16.mxu0 0
    %3998 = vmatpush1.bf16.msra.mxu0 0
    %3999 = vmatprep.subr.bf16.mxu0 0
    %4000 = vmatpush1.bf16.msra.mxu0 0
    %4001 = vmatprep.subr.bf16.mxu0 0
    %4002 = vmatpush1.bf16.msra.mxu0 0
    %4003 = vmatprep.mubr.bf16.mxu0 0
    %4004 = vmatmul.mubr.bf16.gmra.mrb[0].mxu0 %v3970
    %v4005 = vpop.f32.mrb[0].mxu0
    %v4006 = vadd.f32 %v397, %v4005
    %v4007 = vpop.f32.mrb[0].mxu0
    %v4008 = vadd.f32 %v401, %v4007
    %v4009 = vpop.f32.mrb[0].mxu0
    %v4010 = vpop.f32.mrb[0].mxu0
    %4011 = vdwg.mxu0
    %4012 = vmatprep.subr.bf16.mxu0 0
    %4013 = vmatpush1.bf16.msra.mxu0 %v1433
    %4014 = vmatprep.subr.bf16.mxu0 0
    %4015 = vmatpush1.bf16.msra.mxu0 %v1436
    %4016 = vmatprep.subr.bf16.mxu0 0
    %4017 = vmatpush1.bf16.msra.mxu0 %v1439
    %4018 = vmatprep.subr.bf16.mxu0 0
    %4019 = vmatpush1.bf16.msra.mxu0 %v1442
    %4020 = vmatprep.subr.bf16.mxu0 0
    %4021 = vmatpush1.bf16.msra.mxu0 %v1445
    %4022 = vmatprep.subr.bf16.mxu0 0
    %4023 = vmatpush1.bf16.msra.mxu0 %v1448
    %4024 = vmatprep.subr.bf16.mxu0 0
    %4025 = vmatpush1.bf16.msra.mxu0 %v1451
    %4026 = vmatprep.subr.bf16.mxu0 0
    %4027 = vmatpush1.bf16.msra.mxu0 %v1454
    %4028 = vmatprep.subr.bf16.mxu0 0
    %4029 = vmatpush1.bf16.msra.mxu0 0
    %4030 = vmatprep.subr.bf16.mxu0 0
    %4031 = vmatpush1.bf16.msra.mxu0 0
    %4032 = vmatprep.subr.bf16.mxu0 0
    %4033 = vmatpush1.bf16.msra.mxu0 0
    %4034 = vmatprep.subr.bf16.mxu0 0
    %4035 = vmatpush1.bf16.msra.mxu0 0
    %4036 = vmatprep.subr.bf16.mxu0 0
    %4037 = vmatpush1.bf16.msra.mxu0 0
    %4038 = vmatprep.subr.bf16.mxu0 0
    %4039 = vmatpush1.bf16.msra.mxu0 0
    %4040 = vmatprep.subr.bf16.mxu0 0
    %4041 = vmatpush1.bf16.msra.mxu0 0
    %4042 = vmatprep.subr.bf16.mxu0 0
    %4043 = vmatpush1.bf16.msra.mxu0 0
    %4044 = vmatprep.mubr.bf16.mxu0 0
    %4045 = vmatmul.mubr.bf16.gmra.mrb[0].mxu0 %v3970
    %v4046 = vpop.f32.mrb[0].mxu0
    %v4047 = vadd.f32 %v405, %v4046
    %v4048 = vpop.f32.mrb[0].mxu0
    %v4049 = vpop.f32.mrb[0].mxu0
    %v4050 = vpop.f32.mrb[0].mxu0
    %4051 = vdwg.mxu0
    %4052 = vmatprep.subr.bf16.mxu0 %v1641
    %4053 = vmatpush1.bf16.msra.mxu0 %v1640
    %4054 = vmatprep.subr.bf16.mxu0 %v1644
    %4055 = vmatpush1.bf16.msra.mxu0 %v1643
    %4056 = vmatprep.subr.bf16.mxu0 %v1647
    %4057 = vmatpush1.bf16.msra.mxu0 %v1646
    %4058 = vmatprep.subr.bf16.mxu0 %v1650
    %4059 = vmatpush1.bf16.msra.mxu0 %v1649
    %4060 = vmatprep.subr.bf16.mxu0 %v1653
    %4061 = vmatpush1.bf16.msra.mxu0 %v1652
    %4062 = vmatprep.subr.bf16.mxu0 %v1656
    %4063 = vmatpush1.bf16.msra.mxu0 %v1655
    %4064 = vmatprep.subr.bf16.mxu0 %v1659
    %4065 = vmatpush1.bf16.msra.mxu0 %v1658
    %4066 = vmatprep.subr.bf16.mxu0 %v1662
    %4067 = vmatpush1.bf16.msra.mxu0 %v1661
    %4068 = vmatprep.subr.bf16.mxu0 0
    %4069 = vmatpush1.bf16.msra.mxu0 0
    %4070 = vmatprep.subr.bf16.mxu0 0
    %4071 = vmatpush1.bf16.msra.mxu0 0
    %4072 = vmatprep.subr.bf16.mxu0 0
    %4073 = vmatpush1.bf16.msra.mxu0 0
    %4074 = vmatprep.subr.bf16.mxu0 0
    %4075 = vmatpush1.bf16.msra.mxu0 0
    %4076 = vmatprep.subr.bf16.mxu0 0
    %4077 = vmatpush1.bf16.msra.mxu0 0
    %4078 = vmatprep.subr.bf16.mxu0 0
    %4079 = vmatpush1.bf16.msra.mxu0 0
    %4080 = vmatprep.subr.bf16.mxu0 0
    %4081 = vmatpush1.bf16.msra.mxu0 0
    %4082 = vmatprep.subr.bf16.mxu0 0
    %4083 = vmatpush1.bf16.msra.mxu0 0
    %4084 = vmatprep.mubr.bf16.mxu0 0
    %4085 = vmatmul.mubr.bf16.gmra.mrb[0].mxu0 %v3681
    %v4086 = vpop.f32.mrb[0].mxu0
    %v4087 = vadd.f32 %v363, %v4086
    %v4088 = vpop.f32.mrb[0].mxu0
    %v4089 = vadd.f32 %v367, %v4088
    %v4090 = vpop.f32.mrb[0].mxu0
    %v4091 = vpop.f32.mrb[0].mxu0
    %4092 = vdwg.mxu0
    %4093 = vmatprep.subr.bf16.mxu0 0
    %4094 = vmatpush1.bf16.msra.mxu0 %v1642
    %4095 = vmatprep.subr.bf16.mxu0 0
    %4096 = vmatpush1.bf16.msra.mxu0 %v1645
    %4097 = vmatprep.subr.bf16.mxu0 0
    %4098 = vmatpush1.bf16.msra.mxu0 %v1648
    %4099 = vmatprep.subr.bf16.mxu0 0
    %4100 = vmatpush1.bf16.msra.mxu0 %v1651
    %4101 = vmatprep.subr.bf16.mxu0 0
    %4102 = vmatpush1.bf16.msra.mxu0 %v1654
    %4103 = vmatprep.subr.bf16.mxu0 0
    %4104 = vmatpush1.bf16.msra.mxu0 %v1657
    %4105 = vmatprep.subr.bf16.mxu0 0
    %4106 = vmatpush1.bf16.msra.mxu0 %v1660
    %4107 = vmatprep.subr.bf16.mxu0 0
    %4108 = vmatpush1.bf16.msra.mxu0 %v1663
    %4109 = vmatprep.subr.bf16.mxu0 0
    %4110 = vmatpush1.bf16.msra.mxu0 0
    %4111 = vmatprep.subr.bf16.mxu0 0
    %4112 = vmatpush1.bf16.msra.mxu0 0
    %4113 = vmatprep.subr.bf16.mxu0 0
    %4114 = vmatpush1.bf16.msra.mxu0 0
    %4115 = vmatprep.subr.bf16.mxu0 0
    %4116 = vmatpush1.bf16.msra.mxu0 0
    %4117 = vmatprep.subr.bf16.mxu0 0
    %4118 = vmatpush1.bf16.msra.mxu0 0
    %4119 = vmatprep.subr.bf16.mxu0 0
    %4120 = vmatpush1.bf16.msra.mxu0 0
    %4121 = vmatprep.subr.bf16.mxu0 0
    %4122 = vmatpush1.bf16.msra.mxu0 0
    %4123 = vmatprep.subr.bf16.mxu0 0
    %4124 = vmatpush1.bf16.msra.mxu0 0
    %4125 = vmatprep.mubr.bf16.mxu0 0
    %4126 = vmatmul.mubr.bf16.gmra.mrb[0].mxu0 %v3681
    %v4127 = vpop.f32.mrb[0].mxu0
    %v4128 = vadd.f32 %v371, %v4127
    %v4129 = vpop.f32.mrb[0].mxu0
    %v4130 = vpop.f32.mrb[0].mxu0
    %v4131 = vpop.f32.mrb[0].mxu0
    %4132 = vdwg.mxu0
    %v4133 = vadd.f32 %v4006, %v4087
    %v4134 = vxor.u32 %v4133, 2147483648
    %v4135 = vmul.f32 %v4134, 1.442695
    %v4136 = vpow.pop %v4135
    %v4137 = vadd.f32 %v4136, 1.0
    %v4138 = vrcp.pop %v4137
    %v4139 = vmul.f32 1.0, %v4138
    %v4140 = vadd.f32 %v4008, %v4089
    %v4141 = vxor.u32 %v4140, 2147483648
    %v4142 = vmul.f32 %v4141, 1.442695
    %v4143 = vpow.pop %v4142
    %v4144 = vadd.f32 %v4143, 1.0
    %v4145 = vrcp.pop %v4144
    %v4146 = vmul.f32 1.0, %v4145
    %v4147 = vmul.f32 %v4139, %v4128
    %v4148 = vadd.f32 %v4047, %v4147
    %v4149 = vtanh.pop %v4148
    %v4150 = vsub.f32 1.0, %v4146
    %v4151 = vmul.f32 %v4150, %v4149
    %v4152 = vmul.f32 %v4146, %v3680
    %v4153 = vadd.f32 %v4151, %v4152
    %v4154 = vpack.c.bf16 %v4153, %v4153
    %s4155 = scalar_lea.vmem %s16, 20
    %4156 = vst [vmem:[%s4155] sm:$0xf] %v4154
    %4157 = vmatprep.subr.bf16.mxu0 %v761
    %4158 = vmatpush1.bf16.msra.mxu0 %v760
    %4159 = vmatprep.subr.bf16.mxu0 %v764
    %4160 = vmatpush1.bf16.msra.mxu0 %v763
    %4161 = vmatprep.subr.bf16.mxu0 %v767
    %4162 = vmatpush1.bf16.msra.mxu0 %v766
    %4163 = vmatprep.subr.bf16.mxu0 %v770
    %4164 = vmatpush1.bf16.msra.mxu0 %v769
    %4165 = vmatprep.subr.bf16.mxu0 %v773
    %4166 = vmatpush1.bf16.msra.mxu0 %v772
    %4167 = vmatprep.subr.bf16.mxu0 %v776
    %4168 = vmatpush1.bf16.msra.mxu0 %v775
    %4169 = vmatprep.subr.bf16.mxu0 %v779
    %4170 = vmatpush1.bf16.msra.mxu0 %v778
    %4171 = vmatprep.subr.bf16.mxu0 %v782
    %4172 = vmatpush1.bf16.msra.mxu0 %v781
    %4173 = vmatprep.subr.bf16.mxu0 0
    %4174 = vmatpush1.bf16.msra.mxu0 0
    %4175 = vmatprep.subr.bf16.mxu0 0
    %4176 = vmatpush1.bf16.msra.mxu0 0
    %4177 = vmatprep.subr.bf16.mxu0 0
    %4178 = vmatpush1.bf16.msra.mxu0 0
    %4179 = vmatprep.subr.bf16.mxu0 0
    %4180 = vmatpush1.bf16.msra.mxu0 0
    %4181 = vmatprep.subr.bf16.mxu0 0
    %4182 = vmatpush1.bf16.msra.mxu0 0
    %4183 = vmatprep.subr.bf16.mxu0 0
    %4184 = vmatpush1.bf16.msra.mxu0 0
    %4185 = vmatprep.subr.bf16.mxu0 0
    %4186 = vmatpush1.bf16.msra.mxu0 0
    %4187 = vmatprep.subr.bf16.mxu0 0
    %4188 = vmatpush1.bf16.msra.mxu0 0
    %4189 = vmatprep.mubr.bf16.mxu0 0
    %4190 = vmatmul.mubr.bf16.gmra.mrb[0].mxu0 %v3786
    %v4191 = vpop.f32.mrb[0].mxu0
    %v4192 = vadd.f32 %v329, %v4191
    %v4193 = vpop.f32.mrb[0].mxu0
    %v4194 = vadd.f32 %v333, %v4193
    %v4195 = vpop.f32.mrb[0].mxu0
    %v4196 = vpop.f32.mrb[0].mxu0
    %4197 = vdwg.mxu0
    %4198 = vmatprep.subr.bf16.mxu0 0
    %4199 = vmatpush1.bf16.msra.mxu0 %v762
    %4200 = vmatprep.subr.bf16.mxu0 0
    %4201 = vmatpush1.bf16.msra.mxu0 %v765
    %4202 = vmatprep.subr.bf16.mxu0 0
    %4203 = vmatpush1.bf16.msra.mxu0 %v768
    %4204 = vmatprep.subr.bf16.mxu0 0
    %4205 = vmatpush1.bf16.msra.mxu0 %v771
    %4206 = vmatprep.subr.bf16.mxu0 0
    %4207 = vmatpush1.bf16.msra.mxu0 %v774
    %4208 = vmatprep.subr.bf16.mxu0 0
    %4209 = vmatpush1.bf16.msra.mxu0 %v777
    %4210 = vmatprep.subr.bf16.mxu0 0
    %4211 = vmatpush1.bf16.msra.mxu0 %v780
    %4212 = vmatprep.subr.bf16.mxu0 0
    %4213 = vmatpush1.bf16.msra.mxu0 %v783
    %4214 = vmatprep.subr.bf16.mxu0 0
    %4215 = vmatpush1.bf16.msra.mxu0 0
    %4216 = vmatprep.subr.bf16.mxu0 0
    %4217 = vmatpush1.bf16.msra.mxu0 0
    %4218 = vmatprep.subr.bf16.mxu0 0
    %4219 = vmatpush1.bf16.msra.mxu0 0
    %4220 = vmatprep.subr.bf16.mxu0 0
    %4221 = vmatpush1.bf16.msra.mxu0 0
    %4222 = vmatprep.subr.bf16.mxu0 0
    %4223 = vmatpush1.bf16.msra.mxu0 0
    %4224 = vmatprep.subr.bf16.mxu0 0
    %4225 = vmatpush1.bf16.msra.mxu0 0
    %4226 = vmatprep.subr.bf16.mxu0 0
    %4227 = vmatpush1.bf16.msra.mxu0 0
    %4228 = vmatprep.subr.bf16.mxu0 0
    %4229 = vmatpush1.bf16.msra.mxu0 0
    %4230 = vmatprep.mubr.bf16.mxu0 0
    %4231 = vmatmul.mubr.bf16.gmra.mrb[0].mxu0 %v3786
    %v4232 = vpop.f32.mrb[0].mxu0
    %v4233 = vadd.f32 %v337, %v4232
    %v4234 = vpop.f32.mrb[0].mxu0
    %v4235 = vpop.f32.mrb[0].mxu0
    %v4236 = vpop.f32.mrb[0].mxu0
    %4237 = vdwg.mxu0
    %v4238 = vadd.f32 %v609, %v4192
    %v4239 = vxor.u32 %v4238, 2147483648
    %v4240 = vmul.f32 %v4239, 1.442695
    %v4241 = vpow.pop %v4240
    %v4242 = vadd.f32 %v4241, 1.0
    %v4243 = vrcp.pop %v4242
    %v4244 = vmul.f32 1.0, %v4243
    %v4245 = vadd.f32 %v611, %v4194
    %v4246 = vxor.u32 %v4245, 2147483648
    %v4247 = vmul.f32 %v4246, 1.442695
    %v4248 = vpow.pop %v4247
    %v4249 = vadd.f32 %v4248, 1.0
    %v4250 = vrcp.pop %v4249
    %v4251 = vmul.f32 1.0, %v4250
    %v4252 = vmul.f32 %v4244, %v4233
    %v4253 = vadd.f32 %v674, %v4252
    %v4254 = vtanh.pop %v4253
    %v4255 = vsub.f32 1.0, %v4251
    %v4256 = vmul.f32 %v4255, %v4254
    %v4257 = vmul.f32 %v4251, %v3785
    %v4258 = vadd.f32 %v4256, %v4257
    %v4259 = vpack.c.bf16 %v4258, %v4258
    %4260 = vmatprep.subr.bf16.mxu0 %v992
    %4261 = vmatpush1.bf16.msra.mxu0 %v991
    %4262 = vmatprep.subr.bf16.mxu0 %v995
    %4263 = vmatpush1.bf16.msra.mxu0 %v994
    %4264 = vmatprep.subr.bf16.mxu0 %v998
    %4265 = vmatpush1.bf16.msra.mxu0 %v997
    %4266 = vmatprep.subr.bf16.mxu0 %v1001
    %4267 = vmatpush1.bf16.msra.mxu0 %v1000
    %4268 = vmatprep.subr.bf16.mxu0 %v1004
    %4269 = vmatpush1.bf16.msra.mxu0 %v1003
    %4270 = vmatprep.subr.bf16.mxu0 %v1007
    %4271 = vmatpush1.bf16.msra.mxu0 %v1006
    %4272 = vmatprep.subr.bf16.mxu0 %v1010
    %4273 = vmatpush1.bf16.msra.mxu0 %v1009
    %4274 = vmatprep.subr.bf16.mxu0 %v1013
    %4275 = vmatpush1.bf16.msra.mxu0 %v1012
    %4276 = vmatprep.subr.bf16.mxu0 0
    %4277 = vmatpush1.bf16.msra.mxu0 0
    %4278 = vmatprep.subr.bf16.mxu0 0
    %4279 = vmatpush1.bf16.msra.mxu0 0
    %4280 = vmatprep.subr.bf16.mxu0 0
    %4281 = vmatpush1.bf16.msra.mxu0 0
    %4282 = vmatprep.subr.bf16.mxu0 0
    %4283 = vmatpush1.bf16.msra.mxu0 0
    %4284 = vmatprep.subr.bf16.mxu0 0
    %4285 = vmatpush1.bf16.msra.mxu0 0
    %4286 = vmatprep.subr.bf16.mxu0 0
    %4287 = vmatpush1.bf16.msra.mxu0 0
    %4288 = vmatprep.subr.bf16.mxu0 0
    %4289 = vmatpush1.bf16.msra.mxu0 0
    %4290 = vmatprep.subr.bf16.mxu0 0
    %4291 = vmatpush1.bf16.msra.mxu0 0
    %4292 = vmatprep.mubr.bf16.mxu0 0
    %4293 = vmatmul.mubr.bf16.gmra.mrb[0].mxu0 %v4259
    %v4294 = vpop.f32.mrb[0].mxu0
    %v4295 = vadd.f32 %v380, %v4294
    %v4296 = vpop.f32.mrb[0].mxu0
    %v4297 = vadd.f32 %v384, %v4296
    %v4298 = vpop.f32.mrb[0].mxu0
    %v4299 = vpop.f32.mrb[0].mxu0
    %4300 = vdwg.mxu0
    %4301 = vmatprep.subr.bf16.mxu0 0
    %4302 = vmatpush1.bf16.msra.mxu0 %v993
    %4303 = vmatprep.subr.bf16.mxu0 0
    %4304 = vmatpush1.bf16.msra.mxu0 %v996
    %4305 = vmatprep.subr.bf16.mxu0 0
    %4306 = vmatpush1.bf16.msra.mxu0 %v999
    %4307 = vmatprep.subr.bf16.mxu0 0
    %4308 = vmatpush1.bf16.msra.mxu0 %v1002
    %4309 = vmatprep.subr.bf16.mxu0 0
    %4310 = vmatpush1.bf16.msra.mxu0 %v1005
    %4311 = vmatprep.subr.bf16.mxu0 0
    %4312 = vmatpush1.bf16.msra.mxu0 %v1008
    %4313 = vmatprep.subr.bf16.mxu0 0
    %4314 = vmatpush1.bf16.msra.mxu0 %v1011
    %4315 = vmatprep.subr.bf16.mxu0 0
    %4316 = vmatpush1.bf16.msra.mxu0 %v1014
    %4317 = vmatprep.subr.bf16.mxu0 0
    %4318 = vmatpush1.bf16.msra.mxu0 0
    %4319 = vmatprep.subr.bf16.mxu0 0
    %4320 = vmatpush1.bf16.msra.mxu0 0
    %4321 = vmatprep.subr.bf16.mxu0 0
    %4322 = vmatpush1.bf16.msra.mxu0 0
    %4323 = vmatprep.subr.bf16.mxu0 0
    %4324 = vmatpush1.bf16.msra.mxu0 0
    %4325 = vmatprep.subr.bf16.mxu0 0
    %4326 = vmatpush1.bf16.msra.mxu0 0
    %4327 = vmatprep.subr.bf16.mxu0 0
    %4328 = vmatpush1.bf16.msra.mxu0 0
    %4329 = vmatprep.subr.bf16.mxu0 0
    %4330 = vmatpush1.bf16.msra.mxu0 0
    %4331 = vmatprep.subr.bf16.mxu0 0
    %4332 = vmatpush1.bf16.msra.mxu0 0
    %4333 = vmatprep.mubr.bf16.mxu0 0
    %4334 = vmatmul.mubr.bf16.gmra.mrb[0].mxu0 %v4259
    %v4335 = vpop.f32.mrb[0].mxu0
    %v4336 = vadd.f32 %v388, %v4335
    %v4337 = vpop.f32.mrb[0].mxu0
    %v4338 = vpop.f32.mrb[0].mxu0
    %v4339 = vpop.f32.mrb[0].mxu0
    %4340 = vdwg.mxu0
    %4341 = vmatprep.subr.bf16.mxu0 %v1201
    %4342 = vmatpush1.bf16.msra.mxu0 %v1200
    %4343 = vmatprep.subr.bf16.mxu0 %v1204
    %4344 = vmatpush1.bf16.msra.mxu0 %v1203
    %4345 = vmatprep.subr.bf16.mxu0 %v1207
    %4346 = vmatpush1.bf16.msra.mxu0 %v1206
    %4347 = vmatprep.subr.bf16.mxu0 %v1210
    %4348 = vmatpush1.bf16.msra.mxu0 %v1209
    %4349 = vmatprep.subr.bf16.mxu0 %v1213
    %4350 = vmatpush1.bf16.msra.mxu0 %v1212
    %4351 = vmatprep.subr.bf16.mxu0 %v1216
    %4352 = vmatpush1.bf16.msra.mxu0 %v1215
    %4353 = vmatprep.subr.bf16.mxu0 %v1219
    %4354 = vmatpush1.bf16.msra.mxu0 %v1218
    %4355 = vmatprep.subr.bf16.mxu0 %v1222
    %4356 = vmatpush1.bf16.msra.mxu0 %v1221
    %4357 = vmatprep.subr.bf16.mxu0 0
    %4358 = vmatpush1.bf16.msra.mxu0 0
    %4359 = vmatprep.subr.bf16.mxu0 0
    %4360 = vmatpush1.bf16.msra.mxu0 0
    %4361 = vmatprep.subr.bf16.mxu0 0
    %4362 = vmatpush1.bf16.msra.mxu0 0
    %4363 = vmatprep.subr.bf16.mxu0 0
    %4364 = vmatpush1.bf16.msra.mxu0 0
    %4365 = vmatprep.subr.bf16.mxu0 0
    %4366 = vmatpush1.bf16.msra.mxu0 0
    %4367 = vmatprep.subr.bf16.mxu0 0
    %4368 = vmatpush1.bf16.msra.mxu0 0
    %4369 = vmatprep.subr.bf16.mxu0 0
    %4370 = vmatpush1.bf16.msra.mxu0 0
    %4371 = vmatprep.subr.bf16.mxu0 0
    %4372 = vmatpush1.bf16.msra.mxu0 0
    %4373 = vmatprep.mubr.bf16.mxu0 0
    %4374 = vmatmul.mubr.bf16.gmra.mrb[0].mxu0 %v3970
    %v4375 = vpop.f32.mrb[0].mxu0
    %v4376 = vadd.f32 %v346, %v4375
    %v4377 = vpop.f32.mrb[0].mxu0
    %v4378 = vadd.f32 %v350, %v4377
    %v4379 = vpop.f32.mrb[0].mxu0
    %v4380 = vpop.f32.mrb[0].mxu0
    %4381 = vdwg.mxu0
    %4382 = vmatprep.subr.bf16.mxu0 0
    %4383 = vmatpush1.bf16.msra.mxu0 %v1202
    %4384 = vmatprep.subr.bf16.mxu0 0
    %4385 = vmatpush1.bf16.msra.mxu0 %v1205
    %4386 = vmatprep.subr.bf16.mxu0 0
    %4387 = vmatpush1.bf16.msra.mxu0 %v1208
    %4388 = vmatprep.subr.bf16.mxu0 0
    %4389 = vmatpush1.bf16.msra.mxu0 %v1211
    %4390 = vmatprep.subr.bf16.mxu0 0
    %4391 = vmatpush1.bf16.msra.mxu0 %v1214
    %4392 = vmatprep.subr.bf16.mxu0 0
    %4393 = vmatpush1.bf16.msra.mxu0 %v1217
    %4394 = vmatprep.subr.bf16.mxu0 0
    %4395 = vmatpush1.bf16.msra.mxu0 %v1220
    %4396 = vmatprep.subr.bf16.mxu0 0
    %4397 = vmatpush1.bf16.msra.mxu0 %v1223
    %4398 = vmatprep.subr.bf16.mxu0 0
    %4399 = vmatpush1.bf16.msra.mxu0 0
    %4400 = vmatprep.subr.bf16.mxu0 0
    %4401 = vmatpush1.bf16.msra.mxu0 0
    %4402 = vmatprep.subr.bf16.mxu0 0
    %4403 = vmatpush1.bf16.msra.mxu0 0
    %4404 = vmatprep.subr.bf16.mxu0 0
    %4405 = vmatpush1.bf16.msra.mxu0 0
    %4406 = vmatprep.subr.bf16.mxu0 0
    %4407 = vmatpush1.bf16.msra.mxu0 0
    %4408 = vmatprep.subr.bf16.mxu0 0
    %4409 = vmatpush1.bf16.msra.mxu0 0
    %4410 = vmatprep.subr.bf16.mxu0 0
    %4411 = vmatpush1.bf16.msra.mxu0 0
    %4412 = vmatprep.subr.bf16.mxu0 0
    %4413 = vmatpush1.bf16.msra.mxu0 0
    %4414 = vmatprep.mubr.bf16.mxu0 0
    %4415 = vmatmul.mubr.bf16.gmra.mrb[0].mxu0 %v3970
    %v4416 = vpop.f32.mrb[0].mxu0
    %v4417 = vadd.f32 %v354, %v4416
    %v4418 = vpop.f32.mrb[0].mxu0
    %v4419 = vpop.f32.mrb[0].mxu0
    %v4420 = vpop.f32.mrb[0].mxu0
    %4421 = vdwg.mxu0
    %v4422 = vadd.f32 %v4295, %v4376
    %v4423 = vxor.u32 %v4422, 2147483648
    %v4424 = vmul.f32 %v4423, 1.442695
    %v4425 = vpow.pop %v4424
    %v4426 = vadd.f32 %v4425, 1.0
    %v4427 = vrcp.pop %v4426
    %v4428 = vmul.f32 1.0, %v4427
    %v4429 = vadd.f32 %v4297, %v4378
    %v4430 = vxor.u32 %v4429, 2147483648
    %v4431 = vmul.f32 %v4430, 1.442695
    %v4432 = vpow.pop %v4431
    %v4433 = vadd.f32 %v4432, 1.0
    %v4434 = vrcp.pop %v4433
    %v4435 = vmul.f32 1.0, %v4434
    %v4436 = vmul.f32 %v4428, %v4417
    %v4437 = vadd.f32 %v4336, %v4436
    %v4438 = vtanh.pop %v4437
    %v4439 = vsub.f32 1.0, %v4435
    %v4440 = vmul.f32 %v4439, %v4438
    %v4441 = vmul.f32 %v4435, %v3969
    %v4442 = vadd.f32 %v4440, %v4441
    %v4443 = vpack.c.bf16 %v4442, %v4442
    %4444 = vmatprep.subr.bf16.mxu0 %v1432
    %4445 = vmatpush1.bf16.msra.mxu0 %v1431
    %4446 = vmatprep.subr.bf16.mxu0 %v1435
    %4447 = vmatpush1.bf16.msra.mxu0 %v1434
    %4448 = vmatprep.subr.bf16.mxu0 %v1438
    %4449 = vmatpush1.bf16.msra.mxu0 %v1437
    %4450 = vmatprep.subr.bf16.mxu0 %v1441
    %4451 = vmatpush1.bf16.msra.mxu0 %v1440
    %4452 = vmatprep.subr.bf16.mxu0 %v1444
    %4453 = vmatpush1.bf16.msra.mxu0 %v1443
    %4454 = vmatprep.subr.bf16.mxu0 %v1447
    %4455 = vmatpush1.bf16.msra.mxu0 %v1446
    %4456 = vmatprep.subr.bf16.mxu0 %v1450
    %4457 = vmatpush1.bf16.msra.mxu0 %v1449
    %4458 = vmatprep.subr.bf16.mxu0 %v1453
    %4459 = vmatpush1.bf16.msra.mxu0 %v1452
    %4460 = vmatprep.subr.bf16.mxu0 0
    %4461 = vmatpush1.bf16.msra.mxu0 0
    %4462 = vmatprep.subr.bf16.mxu0 0
    %4463 = vmatpush1.bf16.msra.mxu0 0
    %4464 = vmatprep.subr.bf16.mxu0 0
    %4465 = vmatpush1.bf16.msra.mxu0 0
    %4466 = vmatprep.subr.bf16.mxu0 0
    %4467 = vmatpush1.bf16.msra.mxu0 0
    %4468 = vmatprep.subr.bf16.mxu0 0
    %4469 = vmatpush1.bf16.msra.mxu0 0
    %4470 = vmatprep.subr.bf16.mxu0 0
    %4471 = vmatpush1.bf16.msra.mxu0 0
    %4472 = vmatprep.subr.bf16.mxu0 0
    %4473 = vmatpush1.bf16.msra.mxu0 0
    %4474 = vmatprep.subr.bf16.mxu0 0
    %4475 = vmatpush1.bf16.msra.mxu0 0
    %4476 = vmatprep.mubr.bf16.mxu0 0
    %4477 = vmatmul.mubr.bf16.gmra.mrb[0].mxu0 %v4443
    %v4478 = vpop.f32.mrb[0].mxu0
    %v4479 = vadd.f32 %v397, %v4478
    %v4480 = vpop.f32.mrb[0].mxu0
    %v4481 = vadd.f32 %v401, %v4480
    %v4482 = vpop.f32.mrb[0].mxu0
    %v4483 = vpop.f32.mrb[0].mxu0
    %4484 = vdwg.mxu0
    %4485 = vmatprep.subr.bf16.mxu0 0
    %4486 = vmatpush1.bf16.msra.mxu0 %v1433
    %4487 = vmatprep.subr.bf16.mxu0 0
    %4488 = vmatpush1.bf16.msra.mxu0 %v1436
    %4489 = vmatprep.subr.bf16.mxu0 0
    %4490 = vmatpush1.bf16.msra.mxu0 %v1439
    %4491 = vmatprep.subr.bf16.mxu0 0
    %4492 = vmatpush1.bf16.msra.mxu0 %v1442
    %4493 = vmatprep.subr.bf16.mxu0 0
    %4494 = vmatpush1.bf16.msra.mxu0 %v1445
    %4495 = vmatprep.subr.bf16.mxu0 0
    %4496 = vmatpush1.bf16.msra.mxu0 %v1448
    %4497 = vmatprep.subr.bf16.mxu0 0
    %4498 = vmatpush1.bf16.msra.mxu0 %v1451
    %4499 = vmatprep.subr.bf16.mxu0 0
    %4500 = vmatpush1.bf16.msra.mxu0 %v1454
    %4501 = vmatprep.subr.bf16.mxu0 0
    %4502 = vmatpush1.bf16.msra.mxu0 0
    %4503 = vmatprep.subr.bf16.mxu0 0
    %4504 = vmatpush1.bf16.msra.mxu0 0
    %4505 = vmatprep.subr.bf16.mxu0 0
    %4506 = vmatpush1.bf16.msra.mxu0 0
    %4507 = vmatprep.subr.bf16.mxu0 0
    %4508 = vmatpush1.bf16.msra.mxu0 0
    %4509 = vmatprep.subr.bf16.mxu0 0
    %4510 = vmatpush1.bf16.msra.mxu0 0
    %4511 = vmatprep.subr.bf16.mxu0 0
    %4512 = vmatpush1.bf16.msra.mxu0 0
    %4513 = vmatprep.subr.bf16.mxu0 0
    %4514 = vmatpush1.bf16.msra.mxu0 0
    %4515 = vmatprep.subr.bf16.mxu0 0
    %4516 = vmatpush1.bf16.msra.mxu0 0
    %4517 = vmatprep.mubr.bf16.mxu0 0
    %4518 = vmatmul.mubr.bf16.gmra.mrb[0].mxu0 %v4443
    %v4519 = vpop.f32.mrb[0].mxu0
    %v4520 = vadd.f32 %v405, %v4519
    %v4521 = vpop.f32.mrb[0].mxu0
    %v4522 = vpop.f32.mrb[0].mxu0
    %v4523 = vpop.f32.mrb[0].mxu0
    %4524 = vdwg.mxu0
    %4525 = vmatprep.subr.bf16.mxu0 %v1641
    %4526 = vmatpush1.bf16.msra.mxu0 %v1640
    %4527 = vmatprep.subr.bf16.mxu0 %v1644
    %4528 = vmatpush1.bf16.msra.mxu0 %v1643
    %4529 = vmatprep.subr.bf16.mxu0 %v1647
    %4530 = vmatpush1.bf16.msra.mxu0 %v1646
    %4531 = vmatprep.subr.bf16.mxu0 %v1650
    %4532 = vmatpush1.bf16.msra.mxu0 %v1649
    %4533 = vmatprep.subr.bf16.mxu0 %v1653
    %4534 = vmatpush1.bf16.msra.mxu0 %v1652
    %4535 = vmatprep.subr.bf16.mxu0 %v1656
    %4536 = vmatpush1.bf16.msra.mxu0 %v1655
    %4537 = vmatprep.subr.bf16.mxu0 %v1659
    %4538 = vmatpush1.bf16.msra.mxu0 %v1658
    %4539 = vmatprep.subr.bf16.mxu0 %v1662
    %4540 = vmatpush1.bf16.msra.mxu0 %v1661
    %4541 = vmatprep.subr.bf16.mxu0 0
    %4542 = vmatpush1.bf16.msra.mxu0 0
    %4543 = vmatprep.subr.bf16.mxu0 0
    %4544 = vmatpush1.bf16.msra.mxu0 0
    %4545 = vmatprep.subr.bf16.mxu0 0
    %4546 = vmatpush1.bf16.msra.mxu0 0
    %4547 = vmatprep.subr.bf16.mxu0 0
    %4548 = vmatpush1.bf16.msra.mxu0 0
    %4549 = vmatprep.subr.bf16.mxu0 0
    %4550 = vmatpush1.bf16.msra.mxu0 0
    %4551 = vmatprep.subr.bf16.mxu0 0
    %4552 = vmatpush1.bf16.msra.mxu0 0
    %4553 = vmatprep.subr.bf16.mxu0 0
    %4554 = vmatpush1.bf16.msra.mxu0 0
    %4555 = vmatprep.subr.bf16.mxu0 0
    %4556 = vmatpush1.bf16.msra.mxu0 0
    %4557 = vmatprep.mubr.bf16.mxu0 0
    %4558 = vmatmul.mubr.bf16.gmra.mrb[0].mxu0 %v4154
    %v4559 = vpop.f32.mrb[0].mxu0
    %v4560 = vadd.f32 %v363, %v4559
    %v4561 = vpop.f32.mrb[0].mxu0
    %v4562 = vadd.f32 %v367, %v4561
    %v4563 = vpop.f32.mrb[0].mxu0
    %v4564 = vpop.f32.mrb[0].mxu0
    %4565 = vdwg.mxu0
    %4566 = vmatprep.subr.bf16.mxu0 0
    %4567 = vmatpush1.bf16.msra.mxu0 %v1642
    %4568 = vmatprep.subr.bf16.mxu0 0
    %4569 = vmatpush1.bf16.msra.mxu0 %v1645
    %4570 = vmatprep.subr.bf16.mxu0 0
    %4571 = vmatpush1.bf16.msra.mxu0 %v1648
    %4572 = vmatprep.subr.bf16.mxu0 0
    %4573 = vmatpush1.bf16.msra.mxu0 %v1651
    %4574 = vmatprep.subr.bf16.mxu0 0
    %4575 = vmatpush1.bf16.msra.mxu0 %v1654
    %4576 = vmatprep.subr.bf16.mxu0 0
    %4577 = vmatpush1.bf16.msra.mxu0 %v1657
    %4578 = vmatprep.subr.bf16.mxu0 0
    %4579 = vmatpush1.bf16.msra.mxu0 %v1660
    %4580 = vmatprep.subr.bf16.mxu0 0
    %4581 = vmatpush1.bf16.msra.mxu0 %v1663
    %4582 = vmatprep.subr.bf16.mxu0 0
    %4583 = vmatpush1.bf16.msra.mxu0 0
    %4584 = vmatprep.subr.bf16.mxu0 0
    %4585 = vmatpush1.bf16.msra.mxu0 0
    %4586 = vmatprep.subr.bf16.mxu0 0
    %4587 = vmatpush1.bf16.msra.mxu0 0
    %4588 = vmatprep.subr.bf16.mxu0 0
    %4589 = vmatpush1.bf16.msra.mxu0 0
    %4590 = vmatprep.subr.bf16.mxu0 0
    %4591 = vmatpush1.bf16.msra.mxu0 0
    %4592 = vmatprep.subr.bf16.mxu0 0
    %4593 = vmatpush1.bf16.msra.mxu0 0
    %4594 = vmatprep.subr.bf16.mxu0 0
    %4595 = vmatpush1.bf16.msra.mxu0 0
    %4596 = vmatprep.subr.bf16.mxu0 0
    %4597 = vmatpush1.bf16.msra.mxu0 0
    %4598 = vmatprep.mubr.bf16.mxu0 0
    %4599 = vmatmul.mubr.bf16.gmra.mrb[0].mxu0 %v4154
    %v4600 = vpop.f32.mrb[0].mxu0
    %v4601 = vadd.f32 %v371, %v4600
    %v4602 = vpop.f32.mrb[0].mxu0
    %v4603 = vpop.f32.mrb[0].mxu0
    %v4604 = vpop.f32.mrb[0].mxu0
    %4605 = vdwg.mxu0
    %v4606 = vadd.f32 %v4479, %v4560
    %v4607 = vxor.u32 %v4606, 2147483648
    %v4608 = vmul.f32 %v4607, 1.442695
    %v4609 = vpow.pop %v4608
    %v4610 = vadd.f32 %v4609, 1.0
    %v4611 = vrcp.pop %v4610
    %v4612 = vmul.f32 1.0, %v4611
    %v4613 = vadd.f32 %v4481, %v4562
    %v4614 = vxor.u32 %v4613, 2147483648
    %v4615 = vmul.f32 %v4614, 1.442695
    %v4616 = vpow.pop %v4615
    %v4617 = vadd.f32 %v4616, 1.0
    %v4618 = vrcp.pop %v4617
    %v4619 = vmul.f32 1.0, %v4618
    %v4620 = vmul.f32 %v4612, %v4601
    %v4621 = vadd.f32 %v4520, %v4620
    %v4622 = vtanh.pop %v4621
    %v4623 = vsub.f32 1.0, %v4619
    %v4624 = vmul.f32 %v4623, %v4622
    %v4625 = vmul.f32 %v4619, %v4153
    %v4626 = vadd.f32 %v4624, %v4625
    %v4627 = vpack.c.bf16 %v4626, %v4626
    %s4628 = scalar_lea.vmem %s16, 24
    %4629 = vst [vmem:[%s4628] sm:$0xf] %v4627
    // Predicated region
    $region78: #{decoder_forward.2} parent=1 // pred_check
      _
    $region79: #{decoder_forward.2} parent=1 // pred_check_branch
      %4631 = sbr.rel (0) target = $region81
    $region80: #{decoder_forward.2} parent=1 // pred_region
      _
    $region81: #{decoder_forward.2} parent=1 // pred_fallthru
      _
    // Predicated region
    $region82: #{decoder_forward.2} parent=1 // pred_check
      _
    $region83: #{decoder_forward.2} parent=1 // pred_check_branch
      %4633 = sbr.rel (0) target = $region85
    $region84: #{decoder_forward.2} parent=1 // pred_region
      _
    $region85: #{decoder_forward.2} parent=1 // pred_fallthru
      _
    %4634 = vsyncpa [#allocation3], 1
    %4635 = vsyncpa [#allocation5], 1

</llo_original>
